<compile_context>
chip_gen: v5e
topology: v5e:2x2
jax: 0.10.0
libtpu: 0.0.40
codegen_flags: <defaults>
</compile_context>

<pallas_src>
import numpy as np
import jax
import jax.numpy as jnp
from jax import lax
from jax.experimental import pallas as pl
from jax.experimental.pallas import tpu as pltpu

EPS = 1e-5
KSIZE = 3
TILE_CAP = 512                       # row-tile cap; VMEM-safe on v5e/v6e/v7x for K <= ~1k
VMEM_LIMIT = 64 * 1024 * 1024        # raised scoped-VMEM limit


def _pick_tile(n, cap=TILE_CAP):
    """Largest power-of-two row tile <= cap that divides n (else n itself)."""
    for t in (512, 256, 128, 64, 32, 16, 8):
        if t <= cap and n % t == 0:
            return t
    return n


# ----------------------------------------------------------------------------
# Pallas kernels
# ----------------------------------------------------------------------------
def conv_act_stats_kernel(p_ref, w_ref, b_ref, y_ref, s_ref):
    """One row tile of: y = relu(patches @ W + b); per-block (sum, sumsq) partials."""
    acc = jnp.dot(p_ref[...], w_ref[...],            # bf16 x bf16 -> f32 accumulation
                  preferred_element_type=jnp.float32)
    y = jnp.maximum(acc + b_ref[...], 0.0)           # bias + ReLU fused
    y_ref[...] = y
    c = y.shape[1]
    # Two sub-row stores (no concatenate); column reductions ride the XLU slot.
    s_ref[0:1, 0:1, :] = jnp.sum(y, axis=0, keepdims=True).reshape(1, 1, c)
    s_ref[0:1, 1:2, :] = jnp.sum(y * y, axis=0, keepdims=True).reshape(1, 1, c)


def bn_apply_kernel(y_ref, a_ref, d_ref, o_ref):
    """Elementwise y * scale + shift (scale/shift precomputed per channel)."""
    o_ref[...] = (y_ref[...] * a_ref[...] + d_ref[...]).astype(o_ref.dtype)


# ----------------------------------------------------------------------------
# Pallas wrappers
# ----------------------------------------------------------------------------
def conv_act_stats(patches, w_mat, bias):
    """patches (M, K) bf16, w_mat (K, C) bf16 -> y (M, C) f32, stats (G, 2, C) f32."""
    M, K = patches.shape
    C = w_mat.shape[1]
    tm = _pick_tile(M)
    grid = (M // tm,)
    y, stats = pl.pallas_call(
        conv_act_stats_kernel,
        out_shape=(jax.ShapeDtypeStruct((M, C), jnp.float32),
                   jax.ShapeDtypeStruct((M // tm, 2, C), jnp.float32)),
        grid_spec=pltpu.PrefetchScalarGridSpec(
            num_scalar_prefetch=0,
            grid=grid,
            in_specs=[pl.BlockSpec((tm, K), lambda i: (i, 0)),
                      pl.BlockSpec((K, C), lambda i: (0, 0)),
                      pl.BlockSpec((1, C), lambda i: (0, 0))],
            out_specs=[pl.BlockSpec((tm, C), lambda i: (i, 0)),
                       pl.BlockSpec((1, 2, C), lambda i: (i, 0, 0))]),
        compiler_params=pltpu.CompilerParams(
            dimension_semantics=("parallel",),          # per-block outputs -> parallel-safe
            vmem_limit_bytes=VMEM_LIMIT),
    )(patches, w_mat, bias.reshape(1, C).astype(jnp.float32))
    return y, stats


def bn_apply(y, stats, gamma, beta, out_dtype):
    """Batch-norm apply. stats = (2, C) total (sum, sumsq) over all M rows of y."""
    M, C = y.shape
    m = jnp.float32(M)
    mean = stats[0] / m
    var = jnp.maximum(stats[1] / m - mean * mean, 0.0)   # biased variance (training BN)
    a = (gamma * lax.rsqrt(var + EPS)).astype(jnp.float32)   # per-channel scale
    d = (beta - mean * a).astype(jnp.float32)                # per-channel shift

    if C <= 128 and 128 % C == 0 and (M * C) % 128 == 0:
        # Lane-dense view: (M, C) row-major -> (M*C/128, 128); lane l holds channel l % C.
        L = 128
        y2 = y.reshape((M * C) // L, L)
        a2 = jnp.tile(a, L // C).reshape(1, L)
        d2 = jnp.tile(d, L // C).reshape(1, L)
    else:
        y2, a2, d2 = y, a.reshape(1, C), d.reshape(1, C)

    R, L = y2.shape
    tr = _pick_tile(R)
    out = pl.pallas_call(
        bn_apply_kernel,
        out_shape=jax.ShapeDtypeStruct((R, L), out_dtype),
        grid_spec=pltpu.PrefetchScalarGridSpec(
            num_scalar_prefetch=0,
            grid=(R // tr,),
            in_specs=[pl.BlockSpec((tr, L), lambda i: (i, 0)),
                      pl.BlockSpec((1, L), lambda i: (0, 0)),
                      pl.BlockSpec((1, L), lambda i: (0, 0))],
            out_specs=pl.BlockSpec((tr, L), lambda i: (i, 0))),
        compiler_params=pltpu.CompilerParams(
            dimension_semantics=("parallel",),
            vmem_limit_bytes=VMEM_LIMIT),
    )(y2, a2, d2)
    return out.reshape(M, C)


# ----------------------------------------------------------------------------
# Glue: parity decomposition of the transposed conv, im2col for the stride-1 conv
# ----------------------------------------------------------------------------
# ConvTranspose3d(k=3, stride=2, pad=1, outpad=1) per dim:
#   out[2j]   = x[j]   * w[1]
#   out[2j+1] = x[j]   * w[2] + x[j+1] * w[0]          (x[D] := 0)
# => 8 output-parity classes, each a small conv with 1/2/4/8 taps. No dilation,
#    no structural-zero MACs.
def _parity_taps(p):
    return [1] if p == 0 else [2, 0]          # tap offset 0 -> k, offset 1 -> k (odd dims)


def parity_patches(x, parity):
    """x: (N,D,H,W,C). Returns (N*D*H*W, T*C) patch matrix for one output parity."""
    N, D, H, W, C = x.shape
    xp = jnp.pad(x, ((0, 0),) + tuple((0, p) for p in parity) + ((0, 0),))
    offs = [list(range(1 + p)) for p in parity]
    cols = []
    for od in offs[0]:
        for oh in offs[1]:
            for ow in offs[2]:
                cols.append(xp[:, od:od + D, oh:oh + H, ow:ow + W, :])
    p = jnp.stack(cols, axis=4)                       # (N,D,H,W,T,C)
    return p.reshape(N * D * H * W, -1)


def parity_weight(w_t, parity):
    """w_t: (Cin, Cout, 3,3,3). Returns (T*Cin, Cout) matching parity_patches order."""
    taps = []
    for kd in _parity_taps(parity[0]):
        for kh in _parity_taps(parity[1]):
            for kw in _parity_taps(parity[2]):
                taps.append(w_t[:, :, kd, kh, kw])     # (Cin, Cout)
    w = jnp.stack(taps, axis=0)                        # (T, Cin, Cout)
    return w.reshape(-1, w_t.shape[1])


def im2col_3d(xp, k):
    """xp: (N, Dp, Hp, Wp, C) padded -> (N*OD*OH*OW, k^3*C), tap-major then channel."""
    N, Dp, Hp, Wp, C = xp.shape
    OD, OH, OW = Dp - k + 1, Hp - k + 1, Wp - k + 1
    cols = []
    for kd in range(k):
        for kh in range(k):
            for kw in range(k):
                cols.append(xp[:, kd:kd + OD, kh:kh + OH, kw:kw + OW, :])
    p = jnp.stack(cols, axis=4)                        # (N,OD,OH,OW,k^3,C)
    return p.reshape(N * OD * OH * OW, k * k * k * C)


# ----------------------------------------------------------------------------
# Full ConvBlockUp forward
# ----------------------------------------------------------------------------
def conv_block_up_forward(x_ncdhw, params):
    w_t, b1 = params["w_t"], params["b1"]     # ConvTranspose3d: (Cin, Cout, 3,3,3), (Cout,)
    w_c, b2 = params["w_c"], params["b2"]     # Conv3d:          (Cout, Cout, 3,3,3), (Cout,)
    g1, be1 = params["g1"], params["be1"]
    g2, be2 = params["g2"], params["be2"]
    Cout = w_t.shape[1]

    x = jnp.transpose(x_ncdhw, (0, 2, 3, 4, 1)).astype(jnp.bfloat16)   # NDHWC, bf16
    N, D, H, W, _ = x.shape
    OD, OH, OW = 2 * D, 2 * H, 2 * W

    # --- conv_1: ConvTranspose3d(stride=2) as 8 parity sub-convolutions ---
    ys, stat_parts = [], []
    for pd in (0, 1):
        for ph in (0, 1):
            for pw in (0, 1):
                parity = (pd, ph, pw)
                pats = parity_patches(x, parity)                       # bf16
                wsub = parity_weight(w_t, parity).astype(jnp.bfloat16)
                y_p, s_p = conv_act_stats(pats, wsub, b1)              # matmul + bias + ReLU + stats
                ys.append(y_p)
                stat_parts.append(jnp.sum(s_p, axis=0))
    y1 = jnp.concatenate(ys, axis=0)                                   # (N*OD*OH*OW, Cout) f32
    stats1 = jnp.sum(jnp.stack(stat_parts, axis=0), axis=0)            # (2, Cout)
    y1n = bn_apply(y1, stats1, g1, be1, out_dtype=jnp.bfloat16)        # norm_1, bf16 for next matmul

    # interleave parities -> NDHWC: out[n, 2d+pd, 2h+ph, 2w+pw, c]
    h = y1n.reshape(2, 2, 2, N, D, H, W, Cout)
    h = jnp.transpose(h, (3, 4, 0, 5, 1, 6, 2, 7)).reshape(N, OD, OH, OW, Cout)

    # --- conv_2: Conv3d(stride=1, pad=1) ---
    hp = jnp.pad(h, ((0, 0), (1, 1), (1, 1), (1, 1), (0, 0)))
    patches2 = im2col_3d(hp, KSIZE)                                    # bf16
    w_mat2 = jnp.transpose(w_c, (2, 3, 4, 1, 0)).reshape(
        KSIZE ** 3 * Cout, Cout).astype(jnp.bfloat16)
    y2, s2 = conv_act_stats(patches2, w_mat2, b2)
    stats2 = jnp.sum(s2, axis=0)
    y2n = bn_apply(y2, stats2, g2, be2, out_dtype=jnp.float32)         # norm_2

    out = y2n.reshape(N, OD, OH, OW, Cout)
    return jnp.transpose(out, (0, 4, 1, 2, 3))                         # back to NCDHW


# ----------------------------------------------------------------------------
# Pure-JAX reference (same bf16-input / f32-accumulate precision as the kernels)
# ----------------------------------------------------------------------------
def _bn_ref(y, g, b):
    mean = jnp.mean(y, axis=(0, 2, 3, 4), keepdims=True)
    var = jnp.mean((y - mean) ** 2, axis=(0, 2, 3, 4), keepdims=True)
    return (y - mean) * lax.rsqrt(var + EPS) * g.reshape(1, -1, 1, 1, 1) + b.reshape(1, -1, 1, 1, 1)


def reference_forward(x, params):
    dn = ("NCDHW", "OIDHW", "NCDHW")
    w1 = jnp.transpose(jnp.flip(params["w_t"], (2, 3, 4)),
                       (1, 0, 2, 3, 4)).astype(jnp.bfloat16)
    y = lax.conv_general_dilated(
        x.astype(jnp.bfloat16), w1, window_strides=(1, 1, 1), padding=[(1, 2)] * 3,
        lhs_dilation=(2, 2, 2), dimension_numbers=dn,
        preferred_element_type=jnp.float32) + params["b1"].reshape(1, -1, 1, 1, 1)
    y = jnp.maximum(y, 0.0)
    y = _bn_ref(y, params["g1"], params["be1"])
    y = lax.conv_general_dilated(
        y.astype(jnp.bfloat16), params["w_c"].astype(jnp.bfloat16),
        window_strides=(1, 1, 1), padding=[(1, 1)] * 3, dimension_numbers=dn,
        preferred_element_type=jnp.float32) + params["b2"].reshape(1, -1, 1, 1, 1)
    y = jnp.maximum(y, 0.0)
    y = _bn_ref(y, params["g2"], params["be2"])
    return y


# ----------------------------------------------------------------------------
if __name__ == "__main__":
    # Small deterministic config: N=2, Cin=4, Cout=8, spatial 8^3 -> output 16^3.
    N, Cin, Cout, S = 2, 4, 8, 8
    key = jax.random.PRNGKey(0)
    ks = jax.random.split(key, 9)

    params = {
        "w_t": 0.1 * jax.random.normal(ks[0], (Cin, Cout, KSIZE, KSIZE, KSIZE), jnp.float32),
        "b1":  0.1 * jax.random.normal(ks[1], (Cout,), jnp.float32),
        "w_c": 0.1 * jax.random.normal(ks[2], (Cout, Cout, KSIZE, KSIZE, KSIZE), jnp.float32),
        "b2":  0.1 * jax.random.normal(ks[3], (Cout,), jnp.float32),
        "g1":  1.0 + 0.1 * jax.random.normal(ks[4], (Cout,), jnp.float32),
        "be1": 0.1 * jax.random.normal(ks[5], (Cout,), jnp.float32),
        "g2":  1.0 + 0.1 * jax.random.normal(ks[6], (Cout,), jnp.float32),
        "be2": 0.1 * jax.random.normal(ks[7], (Cout,), jnp.float32),
    }
    x = jax.random.normal(ks[8], (N, Cin, S, S, S), jnp.float32)

    fwd = jax.jit(conv_block_up_forward)
    out = jax.block_until_ready(fwd(x, params))
    assert out.shape == (N, Cout, 2 * S, 2 * S, 2 * S), out.shape

    ref = jax.block_until_ready(reference_forward(x, params))
    out_np, ref_np = np.asarray(out), np.asarray(ref)
    if not np.allclose(out_np, ref_np, rtol=2e-2, atol=2e-2):
        raise AssertionError(
            "Pallas ConvBlockUp does not match JAX reference; max abs err = "
            f"{np.max(np.abs(out_np - ref_np))}")

    # TODO(synk): activation/norm are fixed to ReLU / training-mode BatchNorm3d;
    # other (activation, norm) constructor choices would need their own kernels.
    print("KERNEL_OK")
</pallas_src>

<mosaic_0001>
module attributes {stable_mosaic.version = 11 : i64} {
  func.func @conv_act_stats_kernel(%arg0: i32, %arg1: memref<512x16xbf16, #tpu.memory_space<vmem>>, %arg2: memref<16x8xbf16, #tpu.memory_space<vmem>>, %arg3: memref<1x8xf32, #tpu.memory_space<vmem>>, %arg4: memref<512x8xf32, #tpu.memory_space<vmem>>, %arg5: memref<1x2x8xf32, #tpu.memory_space<vmem>>) attributes {dimension_semantics = [#tpu.dimension_semantics<parallel>], iteration_bounds = array<i64: 2>, scalar_prefetch = 0 : i64, scratch_operands = 0 : i64, tpu.core_type = #tpu.core_type<tc>, window_params = [{transform_indices = @transform_0, window_bounds = array<i64: 512, 16>}, {pipeline_mode = #tpu.pipeline_mode<synchronous>, transform_indices = @transform_1, window_bounds = array<i64: 16, 8>}, {pipeline_mode = #tpu.pipeline_mode<synchronous>, transform_indices = @transform_2, window_bounds = array<i64: 1, 8>}, {transform_indices = @transform_3, window_bounds = array<i64: 512, 8>}, {transform_indices = @transform_4, window_bounds = array<i64: 1, 2, 8>}]} {
    %c0 = arith.constant 0 : index
    %c0_0 = arith.constant 0 : index
    %0 = vector.load %arg1[%c0, %c0_0] : memref<512x16xbf16, #tpu.memory_space<vmem>>, vector<512x16xbf16>
    %c0_1 = arith.constant 0 : index
    %c0_2 = arith.constant 0 : index
    %1 = vector.load %arg2[%c0_1, %c0_2] : memref<16x8xbf16, #tpu.memory_space<vmem>>, vector<16x8xbf16>
    %cst = arith.constant dense<0.000000e+00> : vector<512x8xf32>
    %2 = tpu.matmul %0, %1, %cst {dimension_numbers = #tpu.dot_dimension_numbers<[1], [0], [0], [1], [0, 0, 1, 1], [], []>} : vector<512x16xbf16>, vector<16x8xbf16>, vector<512x8xf32> -> vector<512x8xf32>
    %c0_3 = arith.constant 0 : index
    %c0_4 = arith.constant 0 : index
    %3 = vector.load %arg3[%c0_3, %c0_4] : memref<1x8xf32, #tpu.memory_space<vmem>>, vector<1x8xf32>
    %4 = vector.broadcast %3 : vector<1x8xf32> to vector<512x8xf32>
    %5 = arith.addf %2, %4 : vector<512x8xf32>
    %cst_5 = arith.constant 0.000000e+00 : f32
    %6 = vector.broadcast %cst_5 : f32 to vector<512x8xf32>
    %7 = arith.maximumf %5, %6 : vector<512x8xf32>
    %c0_6 = arith.constant 0 : index
    %c0_7 = arith.constant 0 : index
    %8 = vector.load %arg4[%c0_6, %c0_7] : memref<512x8xf32, #tpu.memory_space<vmem>>, vector<512x8xf32>
    tpu.vector_store %arg4[%c0_6, %c0_7], %7 {strides = array<i32>} : memref<512x8xf32, #tpu.memory_space<vmem>>, vector<512x8xf32>,
    %cst_8 = arith.constant dense<0.000000e+00> : vector<8xf32>
    %9 = vector.multi_reduction <add>, %7, %cst_8 [0] : vector<512x8xf32> to vector<8xf32>
    %10 = vector.shape_cast %9 : vector<8xf32> to vector<1x8xf32>
    %11 = vector.shape_cast %10 : vector<1x8xf32> to vector<1x1x8xf32>
    %c0_9 = arith.constant 0 : index
    %c0_10 = arith.constant 0 : index
    %c0_11 = arith.constant 0 : index
    %12 = vector.load %arg5[%c0_9, %c0_10, %c0_11] : memref<1x2x8xf32, #tpu.memory_space<vmem>>, vector<1x1x8xf32>
    tpu.vector_store %arg5[%c0_9, %c0_10, %c0_11], %11 {strides = array<i32>} : memref<1x2x8xf32, #tpu.memory_space<vmem>>, vector<1x1x8xf32>,
    %13 = arith.mulf %7, %7 : vector<512x8xf32>
    %cst_12 = arith.constant dense<0.000000e+00> : vector<8xf32>
    %14 = vector.multi_reduction <add>, %13, %cst_12 [0] : vector<512x8xf32> to vector<8xf32>
    %15 = vector.shape_cast %14 : vector<8xf32> to vector<1x8xf32>
    %16 = vector.shape_cast %15 : vector<1x8xf32> to vector<1x1x8xf32>
    %c0_13 = arith.constant 0 : index
    %c1 = arith.constant 1 : index
    %c0_14 = arith.constant 0 : index
    %17 = vector.load %arg5[%c0_13, %c1, %c0_14] : memref<1x2x8xf32, #tpu.memory_space<vmem>>, vector<1x1x8xf32>
    tpu.vector_store %arg5[%c0_13, %c1, %c0_14], %16 {strides = array<i32>} : memref<1x2x8xf32, #tpu.memory_space<vmem>>, vector<1x1x8xf32>,
    return
  }
  func.func @transform_0(%arg0: i32) -> (i32, i32) {
    %c0_i32 = arith.constant 0 : i32
    %c0_i32_0 = arith.constant 0 : i32
    return %arg0, %c0_i32 : i32, i32
  }
  func.func @transform_1(%arg0: i32) -> (i32, i32) {
    %c0_i32 = arith.constant 0 : i32
    %c0_i32_0 = arith.constant 0 : i32
    %c0_i32_1 = arith.constant 0 : i32
    return %c0_i32, %c0_i32_0 : i32, i32
  }
  func.func @transform_2(%arg0: i32) -> (i32, i32) {
    %c0_i32 = arith.constant 0 : i32
    %c0_i32_0 = arith.constant 0 : i32
    %c0_i32_1 = arith.constant 0 : i32
    return %c0_i32, %c0_i32_0 : i32, i32
  }
  func.func @transform_3(%arg0: i32) -> (i32, i32) {
    %c0_i32 = arith.constant 0 : i32
    %c0_i32_0 = arith.constant 0 : i32
    return %arg0, %c0_i32 : i32, i32
  }
  func.func @transform_4(%arg0: i32) -> (i32, i32, i32) {
    %c0_i32 = arith.constant 0 : i32
    %c0_i32_0 = arith.constant 0 : i32
    %c0_i32_1 = arith.constant 0 : i32
    return %arg0, %c0_i32, %c0_i32_0 : i32, i32, i32
  }
}

module attributes {stable_mosaic.version = 11 : i64} {
  func.func @conv_act_stats_kernel(%arg0: i32, %arg1: memref<512x32xbf16, #tpu.memory_space<vmem>>, %arg2: memref<32x8xbf16, #tpu.memory_space<vmem>>, %arg3: memref<1x8xf32, #tpu.memory_space<vmem>>, %arg4: memref<512x8xf32, #tpu.memory_space<vmem>>, %arg5: memref<1x2x8xf32, #tpu.memory_space<vmem>>) attributes {dimension_semantics = [#tpu.dimension_semantics<parallel>], iteration_bounds = array<i64: 2>, scalar_prefetch = 0 : i64, scratch_operands = 0 : i64, tpu.core_type = #tpu.core_type<tc>, window_params = [{transform_indices = @transform_0, window_bounds = array<i64: 512, 32>}, {pipeline_mode = #tpu.pipeline_mode<synchronous>, transform_indices = @transform_1, window_bounds = array<i64: 32, 8>}, {pipeline_mode = #tpu.pipeline_mode<synchronous>, transform_indices = @transform_2, window_bounds = array<i64: 1, 8>}, {transform_indices = @transform_3, window_bounds = array<i64: 512, 8>}, {transform_indices = @transform_4, window_bounds = array<i64: 1, 2, 8>}]} {
    %c0 = arith.constant 0 : index
    %c0_0 = arith.constant 0 : index
    %0 = vector.load %arg1[%c0, %c0_0] : memref<512x32xbf16, #tpu.memory_space<vmem>>, vector<512x32xbf16>
    %c0_1 = arith.constant 0 : index
    %c0_2 = arith.constant 0 : index
    %1 = vector.load %arg2[%c0_1, %c0_2] : memref<32x8xbf16, #tpu.memory_space<vmem>>, vector<32x8xbf16>
    %cst = arith.constant dense<0.000000e+00> : vector<512x8xf32>
    %2 = tpu.matmul %0, %1, %cst {dimension_numbers = #tpu.dot_dimension_numbers<[1], [0], [0], [1], [0, 0, 1, 1], [], []>} : vector<512x32xbf16>, vector<32x8xbf16>, vector<512x8xf32> -> vector<512x8xf32>
    %c0_3 = arith.constant 0 : index
    %c0_4 = arith.constant 0 : index
    %3 = vector.load %arg3[%c0_3, %c0_4] : memref<1x8xf32, #tpu.memory_space<vmem>>, vector<1x8xf32>
    %4 = vector.broadcast %3 : vector<1x8xf32> to vector<512x8xf32>
    %5 = arith.addf %2, %4 : vector<512x8xf32>
    %cst_5 = arith.constant 0.000000e+00 : f32
    %6 = vector.broadcast %cst_5 : f32 to vector<512x8xf32>
    %7 = arith.maximumf %5, %6 : vector<512x8xf32>
    %c0_6 = arith.constant 0 : index
    %c0_7 = arith.constant 0 : index
    %8 = vector.load %arg4[%c0_6, %c0_7] : memref<512x8xf32, #tpu.memory_space<vmem>>, vector<512x8xf32>
    tpu.vector_store %arg4[%c0_6, %c0_7], %7 {strides = array<i32>} : memref<512x8xf32, #tpu.memory_space<vmem>>, vector<512x8xf32>,
    %cst_8 = arith.constant dense<0.000000e+00> : vector<8xf32>
    %9 = vector.multi_reduction <add>, %7, %cst_8 [0] : vector<512x8xf32> to vector<8xf32>
    %10 = vector.shape_cast %9 : vector<8xf32> to vector<1x8xf32>
    %11 = vector.shape_cast %10 : vector<1x8xf32> to vector<1x1x8xf32>
    %c0_9 = arith.constant 0 : index
    %c0_10 = arith.constant 0 : index
    %c0_11 = arith.constant 0 : index
    %12 = vector.load %arg5[%c0_9, %c0_10, %c0_11] : memref<1x2x8xf32, #tpu.memory_space<vmem>>, vector<1x1x8xf32>
    tpu.vector_store %arg5[%c0_9, %c0_10, %c0_11], %11 {strides = array<i32>} : memref<1x2x8xf32, #tpu.memory_space<vmem>>, vector<1x1x8xf32>,
    %13 = arith.mulf %7, %7 : vector<512x8xf32>
    %cst_12 = arith.constant dense<0.000000e+00> : vector<8xf32>
    %14 = vector.multi_reduction <add>, %13, %cst_12 [0] : vector<512x8xf32> to vector<8xf32>
    %15 = vector.shape_cast %14 : vector<8xf32> to vector<1x8xf32>
    %16 = vector.shape_cast %15 : vector<1x8xf32> to vector<1x1x8xf32>
    %c0_13 = arith.constant 0 : index
    %c1 = arith.constant 1 : index
    %c0_14 = arith.constant 0 : index
    %17 = vector.load %arg5[%c0_13, %c1, %c0_14] : memref<1x2x8xf32, #tpu.memory_space<vmem>>, vector<1x1x8xf32>
    tpu.vector_store %arg5[%c0_13, %c1, %c0_14], %16 {strides = array<i32>} : memref<1x2x8xf32, #tpu.memory_space<vmem>>, vector<1x1x8xf32>,
    return
  }
  func.func @transform_0(%arg0: i32) -> (i32, i32) {
    %c0_i32 = arith.constant 0 : i32
    %c0_i32_0 = arith.constant 0 : i32
    return %arg0, %c0_i32 : i32, i32
  }
  func.func @transform_1(%arg0: i32) -> (i32, i32) {
    %c0_i32 = arith.constant 0 : i32
    %c0_i32_0 = arith.constant 0 : i32
    %c0_i32_1 = arith.constant 0 : i32
    return %c0_i32, %c0_i32_0 : i32, i32
  }
  func.func @transform_2(%arg0: i32) -> (i32, i32) {
    %c0_i32 = arith.constant 0 : i32
    %c0_i32_0 = arith.constant 0 : i32
    %c0_i32_1 = arith.constant 0 : i32
    return %c0_i32, %c0_i32_0 : i32, i32
  }
  func.func @transform_3(%arg0: i32) -> (i32, i32) {
    %c0_i32 = arith.constant 0 : i32
    %c0_i32_0 = arith.constant 0 : i32
    return %arg0, %c0_i32 : i32, i32
  }
  func.func @transform_4(%arg0: i32) -> (i32, i32, i32) {
    %c0_i32 = arith.constant 0 : i32
    %c0_i32_0 = arith.constant 0 : i32
    %c0_i32_1 = arith.constant 0 : i32
    return %arg0, %c0_i32, %c0_i32_0 : i32, i32, i32
  }
}

module attributes {stable_mosaic.version = 11 : i64} {
  func.func @conv_act_stats_kernel(%arg0: i32, %arg1: memref<512x8xbf16, #tpu.memory_space<vmem>>, %arg2: memref<8x8xbf16, #tpu.memory_space<vmem>>, %arg3: memref<1x8xf32, #tpu.memory_space<vmem>>, %arg4: memref<512x8xf32, #tpu.memory_space<vmem>>, %arg5: memref<1x2x8xf32, #tpu.memory_space<vmem>>) attributes {dimension_semantics = [#tpu.dimension_semantics<parallel>], iteration_bounds = array<i64: 2>, scalar_prefetch = 0 : i64, scratch_operands = 0 : i64, tpu.core_type = #tpu.core_type<tc>, window_params = [{transform_indices = @transform_0, window_bounds = array<i64: 512, 8>}, {pipeline_mode = #tpu.pipeline_mode<synchronous>, transform_indices = @transform_1, window_bounds = array<i64: 8, 8>}, {pipeline_mode = #tpu.pipeline_mode<synchronous>, transform_indices = @transform_2, window_bounds = array<i64: 1, 8>}, {transform_indices = @transform_3, window_bounds = array<i64: 512, 8>}, {transform_indices = @transform_4, window_bounds = array<i64: 1, 2, 8>}]} {
    %c0 = arith.constant 0 : index
    %c0_0 = arith.constant 0 : index
    %0 = vector.load %arg1[%c0, %c0_0] : memref<512x8xbf16, #tpu.memory_space<vmem>>, vector<512x8xbf16>
    %c0_1 = arith.constant 0 : index
    %c0_2 = arith.constant 0 : index
    %1 = vector.load %arg2[%c0_1, %c0_2] : memref<8x8xbf16, #tpu.memory_space<vmem>>, vector<8x8xbf16>
    %cst = arith.constant dense<0.000000e+00> : vector<512x8xf32>
    %2 = tpu.matmul %0, %1, %cst {dimension_numbers = #tpu.dot_dimension_numbers<[1], [0], [0], [1], [0, 0, 1, 1], [], []>} : vector<512x8xbf16>, vector<8x8xbf16>, vector<512x8xf32> -> vector<512x8xf32>
    %c0_3 = arith.constant 0 : index
    %c0_4 = arith.constant 0 : index
    %3 = vector.load %arg3[%c0_3, %c0_4] : memref<1x8xf32, #tpu.memory_space<vmem>>, vector<1x8xf32>
    %4 = vector.broadcast %3 : vector<1x8xf32> to vector<512x8xf32>
    %5 = arith.addf %2, %4 : vector<512x8xf32>
    %cst_5 = arith.constant 0.000000e+00 : f32
    %6 = vector.broadcast %cst_5 : f32 to vector<512x8xf32>
    %7 = arith.maximumf %5, %6 : vector<512x8xf32>
    %c0_6 = arith.constant 0 : index
    %c0_7 = arith.constant 0 : index
    %8 = vector.load %arg4[%c0_6, %c0_7] : memref<512x8xf32, #tpu.memory_space<vmem>>, vector<512x8xf32>
    tpu.vector_store %arg4[%c0_6, %c0_7], %7 {strides = array<i32>} : memref<512x8xf32, #tpu.memory_space<vmem>>, vector<512x8xf32>,
    %cst_8 = arith.constant dense<0.000000e+00> : vector<8xf32>
    %9 = vector.multi_reduction <add>, %7, %cst_8 [0] : vector<512x8xf32> to vector<8xf32>
    %10 = vector.shape_cast %9 : vector<8xf32> to vector<1x8xf32>
    %11 = vector.shape_cast %10 : vector<1x8xf32> to vector<1x1x8xf32>
    %c0_9 = arith.constant 0 : index
    %c0_10 = arith.constant 0 : index
    %c0_11 = arith.constant 0 : index
    %12 = vector.load %arg5[%c0_9, %c0_10, %c0_11] : memref<1x2x8xf32, #tpu.memory_space<vmem>>, vector<1x1x8xf32>
    tpu.vector_store %arg5[%c0_9, %c0_10, %c0_11], %11 {strides = array<i32>} : memref<1x2x8xf32, #tpu.memory_space<vmem>>, vector<1x1x8xf32>,
    %13 = arith.mulf %7, %7 : vector<512x8xf32>
    %cst_12 = arith.constant dense<0.000000e+00> : vector<8xf32>
    %14 = vector.multi_reduction <add>, %13, %cst_12 [0] : vector<512x8xf32> to vector<8xf32>
    %15 = vector.shape_cast %14 : vector<8xf32> to vector<1x8xf32>
    %16 = vector.shape_cast %15 : vector<1x8xf32> to vector<1x1x8xf32>
    %c0_13 = arith.constant 0 : index
    %c1 = arith.constant 1 : index
    %c0_14 = arith.constant 0 : index
    %17 = vector.load %arg5[%c0_13, %c1, %c0_14] : memref<1x2x8xf32, #tpu.memory_space<vmem>>, vector<1x1x8xf32>
    tpu.vector_store %arg5[%c0_13, %c1, %c0_14], %16 {strides = array<i32>} : memref<1x2x8xf32, #tpu.memory_space<vmem>>, vector<1x1x8xf32>,
    return
  }
  func.func @transform_0(%arg0: i32) -> (i32, i32) {
    %c0_i32 = arith.constant 0 : i32
    %c0_i32_0 = arith.constant 0 : i32
    return %arg0, %c0_i32 : i32, i32
  }
  func.func @transform_1(%arg0: i32) -> (i32, i32) {
    %c0_i32 = arith.constant 0 : i32
    %c0_i32_0 = arith.constant 0 : i32
    %c0_i32_1 = arith.constant 0 : i32
    return %c0_i32, %c0_i32_0 : i32, i32
  }
  func.func @transform_2(%arg0: i32) -> (i32, i32) {
    %c0_i32 = arith.constant 0 : i32
    %c0_i32_0 = arith.constant 0 : i32
    %c0_i32_1 = arith.constant 0 : i32
    return %c0_i32, %c0_i32_0 : i32, i32
  }
  func.func @transform_3(%arg0: i32) -> (i32, i32) {
    %c0_i32 = arith.constant 0 : i32
    %c0_i32_0 = arith.constant 0 : i32
    return %arg0, %c0_i32 : i32, i32
  }
  func.func @transform_4(%arg0: i32) -> (i32, i32, i32) {
    %c0_i32 = arith.constant 0 : i32
    %c0_i32_0 = arith.constant 0 : i32
    %c0_i32_1 = arith.constant 0 : i32
    return %arg0, %c0_i32, %c0_i32_0 : i32, i32, i32
  }
}

module attributes {stable_mosaic.version = 11 : i64} {
  func.func @conv_act_stats_kernel(%arg0: i32, %arg1: memref<512x4xbf16, #tpu.memory_space<vmem>>, %arg2: memref<4x8xbf16, #tpu.memory_space<vmem>>, %arg3: memref<1x8xf32, #tpu.memory_space<vmem>>, %arg4: memref<512x8xf32, #tpu.memory_space<vmem>>, %arg5: memref<1x2x8xf32, #tpu.memory_space<vmem>>) attributes {dimension_semantics = [#tpu.dimension_semantics<parallel>], iteration_bounds = array<i64: 2>, scalar_prefetch = 0 : i64, scratch_operands = 0 : i64, tpu.core_type = #tpu.core_type<tc>, window_params = [{transform_indices = @transform_0, window_bounds = array<i64: 512, 4>}, {pipeline_mode = #tpu.pipeline_mode<synchronous>, transform_indices = @transform_1, window_bounds = array<i64: 4, 8>}, {pipeline_mode = #tpu.pipeline_mode<synchronous>, transform_indices = @transform_2, window_bounds = array<i64: 1, 8>}, {transform_indices = @transform_3, window_bounds = array<i64: 512, 8>}, {transform_indices = @transform_4, window_bounds = array<i64: 1, 2, 8>}]} {
    %c0 = arith.constant 0 : index
    %c0_0 = arith.constant 0 : index
    %0 = vector.load %arg1[%c0, %c0_0] : memref<512x4xbf16, #tpu.memory_space<vmem>>, vector<512x4xbf16>
    %c0_1 = arith.constant 0 : index
    %c0_2 = arith.constant 0 : index
    %1 = vector.load %arg2[%c0_1, %c0_2] : memref<4x8xbf16, #tpu.memory_space<vmem>>, vector<4x8xbf16>
    %cst = arith.constant dense<0.000000e+00> : vector<512x8xf32>
    %2 = tpu.matmul %0, %1, %cst {dimension_numbers = #tpu.dot_dimension_numbers<[1], [0], [0], [1], [0, 0, 1, 1], [], []>} : vector<512x4xbf16>, vector<4x8xbf16>, vector<512x8xf32> -> vector<512x8xf32>
    %c0_3 = arith.constant 0 : index
    %c0_4 = arith.constant 0 : index
    %3 = vector.load %arg3[%c0_3, %c0_4] : memref<1x8xf32, #tpu.memory_space<vmem>>, vector<1x8xf32>
    %4 = vector.broadcast %3 : vector<1x8xf32> to vector<512x8xf32>
    %5 = arith.addf %2, %4 : vector<512x8xf32>
    %cst_5 = arith.constant 0.000000e+00 : f32
    %6 = vector.broadcast %cst_5 : f32 to vector<512x8xf32>
    %7 = arith.maximumf %5, %6 : vector<512x8xf32>
    %c0_6 = arith.constant 0 : index
    %c0_7 = arith.constant 0 : index
    %8 = vector.load %arg4[%c0_6, %c0_7] : memref<512x8xf32, #tpu.memory_space<vmem>>, vector<512x8xf32>
    tpu.vector_store %arg4[%c0_6, %c0_7], %7 {strides = array<i32>} : memref<512x8xf32, #tpu.memory_space<vmem>>, vector<512x8xf32>,
    %cst_8 = arith.constant dense<0.000000e+00> : vector<8xf32>
    %9 = vector.multi_reduction <add>, %7, %cst_8 [0] : vector<512x8xf32> to vector<8xf32>
    %10 = vector.shape_cast %9 : vector<8xf32> to vector<1x8xf32>
    %11 = vector.shape_cast %10 : vector<1x8xf32> to vector<1x1x8xf32>
    %c0_9 = arith.constant 0 : index
    %c0_10 = arith.constant 0 : index
    %c0_11 = arith.constant 0 : index
    %12 = vector.load %arg5[%c0_9, %c0_10, %c0_11] : memref<1x2x8xf32, #tpu.memory_space<vmem>>, vector<1x1x8xf32>
    tpu.vector_store %arg5[%c0_9, %c0_10, %c0_11], %11 {strides = array<i32>} : memref<1x2x8xf32, #tpu.memory_space<vmem>>, vector<1x1x8xf32>,
    %13 = arith.mulf %7, %7 : vector<512x8xf32>
    %cst_12 = arith.constant dense<0.000000e+00> : vector<8xf32>
    %14 = vector.multi_reduction <add>, %13, %cst_12 [0] : vector<512x8xf32> to vector<8xf32>
    %15 = vector.shape_cast %14 : vector<8xf32> to vector<1x8xf32>
    %16 = vector.shape_cast %15 : vector<1x8xf32> to vector<1x1x8xf32>
    %c0_13 = arith.constant 0 : index
    %c1 = arith.constant 1 : index
    %c0_14 = arith.constant 0 : index
    %17 = vector.load %arg5[%c0_13, %c1, %c0_14] : memref<1x2x8xf32, #tpu.memory_space<vmem>>, vector<1x1x8xf32>
    tpu.vector_store %arg5[%c0_13, %c1, %c0_14], %16 {strides = array<i32>} : memref<1x2x8xf32, #tpu.memory_space<vmem>>, vector<1x1x8xf32>,
    return
  }
  func.func @transform_0(%arg0: i32) -> (i32, i32) {
    %c0_i32 = arith.constant 0 : i32
    %c0_i32_0 = arith.constant 0 : i32
    return %arg0, %c0_i32 : i32, i32
  }
  func.func @transform_1(%arg0: i32) -> (i32, i32) {
    %c0_i32 = arith.constant 0 : i32
    %c0_i32_0 = arith.constant 0 : i32
    %c0_i32_1 = arith.constant 0 : i32
    return %c0_i32, %c0_i32_0 : i32, i32
  }
  func.func @transform_2(%arg0: i32) -> (i32, i32) {
    %c0_i32 = arith.constant 0 : i32
    %c0_i32_0 = arith.constant 0 : i32
    %c0_i32_1 = arith.constant 0 : i32
    return %c0_i32, %c0_i32_0 : i32, i32
  }
  func.func @transform_3(%arg0: i32) -> (i32, i32) {
    %c0_i32 = arith.constant 0 : i32
    %c0_i32_0 = arith.constant 0 : i32
    return %arg0, %c0_i32 : i32, i32
  }
  func.func @transform_4(%arg0: i32) -> (i32, i32, i32) {
    %c0_i32 = arith.constant 0 : i32
    %c0_i32_0 = arith.constant 0 : i32
    %c0_i32_1 = arith.constant 0 : i32
    return %arg0, %c0_i32, %c0_i32_0 : i32, i32, i32
  }
}

module attributes {stable_mosaic.version = 11 : i64} {
  func.func @bn_apply_kernel(%arg0: i32, %arg1: memref<512x128xf32, #tpu.memory_space<vmem>>, %arg2: memref<1x128xf32, #tpu.memory_space<vmem>>, %arg3: memref<1x128xf32, #tpu.memory_space<vmem>>, %arg4: memref<512x128xbf16, #tpu.memory_space<vmem>>) attributes {dimension_semantics = [#tpu.dimension_semantics<parallel>], iteration_bounds = array<i64: 1>, scalar_prefetch = 0 : i64, scratch_operands = 0 : i64, tpu.core_type = #tpu.core_type<tc>, window_params = [{transform_indices = @transform_0, window_bounds = array<i64: 512, 128>}, {pipeline_mode = #tpu.pipeline_mode<synchronous>, transform_indices = @transform_1, window_bounds = array<i64: 1, 128>}, {pipeline_mode = #tpu.pipeline_mode<synchronous>, transform_indices = @transform_2, window_bounds = array<i64: 1, 128>}, {transform_indices = @transform_3, window_bounds = array<i64: 512, 128>}]} {
    %c0 = arith.constant 0 : index
    %c0_0 = arith.constant 0 : index
    %0 = vector.load %arg1[%c0, %c0_0] : memref<512x128xf32, #tpu.memory_space<vmem>>, vector<512x128xf32>
    %c0_1 = arith.constant 0 : index
    %c0_2 = arith.constant 0 : index
    %1 = vector.load %arg2[%c0_1, %c0_2] : memref<1x128xf32, #tpu.memory_space<vmem>>, vector<1x128xf32>
    %2 = vector.broadcast %1 : vector<1x128xf32> to vector<512x128xf32>
    %3 = arith.mulf %0, %2 : vector<512x128xf32>
    %c0_3 = arith.constant 0 : index
    %c0_4 = arith.constant 0 : index
    %4 = vector.load %arg3[%c0_3, %c0_4] : memref<1x128xf32, #tpu.memory_space<vmem>>, vector<1x128xf32>
    %5 = vector.broadcast %4 : vector<1x128xf32> to vector<512x128xf32>
    %6 = arith.addf %3, %5 : vector<512x128xf32>
    %7 = arith.truncf %6 : vector<512x128xf32> to vector<512x128xbf16>
    %c0_5 = arith.constant 0 : index
    %c0_6 = arith.constant 0 : index
    %8 = vector.load %arg4[%c0_5, %c0_6] : memref<512x128xbf16, #tpu.memory_space<vmem>>, vector<512x128xbf16>
    tpu.vector_store %arg4[%c0_5, %c0_6], %7 {strides = array<i32>} : memref<512x128xbf16, #tpu.memory_space<vmem>>, vector<512x128xbf16>,
    return
  }
  func.func @transform_0(%arg0: i32) -> (i32, i32) {
    %c0_i32 = arith.constant 0 : i32
    %c0_i32_0 = arith.constant 0 : i32
    return %arg0, %c0_i32 : i32, i32
  }
  func.func @transform_1(%arg0: i32) -> (i32, i32) {
    %c0_i32 = arith.constant 0 : i32
    %c0_i32_0 = arith.constant 0 : i32
    %c0_i32_1 = arith.constant 0 : i32
    return %c0_i32, %c0_i32_0 : i32, i32
  }
  func.func @transform_2(%arg0: i32) -> (i32, i32) {
    %c0_i32 = arith.constant 0 : i32
    %c0_i32_0 = arith.constant 0 : i32
    %c0_i32_1 = arith.constant 0 : i32
    return %c0_i32, %c0_i32_0 : i32, i32
  }
  func.func @transform_3(%arg0: i32) -> (i32, i32) {
    %c0_i32 = arith.constant 0 : i32
    %c0_i32_0 = arith.constant 0 : i32
    return %arg0, %c0_i32 : i32, i32
  }
}

module attributes {stable_mosaic.version = 11 : i64} {
  func.func @conv_act_stats_kernel(%arg0: i32, %arg1: memref<512x216xbf16, #tpu.memory_space<vmem>>, %arg2: memref<216x8xbf16, #tpu.memory_space<vmem>>, %arg3: memref<1x8xf32, #tpu.memory_space<vmem>>, %arg4: memref<512x8xf32, #tpu.memory_space<vmem>>, %arg5: memref<1x2x8xf32, #tpu.memory_space<vmem>>) attributes {dimension_semantics = [#tpu.dimension_semantics<parallel>], iteration_bounds = array<i64: 16>, scalar_prefetch = 0 : i64, scratch_operands = 0 : i64, tpu.core_type = #tpu.core_type<tc>, window_params = [{transform_indices = @transform_0, window_bounds = array<i64: 512, 216>}, {pipeline_mode = #tpu.pipeline_mode<synchronous>, transform_indices = @transform_1, window_bounds = array<i64: 216, 8>}, {pipeline_mode = #tpu.pipeline_mode<synchronous>, transform_indices = @transform_2, window_bounds = array<i64: 1, 8>}, {transform_indices = @transform_3, window_bounds = array<i64: 512, 8>}, {transform_indices = @transform_4, window_bounds = array<i64: 1, 2, 8>}]} {
    %c0 = arith.constant 0 : index
    %c0_0 = arith.constant 0 : index
    %0 = vector.load %arg1[%c0, %c0_0] : memref<512x216xbf16, #tpu.memory_space<vmem>>, vector<512x216xbf16>
    %c0_1 = arith.constant 0 : index
    %c0_2 = arith.constant 0 : index
    %1 = vector.load %arg2[%c0_1, %c0_2] : memref<216x8xbf16, #tpu.memory_space<vmem>>, vector<216x8xbf16>
    %cst = arith.constant dense<0.000000e+00> : vector<512x8xf32>
    %2 = tpu.matmul %0, %1, %cst {dimension_numbers = #tpu.dot_dimension_numbers<[1], [0], [0], [1], [0, 0, 1, 1], [], []>} : vector<512x216xbf16>, vector<216x8xbf16>, vector<512x8xf32> -> vector<512x8xf32>
    %c0_3 = arith.constant 0 : index
    %c0_4 = arith.constant 0 : index
    %3 = vector.load %arg3[%c0_3, %c0_4] : memref<1x8xf32, #tpu.memory_space<vmem>>, vector<1x8xf32>
    %4 = vector.broadcast %3 : vector<1x8xf32> to vector<512x8xf32>
    %5 = arith.addf %2, %4 : vector<512x8xf32>
    %cst_5 = arith.constant 0.000000e+00 : f32
    %6 = vector.broadcast %cst_5 : f32 to vector<512x8xf32>
    %7 = arith.maximumf %5, %6 : vector<512x8xf32>
    %c0_6 = arith.constant 0 : index
    %c0_7 = arith.constant 0 : index
    %8 = vector.load %arg4[%c0_6, %c0_7] : memref<512x8xf32, #tpu.memory_space<vmem>>, vector<512x8xf32>
    tpu.vector_store %arg4[%c0_6, %c0_7], %7 {strides = array<i32>} : memref<512x8xf32, #tpu.memory_space<vmem>>, vector<512x8xf32>,
    %cst_8 = arith.constant dense<0.000000e+00> : vector<8xf32>
    %9 = vector.multi_reduction <add>, %7, %cst_8 [0] : vector<512x8xf32> to vector<8xf32>
    %10 = vector.shape_cast %9 : vector<8xf32> to vector<1x8xf32>
    %11 = vector.shape_cast %10 : vector<1x8xf32> to vector<1x1x8xf32>
    %c0_9 = arith.constant 0 : index
    %c0_10 = arith.constant 0 : index
    %c0_11 = arith.constant 0 : index
    %12 = vector.load %arg5[%c0_9, %c0_10, %c0_11] : memref<1x2x8xf32, #tpu.memory_space<vmem>>, vector<1x1x8xf32>
    tpu.vector_store %arg5[%c0_9, %c0_10, %c0_11], %11 {strides = array<i32>} : memref<1x2x8xf32, #tpu.memory_space<vmem>>, vector<1x1x8xf32>,
    %13 = arith.mulf %7, %7 : vector<512x8xf32>
    %cst_12 = arith.constant dense<0.000000e+00> : vector<8xf32>
    %14 = vector.multi_reduction <add>, %13, %cst_12 [0] : vector<512x8xf32> to vector<8xf32>
    %15 = vector.shape_cast %14 : vector<8xf32> to vector<1x8xf32>
    %16 = vector.shape_cast %15 : vector<1x8xf32> to vector<1x1x8xf32>
    %c0_13 = arith.constant 0 : index
    %c1 = arith.constant 1 : index
    %c0_14 = arith.constant 0 : index
    %17 = vector.load %arg5[%c0_13, %c1, %c0_14] : memref<1x2x8xf32, #tpu.memory_space<vmem>>, vector<1x1x8xf32>
    tpu.vector_store %arg5[%c0_13, %c1, %c0_14], %16 {strides = array<i32>} : memref<1x2x8xf32, #tpu.memory_space<vmem>>, vector<1x1x8xf32>,
    return
  }
  func.func @transform_0(%arg0: i32) -> (i32, i32) {
    %c0_i32 = arith.constant 0 : i32
    %c0_i32_0 = arith.constant 0 : i32
    return %arg0, %c0_i32 : i32, i32
  }
  func.func @transform_1(%arg0: i32) -> (i32, i32) {
    %c0_i32 = arith.constant 0 : i32
    %c0_i32_0 = arith.constant 0 : i32
    %c0_i32_1 = arith.constant 0 : i32
    return %c0_i32, %c0_i32_0 : i32, i32
  }
  func.func @transform_2(%arg0: i32) -> (i32, i32) {
    %c0_i32 = arith.constant 0 : i32
    %c0_i32_0 = arith.constant 0 : i32
    %c0_i32_1 = arith.constant 0 : i32
    return %c0_i32, %c0_i32_0 : i32, i32
  }
  func.func @transform_3(%arg0: i32) -> (i32, i32) {
    %c0_i32 = arith.constant 0 : i32
    %c0_i32_0 = arith.constant 0 : i32
    return %arg0, %c0_i32 : i32, i32
  }
  func.func @transform_4(%arg0: i32) -> (i32, i32, i32) {
    %c0_i32 = arith.constant 0 : i32
    %c0_i32_0 = arith.constant 0 : i32
    %c0_i32_1 = arith.constant 0 : i32
    return %arg0, %c0_i32, %c0_i32_0 : i32, i32, i32
  }
}

module attributes {stable_mosaic.version = 11 : i64} {
  func.func @bn_apply_kernel(%arg0: i32, %arg1: memref<512x128xf32, #tpu.memory_space<vmem>>, %arg2: memref<1x128xf32, #tpu.memory_space<vmem>>, %arg3: memref<1x128xf32, #tpu.memory_space<vmem>>, %arg4: memref<512x128xf32, #tpu.memory_space<vmem>>) attributes {dimension_semantics = [#tpu.dimension_semantics<parallel>], iteration_bounds = array<i64: 1>, scalar_prefetch = 0 : i64, scratch_operands = 0 : i64, tpu.core_type = #tpu.core_type<tc>, window_params = [{transform_indices = @transform_0, window_bounds = array<i64: 512, 128>}, {pipeline_mode = #tpu.pipeline_mode<synchronous>, transform_indices = @transform_1, window_bounds = array<i64: 1, 128>}, {pipeline_mode = #tpu.pipeline_mode<synchronous>, transform_indices = @transform_2, window_bounds = array<i64: 1, 128>}, {transform_indices = @transform_3, window_bounds = array<i64: 512, 128>}]} {
    %c0 = arith.constant 0 : index
    %c0_0 = arith.constant 0 : index
    %0 = vector.load %arg1[%c0, %c0_0] : memref<512x128xf32, #tpu.memory_space<vmem>>, vector<512x128xf32>
    %c0_1 = arith.constant 0 : index
    %c0_2 = arith.constant 0 : index
    %1 = vector.load %arg2[%c0_1, %c0_2] : memref<1x128xf32, #tpu.memory_space<vmem>>, vector<1x128xf32>
    %2 = vector.broadcast %1 : vector<1x128xf32> to vector<512x128xf32>
    %3 = arith.mulf %0, %2 : vector<512x128xf32>
    %c0_3 = arith.constant 0 : index
    %c0_4 = arith.constant 0 : index
    %4 = vector.load %arg3[%c0_3, %c0_4] : memref<1x128xf32, #tpu.memory_space<vmem>>, vector<1x128xf32>
    %5 = vector.broadcast %4 : vector<1x128xf32> to vector<512x128xf32>
    %6 = arith.addf %3, %5 : vector<512x128xf32>
    %c0_5 = arith.constant 0 : index
    %c0_6 = arith.constant 0 : index
    %7 = vector.load %arg4[%c0_5, %c0_6] : memref<512x128xf32, #tpu.memory_space<vmem>>, vector<512x128xf32>
    tpu.vector_store %arg4[%c0_5, %c0_6], %6 {strides = array<i32>} : memref<512x128xf32, #tpu.memory_space<vmem>>, vector<512x128xf32>,
    return
  }
  func.func @transform_0(%arg0: i32) -> (i32, i32) {
    %c0_i32 = arith.constant 0 : i32
    %c0_i32_0 = arith.constant 0 : i32
    return %arg0, %c0_i32 : i32, i32
  }
  func.func @transform_1(%arg0: i32) -> (i32, i32) {
    %c0_i32 = arith.constant 0 : i32
    %c0_i32_0 = arith.constant 0 : i32
    %c0_i32_1 = arith.constant 0 : i32
    return %c0_i32, %c0_i32_0 : i32, i32
  }
  func.func @transform_2(%arg0: i32) -> (i32, i32) {
    %c0_i32 = arith.constant 0 : i32
    %c0_i32_0 = arith.constant 0 : i32
    %c0_i32_1 = arith.constant 0 : i32
    return %c0_i32, %c0_i32_0 : i32, i32
  }
  func.func @transform_3(%arg0: i32) -> (i32, i32) {
    %c0_i32 = arith.constant 0 : i32
    %c0_i32_0 = arith.constant 0 : i32
    return %arg0, %c0_i32 : i32, i32
  }
}

</mosaic_0001>

<llo_original>
// kernel: conv_block_up_forward.16
$region0: #{conv_block_up_forward.16}
  #allocation0 [shape = 'u32[]', space=smem, size = 0x4, offset = 0x4, fixed_abs, tag = 'smem constant byte address 0x4 - core index']
  #allocation1 [shape = 'u32[72,128]{1,0:T(1,128)}', space=vmem, size = 0x9000, scoped, tag = 'internal scratch']
  %s0 = inlined_call_operand.vmem [shape: bf16[1024,16], index: 0, kind: input, shape index: {}]
  %s1 = inlined_call_operand.vmem [shape: bf16[16,8], index: 1, kind: input, shape index: {}]
  %s2 = inlined_call_operand.vmem [shape: f32[1,8], index: 2, kind: input, shape index: {}]
  %s3 = inlined_call_operand.vmem [shape: f32[1024,8], index: 3, kind: output, shape index: {0}]
  %s4 = inlined_call_operand.vmem [shape: f32[2,2,8], index: 4, kind: output, shape index: {1}]
  %5 = xla_tuple %s3, %s4
  %s6 = sld [smem:[#allocation0]]
  $region53: #{conv_block_up_forward.16} parent=0
    _
  %s8 = ssub.s32 1, %s6
  %s9 = scalar_select 0, %s8, %s6
  loop: start=0, step=1, limit=4
  $region2: #{conv_block_up_forward.16} parent=0 // loop_pre_header
    _
  $region3: #{conv_block_up_forward.16} parent=0 // loop_header
    %s11 = sphi 0, %s15
    %p12 = scmp.ge.s32.totalorder %s11, 4
    %s21 = sphi 0, %s23
    %s24 = sphi 0, %s21
    %s25 = sphi 0, %s24
    %s41 = sphi 0, %s25
    %s45 = sphi 0, %s45
    %s47 = sphi 0, %s45
    %s48 = sphi 0, %s47
    %s62 = sphi 0, %s48
    %s66 = sphi 0, %s66
    %s68 = sphi 0, %s66
    %s69 = sphi 0, %s68
    %s83 = sphi 0, %s69
    %s89 = sphi 0, %s91
    %s92 = sphi 0, %s89
    %s93 = sphi 0, %s92
    %s109 = sphi 0, %s93
    %s115 = sphi 0, %s117
    %s118 = sphi 0, %s115
    %s119 = sphi 0, %s118
    %s135 = sphi 0, %s119
  $region4: #{conv_block_up_forward.16} parent=0 // loop_header_branch
    %14 = sbr.rel (%p12) target = $region8
  $region5: #{conv_block_up_forward.16} parent=0 // loop_body
    %s16 = ssub.s32 %s11, 1
    %s17 = ssub.s32 %s11, 2
    %s18 = sadd.s32 %s11, 1
    %s19 = ssub.s32 %s11, %s18
    %p20 = scmp.eq.s32.totalorder %s19, 0
    %s22 = sadd.s32 %s21, 1
    %s23 = scalar_select %p20, %s21, %s22
    %p26 = pneg %p20
    %p27 = scmp.eq.s32.totalorder %s11, 1
    %p28 = por %p26, %p27
    %p29 = scmp.ne.s32.totalorder %s21, %s24
    %p30 = scmp.eq.s32.totalorder %s11, 0
    %p31 = por %p29, %p30
    %p32 = scmp.ne.s32.totalorder %s21, %s24
    %p33 = scmp.eq.s32.totalorder %s16, 1
    %p34 = por %p32, %p33
    %p35 = scmp.ne.s32.totalorder %s24, %s25
    %p36 = scmp.eq.s32.totalorder %s16, 0
    %p37 = por %p35, %p36
    %p38 = scmp.ne.s32.totalorder %s24, %s25
    %p39 = scmp.eq.s32.totalorder %s17, 1
    %p40 = por %p38, %p39
    %p42 = scmp.ne.s32.totalorder %s25, %s41
    %p43 = scmp.eq.s32.totalorder %s17, 0
    %p44 = por %p42, %p43
    %s46 = sadd.s32 %s45, 1
    %p49 = scmp.eq.s32.totalorder %s11, 1
    %p50 = scmp.ne.s32.totalorder %s45, %s47
    %p51 = scmp.eq.s32.totalorder %s11, 0
    %p52 = por %p50, %p51
    %p53 = scmp.ne.s32.totalorder %s45, %s47
    %p54 = scmp.eq.s32.totalorder %s16, 1
    %p55 = por %p53, %p54
    %p56 = scmp.ne.s32.totalorder %s47, %s48
    %p57 = scmp.eq.s32.totalorder %s16, 0
    %p58 = por %p56, %p57
    %p59 = scmp.ne.s32.totalorder %s47, %s48
    %p60 = scmp.eq.s32.totalorder %s17, 1
    %p61 = por %p59, %p60
    %p63 = scmp.ne.s32.totalorder %s48, %s62
    %p64 = scmp.eq.s32.totalorder %s17, 0
    %p65 = por %p63, %p64
    %s67 = sadd.s32 %s66, 1
    %p70 = scmp.eq.s32.totalorder %s11, 1
    %p71 = scmp.ne.s32.totalorder %s66, %s68
    %p72 = scmp.eq.s32.totalorder %s11, 0
    %p73 = por %p71, %p72
    %p74 = scmp.ne.s32.totalorder %s66, %s68
    %p75 = scmp.eq.s32.totalorder %s16, 1
    %p76 = por %p74, %p75
    %p77 = scmp.ne.s32.totalorder %s68, %s69
    %p78 = scmp.eq.s32.totalorder %s16, 0
    %p79 = por %p77, %p78
    %p80 = scmp.ne.s32.totalorder %s68, %s69
    %p81 = scmp.eq.s32.totalorder %s17, 1
    %p82 = por %p80, %p81
    %p84 = scmp.ne.s32.totalorder %s69, %s83
    %p85 = scmp.eq.s32.totalorder %s17, 0
    %p86 = por %p84, %p85
    %s87 = ssub.s32 %s11, %s18
    %p88 = scmp.eq.s32.totalorder %s87, 0
    %s90 = sadd.s32 %s89, 1
    %s91 = scalar_select %p88, %s89, %s90
    %p94 = pneg %p88
    %p95 = scmp.eq.s32.totalorder %s11, 1
    %p96 = por %p94, %p95
    %p97 = scmp.ne.s32.totalorder %s89, %s92
    %p98 = scmp.eq.s32.totalorder %s11, 0
    %p99 = por %p97, %p98
    %p100 = scmp.ne.s32.totalorder %s89, %s92
    %p101 = scmp.eq.s32.totalorder %s16, 1
    %p102 = por %p100, %p101
    %p103 = scmp.ne.s32.totalorder %s92, %s93
    %p104 = scmp.eq.s32.totalorder %s16, 0
    %p105 = por %p103, %p104
    %p106 = scmp.ne.s32.totalorder %s92, %s93
    %p107 = scmp.eq.s32.totalorder %s17, 1
    %p108 = por %p106, %p107
    %p110 = scmp.ne.s32.totalorder %s93, %s109
    %p111 = scmp.eq.s32.totalorder %s17, 0
    %p112 = por %p110, %p111
    %s113 = ssub.s32 %s11, %s18
    %p114 = scmp.eq.s32.totalorder %s113, 0
    %s116 = sadd.s32 %s115, 1
    %s117 = scalar_select %p114, %s115, %s116
    %p120 = pneg %p114
    %p121 = scmp.eq.s32.totalorder %s11, 1
    %p122 = por %p120, %p121
    %p123 = scmp.ne.s32.totalorder %s115, %s118
    %p124 = scmp.eq.s32.totalorder %s11, 0
    %p125 = por %p123, %p124
    %p126 = scmp.ne.s32.totalorder %s115, %s118
    %p127 = scmp.eq.s32.totalorder %s16, 1
    %p128 = por %p126, %p127
    %p129 = scmp.ne.s32.totalorder %s118, %s119
    %p130 = scmp.eq.s32.totalorder %s16, 0
    %p131 = por %p129, %p130
    %p132 = scmp.ne.s32.totalorder %s118, %s119
    %p133 = scmp.eq.s32.totalorder %s17, 1
    %p134 = por %p132, %p133
    %p136 = scmp.ne.s32.totalorder %s119, %s135
    %p137 = scmp.eq.s32.totalorder %s17, 0
    %p138 = por %p136, %p137
    %p139 = scmp.le.s32.totalorder 1, %s11
    %p140 = scmp.lt.s32.totalorder %s11, 3
    %p141 = pnand %p139, %p140
    %p142 = pneg %p141
    // Predicated region
    $region9: #{conv_block_up_forward.16} parent=5 // pred_check
      _
    $region10: #{conv_block_up_forward.16} parent=5 // pred_check_branch
      %144 = sbr.rel (%p141) target = $region12
    $region11: #{conv_block_up_forward.16} parent=5 // pred_region
      %s145 = ssub.s32 %s11, 1
      // Predicated region
      $region13: #{conv_block_up_forward.16} parent=11 // pred_check
        %p146 = pneg %p58
      $region14: #{conv_block_up_forward.16} parent=11 // pred_check_branch
        %148 = sbr.rel (%p146) target = $region16
      $region15: #{conv_block_up_forward.16} parent=11 // pred_region
        _
      $region16: #{conv_block_up_forward.16} parent=11 // pred_fallthru
        _
      // Predicated region
      $region17: #{conv_block_up_forward.16} parent=11 // pred_check
        %p149 = pneg %p79
      $region18: #{conv_block_up_forward.16} parent=11 // pred_check_branch
        %151 = sbr.rel (%p149) target = $region20
      $region19: #{conv_block_up_forward.16} parent=11 // pred_region
        _
      $region20: #{conv_block_up_forward.16} parent=11 // pred_fallthru
        _
    $region12: #{conv_block_up_forward.16} parent=5 // pred_fallthru
      _
    %p152 = scmp.lt.s32.totalorder %s11, 2
    // Predicated region
    $region21: #{conv_block_up_forward.16} parent=5 // pred_check
      %p153 = pneg %p152
    $region22: #{conv_block_up_forward.16} parent=5 // pred_check_branch
      %155 = sbr.rel (%p153) target = $region24
    $region23: #{conv_block_up_forward.16} parent=5 // pred_region
      // Predicated region
      $region25: #{conv_block_up_forward.16} parent=23 // pred_check
        %p156 = pneg %p31
      $region26: #{conv_block_up_forward.16} parent=23 // pred_check_branch
        %158 = sbr.rel (%p156) target = $region28
      $region27: #{conv_block_up_forward.16} parent=23 // pred_region
        %s159 = smul.u32 64, %s11
        %p160 = scmp.lt.s32.totalorder %s159, 127
        %s161 = scalar_select %p160, %s159, 127
        %s162 = smul.addr %s161, 4
        %s163 = scalar_lea.vmem %s0, %s162
        %s164 = smul.u32 64, %s11
      $region28: #{conv_block_up_forward.16} parent=23 // pred_fallthru
        _
    $region24: #{conv_block_up_forward.16} parent=5 // pred_fallthru
      _
    %p165 = scmp.le.s32.totalorder 1, %s11
    %p166 = scmp.lt.s32.totalorder %s11, 3
    %p167 = pnand %p165, %p166
    %p168 = pneg %p167
    // Predicated region
    $region29: #{conv_block_up_forward.16} parent=5 // pred_check
      _
    $region30: #{conv_block_up_forward.16} parent=5 // pred_check_branch
      %170 = sbr.rel (%p167) target = $region32
    $region31: #{conv_block_up_forward.16} parent=5 // pred_region
      %s171 = ssub.s32 %s11, 1
      %s172 = smul.u32 64, %s16
      %p173 = scmp.lt.s32.totalorder %s172, 127
      %s174 = scalar_select %p173, %s172, 127
      %s175 = smul.addr %s174, 4
      %s176 = scalar_lea.vmem %s0, %s175
      %p177 = pneg %p37
      %p178 = pneg %p34
      %p179 = pneg %p58
      %p180 = pneg %p55
      %p181 = pneg %p79
      %p182 = pneg %p76
      %p183 = pneg %p105
      %p184 = pneg %p102
      %s185 = smul.u32 64, %s16
      %p186 = scmp.lt.s32.totalorder %s185, 127
      %s187 = scalar_select %p186, %s185, 127
      %s188 = smul.addr %s187, 8
      %s189 = scalar_lea.vmem %s3, %s188
      %p190 = pneg %p131
      %p191 = pneg %p128
      %p192 = scmp.lt.s32.totalorder %s16, 1
      %s193 = scalar_select %p192, %s16, 1
      %s194 = smul.addr %s193, 2
      %s195 = scalar_lea.vmem %s4, %s194
      %s196 = smul.u32 64, %s16
      %p197 = scmp.lt.s32.totalorder %s196, 127
      %s198 = scalar_select %p197, %s196, 127
      %s199 = smul.addr %s198, 4
      %s200 = scalar_lea.vmem %s0, %s199
      %s201 = smul.u32 64, %s16
      %s202 = smul.u32 64, %s16
      %p203 = scmp.lt.s32.totalorder %s202, 127
      %s204 = scalar_select %p203, %s202, 127
      %s205 = smul.addr %s204, 8
      %s206 = scalar_lea.vmem %s3, %s205
      %s207 = smul.u32 64, %s16
      %p208 = scmp.lt.s32.totalorder %s16, 1
      %s209 = scalar_select %p208, %s16, 1
      %s210 = smul.addr %s209, 2
      %s211 = scalar_lea.vmem %s4, %s210
      %v213 = vld [vmem:[%s200] sm:$0xf]
      %v214 = vld [vmem:[%s200 + $0x4] sm:$0xf]
      %v215 = vld [vmem:[%s200 + $0x8] sm:$0xf]
      %v216 = vld [vmem:[%s200 + $0xc] sm:$0xf]
      %v217 = vld [vmem:[%s200 + $0x10] sm:$0xf]
      %v218 = vld [vmem:[%s200 + $0x14] sm:$0xf]
      %v219 = vld [vmem:[%s200 + $0x18] sm:$0xf]
      %v220 = vld [vmem:[%s200 + $0x1c] sm:$0xf]
      %v221 = vld [vmem:[%s200 + $0x20] sm:$0xf]
      %v222 = vld [vmem:[%s200 + $0x24] sm:$0xf]
      %v223 = vld [vmem:[%s200 + $0x28] sm:$0xf]
      %v224 = vld [vmem:[%s200 + $0x2c] sm:$0xf]
      %v225 = vld [vmem:[%s200 + $0x30] sm:$0xf]
      %v226 = vld [vmem:[%s200 + $0x34] sm:$0xf]
      %v227 = vld [vmem:[%s200 + $0x38] sm:$0xf]
      %v228 = vld [vmem:[%s200 + $0x3c] sm:$0xf]
      %v229 = vld [vmem:[%s200 + $0x40] sm:$0xf]
      %v230 = vld [vmem:[%s200 + $0x44] sm:$0xf]
      %v231 = vld [vmem:[%s200 + $0x48] sm:$0xf]
      %v232 = vld [vmem:[%s200 + $0x4c] sm:$0xf]
      %v233 = vld [vmem:[%s200 + $0x50] sm:$0xf]
      %v234 = vld [vmem:[%s200 + $0x54] sm:$0xf]
      %v235 = vld [vmem:[%s200 + $0x58] sm:$0xf]
      %v236 = vld [vmem:[%s200 + $0x5c] sm:$0xf]
      %v237 = vld [vmem:[%s200 + $0x60] sm:$0xf]
      %v238 = vld [vmem:[%s200 + $0x64] sm:$0xf]
      %v239 = vld [vmem:[%s200 + $0x68] sm:$0xf]
      %v240 = vld [vmem:[%s200 + $0x6c] sm:$0xf]
      %v241 = vld [vmem:[%s200 + $0x70] sm:$0xf]
      %v242 = vld [vmem:[%s200 + $0x74] sm:$0xf]
      %v243 = vld [vmem:[%s200 + $0x78] sm:$0xf]
      %v244 = vld [vmem:[%s200 + $0x7c] sm:$0xf]
      %v245 = vld [vmem:[%s200 + $0x80] sm:$0xf]
      %v246 = vld [vmem:[%s200 + $0x84] sm:$0xf]
      %v247 = vld [vmem:[%s200 + $0x88] sm:$0xf]
      %v248 = vld [vmem:[%s200 + $0x8c] sm:$0xf]
      %v249 = vld [vmem:[%s200 + $0x90] sm:$0xf]
      %v250 = vld [vmem:[%s200 + $0x94] sm:$0xf]
      %v251 = vld [vmem:[%s200 + $0x98] sm:$0xf]
      %v252 = vld [vmem:[%s200 + $0x9c] sm:$0xf]
      %v253 = vld [vmem:[%s200 + $0xa0] sm:$0xf]
      %v254 = vld [vmem:[%s200 + $0xa4] sm:$0xf]
      %v255 = vld [vmem:[%s200 + $0xa8] sm:$0xf]
      %v256 = vld [vmem:[%s200 + $0xac] sm:$0xf]
      %v257 = vld [vmem:[%s200 + $0xb0] sm:$0xf]
      %v258 = vld [vmem:[%s200 + $0xb4] sm:$0xf]
      %v259 = vld [vmem:[%s200 + $0xb8] sm:$0xf]
      %v260 = vld [vmem:[%s200 + $0xbc] sm:$0xf]
      %v261 = vld [vmem:[%s200 + $0xc0] sm:$0xf]
      %v262 = vld [vmem:[%s200 + $0xc4] sm:$0xf]
      %v263 = vld [vmem:[%s200 + $0xc8] sm:$0xf]
      %v264 = vld [vmem:[%s200 + $0xcc] sm:$0xf]
      %v265 = vld [vmem:[%s200 + $0xd0] sm:$0xf]
      %v266 = vld [vmem:[%s200 + $0xd4] sm:$0xf]
      %v267 = vld [vmem:[%s200 + $0xd8] sm:$0xf]
      %v268 = vld [vmem:[%s200 + $0xdc] sm:$0xf]
      %v269 = vld [vmem:[%s200 + $0xe0] sm:$0xf]
      %v270 = vld [vmem:[%s200 + $0xe4] sm:$0xf]
      %v271 = vld [vmem:[%s200 + $0xe8] sm:$0xf]
      %v272 = vld [vmem:[%s200 + $0xec] sm:$0xf]
      %v273 = vld [vmem:[%s200 + $0xf0] sm:$0xf]
      %v274 = vld [vmem:[%s200 + $0xf4] sm:$0xf]
      %v275 = vld [vmem:[%s200 + $0xf8] sm:$0xf]
      %v276 = vld [vmem:[%s200 + $0xfc] sm:$0xf]
      %v277 = vld [vmem:[%s1] sm:$0xf]
      %v278 = vld [vmem:[%s1 + $0x4] sm:$0xf]
      %v279 = vld [vmem:[%s2] sm:$0x1]
      %v281 = vperm.slane %v279, 0
      %v347 = vunpack.c.l.b16 %v213
      %v348 = vunpack.c.l.b16 %v214
      %v349 = vunpack.c.l.b16 %v215
      %v350 = vunpack.c.l.b16 %v216
      %v351 = vunpack.c.l.b16 %v217
      %v352 = vunpack.c.l.b16 %v218
      %v353 = vunpack.c.l.b16 %v219
      %v354 = vunpack.c.l.b16 %v220
      %v355 = vunpack.c.l.b16 %v221
      %v356 = vunpack.c.l.b16 %v222
      %v357 = vunpack.c.l.b16 %v223
      %v358 = vunpack.c.l.b16 %v224
      %v359 = vunpack.c.l.b16 %v225
      %v360 = vunpack.c.l.b16 %v226
      %v361 = vunpack.c.l.b16 %v227
      %v362 = vunpack.c.l.b16 %v228
      %v363 = vunpack.c.l.b16 %v229
      %v364 = vunpack.c.l.b16 %v230
      %v365 = vunpack.c.l.b16 %v231
      %v366 = vunpack.c.l.b16 %v232
      %v367 = vunpack.c.l.b16 %v233
      %v368 = vunpack.c.l.b16 %v234
      %v369 = vunpack.c.l.b16 %v235
      %v370 = vunpack.c.l.b16 %v236
      %v371 = vunpack.c.l.b16 %v237
      %v372 = vunpack.c.l.b16 %v238
      %v373 = vunpack.c.l.b16 %v239
      %v374 = vunpack.c.l.b16 %v240
      %v375 = vunpack.c.l.b16 %v241
      %v376 = vunpack.c.l.b16 %v242
      %v377 = vunpack.c.l.b16 %v243
      %v378 = vunpack.c.l.b16 %v244
      %v379 = vunpack.c.l.b16 %v245
      %v380 = vunpack.c.l.b16 %v246
      %v381 = vunpack.c.l.b16 %v247
      %v382 = vunpack.c.l.b16 %v248
      %v383 = vunpack.c.l.b16 %v249
      %v384 = vunpack.c.l.b16 %v250
      %v385 = vunpack.c.l.b16 %v251
      %v386 = vunpack.c.l.b16 %v252
      %v387 = vunpack.c.l.b16 %v253
      %v388 = vunpack.c.l.b16 %v254
      %v389 = vunpack.c.l.b16 %v255
      %v390 = vunpack.c.l.b16 %v256
      %v391 = vunpack.c.l.b16 %v257
      %v392 = vunpack.c.l.b16 %v258
      %v393 = vunpack.c.l.b16 %v259
      %v394 = vunpack.c.l.b16 %v260
      %v395 = vunpack.c.l.b16 %v261
      %v396 = vunpack.c.l.b16 %v262
      %v397 = vunpack.c.l.b16 %v263
      %v398 = vunpack.c.l.b16 %v264
      %v399 = vunpack.c.l.b16 %v265
      %v400 = vunpack.c.l.b16 %v266
      %v401 = vunpack.c.l.b16 %v267
      %v402 = vunpack.c.l.b16 %v268
      %v403 = vunpack.c.l.b16 %v269
      %v404 = vunpack.c.l.b16 %v270
      %v405 = vunpack.c.l.b16 %v271
      %v406 = vunpack.c.l.b16 %v272
      %v407 = vunpack.c.l.b16 %v273
      %v408 = vunpack.c.l.b16 %v274
      %v409 = vunpack.c.l.b16 %v275
      %v410 = vunpack.c.l.b16 %v276
      %v411 = vpack.c.b16 %v348, %v347
      %v412 = vpack.c.b16 %v350, %v349
      %v413 = vpack.c.b16 %v352, %v351
      %v414 = vpack.c.b16 %v354, %v353
      %v415 = vpack.c.b16 %v356, %v355
      %v416 = vpack.c.b16 %v358, %v357
      %v417 = vpack.c.b16 %v360, %v359
      %v418 = vpack.c.b16 %v362, %v361
      %v419 = vpack.c.b16 %v364, %v363
      %v420 = vpack.c.b16 %v366, %v365
      %v421 = vpack.c.b16 %v368, %v367
      %v422 = vpack.c.b16 %v370, %v369
      %v423 = vpack.c.b16 %v372, %v371
      %v424 = vpack.c.b16 %v374, %v373
      %v425 = vpack.c.b16 %v376, %v375
      %v426 = vpack.c.b16 %v378, %v377
      %v427 = vpack.c.b16 %v380, %v379
      %v428 = vpack.c.b16 %v382, %v381
      %v429 = vpack.c.b16 %v384, %v383
      %v430 = vpack.c.b16 %v386, %v385
      %v431 = vpack.c.b16 %v388, %v387
      %v432 = vpack.c.b16 %v390, %v389
      %v433 = vpack.c.b16 %v392, %v391
      %v434 = vpack.c.b16 %v394, %v393
      %v435 = vpack.c.b16 %v396, %v395
      %v436 = vpack.c.b16 %v398, %v397
      %v437 = vpack.c.b16 %v400, %v399
      %v438 = vpack.c.b16 %v402, %v401
      %v439 = vpack.c.b16 %v404, %v403
      %v440 = vpack.c.b16 %v406, %v405
      %v441 = vpack.c.b16 %v408, %v407
      %v442 = vpack.c.b16 %v410, %v409
      %v445 = vunpack.c.l.b16 %v277
      %v446 = vunpack.c.l.b16 %v278
      %v447 = vpack.c.b16 %v446, %v445
      %vm449 = vcmask 130048
      %v451 = vsel %vm449, %v411, 0
      %v454 = vsel %vm449, %v412, 0
      %v457 = vsel %vm449, %v413, 0
      %v460 = vsel %vm449, %v414, 0
      %v463 = vsel %vm449, %v415, 0
      %v466 = vsel %vm449, %v416, 0
      %v469 = vsel %vm449, %v417, 0
      %v472 = vsel %vm449, %v418, 0
      %v475 = vsel %vm449, %v419, 0
      %v478 = vsel %vm449, %v420, 0
      %v481 = vsel %vm449, %v421, 0
      %v484 = vsel %vm449, %v422, 0
      %v487 = vsel %vm449, %v423, 0
      %v490 = vsel %vm449, %v424, 0
      %v493 = vsel %vm449, %v425, 0
      %v496 = vsel %vm449, %v426, 0
      %v499 = vsel %vm449, %v427, 0
      %v502 = vsel %vm449, %v428, 0
      %v505 = vsel %vm449, %v429, 0
      %v508 = vsel %vm449, %v430, 0
      %v511 = vsel %vm449, %v431, 0
      %v514 = vsel %vm449, %v432, 0
      %v517 = vsel %vm449, %v433, 0
      %v520 = vsel %vm449, %v434, 0
      %v523 = vsel %vm449, %v435, 0
      %v526 = vsel %vm449, %v436, 0
      %v529 = vsel %vm449, %v437, 0
      %v532 = vsel %vm449, %v438, 0
      %v535 = vsel %vm449, %v439, 0
      %v538 = vsel %vm449, %v440, 0
      %v541 = vsel %vm449, %v441, 0
      %v544 = vsel %vm449, %v442, 0
      %546 = vmatpush.bf16.msra.mxu0 0
      %547 = vmatpush.bf16.msra.mxu0 0
      %548 = vmatpush.bf16.msra.mxu0 0
      %549 = vmatpush.bf16.msra.mxu0 0
      %550 = vmatpush.bf16.msra.mxu0 0
      %551 = vmatpush.bf16.msra.mxu0 0
      %552 = vmatpush.bf16.msra.mxu0 0
      %553 = vmatpush.bf16.msra.mxu0 %v447
      %554 = vmatmul.bf16.gmra.mxu0 %v451
      %v555 = vpop.f32.mrf.mxu0
      %v556 = vadd.f32 %v281, %v555
      %v557 = vpop.f32.mrf.mxu0
      %v558 = vadd.f32 %v281, %v557
      %559 = vmatmul.bf16.gmra.mxu0 %v454
      %v560 = vpop.f32.mrf.mxu0
      %v561 = vadd.f32 %v281, %v560
      %v562 = vpop.f32.mrf.mxu0
      %v563 = vadd.f32 %v281, %v562
      %564 = vmatmul.bf16.gmra.mxu0 %v457
      %v565 = vpop.f32.mrf.mxu0
      %v566 = vadd.f32 %v281, %v565
      %v567 = vpop.f32.mrf.mxu0
      %v568 = vadd.f32 %v281, %v567
      %569 = vmatmul.bf16.gmra.mxu0 %v460
      %v570 = vpop.f32.mrf.mxu0
      %v571 = vadd.f32 %v281, %v570
      %v572 = vpop.f32.mrf.mxu0
      %v573 = vadd.f32 %v281, %v572
      %574 = vmatmul.bf16.gmra.mxu0 %v463
      %v575 = vpop.f32.mrf.mxu0
      %v576 = vadd.f32 %v281, %v575
      %v577 = vpop.f32.mrf.mxu0
      %v578 = vadd.f32 %v281, %v577
      %579 = vmatmul.bf16.gmra.mxu0 %v466
      %v580 = vpop.f32.mrf.mxu0
      %v581 = vadd.f32 %v281, %v580
      %v582 = vpop.f32.mrf.mxu0
      %v583 = vadd.f32 %v281, %v582
      %584 = vmatmul.bf16.gmra.mxu0 %v469
      %v585 = vpop.f32.mrf.mxu0
      %v586 = vadd.f32 %v281, %v585
      %v587 = vpop.f32.mrf.mxu0
      %v588 = vadd.f32 %v281, %v587
      %589 = vmatmul.bf16.gmra.mxu0 %v472
      %v590 = vpop.f32.mrf.mxu0
      %v591 = vadd.f32 %v281, %v590
      %v592 = vpop.f32.mrf.mxu0
      %v593 = vadd.f32 %v281, %v592
      %594 = vmatmul.bf16.gmra.mxu0 %v475
      %v595 = vpop.f32.mrf.mxu0
      %v596 = vadd.f32 %v281, %v595
      %v597 = vpop.f32.mrf.mxu0
      %v598 = vadd.f32 %v281, %v597
      %599 = vmatmul.bf16.gmra.mxu0 %v478
      %v600 = vpop.f32.mrf.mxu0
      %v601 = vadd.f32 %v281, %v600
      %v602 = vpop.f32.mrf.mxu0
      %v603 = vadd.f32 %v281, %v602
      %604 = vmatmul.bf16.gmra.mxu0 %v481
      %v605 = vpop.f32.mrf.mxu0
      %v606 = vadd.f32 %v281, %v605
      %v607 = vpop.f32.mrf.mxu0
      %v608 = vadd.f32 %v281, %v607
      %609 = vmatmul.bf16.gmra.mxu0 %v484
      %v610 = vpop.f32.mrf.mxu0
      %v611 = vadd.f32 %v281, %v610
      %v612 = vpop.f32.mrf.mxu0
      %v613 = vadd.f32 %v281, %v612
      %614 = vmatmul.bf16.gmra.mxu0 %v487
      %v615 = vpop.f32.mrf.mxu0
      %v616 = vadd.f32 %v281, %v615
      %v617 = vpop.f32.mrf.mxu0
      %v618 = vadd.f32 %v281, %v617
      %619 = vmatmul.bf16.gmra.mxu0 %v490
      %v620 = vpop.f32.mrf.mxu0
      %v621 = vadd.f32 %v281, %v620
      %v622 = vpop.f32.mrf.mxu0
      %v623 = vadd.f32 %v281, %v622
      %624 = vmatmul.bf16.gmra.mxu0 %v493
      %v625 = vpop.f32.mrf.mxu0
      %v626 = vadd.f32 %v281, %v625
      %v627 = vpop.f32.mrf.mxu0
      %v628 = vadd.f32 %v281, %v627
      %629 = vmatmul.bf16.gmra.mxu0 %v496
      %v630 = vpop.f32.mrf.mxu0
      %v631 = vadd.f32 %v281, %v630
      %v632 = vpop.f32.mrf.mxu0
      %v633 = vadd.f32 %v281, %v632
      %634 = vmatmul.bf16.gmra.mxu0 %v499
      %v635 = vpop.f32.mrf.mxu0
      %v636 = vadd.f32 %v281, %v635
      %v637 = vpop.f32.mrf.mxu0
      %v638 = vadd.f32 %v281, %v637
      %639 = vmatmul.bf16.gmra.mxu0 %v502
      %v640 = vpop.f32.mrf.mxu0
      %v641 = vadd.f32 %v281, %v640
      %v642 = vpop.f32.mrf.mxu0
      %v643 = vadd.f32 %v281, %v642
      %644 = vmatmul.bf16.gmra.mxu0 %v505
      %v645 = vpop.f32.mrf.mxu0
      %v646 = vadd.f32 %v281, %v645
      %v647 = vpop.f32.mrf.mxu0
      %v648 = vadd.f32 %v281, %v647
      %649 = vmatmul.bf16.gmra.mxu0 %v508
      %v650 = vpop.f32.mrf.mxu0
      %v651 = vadd.f32 %v281, %v650
      %v652 = vpop.f32.mrf.mxu0
      %v653 = vadd.f32 %v281, %v652
      %654 = vmatmul.bf16.gmra.mxu0 %v511
      %v655 = vpop.f32.mrf.mxu0
      %v656 = vadd.f32 %v281, %v655
      %v657 = vpop.f32.mrf.mxu0
      %v658 = vadd.f32 %v281, %v657
      %659 = vmatmul.bf16.gmra.mxu0 %v514
      %v660 = vpop.f32.mrf.mxu0
      %v661 = vadd.f32 %v281, %v660
      %v662 = vpop.f32.mrf.mxu0
      %v663 = vadd.f32 %v281, %v662
      %664 = vmatmul.bf16.gmra.mxu0 %v517
      %v665 = vpop.f32.mrf.mxu0
      %v666 = vadd.f32 %v281, %v665
      %v667 = vpop.f32.mrf.mxu0
      %v668 = vadd.f32 %v281, %v667
      %669 = vmatmul.bf16.gmra.mxu0 %v520
      %v670 = vpop.f32.mrf.mxu0
      %v671 = vadd.f32 %v281, %v670
      %v672 = vpop.f32.mrf.mxu0
      %v673 = vadd.f32 %v281, %v672
      %674 = vmatmul.bf16.gmra.mxu0 %v523
      %v675 = vpop.f32.mrf.mxu0
      %v676 = vadd.f32 %v281, %v675
      %v677 = vpop.f32.mrf.mxu0
      %v678 = vadd.f32 %v281, %v677
      %679 = vmatmul.bf16.gmra.mxu0 %v526
      %v680 = vpop.f32.mrf.mxu0
      %v681 = vadd.f32 %v281, %v680
      %v682 = vpop.f32.mrf.mxu0
      %v683 = vadd.f32 %v281, %v682
      %684 = vmatmul.bf16.gmra.mxu0 %v529
      %v685 = vpop.f32.mrf.mxu0
      %v686 = vadd.f32 %v281, %v685
      %v687 = vpop.f32.mrf.mxu0
      %v688 = vadd.f32 %v281, %v687
      %689 = vmatmul.bf16.gmra.mxu0 %v532
      %v690 = vpop.f32.mrf.mxu0
      %v691 = vadd.f32 %v281, %v690
      %v692 = vpop.f32.mrf.mxu0
      %v693 = vadd.f32 %v281, %v692
      %694 = vmatmul.bf16.gmra.mxu0 %v535
      %v695 = vpop.f32.mrf.mxu0
      %v696 = vadd.f32 %v281, %v695
      %v697 = vpop.f32.mrf.mxu0
      %v698 = vadd.f32 %v281, %v697
      %699 = vmatmul.bf16.gmra.mxu0 %v538
      %v700 = vpop.f32.mrf.mxu0
      %v701 = vadd.f32 %v281, %v700
      %v702 = vpop.f32.mrf.mxu0
      %v703 = vadd.f32 %v281, %v702
      %704 = vmatmul.bf16.gmra.mxu0 %v541
      %v705 = vpop.f32.mrf.mxu0
      %v706 = vadd.f32 %v281, %v705
      %v707 = vpop.f32.mrf.mxu0
      %v708 = vadd.f32 %v281, %v707
      %709 = vmatmul.bf16.gmra.mxu0 %v544
      %v710 = vpop.f32.mrf.mxu0
      %v711 = vadd.f32 %v281, %v710
      %v712 = vpop.f32.mrf.mxu0
      %v713 = vadd.f32 %v281, %v712
      %714 = vdwg.mxu0
      %v715 = vmax.f32 %v556, 0.0
      %v716 = vmax.f32 %v558, 0.0
      %v717 = vmax.f32 %v561, 0.0
      %v718 = vmax.f32 %v563, 0.0
      %v719 = vmax.f32 %v566, 0.0
      %v720 = vmax.f32 %v568, 0.0
      %v721 = vmax.f32 %v571, 0.0
      %v722 = vmax.f32 %v573, 0.0
      %v723 = vmax.f32 %v576, 0.0
      %v724 = vmax.f32 %v578, 0.0
      %v725 = vmax.f32 %v581, 0.0
      %v726 = vmax.f32 %v583, 0.0
      %v727 = vmax.f32 %v586, 0.0
      %v728 = vmax.f32 %v588, 0.0
      %v729 = vmax.f32 %v591, 0.0
      %v730 = vmax.f32 %v593, 0.0
      %v731 = vmax.f32 %v596, 0.0
      %v732 = vmax.f32 %v598, 0.0
      %v733 = vmax.f32 %v601, 0.0
      %v734 = vmax.f32 %v603, 0.0
      %v735 = vmax.f32 %v606, 0.0
      %v736 = vmax.f32 %v608, 0.0
      %v737 = vmax.f32 %v611, 0.0
      %v738 = vmax.f32 %v613, 0.0
      %v739 = vmax.f32 %v616, 0.0
      %v740 = vmax.f32 %v618, 0.0
      %v741 = vmax.f32 %v621, 0.0
      %v742 = vmax.f32 %v623, 0.0
      %v743 = vmax.f32 %v626, 0.0
      %v744 = vmax.f32 %v628, 0.0
      %v745 = vmax.f32 %v631, 0.0
      %v746 = vmax.f32 %v633, 0.0
      %v747 = vmax.f32 %v636, 0.0
      %v748 = vmax.f32 %v638, 0.0
      %v749 = vmax.f32 %v641, 0.0
      %v750 = vmax.f32 %v643, 0.0
      %v751 = vmax.f32 %v646, 0.0
      %v752 = vmax.f32 %v648, 0.0
      %v753 = vmax.f32 %v651, 0.0
      %v754 = vmax.f32 %v653, 0.0
      %v755 = vmax.f32 %v656, 0.0
      %v756 = vmax.f32 %v658, 0.0
      %v757 = vmax.f32 %v661, 0.0
      %v758 = vmax.f32 %v663, 0.0
      %v759 = vmax.f32 %v666, 0.0
      %v760 = vmax.f32 %v668, 0.0
      %v761 = vmax.f32 %v671, 0.0
      %v762 = vmax.f32 %v673, 0.0
      %v763 = vmax.f32 %v676, 0.0
      %v764 = vmax.f32 %v678, 0.0
      %v765 = vmax.f32 %v681, 0.0
      %v766 = vmax.f32 %v683, 0.0
      %v767 = vmax.f32 %v686, 0.0
      %v768 = vmax.f32 %v688, 0.0
      %v769 = vmax.f32 %v691, 0.0
      %v770 = vmax.f32 %v693, 0.0
      %v771 = vmax.f32 %v696, 0.0
      %v772 = vmax.f32 %v698, 0.0
      %v773 = vmax.f32 %v701, 0.0
      %v774 = vmax.f32 %v703, 0.0
      %v775 = vmax.f32 %v706, 0.0
      %v776 = vmax.f32 %v708, 0.0
      %v777 = vmax.f32 %v711, 0.0
      %v778 = vmax.f32 %v713, 0.0
      %vm779 = vcmask 64512
      %780 = vst.msk [vmem:[%s206] sm:$0xff] %vm779, %v715
      %781 = vst.msk [vmem:[%s206 + $0x8] sm:$0xff] %vm779, %v716
      %782 = vst.msk [vmem:[%s206 + $0x10] sm:$0xff] %vm779, %v717
      %783 = vst.msk [vmem:[%s206 + $0x18] sm:$0xff] %vm779, %v718
      %784 = vst.msk [vmem:[%s206 + $0x20] sm:$0xff] %vm779, %v719
      %785 = vst.msk [vmem:[%s206 + $0x28] sm:$0xff] %vm779, %v720
      %786 = vst.msk [vmem:[%s206 + $0x30] sm:$0xff] %vm779, %v721
      %787 = vst.msk [vmem:[%s206 + $0x38] sm:$0xff] %vm779, %v722
      %788 = vst.msk [vmem:[%s206 + $0x40] sm:$0xff] %vm779, %v723
      %789 = vst.msk [vmem:[%s206 + $0x48] sm:$0xff] %vm779, %v724
      %790 = vst.msk [vmem:[%s206 + $0x50] sm:$0xff] %vm779, %v725
      %791 = vst.msk [vmem:[%s206 + $0x58] sm:$0xff] %vm779, %v726
      %792 = vst.msk [vmem:[%s206 + $0x60] sm:$0xff] %vm779, %v727
      %793 = vst.msk [vmem:[%s206 + $0x68] sm:$0xff] %vm779, %v728
      %794 = vst.msk [vmem:[%s206 + $0x70] sm:$0xff] %vm779, %v729
      %795 = vst.msk [vmem:[%s206 + $0x78] sm:$0xff] %vm779, %v730
      %796 = vst.msk [vmem:[%s206 + $0x80] sm:$0xff] %vm779, %v731
      %797 = vst.msk [vmem:[%s206 + $0x88] sm:$0xff] %vm779, %v732
      %798 = vst.msk [vmem:[%s206 + $0x90] sm:$0xff] %vm779, %v733
      %799 = vst.msk [vmem:[%s206 + $0x98] sm:$0xff] %vm779, %v734
      %800 = vst.msk [vmem:[%s206 + $0xa0] sm:$0xff] %vm779, %v735
      %801 = vst.msk [vmem:[%s206 + $0xa8] sm:$0xff] %vm779, %v736
      %802 = vst.msk [vmem:[%s206 + $0xb0] sm:$0xff] %vm779, %v737
      %803 = vst.msk [vmem:[%s206 + $0xb8] sm:$0xff] %vm779, %v738
      %804 = vst.msk [vmem:[%s206 + $0xc0] sm:$0xff] %vm779, %v739
      %805 = vst.msk [vmem:[%s206 + $0xc8] sm:$0xff] %vm779, %v740
      %806 = vst.msk [vmem:[%s206 + $0xd0] sm:$0xff] %vm779, %v741
      %807 = vst.msk [vmem:[%s206 + $0xd8] sm:$0xff] %vm779, %v742
      %808 = vst.msk [vmem:[%s206 + $0xe0] sm:$0xff] %vm779, %v743
      %809 = vst.msk [vmem:[%s206 + $0xe8] sm:$0xff] %vm779, %v744
      %810 = vst.msk [vmem:[%s206 + $0xf0] sm:$0xff] %vm779, %v745
      %811 = vst.msk [vmem:[%s206 + $0xf8] sm:$0xff] %vm779, %v746
      %812 = vst.msk [vmem:[%s206 + $0x100] sm:$0xff] %vm779, %v747
      %813 = vst.msk [vmem:[%s206 + $0x108] sm:$0xff] %vm779, %v748
      %814 = vst.msk [vmem:[%s206 + $0x110] sm:$0xff] %vm779, %v749
      %815 = vst.msk [vmem:[%s206 + $0x118] sm:$0xff] %vm779, %v750
      %816 = vst.msk [vmem:[%s206 + $0x120] sm:$0xff] %vm779, %v751
      %817 = vst.msk [vmem:[%s206 + $0x128] sm:$0xff] %vm779, %v752
      %818 = vst.msk [vmem:[%s206 + $0x130] sm:$0xff] %vm779, %v753
      %819 = vst.msk [vmem:[%s206 + $0x138] sm:$0xff] %vm779, %v754
      %820 = vst.msk [vmem:[%s206 + $0x140] sm:$0xff] %vm779, %v755
      %821 = vst.msk [vmem:[%s206 + $0x148] sm:$0xff] %vm779, %v756
      %822 = vst.msk [vmem:[%s206 + $0x150] sm:$0xff] %vm779, %v757
      %823 = vst.msk [vmem:[%s206 + $0x158] sm:$0xff] %vm779, %v758
      %824 = vst.msk [vmem:[%s206 + $0x160] sm:$0xff] %vm779, %v759
      %825 = vst.msk [vmem:[%s206 + $0x168] sm:$0xff] %vm779, %v760
      %826 = vst.msk [vmem:[%s206 + $0x170] sm:$0xff] %vm779, %v761
      %827 = vst.msk [vmem:[%s206 + $0x178] sm:$0xff] %vm779, %v762
      %828 = vst.msk [vmem:[%s206 + $0x180] sm:$0xff] %vm779, %v763
      %829 = vst.msk [vmem:[%s206 + $0x188] sm:$0xff] %vm779, %v764
      %830 = vst.msk [vmem:[%s206 + $0x190] sm:$0xff] %vm779, %v765
      %831 = vst.msk [vmem:[%s206 + $0x198] sm:$0xff] %vm779, %v766
      %832 = vst.msk [vmem:[%s206 + $0x1a0] sm:$0xff] %vm779, %v767
      %833 = vst.msk [vmem:[%s206 + $0x1a8] sm:$0xff] %vm779, %v768
      %834 = vst.msk [vmem:[%s206 + $0x1b0] sm:$0xff] %vm779, %v769
      %835 = vst.msk [vmem:[%s206 + $0x1b8] sm:$0xff] %vm779, %v770
      %836 = vst.msk [vmem:[%s206 + $0x1c0] sm:$0xff] %vm779, %v771
      %837 = vst.msk [vmem:[%s206 + $0x1c8] sm:$0xff] %vm779, %v772
      %838 = vst.msk [vmem:[%s206 + $0x1d0] sm:$0xff] %vm779, %v773
      %839 = vst.msk [vmem:[%s206 + $0x1d8] sm:$0xff] %vm779, %v774
      %840 = vst.msk [vmem:[%s206 + $0x1e0] sm:$0xff] %vm779, %v775
      %841 = vst.msk [vmem:[%s206 + $0x1e8] sm:$0xff] %vm779, %v776
      %842 = vst.msk [vmem:[%s206 + $0x1f0] sm:$0xff] %vm779, %v777
      %843 = vst.msk [vmem:[%s206 + $0x1f8] sm:$0xff] %vm779, %v778
      %v844 = vsel %vm779, %v715, 0.0
      %v845 = vsel %vm779, %v716, 0.0
      %v846 = vadd.f32 %v844, %v845
      %v847 = vsel %vm779, %v717, 0.0
      %v848 = vadd.f32 %v846, %v847
      %v849 = vsel %vm779, %v718, 0.0
      %v850 = vadd.f32 %v848, %v849
      %v851 = vsel %vm779, %v719, 0.0
      %v852 = vadd.f32 %v850, %v851
      %v853 = vsel %vm779, %v720, 0.0
      %v854 = vadd.f32 %v852, %v853
      %v855 = vsel %vm779, %v721, 0.0
      %v856 = vadd.f32 %v854, %v855
      %v857 = vsel %vm779, %v722, 0.0
      %v858 = vadd.f32 %v856, %v857
      %v859 = vsel %vm779, %v723, 0.0
      %v860 = vadd.f32 %v858, %v859
      %v861 = vsel %vm779, %v724, 0.0
      %v862 = vadd.f32 %v860, %v861
      %v863 = vsel %vm779, %v725, 0.0
      %v864 = vadd.f32 %v862, %v863
      %v865 = vsel %vm779, %v726, 0.0
      %v866 = vadd.f32 %v864, %v865
      %v867 = vsel %vm779, %v727, 0.0
      %v868 = vadd.f32 %v866, %v867
      %v869 = vsel %vm779, %v728, 0.0
      %v870 = vadd.f32 %v868, %v869
      %v871 = vsel %vm779, %v729, 0.0
      %v872 = vadd.f32 %v870, %v871
      %v873 = vsel %vm779, %v730, 0.0
      %v874 = vadd.f32 %v872, %v873
      %v875 = vsel %vm779, %v731, 0.0
      %v876 = vadd.f32 %v874, %v875
      %v877 = vsel %vm779, %v732, 0.0
      %v878 = vadd.f32 %v876, %v877
      %v879 = vsel %vm779, %v733, 0.0
      %v880 = vadd.f32 %v878, %v879
      %v881 = vsel %vm779, %v734, 0.0
      %v882 = vadd.f32 %v880, %v881
      %v883 = vsel %vm779, %v735, 0.0
      %v884 = vadd.f32 %v882, %v883
      %v885 = vsel %vm779, %v736, 0.0
      %v886 = vadd.f32 %v884, %v885
      %v887 = vsel %vm779, %v737, 0.0
      %v888 = vadd.f32 %v886, %v887
      %v889 = vsel %vm779, %v738, 0.0
      %v890 = vadd.f32 %v888, %v889
      %v891 = vsel %vm779, %v739, 0.0
      %v892 = vadd.f32 %v890, %v891
      %v893 = vsel %vm779, %v740, 0.0
      %v894 = vadd.f32 %v892, %v893
      %v895 = vsel %vm779, %v741, 0.0
      %v896 = vadd.f32 %v894, %v895
      %v897 = vsel %vm779, %v742, 0.0
      %v898 = vadd.f32 %v896, %v897
      %v899 = vsel %vm779, %v743, 0.0
      %v900 = vadd.f32 %v898, %v899
      %v901 = vsel %vm779, %v744, 0.0
      %v902 = vadd.f32 %v900, %v901
      %v903 = vsel %vm779, %v745, 0.0
      %v904 = vadd.f32 %v902, %v903
      %v905 = vsel %vm779, %v746, 0.0
      %v906 = vadd.f32 %v904, %v905
      %v907 = vsel %vm779, %v747, 0.0
      %v908 = vadd.f32 %v906, %v907
      %v909 = vsel %vm779, %v748, 0.0
      %v910 = vadd.f32 %v908, %v909
      %v911 = vsel %vm779, %v749, 0.0
      %v912 = vadd.f32 %v910, %v911
      %v913 = vsel %vm779, %v750, 0.0
      %v914 = vadd.f32 %v912, %v913
      %v915 = vsel %vm779, %v751, 0.0
      %v916 = vadd.f32 %v914, %v915
      %v917 = vsel %vm779, %v752, 0.0
      %v918 = vadd.f32 %v916, %v917
      %v919 = vsel %vm779, %v753, 0.0
      %v920 = vadd.f32 %v918, %v919
      %v921 = vsel %vm779, %v754, 0.0
      %v922 = vadd.f32 %v920, %v921
      %v923 = vsel %vm779, %v755, 0.0
      %v924 = vadd.f32 %v922, %v923
      %v925 = vsel %vm779, %v756, 0.0
      %v926 = vadd.f32 %v924, %v925
      %v927 = vsel %vm779, %v757, 0.0
      %v928 = vadd.f32 %v926, %v927
      %v929 = vsel %vm779, %v758, 0.0
      %v930 = vadd.f32 %v928, %v929
      %v931 = vsel %vm779, %v759, 0.0
      %v932 = vadd.f32 %v930, %v931
      %v933 = vsel %vm779, %v760, 0.0
      %v934 = vadd.f32 %v932, %v933
      %v935 = vsel %vm779, %v761, 0.0
      %v936 = vadd.f32 %v934, %v935
      %v937 = vsel %vm779, %v762, 0.0
      %v938 = vadd.f32 %v936, %v937
      %v939 = vsel %vm779, %v763, 0.0
      %v940 = vadd.f32 %v938, %v939
      %v941 = vsel %vm779, %v764, 0.0
      %v942 = vadd.f32 %v940, %v941
      %v943 = vsel %vm779, %v765, 0.0
      %v944 = vadd.f32 %v942, %v943
      %v945 = vsel %vm779, %v766, 0.0
      %v946 = vadd.f32 %v944, %v945
      %v947 = vsel %vm779, %v767, 0.0
      %v948 = vadd.f32 %v946, %v947
      %v949 = vsel %vm779, %v768, 0.0
      %v950 = vadd.f32 %v948, %v949
      %v951 = vsel %vm779, %v769, 0.0
      %v952 = vadd.f32 %v950, %v951
      %v953 = vsel %vm779, %v770, 0.0
      %v954 = vadd.f32 %v952, %v953
      %v955 = vsel %vm779, %v771, 0.0
      %v956 = vadd.f32 %v954, %v955
      %v957 = vsel %vm779, %v772, 0.0
      %v958 = vadd.f32 %v956, %v957
      %v959 = vsel %vm779, %v773, 0.0
      %v960 = vadd.f32 %v958, %v959
      %v961 = vsel %vm779, %v774, 0.0
      %v962 = vadd.f32 %v960, %v961
      %v963 = vsel %vm779, %v775, 0.0
      %v964 = vadd.f32 %v962, %v963
      %v965 = vsel %vm779, %v776, 0.0
      %v966 = vadd.f32 %v964, %v965
      %v967 = vsel %vm779, %v777, 0.0
      %v968 = vadd.f32 %v966, %v967
      %v969 = vsel %vm779, %v778, 0.0
      %v970 = vadd.f32 %v968, %v969
      %v971 = vrot.slane %v970, 4
      %v972 = vadd.f32 %v970, %v971
      %v973 = vrot.slane %v972, 2
      %v974 = vadd.f32 %v972, %v973
      %v975 = vrot.slane %v974, 1
      %v976 = vadd.f32 %v974, %v975
      %vm977 = vcmask 57344
      %978 = vst.msk [vmem:[%s211] sm:$0x1] %vm977, %v976
      %v979 = vmul.f32 %v715, %v715
      %v980 = vmul.f32 %v716, %v716
      %v981 = vmul.f32 %v717, %v717
      %v982 = vmul.f32 %v718, %v718
      %v983 = vmul.f32 %v719, %v719
      %v984 = vmul.f32 %v720, %v720
      %v985 = vmul.f32 %v721, %v721
      %v986 = vmul.f32 %v722, %v722
      %v987 = vmul.f32 %v723, %v723
      %v988 = vmul.f32 %v724, %v724
      %v989 = vmul.f32 %v725, %v725
      %v990 = vmul.f32 %v726, %v726
      %v991 = vmul.f32 %v727, %v727
      %v992 = vmul.f32 %v728, %v728
      %v993 = vmul.f32 %v729, %v729
      %v994 = vmul.f32 %v730, %v730
      %v995 = vmul.f32 %v731, %v731
      %v996 = vmul.f32 %v732, %v732
      %v997 = vmul.f32 %v733, %v733
      %v998 = vmul.f32 %v734, %v734
      %v999 = vmul.f32 %v735, %v735
      %v1000 = vmul.f32 %v736, %v736
      %v1001 = vmul.f32 %v737, %v737
      %v1002 = vmul.f32 %v738, %v738
      %v1003 = vmul.f32 %v739, %v739
      %v1004 = vmul.f32 %v740, %v740
      %v1005 = vmul.f32 %v741, %v741
      %v1006 = vmul.f32 %v742, %v742
      %v1007 = vmul.f32 %v743, %v743
      %v1008 = vmul.f32 %v744, %v744
      %v1009 = vmul.f32 %v745, %v745
      %v1010 = vmul.f32 %v746, %v746
      %v1011 = vmul.f32 %v747, %v747
      %v1012 = vmul.f32 %v748, %v748
      %v1013 = vmul.f32 %v749, %v749
      %v1014 = vmul.f32 %v750, %v750
      %v1015 = vmul.f32 %v751, %v751
      %v1016 = vmul.f32 %v752, %v752
      %v1017 = vmul.f32 %v753, %v753
      %v1018 = vmul.f32 %v754, %v754
      %v1019 = vmul.f32 %v755, %v755
      %v1020 = vmul.f32 %v756, %v756
      %v1021 = vmul.f32 %v757, %v757
      %v1022 = vmul.f32 %v758, %v758
      %v1023 = vmul.f32 %v759, %v759
      %v1024 = vmul.f32 %v760, %v760
      %v1025 = vmul.f32 %v761, %v761
      %v1026 = vmul.f32 %v762, %v762
      %v1027 = vmul.f32 %v763, %v763
      %v1028 = vmul.f32 %v764, %v764
      %v1029 = vmul.f32 %v765, %v765
      %v1030 = vmul.f32 %v766, %v766
      %v1031 = vmul.f32 %v767, %v767
      %v1032 = vmul.f32 %v768, %v768
      %v1033 = vmul.f32 %v769, %v769
      %v1034 = vmul.f32 %v770, %v770
      %v1035 = vmul.f32 %v771, %v771
      %v1036 = vmul.f32 %v772, %v772
      %v1037 = vmul.f32 %v773, %v773
      %v1038 = vmul.f32 %v774, %v774
      %v1039 = vmul.f32 %v775, %v775
      %v1040 = vmul.f32 %v776, %v776
      %v1041 = vmul.f32 %v777, %v777
      %v1042 = vmul.f32 %v778, %v778
      %v1043 = vsel %vm779, %v979, 0.0
      %v1044 = vsel %vm779, %v980, 0.0
      %v1045 = vadd.f32 %v1043, %v1044
      %v1046 = vsel %vm779, %v981, 0.0
      %v1047 = vadd.f32 %v1045, %v1046
      %v1048 = vsel %vm779, %v982, 0.0
      %v1049 = vadd.f32 %v1047, %v1048
      %v1050 = vsel %vm779, %v983, 0.0
      %v1051 = vadd.f32 %v1049, %v1050
      %v1052 = vsel %vm779, %v984, 0.0
      %v1053 = vadd.f32 %v1051, %v1052
      %v1054 = vsel %vm779, %v985, 0.0
      %v1055 = vadd.f32 %v1053, %v1054
      %v1056 = vsel %vm779, %v986, 0.0
      %v1057 = vadd.f32 %v1055, %v1056
      %v1058 = vsel %vm779, %v987, 0.0
      %v1059 = vadd.f32 %v1057, %v1058
      %v1060 = vsel %vm779, %v988, 0.0
      %v1061 = vadd.f32 %v1059, %v1060
      %v1062 = vsel %vm779, %v989, 0.0
      %v1063 = vadd.f32 %v1061, %v1062
      %v1064 = vsel %vm779, %v990, 0.0
      %v1065 = vadd.f32 %v1063, %v1064
      %v1066 = vsel %vm779, %v991, 0.0
      %v1067 = vadd.f32 %v1065, %v1066
      %v1068 = vsel %vm779, %v992, 0.0
      %v1069 = vadd.f32 %v1067, %v1068
      %v1070 = vsel %vm779, %v993, 0.0
      %v1071 = vadd.f32 %v1069, %v1070
      %v1072 = vsel %vm779, %v994, 0.0
      %v1073 = vadd.f32 %v1071, %v1072
      %v1074 = vsel %vm779, %v995, 0.0
      %v1075 = vadd.f32 %v1073, %v1074
      %v1076 = vsel %vm779, %v996, 0.0
      %v1077 = vadd.f32 %v1075, %v1076
      %v1078 = vsel %vm779, %v997, 0.0
      %v1079 = vadd.f32 %v1077, %v1078
      %v1080 = vsel %vm779, %v998, 0.0
      %v1081 = vadd.f32 %v1079, %v1080
      %v1082 = vsel %vm779, %v999, 0.0
      %v1083 = vadd.f32 %v1081, %v1082
      %v1084 = vsel %vm779, %v1000, 0.0
      %v1085 = vadd.f32 %v1083, %v1084
      %v1086 = vsel %vm779, %v1001, 0.0
      %v1087 = vadd.f32 %v1085, %v1086
      %v1088 = vsel %vm779, %v1002, 0.0
      %v1089 = vadd.f32 %v1087, %v1088
      %v1090 = vsel %vm779, %v1003, 0.0
      %v1091 = vadd.f32 %v1089, %v1090
      %v1092 = vsel %vm779, %v1004, 0.0
      %v1093 = vadd.f32 %v1091, %v1092
      %v1094 = vsel %vm779, %v1005, 0.0
      %v1095 = vadd.f32 %v1093, %v1094
      %v1096 = vsel %vm779, %v1006, 0.0
      %v1097 = vadd.f32 %v1095, %v1096
      %v1098 = vsel %vm779, %v1007, 0.0
      %v1099 = vadd.f32 %v1097, %v1098
      %v1100 = vsel %vm779, %v1008, 0.0
      %v1101 = vadd.f32 %v1099, %v1100
      %v1102 = vsel %vm779, %v1009, 0.0
      %v1103 = vadd.f32 %v1101, %v1102
      %v1104 = vsel %vm779, %v1010, 0.0
      %v1105 = vadd.f32 %v1103, %v1104
      %v1106 = vsel %vm779, %v1011, 0.0
      %v1107 = vadd.f32 %v1105, %v1106
      %v1108 = vsel %vm779, %v1012, 0.0
      %v1109 = vadd.f32 %v1107, %v1108
      %v1110 = vsel %vm779, %v1013, 0.0
      %v1111 = vadd.f32 %v1109, %v1110
      %v1112 = vsel %vm779, %v1014, 0.0
      %v1113 = vadd.f32 %v1111, %v1112
      %v1114 = vsel %vm779, %v1015, 0.0
      %v1115 = vadd.f32 %v1113, %v1114
      %v1116 = vsel %vm779, %v1016, 0.0
      %v1117 = vadd.f32 %v1115, %v1116
      %v1118 = vsel %vm779, %v1017, 0.0
      %v1119 = vadd.f32 %v1117, %v1118
      %v1120 = vsel %vm779, %v1018, 0.0
      %v1121 = vadd.f32 %v1119, %v1120
      %v1122 = vsel %vm779, %v1019, 0.0
      %v1123 = vadd.f32 %v1121, %v1122
      %v1124 = vsel %vm779, %v1020, 0.0
      %v1125 = vadd.f32 %v1123, %v1124
      %v1126 = vsel %vm779, %v1021, 0.0
      %v1127 = vadd.f32 %v1125, %v1126
      %v1128 = vsel %vm779, %v1022, 0.0
      %v1129 = vadd.f32 %v1127, %v1128
      %v1130 = vsel %vm779, %v1023, 0.0
      %v1131 = vadd.f32 %v1129, %v1130
      %v1132 = vsel %vm779, %v1024, 0.0
      %v1133 = vadd.f32 %v1131, %v1132
      %v1134 = vsel %vm779, %v1025, 0.0
      %v1135 = vadd.f32 %v1133, %v1134
      %v1136 = vsel %vm779, %v1026, 0.0
      %v1137 = vadd.f32 %v1135, %v1136
      %v1138 = vsel %vm779, %v1027, 0.0
      %v1139 = vadd.f32 %v1137, %v1138
      %v1140 = vsel %vm779, %v1028, 0.0
      %v1141 = vadd.f32 %v1139, %v1140
      %v1142 = vsel %vm779, %v1029, 0.0
      %v1143 = vadd.f32 %v1141, %v1142
      %v1144 = vsel %vm779, %v1030, 0.0
      %v1145 = vadd.f32 %v1143, %v1144
      %v1146 = vsel %vm779, %v1031, 0.0
      %v1147 = vadd.f32 %v1145, %v1146
      %v1148 = vsel %vm779, %v1032, 0.0
      %v1149 = vadd.f32 %v1147, %v1148
      %v1150 = vsel %vm779, %v1033, 0.0
      %v1151 = vadd.f32 %v1149, %v1150
      %v1152 = vsel %vm779, %v1034, 0.0
      %v1153 = vadd.f32 %v1151, %v1152
      %v1154 = vsel %vm779, %v1035, 0.0
      %v1155 = vadd.f32 %v1153, %v1154
      %v1156 = vsel %vm779, %v1036, 0.0
      %v1157 = vadd.f32 %v1155, %v1156
      %v1158 = vsel %vm779, %v1037, 0.0
      %v1159 = vadd.f32 %v1157, %v1158
      %v1160 = vsel %vm779, %v1038, 0.0
      %v1161 = vadd.f32 %v1159, %v1160
      %v1162 = vsel %vm779, %v1039, 0.0
      %v1163 = vadd.f32 %v1161, %v1162
      %v1164 = vsel %vm779, %v1040, 0.0
      %v1165 = vadd.f32 %v1163, %v1164
      %v1166 = vsel %vm779, %v1041, 0.0
      %v1167 = vadd.f32 %v1165, %v1166
      %v1168 = vsel %vm779, %v1042, 0.0
      %v1169 = vadd.f32 %v1167, %v1168
      %v1170 = vrot.slane %v1169, 4
      %v1171 = vadd.f32 %v1169, %v1170
      %v1172 = vrot.slane %v1171, 2
      %v1173 = vadd.f32 %v1171, %v1172
      %v1174 = vrot.slane %v1173, 1
      %v1175 = vadd.f32 %v1173, %v1174
      %1176 = vst.msk [vmem:[%s211 + $0x1] sm:$0x1] %vm977, %v1175
      %s1177 = smul.u32 64, %s16
      %p1178 = scmp.lt.s32.totalorder %s1177, 127
      %s1179 = scalar_select %p1178, %s1177, 127
      %s1180 = smul.addr %s1179, 8
      %s1181 = scalar_lea.vmem %s3, %s1180
      %p1182 = scmp.lt.s32.totalorder %s16, 1
      %s1183 = scalar_select %p1182, %s16, 1
      %s1184 = smul.addr %s1183, 2
      %s1185 = scalar_lea.vmem %s4, %s1184
      // Predicated region
      $region33: #{conv_block_up_forward.16} parent=31 // pred_check
        %p1186 = pneg %p102
      $region34: #{conv_block_up_forward.16} parent=31 // pred_check_branch
        %1188 = sbr.rel (%p1186) target = $region36
      $region35: #{conv_block_up_forward.16} parent=31 // pred_region
        %s1189 = smul.u32 64, %s16
      $region36: #{conv_block_up_forward.16} parent=31 // pred_fallthru
        _
      // Predicated region
      $region37: #{conv_block_up_forward.16} parent=31 // pred_check
        %p1190 = pneg %p128
      $region38: #{conv_block_up_forward.16} parent=31 // pred_check_branch
        %1192 = sbr.rel (%p1190) target = $region40
      $region39: #{conv_block_up_forward.16} parent=31 // pred_region
        _
      $region40: #{conv_block_up_forward.16} parent=31 // pred_fallthru
        _
    $region32: #{conv_block_up_forward.16} parent=5 // pred_fallthru
      _
    %p1193 = scmp.le.s32.totalorder 2, %s11
    // Predicated region
    $region41: #{conv_block_up_forward.16} parent=5 // pred_check
      %p1194 = pneg %p1193
    $region42: #{conv_block_up_forward.16} parent=5 // pred_check_branch
      %1196 = sbr.rel (%p1194) target = $region44
    $region43: #{conv_block_up_forward.16} parent=5 // pred_region
      %s1197 = ssub.s32 %s11, 2
      // Predicated region
      $region45: #{conv_block_up_forward.16} parent=43 // pred_check
        %p1198 = pneg %p108
      $region46: #{conv_block_up_forward.16} parent=43 // pred_check_branch
        %1200 = sbr.rel (%p1198) target = $region48
      $region47: #{conv_block_up_forward.16} parent=43 // pred_region
        %s1201 = smul.u32 64, %s17
        %p1202 = scmp.lt.s32.totalorder %s1201, 127
        %s1203 = scalar_select %p1202, %s1201, 127
        %s1204 = smul.addr %s1203, 8
        %s1205 = scalar_lea.vmem %s3, %s1204
      $region48: #{conv_block_up_forward.16} parent=43 // pred_fallthru
        _
      // Predicated region
      $region49: #{conv_block_up_forward.16} parent=43 // pred_check
        %p1206 = pneg %p134
      $region50: #{conv_block_up_forward.16} parent=43 // pred_check_branch
        %1208 = sbr.rel (%p1206) target = $region52
      $region51: #{conv_block_up_forward.16} parent=43 // pred_region
        %p1209 = scmp.lt.s32.totalorder %s17, 1
        %s1210 = scalar_select %p1209, %s17, 1
        %s1211 = smul.addr %s1210, 2
        %s1212 = scalar_lea.vmem %s4, %s1211
      $region52: #{conv_block_up_forward.16} parent=43 // pred_fallthru
        _
    $region44: #{conv_block_up_forward.16} parent=5 // pred_fallthru
      _
  $region6: #{conv_block_up_forward.16} parent=0 // loop_footer
    %s15 = sadd.s32 1, %s11
  $region7: #{conv_block_up_forward.16} parent=0 // loop_footer_branch
    %10 = sbr.rel target = $region3
  $region8: #{conv_block_up_forward.16} parent=0 // loop_exit
    _

// kernel: conv_block_up_forward.18
$region0: #{conv_block_up_forward.18}
  #allocation0 [shape = 'u32[]', space=smem, size = 0x4, offset = 0x4, fixed_abs, tag = 'smem constant byte address 0x4 - core index']
  #allocation1 [shape = 'u32[72,128]{1,0:T(1,128)}', space=vmem, size = 0x9000, scoped, tag = 'internal scratch']
  %s0 = inlined_call_operand.vmem [shape: bf16[1024,32], index: 0, kind: input, shape index: {}]
  %s1 = inlined_call_operand.vmem [shape: bf16[32,8], index: 1, kind: input, shape index: {}]
  %s2 = inlined_call_operand.vmem [shape: f32[1,8], index: 2, kind: input, shape index: {}]
  %s3 = inlined_call_operand.vmem [shape: f32[1024,8], index: 3, kind: output, shape index: {0}]
  %s4 = inlined_call_operand.vmem [shape: f32[2,2,8], index: 4, kind: output, shape index: {1}]
  %5 = xla_tuple %s3, %s4
  %s6 = sld [smem:[#allocation0]]
  $region53: #{conv_block_up_forward.18} parent=0
    _
  %s8 = ssub.s32 1, %s6
  %s9 = scalar_select 0, %s8, %s6
  loop: start=0, step=1, limit=4
  $region2: #{conv_block_up_forward.18} parent=0 // loop_pre_header
    _
  $region3: #{conv_block_up_forward.18} parent=0 // loop_header
    %s11 = sphi 0, %s15
    %p12 = scmp.ge.s32.totalorder %s11, 4
    %s21 = sphi 0, %s23
    %s24 = sphi 0, %s21
    %s25 = sphi 0, %s24
    %s41 = sphi 0, %s25
    %s45 = sphi 0, %s45
    %s47 = sphi 0, %s45
    %s48 = sphi 0, %s47
    %s62 = sphi 0, %s48
    %s66 = sphi 0, %s66
    %s68 = sphi 0, %s66
    %s69 = sphi 0, %s68
    %s83 = sphi 0, %s69
    %s89 = sphi 0, %s91
    %s92 = sphi 0, %s89
    %s93 = sphi 0, %s92
    %s109 = sphi 0, %s93
    %s115 = sphi 0, %s117
    %s118 = sphi 0, %s115
    %s119 = sphi 0, %s118
    %s135 = sphi 0, %s119
  $region4: #{conv_block_up_forward.18} parent=0 // loop_header_branch
    %14 = sbr.rel (%p12) target = $region8
  $region5: #{conv_block_up_forward.18} parent=0 // loop_body
    %s16 = ssub.s32 %s11, 1
    %s17 = ssub.s32 %s11, 2
    %s18 = sadd.s32 %s11, 1
    %s19 = ssub.s32 %s11, %s18
    %p20 = scmp.eq.s32.totalorder %s19, 0
    %s22 = sadd.s32 %s21, 1
    %s23 = scalar_select %p20, %s21, %s22
    %p26 = pneg %p20
    %p27 = scmp.eq.s32.totalorder %s11, 1
    %p28 = por %p26, %p27
    %p29 = scmp.ne.s32.totalorder %s21, %s24
    %p30 = scmp.eq.s32.totalorder %s11, 0
    %p31 = por %p29, %p30
    %p32 = scmp.ne.s32.totalorder %s21, %s24
    %p33 = scmp.eq.s32.totalorder %s16, 1
    %p34 = por %p32, %p33
    %p35 = scmp.ne.s32.totalorder %s24, %s25
    %p36 = scmp.eq.s32.totalorder %s16, 0
    %p37 = por %p35, %p36
    %p38 = scmp.ne.s32.totalorder %s24, %s25
    %p39 = scmp.eq.s32.totalorder %s17, 1
    %p40 = por %p38, %p39
    %p42 = scmp.ne.s32.totalorder %s25, %s41
    %p43 = scmp.eq.s32.totalorder %s17, 0
    %p44 = por %p42, %p43
    %s46 = sadd.s32 %s45, 1
    %p49 = scmp.eq.s32.totalorder %s11, 1
    %p50 = scmp.ne.s32.totalorder %s45, %s47
    %p51 = scmp.eq.s32.totalorder %s11, 0
    %p52 = por %p50, %p51
    %p53 = scmp.ne.s32.totalorder %s45, %s47
    %p54 = scmp.eq.s32.totalorder %s16, 1
    %p55 = por %p53, %p54
    %p56 = scmp.ne.s32.totalorder %s47, %s48
    %p57 = scmp.eq.s32.totalorder %s16, 0
    %p58 = por %p56, %p57
    %p59 = scmp.ne.s32.totalorder %s47, %s48
    %p60 = scmp.eq.s32.totalorder %s17, 1
    %p61 = por %p59, %p60
    %p63 = scmp.ne.s32.totalorder %s48, %s62
    %p64 = scmp.eq.s32.totalorder %s17, 0
    %p65 = por %p63, %p64
    %s67 = sadd.s32 %s66, 1
    %p70 = scmp.eq.s32.totalorder %s11, 1
    %p71 = scmp.ne.s32.totalorder %s66, %s68
    %p72 = scmp.eq.s32.totalorder %s11, 0
    %p73 = por %p71, %p72
    %p74 = scmp.ne.s32.totalorder %s66, %s68
    %p75 = scmp.eq.s32.totalorder %s16, 1
    %p76 = por %p74, %p75
    %p77 = scmp.ne.s32.totalorder %s68, %s69
    %p78 = scmp.eq.s32.totalorder %s16, 0
    %p79 = por %p77, %p78
    %p80 = scmp.ne.s32.totalorder %s68, %s69
    %p81 = scmp.eq.s32.totalorder %s17, 1
    %p82 = por %p80, %p81
    %p84 = scmp.ne.s32.totalorder %s69, %s83
    %p85 = scmp.eq.s32.totalorder %s17, 0
    %p86 = por %p84, %p85
    %s87 = ssub.s32 %s11, %s18
    %p88 = scmp.eq.s32.totalorder %s87, 0
    %s90 = sadd.s32 %s89, 1
    %s91 = scalar_select %p88, %s89, %s90
    %p94 = pneg %p88
    %p95 = scmp.eq.s32.totalorder %s11, 1
    %p96 = por %p94, %p95
    %p97 = scmp.ne.s32.totalorder %s89, %s92
    %p98 = scmp.eq.s32.totalorder %s11, 0
    %p99 = por %p97, %p98
    %p100 = scmp.ne.s32.totalorder %s89, %s92
    %p101 = scmp.eq.s32.totalorder %s16, 1
    %p102 = por %p100, %p101
    %p103 = scmp.ne.s32.totalorder %s92, %s93
    %p104 = scmp.eq.s32.totalorder %s16, 0
    %p105 = por %p103, %p104
    %p106 = scmp.ne.s32.totalorder %s92, %s93
    %p107 = scmp.eq.s32.totalorder %s17, 1
    %p108 = por %p106, %p107
    %p110 = scmp.ne.s32.totalorder %s93, %s109
    %p111 = scmp.eq.s32.totalorder %s17, 0
    %p112 = por %p110, %p111
    %s113 = ssub.s32 %s11, %s18
    %p114 = scmp.eq.s32.totalorder %s113, 0
    %s116 = sadd.s32 %s115, 1
    %s117 = scalar_select %p114, %s115, %s116
    %p120 = pneg %p114
    %p121 = scmp.eq.s32.totalorder %s11, 1
    %p122 = por %p120, %p121
    %p123 = scmp.ne.s32.totalorder %s115, %s118
    %p124 = scmp.eq.s32.totalorder %s11, 0
    %p125 = por %p123, %p124
    %p126 = scmp.ne.s32.totalorder %s115, %s118
    %p127 = scmp.eq.s32.totalorder %s16, 1
    %p128 = por %p126, %p127
    %p129 = scmp.ne.s32.totalorder %s118, %s119
    %p130 = scmp.eq.s32.totalorder %s16, 0
    %p131 = por %p129, %p130
    %p132 = scmp.ne.s32.totalorder %s118, %s119
    %p133 = scmp.eq.s32.totalorder %s17, 1
    %p134 = por %p132, %p133
    %p136 = scmp.ne.s32.totalorder %s119, %s135
    %p137 = scmp.eq.s32.totalorder %s17, 0
    %p138 = por %p136, %p137
    %p139 = scmp.le.s32.totalorder 1, %s11
    %p140 = scmp.lt.s32.totalorder %s11, 3
    %p141 = pnand %p139, %p140
    %p142 = pneg %p141
    // Predicated region
    $region9: #{conv_block_up_forward.18} parent=5 // pred_check
      _
    $region10: #{conv_block_up_forward.18} parent=5 // pred_check_branch
      %144 = sbr.rel (%p141) target = $region12
    $region11: #{conv_block_up_forward.18} parent=5 // pred_region
      %s145 = ssub.s32 %s11, 1
      // Predicated region
      $region13: #{conv_block_up_forward.18} parent=11 // pred_check
        %p146 = pneg %p58
      $region14: #{conv_block_up_forward.18} parent=11 // pred_check_branch
        %148 = sbr.rel (%p146) target = $region16
      $region15: #{conv_block_up_forward.18} parent=11 // pred_region
        _
      $region16: #{conv_block_up_forward.18} parent=11 // pred_fallthru
        _
      // Predicated region
      $region17: #{conv_block_up_forward.18} parent=11 // pred_check
        %p149 = pneg %p79
      $region18: #{conv_block_up_forward.18} parent=11 // pred_check_branch
        %151 = sbr.rel (%p149) target = $region20
      $region19: #{conv_block_up_forward.18} parent=11 // pred_region
        _
      $region20: #{conv_block_up_forward.18} parent=11 // pred_fallthru
        _
    $region12: #{conv_block_up_forward.18} parent=5 // pred_fallthru
      _
    %p152 = scmp.lt.s32.totalorder %s11, 2
    // Predicated region
    $region21: #{conv_block_up_forward.18} parent=5 // pred_check
      %p153 = pneg %p152
    $region22: #{conv_block_up_forward.18} parent=5 // pred_check_branch
      %155 = sbr.rel (%p153) target = $region24
    $region23: #{conv_block_up_forward.18} parent=5 // pred_region
      // Predicated region
      $region25: #{conv_block_up_forward.18} parent=23 // pred_check
        %p156 = pneg %p31
      $region26: #{conv_block_up_forward.18} parent=23 // pred_check_branch
        %158 = sbr.rel (%p156) target = $region28
      $region27: #{conv_block_up_forward.18} parent=23 // pred_region
        %s159 = smul.u32 64, %s11
        %p160 = scmp.lt.s32.totalorder %s159, 127
        %s161 = scalar_select %p160, %s159, 127
        %s162 = smul.addr %s161, 4
        %s163 = scalar_lea.vmem %s0, %s162
        %s164 = smul.u32 64, %s11
      $region28: #{conv_block_up_forward.18} parent=23 // pred_fallthru
        _
    $region24: #{conv_block_up_forward.18} parent=5 // pred_fallthru
      _
    %p165 = scmp.le.s32.totalorder 1, %s11
    %p166 = scmp.lt.s32.totalorder %s11, 3
    %p167 = pnand %p165, %p166
    %p168 = pneg %p167
    // Predicated region
    $region29: #{conv_block_up_forward.18} parent=5 // pred_check
      _
    $region30: #{conv_block_up_forward.18} parent=5 // pred_check_branch
      %170 = sbr.rel (%p167) target = $region32
    $region31: #{conv_block_up_forward.18} parent=5 // pred_region
      %s171 = ssub.s32 %s11, 1
      %s172 = smul.u32 64, %s16
      %p173 = scmp.lt.s32.totalorder %s172, 127
      %s174 = scalar_select %p173, %s172, 127
      %s175 = smul.addr %s174, 4
      %s176 = scalar_lea.vmem %s0, %s175
      %p177 = pneg %p37
      %p178 = pneg %p34
      %p179 = pneg %p58
      %p180 = pneg %p55
      %p181 = pneg %p79
      %p182 = pneg %p76
      %p183 = pneg %p105
      %p184 = pneg %p102
      %s185 = smul.u32 64, %s16
      %p186 = scmp.lt.s32.totalorder %s185, 127
      %s187 = scalar_select %p186, %s185, 127
      %s188 = smul.addr %s187, 8
      %s189 = scalar_lea.vmem %s3, %s188
      %p190 = pneg %p131
      %p191 = pneg %p128
      %p192 = scmp.lt.s32.totalorder %s16, 1
      %s193 = scalar_select %p192, %s16, 1
      %s194 = smul.addr %s193, 2
      %s195 = scalar_lea.vmem %s4, %s194
      %s196 = smul.u32 64, %s16
      %p197 = scmp.lt.s32.totalorder %s196, 127
      %s198 = scalar_select %p197, %s196, 127
      %s199 = smul.addr %s198, 4
      %s200 = scalar_lea.vmem %s0, %s199
      %s201 = smul.u32 64, %s16
      %s202 = smul.u32 64, %s16
      %p203 = scmp.lt.s32.totalorder %s202, 127
      %s204 = scalar_select %p203, %s202, 127
      %s205 = smul.addr %s204, 8
      %s206 = scalar_lea.vmem %s3, %s205
      %s207 = smul.u32 64, %s16
      %p208 = scmp.lt.s32.totalorder %s16, 1
      %s209 = scalar_select %p208, %s16, 1
      %s210 = smul.addr %s209, 2
      %s211 = scalar_lea.vmem %s4, %s210
      %v213 = vld [vmem:[%s200] sm:$0xf]
      %v214 = vld [vmem:[%s200 + $0x4] sm:$0xf]
      %v215 = vld [vmem:[%s200 + $0x8] sm:$0xf]
      %v216 = vld [vmem:[%s200 + $0xc] sm:$0xf]
      %v217 = vld [vmem:[%s200 + $0x10] sm:$0xf]
      %v218 = vld [vmem:[%s200 + $0x14] sm:$0xf]
      %v219 = vld [vmem:[%s200 + $0x18] sm:$0xf]
      %v220 = vld [vmem:[%s200 + $0x1c] sm:$0xf]
      %v221 = vld [vmem:[%s200 + $0x20] sm:$0xf]
      %v222 = vld [vmem:[%s200 + $0x24] sm:$0xf]
      %v223 = vld [vmem:[%s200 + $0x28] sm:$0xf]
      %v224 = vld [vmem:[%s200 + $0x2c] sm:$0xf]
      %v225 = vld [vmem:[%s200 + $0x30] sm:$0xf]
      %v226 = vld [vmem:[%s200 + $0x34] sm:$0xf]
      %v227 = vld [vmem:[%s200 + $0x38] sm:$0xf]
      %v228 = vld [vmem:[%s200 + $0x3c] sm:$0xf]
      %v229 = vld [vmem:[%s200 + $0x40] sm:$0xf]
      %v230 = vld [vmem:[%s200 + $0x44] sm:$0xf]
      %v231 = vld [vmem:[%s200 + $0x48] sm:$0xf]
      %v232 = vld [vmem:[%s200 + $0x4c] sm:$0xf]
      %v233 = vld [vmem:[%s200 + $0x50] sm:$0xf]
      %v234 = vld [vmem:[%s200 + $0x54] sm:$0xf]
      %v235 = vld [vmem:[%s200 + $0x58] sm:$0xf]
      %v236 = vld [vmem:[%s200 + $0x5c] sm:$0xf]
      %v237 = vld [vmem:[%s200 + $0x60] sm:$0xf]
      %v238 = vld [vmem:[%s200 + $0x64] sm:$0xf]
      %v239 = vld [vmem:[%s200 + $0x68] sm:$0xf]
      %v240 = vld [vmem:[%s200 + $0x6c] sm:$0xf]
      %v241 = vld [vmem:[%s200 + $0x70] sm:$0xf]
      %v242 = vld [vmem:[%s200 + $0x74] sm:$0xf]
      %v243 = vld [vmem:[%s200 + $0x78] sm:$0xf]
      %v244 = vld [vmem:[%s200 + $0x7c] sm:$0xf]
      %v245 = vld [vmem:[%s200 + $0x80] sm:$0xf]
      %v246 = vld [vmem:[%s200 + $0x84] sm:$0xf]
      %v247 = vld [vmem:[%s200 + $0x88] sm:$0xf]
      %v248 = vld [vmem:[%s200 + $0x8c] sm:$0xf]
      %v249 = vld [vmem:[%s200 + $0x90] sm:$0xf]
      %v250 = vld [vmem:[%s200 + $0x94] sm:$0xf]
      %v251 = vld [vmem:[%s200 + $0x98] sm:$0xf]
      %v252 = vld [vmem:[%s200 + $0x9c] sm:$0xf]
      %v253 = vld [vmem:[%s200 + $0xa0] sm:$0xf]
      %v254 = vld [vmem:[%s200 + $0xa4] sm:$0xf]
      %v255 = vld [vmem:[%s200 + $0xa8] sm:$0xf]
      %v256 = vld [vmem:[%s200 + $0xac] sm:$0xf]
      %v257 = vld [vmem:[%s200 + $0xb0] sm:$0xf]
      %v258 = vld [vmem:[%s200 + $0xb4] sm:$0xf]
      %v259 = vld [vmem:[%s200 + $0xb8] sm:$0xf]
      %v260 = vld [vmem:[%s200 + $0xbc] sm:$0xf]
      %v261 = vld [vmem:[%s200 + $0xc0] sm:$0xf]
      %v262 = vld [vmem:[%s200 + $0xc4] sm:$0xf]
      %v263 = vld [vmem:[%s200 + $0xc8] sm:$0xf]
      %v264 = vld [vmem:[%s200 + $0xcc] sm:$0xf]
      %v265 = vld [vmem:[%s200 + $0xd0] sm:$0xf]
      %v266 = vld [vmem:[%s200 + $0xd4] sm:$0xf]
      %v267 = vld [vmem:[%s200 + $0xd8] sm:$0xf]
      %v268 = vld [vmem:[%s200 + $0xdc] sm:$0xf]
      %v269 = vld [vmem:[%s200 + $0xe0] sm:$0xf]
      %v270 = vld [vmem:[%s200 + $0xe4] sm:$0xf]
      %v271 = vld [vmem:[%s200 + $0xe8] sm:$0xf]
      %v272 = vld [vmem:[%s200 + $0xec] sm:$0xf]
      %v273 = vld [vmem:[%s200 + $0xf0] sm:$0xf]
      %v274 = vld [vmem:[%s200 + $0xf4] sm:$0xf]
      %v275 = vld [vmem:[%s200 + $0xf8] sm:$0xf]
      %v276 = vld [vmem:[%s200 + $0xfc] sm:$0xf]
      %v277 = vld [vmem:[%s1] sm:$0xf]
      %v278 = vld [vmem:[%s1 + $0x4] sm:$0xf]
      %v279 = vld [vmem:[%s1 + $0x8] sm:$0xf]
      %v280 = vld [vmem:[%s1 + $0xc] sm:$0xf]
      %v281 = vld [vmem:[%s2] sm:$0x1]
      %v283 = vperm.slane %v281, 0
      %v349 = vunpack.c.l.b16 %v213
      %v350 = vunpack.c.l.b16 %v214
      %v351 = vunpack.c.l.b16 %v215
      %v352 = vunpack.c.l.b16 %v216
      %v353 = vunpack.c.l.b16 %v217
      %v354 = vunpack.c.l.b16 %v218
      %v355 = vunpack.c.l.b16 %v219
      %v356 = vunpack.c.l.b16 %v220
      %v357 = vunpack.c.l.b16 %v221
      %v358 = vunpack.c.l.b16 %v222
      %v359 = vunpack.c.l.b16 %v223
      %v360 = vunpack.c.l.b16 %v224
      %v361 = vunpack.c.l.b16 %v225
      %v362 = vunpack.c.l.b16 %v226
      %v363 = vunpack.c.l.b16 %v227
      %v364 = vunpack.c.l.b16 %v228
      %v365 = vunpack.c.l.b16 %v229
      %v366 = vunpack.c.l.b16 %v230
      %v367 = vunpack.c.l.b16 %v231
      %v368 = vunpack.c.l.b16 %v232
      %v369 = vunpack.c.l.b16 %v233
      %v370 = vunpack.c.l.b16 %v234
      %v371 = vunpack.c.l.b16 %v235
      %v372 = vunpack.c.l.b16 %v236
      %v373 = vunpack.c.l.b16 %v237
      %v374 = vunpack.c.l.b16 %v238
      %v375 = vunpack.c.l.b16 %v239
      %v376 = vunpack.c.l.b16 %v240
      %v377 = vunpack.c.l.b16 %v241
      %v378 = vunpack.c.l.b16 %v242
      %v379 = vunpack.c.l.b16 %v243
      %v380 = vunpack.c.l.b16 %v244
      %v381 = vunpack.c.l.b16 %v245
      %v382 = vunpack.c.l.b16 %v246
      %v383 = vunpack.c.l.b16 %v247
      %v384 = vunpack.c.l.b16 %v248
      %v385 = vunpack.c.l.b16 %v249
      %v386 = vunpack.c.l.b16 %v250
      %v387 = vunpack.c.l.b16 %v251
      %v388 = vunpack.c.l.b16 %v252
      %v389 = vunpack.c.l.b16 %v253
      %v390 = vunpack.c.l.b16 %v254
      %v391 = vunpack.c.l.b16 %v255
      %v392 = vunpack.c.l.b16 %v256
      %v393 = vunpack.c.l.b16 %v257
      %v394 = vunpack.c.l.b16 %v258
      %v395 = vunpack.c.l.b16 %v259
      %v396 = vunpack.c.l.b16 %v260
      %v397 = vunpack.c.l.b16 %v261
      %v398 = vunpack.c.l.b16 %v262
      %v399 = vunpack.c.l.b16 %v263
      %v400 = vunpack.c.l.b16 %v264
      %v401 = vunpack.c.l.b16 %v265
      %v402 = vunpack.c.l.b16 %v266
      %v403 = vunpack.c.l.b16 %v267
      %v404 = vunpack.c.l.b16 %v268
      %v405 = vunpack.c.l.b16 %v269
      %v406 = vunpack.c.l.b16 %v270
      %v407 = vunpack.c.l.b16 %v271
      %v408 = vunpack.c.l.b16 %v272
      %v409 = vunpack.c.l.b16 %v273
      %v410 = vunpack.c.l.b16 %v274
      %v411 = vunpack.c.l.b16 %v275
      %v412 = vunpack.c.l.b16 %v276
      %v413 = vpack.c.b16 %v350, %v349
      %v414 = vpack.c.b16 %v352, %v351
      %v415 = vpack.c.b16 %v354, %v353
      %v416 = vpack.c.b16 %v356, %v355
      %v417 = vpack.c.b16 %v358, %v357
      %v418 = vpack.c.b16 %v360, %v359
      %v419 = vpack.c.b16 %v362, %v361
      %v420 = vpack.c.b16 %v364, %v363
      %v421 = vpack.c.b16 %v366, %v365
      %v422 = vpack.c.b16 %v368, %v367
      %v423 = vpack.c.b16 %v370, %v369
      %v424 = vpack.c.b16 %v372, %v371
      %v425 = vpack.c.b16 %v374, %v373
      %v426 = vpack.c.b16 %v376, %v375
      %v427 = vpack.c.b16 %v378, %v377
      %v428 = vpack.c.b16 %v380, %v379
      %v429 = vpack.c.b16 %v382, %v381
      %v430 = vpack.c.b16 %v384, %v383
      %v431 = vpack.c.b16 %v386, %v385
      %v432 = vpack.c.b16 %v388, %v387
      %v433 = vpack.c.b16 %v390, %v389
      %v434 = vpack.c.b16 %v392, %v391
      %v435 = vpack.c.b16 %v394, %v393
      %v436 = vpack.c.b16 %v396, %v395
      %v437 = vpack.c.b16 %v398, %v397
      %v438 = vpack.c.b16 %v400, %v399
      %v439 = vpack.c.b16 %v402, %v401
      %v440 = vpack.c.b16 %v404, %v403
      %v441 = vpack.c.b16 %v406, %v405
      %v442 = vpack.c.b16 %v408, %v407
      %v443 = vpack.c.b16 %v410, %v409
      %v444 = vpack.c.b16 %v412, %v411
      %v449 = vunpack.c.l.b16 %v277
      %v450 = vunpack.c.l.b16 %v278
      %v451 = vunpack.c.l.b16 %v279
      %v452 = vunpack.c.l.b16 %v280
      %v453 = vpack.c.b16 %v450, %v449
      %v454 = vpack.c.b16 %v452, %v451
      %vm457 = vcmask 261120
      %v459 = vsel %vm457, %v413, 0
      %v462 = vsel %vm457, %v414, 0
      %v465 = vsel %vm457, %v415, 0
      %v468 = vsel %vm457, %v416, 0
      %v471 = vsel %vm457, %v417, 0
      %v474 = vsel %vm457, %v418, 0
      %v477 = vsel %vm457, %v419, 0
      %v480 = vsel %vm457, %v420, 0
      %v483 = vsel %vm457, %v421, 0
      %v486 = vsel %vm457, %v422, 0
      %v489 = vsel %vm457, %v423, 0
      %v492 = vsel %vm457, %v424, 0
      %v495 = vsel %vm457, %v425, 0
      %v498 = vsel %vm457, %v426, 0
      %v501 = vsel %vm457, %v427, 0
      %v504 = vsel %vm457, %v428, 0
      %v507 = vsel %vm457, %v429, 0
      %v510 = vsel %vm457, %v430, 0
      %v513 = vsel %vm457, %v431, 0
      %v516 = vsel %vm457, %v432, 0
      %v519 = vsel %vm457, %v433, 0
      %v522 = vsel %vm457, %v434, 0
      %v525 = vsel %vm457, %v435, 0
      %v528 = vsel %vm457, %v436, 0
      %v531 = vsel %vm457, %v437, 0
      %v534 = vsel %vm457, %v438, 0
      %v537 = vsel %vm457, %v439, 0
      %v540 = vsel %vm457, %v440, 0
      %v543 = vsel %vm457, %v441, 0
      %v546 = vsel %vm457, %v442, 0
      %v549 = vsel %vm457, %v443, 0
      %v552 = vsel %vm457, %v444, 0
      %554 = vmatpush.bf16.msra.mxu0 0
      %555 = vmatpush.bf16.msra.mxu0 0
      %556 = vmatpush.bf16.msra.mxu0 0
      %557 = vmatpush.bf16.msra.mxu0 0
      %558 = vmatpush.bf16.msra.mxu0 0
      %559 = vmatpush.bf16.msra.mxu0 0
      %560 = vmatpush.bf16.msra.mxu0 %v454
      %561 = vmatpush.bf16.msra.mxu0 %v453
      %562 = vmatmul.bf16.gmra.mxu0 %v459
      %v563 = vpop.f32.mrf.mxu0
      %v564 = vadd.f32 %v283, %v563
      %v565 = vpop.f32.mrf.mxu0
      %v566 = vadd.f32 %v283, %v565
      %567 = vmatmul.bf16.gmra.mxu0 %v462
      %v568 = vpop.f32.mrf.mxu0
      %v569 = vadd.f32 %v283, %v568
      %v570 = vpop.f32.mrf.mxu0
      %v571 = vadd.f32 %v283, %v570
      %572 = vmatmul.bf16.gmra.mxu0 %v465
      %v573 = vpop.f32.mrf.mxu0
      %v574 = vadd.f32 %v283, %v573
      %v575 = vpop.f32.mrf.mxu0
      %v576 = vadd.f32 %v283, %v575
      %577 = vmatmul.bf16.gmra.mxu0 %v468
      %v578 = vpop.f32.mrf.mxu0
      %v579 = vadd.f32 %v283, %v578
      %v580 = vpop.f32.mrf.mxu0
      %v581 = vadd.f32 %v283, %v580
      %582 = vmatmul.bf16.gmra.mxu0 %v471
      %v583 = vpop.f32.mrf.mxu0
      %v584 = vadd.f32 %v283, %v583
      %v585 = vpop.f32.mrf.mxu0
      %v586 = vadd.f32 %v283, %v585
      %587 = vmatmul.bf16.gmra.mxu0 %v474
      %v588 = vpop.f32.mrf.mxu0
      %v589 = vadd.f32 %v283, %v588
      %v590 = vpop.f32.mrf.mxu0
      %v591 = vadd.f32 %v283, %v590
      %592 = vmatmul.bf16.gmra.mxu0 %v477
      %v593 = vpop.f32.mrf.mxu0
      %v594 = vadd.f32 %v283, %v593
      %v595 = vpop.f32.mrf.mxu0
      %v596 = vadd.f32 %v283, %v595
      %597 = vmatmul.bf16.gmra.mxu0 %v480
      %v598 = vpop.f32.mrf.mxu0
      %v599 = vadd.f32 %v283, %v598
      %v600 = vpop.f32.mrf.mxu0
      %v601 = vadd.f32 %v283, %v600
      %602 = vmatmul.bf16.gmra.mxu0 %v483
      %v603 = vpop.f32.mrf.mxu0
      %v604 = vadd.f32 %v283, %v603
      %v605 = vpop.f32.mrf.mxu0
      %v606 = vadd.f32 %v283, %v605
      %607 = vmatmul.bf16.gmra.mxu0 %v486
      %v608 = vpop.f32.mrf.mxu0
      %v609 = vadd.f32 %v283, %v608
      %v610 = vpop.f32.mrf.mxu0
      %v611 = vadd.f32 %v283, %v610
      %612 = vmatmul.bf16.gmra.mxu0 %v489
      %v613 = vpop.f32.mrf.mxu0
      %v614 = vadd.f32 %v283, %v613
      %v615 = vpop.f32.mrf.mxu0
      %v616 = vadd.f32 %v283, %v615
      %617 = vmatmul.bf16.gmra.mxu0 %v492
      %v618 = vpop.f32.mrf.mxu0
      %v619 = vadd.f32 %v283, %v618
      %v620 = vpop.f32.mrf.mxu0
      %v621 = vadd.f32 %v283, %v620
      %622 = vmatmul.bf16.gmra.mxu0 %v495
      %v623 = vpop.f32.mrf.mxu0
      %v624 = vadd.f32 %v283, %v623
      %v625 = vpop.f32.mrf.mxu0
      %v626 = vadd.f32 %v283, %v625
      %627 = vmatmul.bf16.gmra.mxu0 %v498
      %v628 = vpop.f32.mrf.mxu0
      %v629 = vadd.f32 %v283, %v628
      %v630 = vpop.f32.mrf.mxu0
      %v631 = vadd.f32 %v283, %v630
      %632 = vmatmul.bf16.gmra.mxu0 %v501
      %v633 = vpop.f32.mrf.mxu0
      %v634 = vadd.f32 %v283, %v633
      %v635 = vpop.f32.mrf.mxu0
      %v636 = vadd.f32 %v283, %v635
      %637 = vmatmul.bf16.gmra.mxu0 %v504
      %v638 = vpop.f32.mrf.mxu0
      %v639 = vadd.f32 %v283, %v638
      %v640 = vpop.f32.mrf.mxu0
      %v641 = vadd.f32 %v283, %v640
      %642 = vmatmul.bf16.gmra.mxu0 %v507
      %v643 = vpop.f32.mrf.mxu0
      %v644 = vadd.f32 %v283, %v643
      %v645 = vpop.f32.mrf.mxu0
      %v646 = vadd.f32 %v283, %v645
      %647 = vmatmul.bf16.gmra.mxu0 %v510
      %v648 = vpop.f32.mrf.mxu0
      %v649 = vadd.f32 %v283, %v648
      %v650 = vpop.f32.mrf.mxu0
      %v651 = vadd.f32 %v283, %v650
      %652 = vmatmul.bf16.gmra.mxu0 %v513
      %v653 = vpop.f32.mrf.mxu0
      %v654 = vadd.f32 %v283, %v653
      %v655 = vpop.f32.mrf.mxu0
      %v656 = vadd.f32 %v283, %v655
      %657 = vmatmul.bf16.gmra.mxu0 %v516
      %v658 = vpop.f32.mrf.mxu0
      %v659 = vadd.f32 %v283, %v658
      %v660 = vpop.f32.mrf.mxu0
      %v661 = vadd.f32 %v283, %v660
      %662 = vmatmul.bf16.gmra.mxu0 %v519
      %v663 = vpop.f32.mrf.mxu0
      %v664 = vadd.f32 %v283, %v663
      %v665 = vpop.f32.mrf.mxu0
      %v666 = vadd.f32 %v283, %v665
      %667 = vmatmul.bf16.gmra.mxu0 %v522
      %v668 = vpop.f32.mrf.mxu0
      %v669 = vadd.f32 %v283, %v668
      %v670 = vpop.f32.mrf.mxu0
      %v671 = vadd.f32 %v283, %v670
      %672 = vmatmul.bf16.gmra.mxu0 %v525
      %v673 = vpop.f32.mrf.mxu0
      %v674 = vadd.f32 %v283, %v673
      %v675 = vpop.f32.mrf.mxu0
      %v676 = vadd.f32 %v283, %v675
      %677 = vmatmul.bf16.gmra.mxu0 %v528
      %v678 = vpop.f32.mrf.mxu0
      %v679 = vadd.f32 %v283, %v678
      %v680 = vpop.f32.mrf.mxu0
      %v681 = vadd.f32 %v283, %v680
      %682 = vmatmul.bf16.gmra.mxu0 %v531
      %v683 = vpop.f32.mrf.mxu0
      %v684 = vadd.f32 %v283, %v683
      %v685 = vpop.f32.mrf.mxu0
      %v686 = vadd.f32 %v283, %v685
      %687 = vmatmul.bf16.gmra.mxu0 %v534
      %v688 = vpop.f32.mrf.mxu0
      %v689 = vadd.f32 %v283, %v688
      %v690 = vpop.f32.mrf.mxu0
      %v691 = vadd.f32 %v283, %v690
      %692 = vmatmul.bf16.gmra.mxu0 %v537
      %v693 = vpop.f32.mrf.mxu0
      %v694 = vadd.f32 %v283, %v693
      %v695 = vpop.f32.mrf.mxu0
      %v696 = vadd.f32 %v283, %v695
      %697 = vmatmul.bf16.gmra.mxu0 %v540
      %v698 = vpop.f32.mrf.mxu0
      %v699 = vadd.f32 %v283, %v698
      %v700 = vpop.f32.mrf.mxu0
      %v701 = vadd.f32 %v283, %v700
      %702 = vmatmul.bf16.gmra.mxu0 %v543
      %v703 = vpop.f32.mrf.mxu0
      %v704 = vadd.f32 %v283, %v703
      %v705 = vpop.f32.mrf.mxu0
      %v706 = vadd.f32 %v283, %v705
      %707 = vmatmul.bf16.gmra.mxu0 %v546
      %v708 = vpop.f32.mrf.mxu0
      %v709 = vadd.f32 %v283, %v708
      %v710 = vpop.f32.mrf.mxu0
      %v711 = vadd.f32 %v283, %v710
      %712 = vmatmul.bf16.gmra.mxu0 %v549
      %v713 = vpop.f32.mrf.mxu0
      %v714 = vadd.f32 %v283, %v713
      %v715 = vpop.f32.mrf.mxu0
      %v716 = vadd.f32 %v283, %v715
      %717 = vmatmul.bf16.gmra.mxu0 %v552
      %v718 = vpop.f32.mrf.mxu0
      %v719 = vadd.f32 %v283, %v718
      %v720 = vpop.f32.mrf.mxu0
      %v721 = vadd.f32 %v283, %v720
      %722 = vdwg.mxu0
      %v723 = vmax.f32 %v564, 0.0
      %v724 = vmax.f32 %v566, 0.0
      %v725 = vmax.f32 %v569, 0.0
      %v726 = vmax.f32 %v571, 0.0
      %v727 = vmax.f32 %v574, 0.0
      %v728 = vmax.f32 %v576, 0.0
      %v729 = vmax.f32 %v579, 0.0
      %v730 = vmax.f32 %v581, 0.0
      %v731 = vmax.f32 %v584, 0.0
      %v732 = vmax.f32 %v586, 0.0
      %v733 = vmax.f32 %v589, 0.0
      %v734 = vmax.f32 %v591, 0.0
      %v735 = vmax.f32 %v594, 0.0
      %v736 = vmax.f32 %v596, 0.0
      %v737 = vmax.f32 %v599, 0.0
      %v738 = vmax.f32 %v601, 0.0
      %v739 = vmax.f32 %v604, 0.0
      %v740 = vmax.f32 %v606, 0.0
      %v741 = vmax.f32 %v609, 0.0
      %v742 = vmax.f32 %v611, 0.0
      %v743 = vmax.f32 %v614, 0.0
      %v744 = vmax.f32 %v616, 0.0
      %v745 = vmax.f32 %v619, 0.0
      %v746 = vmax.f32 %v621, 0.0
      %v747 = vmax.f32 %v624, 0.0
      %v748 = vmax.f32 %v626, 0.0
      %v749 = vmax.f32 %v629, 0.0
      %v750 = vmax.f32 %v631, 0.0
      %v751 = vmax.f32 %v634, 0.0
      %v752 = vmax.f32 %v636, 0.0
      %v753 = vmax.f32 %v639, 0.0
      %v754 = vmax.f32 %v641, 0.0
      %v755 = vmax.f32 %v644, 0.0
      %v756 = vmax.f32 %v646, 0.0
      %v757 = vmax.f32 %v649, 0.0
      %v758 = vmax.f32 %v651, 0.0
      %v759 = vmax.f32 %v654, 0.0
      %v760 = vmax.f32 %v656, 0.0
      %v761 = vmax.f32 %v659, 0.0
      %v762 = vmax.f32 %v661, 0.0
      %v763 = vmax.f32 %v664, 0.0
      %v764 = vmax.f32 %v666, 0.0
      %v765 = vmax.f32 %v669, 0.0
      %v766 = vmax.f32 %v671, 0.0
      %v767 = vmax.f32 %v674, 0.0
      %v768 = vmax.f32 %v676, 0.0
      %v769 = vmax.f32 %v679, 0.0
      %v770 = vmax.f32 %v681, 0.0
      %v771 = vmax.f32 %v684, 0.0
      %v772 = vmax.f32 %v686, 0.0
      %v773 = vmax.f32 %v689, 0.0
      %v774 = vmax.f32 %v691, 0.0
      %v775 = vmax.f32 %v694, 0.0
      %v776 = vmax.f32 %v696, 0.0
      %v777 = vmax.f32 %v699, 0.0
      %v778 = vmax.f32 %v701, 0.0
      %v779 = vmax.f32 %v704, 0.0
      %v780 = vmax.f32 %v706, 0.0
      %v781 = vmax.f32 %v709, 0.0
      %v782 = vmax.f32 %v711, 0.0
      %v783 = vmax.f32 %v714, 0.0
      %v784 = vmax.f32 %v716, 0.0
      %v785 = vmax.f32 %v719, 0.0
      %v786 = vmax.f32 %v721, 0.0
      %vm787 = vcmask 64512
      %788 = vst.msk [vmem:[%s206] sm:$0xff] %vm787, %v723
      %789 = vst.msk [vmem:[%s206 + $0x8] sm:$0xff] %vm787, %v724
      %790 = vst.msk [vmem:[%s206 + $0x10] sm:$0xff] %vm787, %v725
      %791 = vst.msk [vmem:[%s206 + $0x18] sm:$0xff] %vm787, %v726
      %792 = vst.msk [vmem:[%s206 + $0x20] sm:$0xff] %vm787, %v727
      %793 = vst.msk [vmem:[%s206 + $0x28] sm:$0xff] %vm787, %v728
      %794 = vst.msk [vmem:[%s206 + $0x30] sm:$0xff] %vm787, %v729
      %795 = vst.msk [vmem:[%s206 + $0x38] sm:$0xff] %vm787, %v730
      %796 = vst.msk [vmem:[%s206 + $0x40] sm:$0xff] %vm787, %v731
      %797 = vst.msk [vmem:[%s206 + $0x48] sm:$0xff] %vm787, %v732
      %798 = vst.msk [vmem:[%s206 + $0x50] sm:$0xff] %vm787, %v733
      %799 = vst.msk [vmem:[%s206 + $0x58] sm:$0xff] %vm787, %v734
      %800 = vst.msk [vmem:[%s206 + $0x60] sm:$0xff] %vm787, %v735
      %801 = vst.msk [vmem:[%s206 + $0x68] sm:$0xff] %vm787, %v736
      %802 = vst.msk [vmem:[%s206 + $0x70] sm:$0xff] %vm787, %v737
      %803 = vst.msk [vmem:[%s206 + $0x78] sm:$0xff] %vm787, %v738
      %804 = vst.msk [vmem:[%s206 + $0x80] sm:$0xff] %vm787, %v739
      %805 = vst.msk [vmem:[%s206 + $0x88] sm:$0xff] %vm787, %v740
      %806 = vst.msk [vmem:[%s206 + $0x90] sm:$0xff] %vm787, %v741
      %807 = vst.msk [vmem:[%s206 + $0x98] sm:$0xff] %vm787, %v742
      %808 = vst.msk [vmem:[%s206 + $0xa0] sm:$0xff] %vm787, %v743
      %809 = vst.msk [vmem:[%s206 + $0xa8] sm:$0xff] %vm787, %v744
      %810 = vst.msk [vmem:[%s206 + $0xb0] sm:$0xff] %vm787, %v745
      %811 = vst.msk [vmem:[%s206 + $0xb8] sm:$0xff] %vm787, %v746
      %812 = vst.msk [vmem:[%s206 + $0xc0] sm:$0xff] %vm787, %v747
      %813 = vst.msk [vmem:[%s206 + $0xc8] sm:$0xff] %vm787, %v748
      %814 = vst.msk [vmem:[%s206 + $0xd0] sm:$0xff] %vm787, %v749
      %815 = vst.msk [vmem:[%s206 + $0xd8] sm:$0xff] %vm787, %v750
      %816 = vst.msk [vmem:[%s206 + $0xe0] sm:$0xff] %vm787, %v751
      %817 = vst.msk [vmem:[%s206 + $0xe8] sm:$0xff] %vm787, %v752
      %818 = vst.msk [vmem:[%s206 + $0xf0] sm:$0xff] %vm787, %v753
      %819 = vst.msk [vmem:[%s206 + $0xf8] sm:$0xff] %vm787, %v754
      %820 = vst.msk [vmem:[%s206 + $0x100] sm:$0xff] %vm787, %v755
      %821 = vst.msk [vmem:[%s206 + $0x108] sm:$0xff] %vm787, %v756
      %822 = vst.msk [vmem:[%s206 + $0x110] sm:$0xff] %vm787, %v757
      %823 = vst.msk [vmem:[%s206 + $0x118] sm:$0xff] %vm787, %v758
      %824 = vst.msk [vmem:[%s206 + $0x120] sm:$0xff] %vm787, %v759
      %825 = vst.msk [vmem:[%s206 + $0x128] sm:$0xff] %vm787, %v760
      %826 = vst.msk [vmem:[%s206 + $0x130] sm:$0xff] %vm787, %v761
      %827 = vst.msk [vmem:[%s206 + $0x138] sm:$0xff] %vm787, %v762
      %828 = vst.msk [vmem:[%s206 + $0x140] sm:$0xff] %vm787, %v763
      %829 = vst.msk [vmem:[%s206 + $0x148] sm:$0xff] %vm787, %v764
      %830 = vst.msk [vmem:[%s206 + $0x150] sm:$0xff] %vm787, %v765
      %831 = vst.msk [vmem:[%s206 + $0x158] sm:$0xff] %vm787, %v766
      %832 = vst.msk [vmem:[%s206 + $0x160] sm:$0xff] %vm787, %v767
      %833 = vst.msk [vmem:[%s206 + $0x168] sm:$0xff] %vm787, %v768
      %834 = vst.msk [vmem:[%s206 + $0x170] sm:$0xff] %vm787, %v769
      %835 = vst.msk [vmem:[%s206 + $0x178] sm:$0xff] %vm787, %v770
      %836 = vst.msk [vmem:[%s206 + $0x180] sm:$0xff] %vm787, %v771
      %837 = vst.msk [vmem:[%s206 + $0x188] sm:$0xff] %vm787, %v772
      %838 = vst.msk [vmem:[%s206 + $0x190] sm:$0xff] %vm787, %v773
      %839 = vst.msk [vmem:[%s206 + $0x198] sm:$0xff] %vm787, %v774
      %840 = vst.msk [vmem:[%s206 + $0x1a0] sm:$0xff] %vm787, %v775
      %841 = vst.msk [vmem:[%s206 + $0x1a8] sm:$0xff] %vm787, %v776
      %842 = vst.msk [vmem:[%s206 + $0x1b0] sm:$0xff] %vm787, %v777
      %843 = vst.msk [vmem:[%s206 + $0x1b8] sm:$0xff] %vm787, %v778
      %844 = vst.msk [vmem:[%s206 + $0x1c0] sm:$0xff] %vm787, %v779
      %845 = vst.msk [vmem:[%s206 + $0x1c8] sm:$0xff] %vm787, %v780
      %846 = vst.msk [vmem:[%s206 + $0x1d0] sm:$0xff] %vm787, %v781
      %847 = vst.msk [vmem:[%s206 + $0x1d8] sm:$0xff] %vm787, %v782
      %848 = vst.msk [vmem:[%s206 + $0x1e0] sm:$0xff] %vm787, %v783
      %849 = vst.msk [vmem:[%s206 + $0x1e8] sm:$0xff] %vm787, %v784
      %850 = vst.msk [vmem:[%s206 + $0x1f0] sm:$0xff] %vm787, %v785
      %851 = vst.msk [vmem:[%s206 + $0x1f8] sm:$0xff] %vm787, %v786
      %v852 = vsel %vm787, %v723, 0.0
      %v853 = vsel %vm787, %v724, 0.0
      %v854 = vadd.f32 %v852, %v853
      %v855 = vsel %vm787, %v725, 0.0
      %v856 = vadd.f32 %v854, %v855
      %v857 = vsel %vm787, %v726, 0.0
      %v858 = vadd.f32 %v856, %v857
      %v859 = vsel %vm787, %v727, 0.0
      %v860 = vadd.f32 %v858, %v859
      %v861 = vsel %vm787, %v728, 0.0
      %v862 = vadd.f32 %v860, %v861
      %v863 = vsel %vm787, %v729, 0.0
      %v864 = vadd.f32 %v862, %v863
      %v865 = vsel %vm787, %v730, 0.0
      %v866 = vadd.f32 %v864, %v865
      %v867 = vsel %vm787, %v731, 0.0
      %v868 = vadd.f32 %v866, %v867
      %v869 = vsel %vm787, %v732, 0.0
      %v870 = vadd.f32 %v868, %v869
      %v871 = vsel %vm787, %v733, 0.0
      %v872 = vadd.f32 %v870, %v871
      %v873 = vsel %vm787, %v734, 0.0
      %v874 = vadd.f32 %v872, %v873
      %v875 = vsel %vm787, %v735, 0.0
      %v876 = vadd.f32 %v874, %v875
      %v877 = vsel %vm787, %v736, 0.0
      %v878 = vadd.f32 %v876, %v877
      %v879 = vsel %vm787, %v737, 0.0
      %v880 = vadd.f32 %v878, %v879
      %v881 = vsel %vm787, %v738, 0.0
      %v882 = vadd.f32 %v880, %v881
      %v883 = vsel %vm787, %v739, 0.0
      %v884 = vadd.f32 %v882, %v883
      %v885 = vsel %vm787, %v740, 0.0
      %v886 = vadd.f32 %v884, %v885
      %v887 = vsel %vm787, %v741, 0.0
      %v888 = vadd.f32 %v886, %v887
      %v889 = vsel %vm787, %v742, 0.0
      %v890 = vadd.f32 %v888, %v889
      %v891 = vsel %vm787, %v743, 0.0
      %v892 = vadd.f32 %v890, %v891
      %v893 = vsel %vm787, %v744, 0.0
      %v894 = vadd.f32 %v892, %v893
      %v895 = vsel %vm787, %v745, 0.0
      %v896 = vadd.f32 %v894, %v895
      %v897 = vsel %vm787, %v746, 0.0
      %v898 = vadd.f32 %v896, %v897
      %v899 = vsel %vm787, %v747, 0.0
      %v900 = vadd.f32 %v898, %v899
      %v901 = vsel %vm787, %v748, 0.0
      %v902 = vadd.f32 %v900, %v901
      %v903 = vsel %vm787, %v749, 0.0
      %v904 = vadd.f32 %v902, %v903
      %v905 = vsel %vm787, %v750, 0.0
      %v906 = vadd.f32 %v904, %v905
      %v907 = vsel %vm787, %v751, 0.0
      %v908 = vadd.f32 %v906, %v907
      %v909 = vsel %vm787, %v752, 0.0
      %v910 = vadd.f32 %v908, %v909
      %v911 = vsel %vm787, %v753, 0.0
      %v912 = vadd.f32 %v910, %v911
      %v913 = vsel %vm787, %v754, 0.0
      %v914 = vadd.f32 %v912, %v913
      %v915 = vsel %vm787, %v755, 0.0
      %v916 = vadd.f32 %v914, %v915
      %v917 = vsel %vm787, %v756, 0.0
      %v918 = vadd.f32 %v916, %v917
      %v919 = vsel %vm787, %v757, 0.0
      %v920 = vadd.f32 %v918, %v919
      %v921 = vsel %vm787, %v758, 0.0
      %v922 = vadd.f32 %v920, %v921
      %v923 = vsel %vm787, %v759, 0.0
      %v924 = vadd.f32 %v922, %v923
      %v925 = vsel %vm787, %v760, 0.0
      %v926 = vadd.f32 %v924, %v925
      %v927 = vsel %vm787, %v761, 0.0
      %v928 = vadd.f32 %v926, %v927
      %v929 = vsel %vm787, %v762, 0.0
      %v930 = vadd.f32 %v928, %v929
      %v931 = vsel %vm787, %v763, 0.0
      %v932 = vadd.f32 %v930, %v931
      %v933 = vsel %vm787, %v764, 0.0
      %v934 = vadd.f32 %v932, %v933
      %v935 = vsel %vm787, %v765, 0.0
      %v936 = vadd.f32 %v934, %v935
      %v937 = vsel %vm787, %v766, 0.0
      %v938 = vadd.f32 %v936, %v937
      %v939 = vsel %vm787, %v767, 0.0
      %v940 = vadd.f32 %v938, %v939
      %v941 = vsel %vm787, %v768, 0.0
      %v942 = vadd.f32 %v940, %v941
      %v943 = vsel %vm787, %v769, 0.0
      %v944 = vadd.f32 %v942, %v943
      %v945 = vsel %vm787, %v770, 0.0
      %v946 = vadd.f32 %v944, %v945
      %v947 = vsel %vm787, %v771, 0.0
      %v948 = vadd.f32 %v946, %v947
      %v949 = vsel %vm787, %v772, 0.0
      %v950 = vadd.f32 %v948, %v949
      %v951 = vsel %vm787, %v773, 0.0
      %v952 = vadd.f32 %v950, %v951
      %v953 = vsel %vm787, %v774, 0.0
      %v954 = vadd.f32 %v952, %v953
      %v955 = vsel %vm787, %v775, 0.0
      %v956 = vadd.f32 %v954, %v955
      %v957 = vsel %vm787, %v776, 0.0
      %v958 = vadd.f32 %v956, %v957
      %v959 = vsel %vm787, %v777, 0.0
      %v960 = vadd.f32 %v958, %v959
      %v961 = vsel %vm787, %v778, 0.0
      %v962 = vadd.f32 %v960, %v961
      %v963 = vsel %vm787, %v779, 0.0
      %v964 = vadd.f32 %v962, %v963
      %v965 = vsel %vm787, %v780, 0.0
      %v966 = vadd.f32 %v964, %v965
      %v967 = vsel %vm787, %v781, 0.0
      %v968 = vadd.f32 %v966, %v967
      %v969 = vsel %vm787, %v782, 0.0
      %v970 = vadd.f32 %v968, %v969
      %v971 = vsel %vm787, %v783, 0.0
      %v972 = vadd.f32 %v970, %v971
      %v973 = vsel %vm787, %v784, 0.0
      %v974 = vadd.f32 %v972, %v973
      %v975 = vsel %vm787, %v785, 0.0
      %v976 = vadd.f32 %v974, %v975
      %v977 = vsel %vm787, %v786, 0.0
      %v978 = vadd.f32 %v976, %v977
      %v979 = vrot.slane %v978, 4
      %v980 = vadd.f32 %v978, %v979
      %v981 = vrot.slane %v980, 2
      %v982 = vadd.f32 %v980, %v981
      %v983 = vrot.slane %v982, 1
      %v984 = vadd.f32 %v982, %v983
      %vm985 = vcmask 57344
      %986 = vst.msk [vmem:[%s211] sm:$0x1] %vm985, %v984
      %v987 = vmul.f32 %v723, %v723
      %v988 = vmul.f32 %v724, %v724
      %v989 = vmul.f32 %v725, %v725
      %v990 = vmul.f32 %v726, %v726
      %v991 = vmul.f32 %v727, %v727
      %v992 = vmul.f32 %v728, %v728
      %v993 = vmul.f32 %v729, %v729
      %v994 = vmul.f32 %v730, %v730
      %v995 = vmul.f32 %v731, %v731
      %v996 = vmul.f32 %v732, %v732
      %v997 = vmul.f32 %v733, %v733
      %v998 = vmul.f32 %v734, %v734
      %v999 = vmul.f32 %v735, %v735
      %v1000 = vmul.f32 %v736, %v736
      %v1001 = vmul.f32 %v737, %v737
      %v1002 = vmul.f32 %v738, %v738
      %v1003 = vmul.f32 %v739, %v739
      %v1004 = vmul.f32 %v740, %v740
      %v1005 = vmul.f32 %v741, %v741
      %v1006 = vmul.f32 %v742, %v742
      %v1007 = vmul.f32 %v743, %v743
      %v1008 = vmul.f32 %v744, %v744
      %v1009 = vmul.f32 %v745, %v745
      %v1010 = vmul.f32 %v746, %v746
      %v1011 = vmul.f32 %v747, %v747
      %v1012 = vmul.f32 %v748, %v748
      %v1013 = vmul.f32 %v749, %v749
      %v1014 = vmul.f32 %v750, %v750
      %v1015 = vmul.f32 %v751, %v751
      %v1016 = vmul.f32 %v752, %v752
      %v1017 = vmul.f32 %v753, %v753
      %v1018 = vmul.f32 %v754, %v754
      %v1019 = vmul.f32 %v755, %v755
      %v1020 = vmul.f32 %v756, %v756
      %v1021 = vmul.f32 %v757, %v757
      %v1022 = vmul.f32 %v758, %v758
      %v1023 = vmul.f32 %v759, %v759
      %v1024 = vmul.f32 %v760, %v760
      %v1025 = vmul.f32 %v761, %v761
      %v1026 = vmul.f32 %v762, %v762
      %v1027 = vmul.f32 %v763, %v763
      %v1028 = vmul.f32 %v764, %v764
      %v1029 = vmul.f32 %v765, %v765
      %v1030 = vmul.f32 %v766, %v766
      %v1031 = vmul.f32 %v767, %v767
      %v1032 = vmul.f32 %v768, %v768
      %v1033 = vmul.f32 %v769, %v769
      %v1034 = vmul.f32 %v770, %v770
      %v1035 = vmul.f32 %v771, %v771
      %v1036 = vmul.f32 %v772, %v772
      %v1037 = vmul.f32 %v773, %v773
      %v1038 = vmul.f32 %v774, %v774
      %v1039 = vmul.f32 %v775, %v775
      %v1040 = vmul.f32 %v776, %v776
      %v1041 = vmul.f32 %v777, %v777
      %v1042 = vmul.f32 %v778, %v778
      %v1043 = vmul.f32 %v779, %v779
      %v1044 = vmul.f32 %v780, %v780
      %v1045 = vmul.f32 %v781, %v781
      %v1046 = vmul.f32 %v782, %v782
      %v1047 = vmul.f32 %v783, %v783
      %v1048 = vmul.f32 %v784, %v784
      %v1049 = vmul.f32 %v785, %v785
      %v1050 = vmul.f32 %v786, %v786
      %v1051 = vsel %vm787, %v987, 0.0
      %v1052 = vsel %vm787, %v988, 0.0
      %v1053 = vadd.f32 %v1051, %v1052
      %v1054 = vsel %vm787, %v989, 0.0
      %v1055 = vadd.f32 %v1053, %v1054
      %v1056 = vsel %vm787, %v990, 0.0
      %v1057 = vadd.f32 %v1055, %v1056
      %v1058 = vsel %vm787, %v991, 0.0
      %v1059 = vadd.f32 %v1057, %v1058
      %v1060 = vsel %vm787, %v992, 0.0
      %v1061 = vadd.f32 %v1059, %v1060
      %v1062 = vsel %vm787, %v993, 0.0
      %v1063 = vadd.f32 %v1061, %v1062
      %v1064 = vsel %vm787, %v994, 0.0
      %v1065 = vadd.f32 %v1063, %v1064
      %v1066 = vsel %vm787, %v995, 0.0
      %v1067 = vadd.f32 %v1065, %v1066
      %v1068 = vsel %vm787, %v996, 0.0
      %v1069 = vadd.f32 %v1067, %v1068
      %v1070 = vsel %vm787, %v997, 0.0
      %v1071 = vadd.f32 %v1069, %v1070
      %v1072 = vsel %vm787, %v998, 0.0
      %v1073 = vadd.f32 %v1071, %v1072
      %v1074 = vsel %vm787, %v999, 0.0
      %v1075 = vadd.f32 %v1073, %v1074
      %v1076 = vsel %vm787, %v1000, 0.0
      %v1077 = vadd.f32 %v1075, %v1076
      %v1078 = vsel %vm787, %v1001, 0.0
      %v1079 = vadd.f32 %v1077, %v1078
      %v1080 = vsel %vm787, %v1002, 0.0
      %v1081 = vadd.f32 %v1079, %v1080
      %v1082 = vsel %vm787, %v1003, 0.0
      %v1083 = vadd.f32 %v1081, %v1082
      %v1084 = vsel %vm787, %v1004, 0.0
      %v1085 = vadd.f32 %v1083, %v1084
      %v1086 = vsel %vm787, %v1005, 0.0
      %v1087 = vadd.f32 %v1085, %v1086
      %v1088 = vsel %vm787, %v1006, 0.0
      %v1089 = vadd.f32 %v1087, %v1088
      %v1090 = vsel %vm787, %v1007, 0.0
      %v1091 = vadd.f32 %v1089, %v1090
      %v1092 = vsel %vm787, %v1008, 0.0
      %v1093 = vadd.f32 %v1091, %v1092
      %v1094 = vsel %vm787, %v1009, 0.0
      %v1095 = vadd.f32 %v1093, %v1094
      %v1096 = vsel %vm787, %v1010, 0.0
      %v1097 = vadd.f32 %v1095, %v1096
      %v1098 = vsel %vm787, %v1011, 0.0
      %v1099 = vadd.f32 %v1097, %v1098
      %v1100 = vsel %vm787, %v1012, 0.0
      %v1101 = vadd.f32 %v1099, %v1100
      %v1102 = vsel %vm787, %v1013, 0.0
      %v1103 = vadd.f32 %v1101, %v1102
      %v1104 = vsel %vm787, %v1014, 0.0
      %v1105 = vadd.f32 %v1103, %v1104
      %v1106 = vsel %vm787, %v1015, 0.0
      %v1107 = vadd.f32 %v1105, %v1106
      %v1108 = vsel %vm787, %v1016, 0.0
      %v1109 = vadd.f32 %v1107, %v1108
      %v1110 = vsel %vm787, %v1017, 0.0
      %v1111 = vadd.f32 %v1109, %v1110
      %v1112 = vsel %vm787, %v1018, 0.0
      %v1113 = vadd.f32 %v1111, %v1112
      %v1114 = vsel %vm787, %v1019, 0.0
      %v1115 = vadd.f32 %v1113, %v1114
      %v1116 = vsel %vm787, %v1020, 0.0
      %v1117 = vadd.f32 %v1115, %v1116
      %v1118 = vsel %vm787, %v1021, 0.0
      %v1119 = vadd.f32 %v1117, %v1118
      %v1120 = vsel %vm787, %v1022, 0.0
      %v1121 = vadd.f32 %v1119, %v1120
      %v1122 = vsel %vm787, %v1023, 0.0
      %v1123 = vadd.f32 %v1121, %v1122
      %v1124 = vsel %vm787, %v1024, 0.0
      %v1125 = vadd.f32 %v1123, %v1124
      %v1126 = vsel %vm787, %v1025, 0.0
      %v1127 = vadd.f32 %v1125, %v1126
      %v1128 = vsel %vm787, %v1026, 0.0
      %v1129 = vadd.f32 %v1127, %v1128
      %v1130 = vsel %vm787, %v1027, 0.0
      %v1131 = vadd.f32 %v1129, %v1130
      %v1132 = vsel %vm787, %v1028, 0.0
      %v1133 = vadd.f32 %v1131, %v1132
      %v1134 = vsel %vm787, %v1029, 0.0
      %v1135 = vadd.f32 %v1133, %v1134
      %v1136 = vsel %vm787, %v1030, 0.0
      %v1137 = vadd.f32 %v1135, %v1136
      %v1138 = vsel %vm787, %v1031, 0.0
      %v1139 = vadd.f32 %v1137, %v1138
      %v1140 = vsel %vm787, %v1032, 0.0
      %v1141 = vadd.f32 %v1139, %v1140
      %v1142 = vsel %vm787, %v1033, 0.0
      %v1143 = vadd.f32 %v1141, %v1142
      %v1144 = vsel %vm787, %v1034, 0.0
      %v1145 = vadd.f32 %v1143, %v1144
      %v1146 = vsel %vm787, %v1035, 0.0
      %v1147 = vadd.f32 %v1145, %v1146
      %v1148 = vsel %vm787, %v1036, 0.0
      %v1149 = vadd.f32 %v1147, %v1148
      %v1150 = vsel %vm787, %v1037, 0.0
      %v1151 = vadd.f32 %v1149, %v1150
      %v1152 = vsel %vm787, %v1038, 0.0
      %v1153 = vadd.f32 %v1151, %v1152
      %v1154 = vsel %vm787, %v1039, 0.0
      %v1155 = vadd.f32 %v1153, %v1154
      %v1156 = vsel %vm787, %v1040, 0.0
      %v1157 = vadd.f32 %v1155, %v1156
      %v1158 = vsel %vm787, %v1041, 0.0
      %v1159 = vadd.f32 %v1157, %v1158
      %v1160 = vsel %vm787, %v1042, 0.0
      %v1161 = vadd.f32 %v1159, %v1160
      %v1162 = vsel %vm787, %v1043, 0.0
      %v1163 = vadd.f32 %v1161, %v1162
      %v1164 = vsel %vm787, %v1044, 0.0
      %v1165 = vadd.f32 %v1163, %v1164
      %v1166 = vsel %vm787, %v1045, 0.0
      %v1167 = vadd.f32 %v1165, %v1166
      %v1168 = vsel %vm787, %v1046, 0.0
      %v1169 = vadd.f32 %v1167, %v1168
      %v1170 = vsel %vm787, %v1047, 0.0
      %v1171 = vadd.f32 %v1169, %v1170
      %v1172 = vsel %vm787, %v1048, 0.0
      %v1173 = vadd.f32 %v1171, %v1172
      %v1174 = vsel %vm787, %v1049, 0.0
      %v1175 = vadd.f32 %v1173, %v1174
      %v1176 = vsel %vm787, %v1050, 0.0
      %v1177 = vadd.f32 %v1175, %v1176
      %v1178 = vrot.slane %v1177, 4
      %v1179 = vadd.f32 %v1177, %v1178
      %v1180 = vrot.slane %v1179, 2
      %v1181 = vadd.f32 %v1179, %v1180
      %v1182 = vrot.slane %v1181, 1
      %v1183 = vadd.f32 %v1181, %v1182
      %1184 = vst.msk [vmem:[%s211 + $0x1] sm:$0x1] %vm985, %v1183
      %s1185 = smul.u32 64, %s16
      %p1186 = scmp.lt.s32.totalorder %s1185, 127
      %s1187 = scalar_select %p1186, %s1185, 127
      %s1188 = smul.addr %s1187, 8
      %s1189 = scalar_lea.vmem %s3, %s1188
      %p1190 = scmp.lt.s32.totalorder %s16, 1
      %s1191 = scalar_select %p1190, %s16, 1
      %s1192 = smul.addr %s1191, 2
      %s1193 = scalar_lea.vmem %s4, %s1192
      // Predicated region
      $region33: #{conv_block_up_forward.18} parent=31 // pred_check
        %p1194 = pneg %p102
      $region34: #{conv_block_up_forward.18} parent=31 // pred_check_branch
        %1196 = sbr.rel (%p1194) target = $region36
      $region35: #{conv_block_up_forward.18} parent=31 // pred_region
        %s1197 = smul.u32 64, %s16
      $region36: #{conv_block_up_forward.18} parent=31 // pred_fallthru
        _
      // Predicated region
      $region37: #{conv_block_up_forward.18} parent=31 // pred_check
        %p1198 = pneg %p128
      $region38: #{conv_block_up_forward.18} parent=31 // pred_check_branch
        %1200 = sbr.rel (%p1198) target = $region40
      $region39: #{conv_block_up_forward.18} parent=31 // pred_region
        _
      $region40: #{conv_block_up_forward.18} parent=31 // pred_fallthru
        _
    $region32: #{conv_block_up_forward.18} parent=5 // pred_fallthru
      _
    %p1201 = scmp.le.s32.totalorder 2, %s11
    // Predicated region
    $region41: #{conv_block_up_forward.18} parent=5 // pred_check
      %p1202 = pneg %p1201
    $region42: #{conv_block_up_forward.18} parent=5 // pred_check_branch
      %1204 = sbr.rel (%p1202) target = $region44
    $region43: #{conv_block_up_forward.18} parent=5 // pred_region
      %s1205 = ssub.s32 %s11, 2
      // Predicated region
      $region45: #{conv_block_up_forward.18} parent=43 // pred_check
        %p1206 = pneg %p108
      $region46: #{conv_block_up_forward.18} parent=43 // pred_check_branch
        %1208 = sbr.rel (%p1206) target = $region48
      $region47: #{conv_block_up_forward.18} parent=43 // pred_region
        %s1209 = smul.u32 64, %s17
        %p1210 = scmp.lt.s32.totalorder %s1209, 127
        %s1211 = scalar_select %p1210, %s1209, 127
        %s1212 = smul.addr %s1211, 8
        %s1213 = scalar_lea.vmem %s3, %s1212
      $region48: #{conv_block_up_forward.18} parent=43 // pred_fallthru
        _
      // Predicated region
      $region49: #{conv_block_up_forward.18} parent=43 // pred_check
        %p1214 = pneg %p134
      $region50: #{conv_block_up_forward.18} parent=43 // pred_check_branch
        %1216 = sbr.rel (%p1214) target = $region52
      $region51: #{conv_block_up_forward.18} parent=43 // pred_region
        %p1217 = scmp.lt.s32.totalorder %s17, 1
        %s1218 = scalar_select %p1217, %s17, 1
        %s1219 = smul.addr %s1218, 2
        %s1220 = scalar_lea.vmem %s4, %s1219
      $region52: #{conv_block_up_forward.18} parent=43 // pred_fallthru
        _
    $region44: #{conv_block_up_forward.18} parent=5 // pred_fallthru
      _
  $region6: #{conv_block_up_forward.18} parent=0 // loop_footer
    %s15 = sadd.s32 1, %s11
  $region7: #{conv_block_up_forward.18} parent=0 // loop_footer_branch
    %10 = sbr.rel target = $region3
  $region8: #{conv_block_up_forward.18} parent=0 // loop_exit
    _

// kernel: conv_block_up_forward.13
$region0: #{conv_block_up_forward.13}
  #allocation0 [shape = 'u32[]', space=smem, size = 0x4, offset = 0x4, fixed_abs, tag = 'smem constant byte address 0x4 - core index']
  #allocation1 [shape = 'u32[72,128]{1,0:T(1,128)}', space=vmem, size = 0x9000, scoped, tag = 'internal scratch']
  %s0 = inlined_call_operand.vmem [shape: bf16[1024,8], index: 0, kind: input, shape index: {}]
  %s1 = inlined_call_operand.vmem [shape: bf16[8,8], index: 1, kind: input, shape index: {}]
  %s2 = inlined_call_operand.vmem [shape: f32[1,8], index: 2, kind: input, shape index: {}]
  %s3 = inlined_call_operand.vmem [shape: f32[1024,8], index: 3, kind: output, shape index: {0}]
  %s4 = inlined_call_operand.vmem [shape: f32[2,2,8], index: 4, kind: output, shape index: {1}]
  %5 = xla_tuple %s3, %s4
  %s6 = sld [smem:[#allocation0]]
  $region53: #{conv_block_up_forward.13} parent=0
    _
  %s8 = ssub.s32 1, %s6
  %s9 = scalar_select 0, %s8, %s6
  loop: start=0, step=1, limit=4
  $region2: #{conv_block_up_forward.13} parent=0 // loop_pre_header
    _
  $region3: #{conv_block_up_forward.13} parent=0 // loop_header
    %s11 = sphi 0, %s15
    %p12 = scmp.ge.s32.totalorder %s11, 4
    %s21 = sphi 0, %s23
    %s24 = sphi 0, %s21
    %s25 = sphi 0, %s24
    %s41 = sphi 0, %s25
    %s45 = sphi 0, %s45
    %s47 = sphi 0, %s45
    %s48 = sphi 0, %s47
    %s62 = sphi 0, %s48
    %s66 = sphi 0, %s66
    %s68 = sphi 0, %s66
    %s69 = sphi 0, %s68
    %s83 = sphi 0, %s69
    %s89 = sphi 0, %s91
    %s92 = sphi 0, %s89
    %s93 = sphi 0, %s92
    %s109 = sphi 0, %s93
    %s115 = sphi 0, %s117
    %s118 = sphi 0, %s115
    %s119 = sphi 0, %s118
    %s135 = sphi 0, %s119
  $region4: #{conv_block_up_forward.13} parent=0 // loop_header_branch
    %14 = sbr.rel (%p12) target = $region8
  $region5: #{conv_block_up_forward.13} parent=0 // loop_body
    %s16 = ssub.s32 %s11, 1
    %s17 = ssub.s32 %s11, 2
    %s18 = sadd.s32 %s11, 1
    %s19 = ssub.s32 %s11, %s18
    %p20 = scmp.eq.s32.totalorder %s19, 0
    %s22 = sadd.s32 %s21, 1
    %s23 = scalar_select %p20, %s21, %s22
    %p26 = pneg %p20
    %p27 = scmp.eq.s32.totalorder %s11, 1
    %p28 = por %p26, %p27
    %p29 = scmp.ne.s32.totalorder %s21, %s24
    %p30 = scmp.eq.s32.totalorder %s11, 0
    %p31 = por %p29, %p30
    %p32 = scmp.ne.s32.totalorder %s21, %s24
    %p33 = scmp.eq.s32.totalorder %s16, 1
    %p34 = por %p32, %p33
    %p35 = scmp.ne.s32.totalorder %s24, %s25
    %p36 = scmp.eq.s32.totalorder %s16, 0
    %p37 = por %p35, %p36
    %p38 = scmp.ne.s32.totalorder %s24, %s25
    %p39 = scmp.eq.s32.totalorder %s17, 1
    %p40 = por %p38, %p39
    %p42 = scmp.ne.s32.totalorder %s25, %s41
    %p43 = scmp.eq.s32.totalorder %s17, 0
    %p44 = por %p42, %p43
    %s46 = sadd.s32 %s45, 1
    %p49 = scmp.eq.s32.totalorder %s11, 1
    %p50 = scmp.ne.s32.totalorder %s45, %s47
    %p51 = scmp.eq.s32.totalorder %s11, 0
    %p52 = por %p50, %p51
    %p53 = scmp.ne.s32.totalorder %s45, %s47
    %p54 = scmp.eq.s32.totalorder %s16, 1
    %p55 = por %p53, %p54
    %p56 = scmp.ne.s32.totalorder %s47, %s48
    %p57 = scmp.eq.s32.totalorder %s16, 0
    %p58 = por %p56, %p57
    %p59 = scmp.ne.s32.totalorder %s47, %s48
    %p60 = scmp.eq.s32.totalorder %s17, 1
    %p61 = por %p59, %p60
    %p63 = scmp.ne.s32.totalorder %s48, %s62
    %p64 = scmp.eq.s32.totalorder %s17, 0
    %p65 = por %p63, %p64
    %s67 = sadd.s32 %s66, 1
    %p70 = scmp.eq.s32.totalorder %s11, 1
    %p71 = scmp.ne.s32.totalorder %s66, %s68
    %p72 = scmp.eq.s32.totalorder %s11, 0
    %p73 = por %p71, %p72
    %p74 = scmp.ne.s32.totalorder %s66, %s68
    %p75 = scmp.eq.s32.totalorder %s16, 1
    %p76 = por %p74, %p75
    %p77 = scmp.ne.s32.totalorder %s68, %s69
    %p78 = scmp.eq.s32.totalorder %s16, 0
    %p79 = por %p77, %p78
    %p80 = scmp.ne.s32.totalorder %s68, %s69
    %p81 = scmp.eq.s32.totalorder %s17, 1
    %p82 = por %p80, %p81
    %p84 = scmp.ne.s32.totalorder %s69, %s83
    %p85 = scmp.eq.s32.totalorder %s17, 0
    %p86 = por %p84, %p85
    %s87 = ssub.s32 %s11, %s18
    %p88 = scmp.eq.s32.totalorder %s87, 0
    %s90 = sadd.s32 %s89, 1
    %s91 = scalar_select %p88, %s89, %s90
    %p94 = pneg %p88
    %p95 = scmp.eq.s32.totalorder %s11, 1
    %p96 = por %p94, %p95
    %p97 = scmp.ne.s32.totalorder %s89, %s92
    %p98 = scmp.eq.s32.totalorder %s11, 0
    %p99 = por %p97, %p98
    %p100 = scmp.ne.s32.totalorder %s89, %s92
    %p101 = scmp.eq.s32.totalorder %s16, 1
    %p102 = por %p100, %p101
    %p103 = scmp.ne.s32.totalorder %s92, %s93
    %p104 = scmp.eq.s32.totalorder %s16, 0
    %p105 = por %p103, %p104
    %p106 = scmp.ne.s32.totalorder %s92, %s93
    %p107 = scmp.eq.s32.totalorder %s17, 1
    %p108 = por %p106, %p107
    %p110 = scmp.ne.s32.totalorder %s93, %s109
    %p111 = scmp.eq.s32.totalorder %s17, 0
    %p112 = por %p110, %p111
    %s113 = ssub.s32 %s11, %s18
    %p114 = scmp.eq.s32.totalorder %s113, 0
    %s116 = sadd.s32 %s115, 1
    %s117 = scalar_select %p114, %s115, %s116
    %p120 = pneg %p114
    %p121 = scmp.eq.s32.totalorder %s11, 1
    %p122 = por %p120, %p121
    %p123 = scmp.ne.s32.totalorder %s115, %s118
    %p124 = scmp.eq.s32.totalorder %s11, 0
    %p125 = por %p123, %p124
    %p126 = scmp.ne.s32.totalorder %s115, %s118
    %p127 = scmp.eq.s32.totalorder %s16, 1
    %p128 = por %p126, %p127
    %p129 = scmp.ne.s32.totalorder %s118, %s119
    %p130 = scmp.eq.s32.totalorder %s16, 0
    %p131 = por %p129, %p130
    %p132 = scmp.ne.s32.totalorder %s118, %s119
    %p133 = scmp.eq.s32.totalorder %s17, 1
    %p134 = por %p132, %p133
    %p136 = scmp.ne.s32.totalorder %s119, %s135
    %p137 = scmp.eq.s32.totalorder %s17, 0
    %p138 = por %p136, %p137
    %p139 = scmp.le.s32.totalorder 1, %s11
    %p140 = scmp.lt.s32.totalorder %s11, 3
    %p141 = pnand %p139, %p140
    %p142 = pneg %p141
    // Predicated region
    $region9: #{conv_block_up_forward.13} parent=5 // pred_check
      _
    $region10: #{conv_block_up_forward.13} parent=5 // pred_check_branch
      %144 = sbr.rel (%p141) target = $region12
    $region11: #{conv_block_up_forward.13} parent=5 // pred_region
      %s145 = ssub.s32 %s11, 1
      // Predicated region
      $region13: #{conv_block_up_forward.13} parent=11 // pred_check
        %p146 = pneg %p58
      $region14: #{conv_block_up_forward.13} parent=11 // pred_check_branch
        %148 = sbr.rel (%p146) target = $region16
      $region15: #{conv_block_up_forward.13} parent=11 // pred_region
        _
      $region16: #{conv_block_up_forward.13} parent=11 // pred_fallthru
        _
      // Predicated region
      $region17: #{conv_block_up_forward.13} parent=11 // pred_check
        %p149 = pneg %p79
      $region18: #{conv_block_up_forward.13} parent=11 // pred_check_branch
        %151 = sbr.rel (%p149) target = $region20
      $region19: #{conv_block_up_forward.13} parent=11 // pred_region
        _
      $region20: #{conv_block_up_forward.13} parent=11 // pred_fallthru
        _
    $region12: #{conv_block_up_forward.13} parent=5 // pred_fallthru
      _
    %p152 = scmp.lt.s32.totalorder %s11, 2
    // Predicated region
    $region21: #{conv_block_up_forward.13} parent=5 // pred_check
      %p153 = pneg %p152
    $region22: #{conv_block_up_forward.13} parent=5 // pred_check_branch
      %155 = sbr.rel (%p153) target = $region24
    $region23: #{conv_block_up_forward.13} parent=5 // pred_region
      // Predicated region
      $region25: #{conv_block_up_forward.13} parent=23 // pred_check
        %p156 = pneg %p31
      $region26: #{conv_block_up_forward.13} parent=23 // pred_check_branch
        %158 = sbr.rel (%p156) target = $region28
      $region27: #{conv_block_up_forward.13} parent=23 // pred_region
        %s159 = smul.u32 64, %s11
        %p160 = scmp.lt.s32.totalorder %s159, 127
        %s161 = scalar_select %p160, %s159, 127
        %s162 = smul.addr %s161, 4
        %s163 = scalar_lea.vmem %s0, %s162
        %s164 = smul.u32 64, %s11
      $region28: #{conv_block_up_forward.13} parent=23 // pred_fallthru
        _
    $region24: #{conv_block_up_forward.13} parent=5 // pred_fallthru
      _
    %p165 = scmp.le.s32.totalorder 1, %s11
    %p166 = scmp.lt.s32.totalorder %s11, 3
    %p167 = pnand %p165, %p166
    %p168 = pneg %p167
    // Predicated region
    $region29: #{conv_block_up_forward.13} parent=5 // pred_check
      _
    $region30: #{conv_block_up_forward.13} parent=5 // pred_check_branch
      %170 = sbr.rel (%p167) target = $region32
    $region31: #{conv_block_up_forward.13} parent=5 // pred_region
      %s171 = ssub.s32 %s11, 1
      %s172 = smul.u32 64, %s16
      %p173 = scmp.lt.s32.totalorder %s172, 127
      %s174 = scalar_select %p173, %s172, 127
      %s175 = smul.addr %s174, 4
      %s176 = scalar_lea.vmem %s0, %s175
      %p177 = pneg %p37
      %p178 = pneg %p34
      %p179 = pneg %p58
      %p180 = pneg %p55
      %p181 = pneg %p79
      %p182 = pneg %p76
      %p183 = pneg %p105
      %p184 = pneg %p102
      %s185 = smul.u32 64, %s16
      %p186 = scmp.lt.s32.totalorder %s185, 127
      %s187 = scalar_select %p186, %s185, 127
      %s188 = smul.addr %s187, 8
      %s189 = scalar_lea.vmem %s3, %s188
      %p190 = pneg %p131
      %p191 = pneg %p128
      %p192 = scmp.lt.s32.totalorder %s16, 1
      %s193 = scalar_select %p192, %s16, 1
      %s194 = smul.addr %s193, 2
      %s195 = scalar_lea.vmem %s4, %s194
      %s196 = smul.u32 64, %s16
      %p197 = scmp.lt.s32.totalorder %s196, 127
      %s198 = scalar_select %p197, %s196, 127
      %s199 = smul.addr %s198, 4
      %s200 = scalar_lea.vmem %s0, %s199
      %s201 = smul.u32 64, %s16
      %s202 = smul.u32 64, %s16
      %p203 = scmp.lt.s32.totalorder %s202, 127
      %s204 = scalar_select %p203, %s202, 127
      %s205 = smul.addr %s204, 8
      %s206 = scalar_lea.vmem %s3, %s205
      %s207 = smul.u32 64, %s16
      %p208 = scmp.lt.s32.totalorder %s16, 1
      %s209 = scalar_select %p208, %s16, 1
      %s210 = smul.addr %s209, 2
      %s211 = scalar_lea.vmem %s4, %s210
      %v213 = vld [vmem:[%s200] sm:$0xf]
      %v214 = vld [vmem:[%s200 + $0x4] sm:$0xf]
      %v215 = vld [vmem:[%s200 + $0x8] sm:$0xf]
      %v216 = vld [vmem:[%s200 + $0xc] sm:$0xf]
      %v217 = vld [vmem:[%s200 + $0x10] sm:$0xf]
      %v218 = vld [vmem:[%s200 + $0x14] sm:$0xf]
      %v219 = vld [vmem:[%s200 + $0x18] sm:$0xf]
      %v220 = vld [vmem:[%s200 + $0x1c] sm:$0xf]
      %v221 = vld [vmem:[%s200 + $0x20] sm:$0xf]
      %v222 = vld [vmem:[%s200 + $0x24] sm:$0xf]
      %v223 = vld [vmem:[%s200 + $0x28] sm:$0xf]
      %v224 = vld [vmem:[%s200 + $0x2c] sm:$0xf]
      %v225 = vld [vmem:[%s200 + $0x30] sm:$0xf]
      %v226 = vld [vmem:[%s200 + $0x34] sm:$0xf]
      %v227 = vld [vmem:[%s200 + $0x38] sm:$0xf]
      %v228 = vld [vmem:[%s200 + $0x3c] sm:$0xf]
      %v229 = vld [vmem:[%s200 + $0x40] sm:$0xf]
      %v230 = vld [vmem:[%s200 + $0x44] sm:$0xf]
      %v231 = vld [vmem:[%s200 + $0x48] sm:$0xf]
      %v232 = vld [vmem:[%s200 + $0x4c] sm:$0xf]
      %v233 = vld [vmem:[%s200 + $0x50] sm:$0xf]
      %v234 = vld [vmem:[%s200 + $0x54] sm:$0xf]
      %v235 = vld [vmem:[%s200 + $0x58] sm:$0xf]
      %v236 = vld [vmem:[%s200 + $0x5c] sm:$0xf]
      %v237 = vld [vmem:[%s200 + $0x60] sm:$0xf]
      %v238 = vld [vmem:[%s200 + $0x64] sm:$0xf]
      %v239 = vld [vmem:[%s200 + $0x68] sm:$0xf]
      %v240 = vld [vmem:[%s200 + $0x6c] sm:$0xf]
      %v241 = vld [vmem:[%s200 + $0x70] sm:$0xf]
      %v242 = vld [vmem:[%s200 + $0x74] sm:$0xf]
      %v243 = vld [vmem:[%s200 + $0x78] sm:$0xf]
      %v244 = vld [vmem:[%s200 + $0x7c] sm:$0xf]
      %v245 = vld [vmem:[%s200 + $0x80] sm:$0xf]
      %v246 = vld [vmem:[%s200 + $0x84] sm:$0xf]
      %v247 = vld [vmem:[%s200 + $0x88] sm:$0xf]
      %v248 = vld [vmem:[%s200 + $0x8c] sm:$0xf]
      %v249 = vld [vmem:[%s200 + $0x90] sm:$0xf]
      %v250 = vld [vmem:[%s200 + $0x94] sm:$0xf]
      %v251 = vld [vmem:[%s200 + $0x98] sm:$0xf]
      %v252 = vld [vmem:[%s200 + $0x9c] sm:$0xf]
      %v253 = vld [vmem:[%s200 + $0xa0] sm:$0xf]
      %v254 = vld [vmem:[%s200 + $0xa4] sm:$0xf]
      %v255 = vld [vmem:[%s200 + $0xa8] sm:$0xf]
      %v256 = vld [vmem:[%s200 + $0xac] sm:$0xf]
      %v257 = vld [vmem:[%s200 + $0xb0] sm:$0xf]
      %v258 = vld [vmem:[%s200 + $0xb4] sm:$0xf]
      %v259 = vld [vmem:[%s200 + $0xb8] sm:$0xf]
      %v260 = vld [vmem:[%s200 + $0xbc] sm:$0xf]
      %v261 = vld [vmem:[%s200 + $0xc0] sm:$0xf]
      %v262 = vld [vmem:[%s200 + $0xc4] sm:$0xf]
      %v263 = vld [vmem:[%s200 + $0xc8] sm:$0xf]
      %v264 = vld [vmem:[%s200 + $0xcc] sm:$0xf]
      %v265 = vld [vmem:[%s200 + $0xd0] sm:$0xf]
      %v266 = vld [vmem:[%s200 + $0xd4] sm:$0xf]
      %v267 = vld [vmem:[%s200 + $0xd8] sm:$0xf]
      %v268 = vld [vmem:[%s200 + $0xdc] sm:$0xf]
      %v269 = vld [vmem:[%s200 + $0xe0] sm:$0xf]
      %v270 = vld [vmem:[%s200 + $0xe4] sm:$0xf]
      %v271 = vld [vmem:[%s200 + $0xe8] sm:$0xf]
      %v272 = vld [vmem:[%s200 + $0xec] sm:$0xf]
      %v273 = vld [vmem:[%s200 + $0xf0] sm:$0xf]
      %v274 = vld [vmem:[%s200 + $0xf4] sm:$0xf]
      %v275 = vld [vmem:[%s200 + $0xf8] sm:$0xf]
      %v276 = vld [vmem:[%s200 + $0xfc] sm:$0xf]
      %v277 = vld [vmem:[%s1] sm:$0xf]
      %v278 = vld [vmem:[%s2] sm:$0x1]
      %v280 = vperm.slane %v278, 0
      %v346 = vunpack.c.l.b16 %v213
      %v347 = vunpack.c.l.b16 %v214
      %v348 = vunpack.c.l.b16 %v215
      %v349 = vunpack.c.l.b16 %v216
      %v350 = vunpack.c.l.b16 %v217
      %v351 = vunpack.c.l.b16 %v218
      %v352 = vunpack.c.l.b16 %v219
      %v353 = vunpack.c.l.b16 %v220
      %v354 = vunpack.c.l.b16 %v221
      %v355 = vunpack.c.l.b16 %v222
      %v356 = vunpack.c.l.b16 %v223
      %v357 = vunpack.c.l.b16 %v224
      %v358 = vunpack.c.l.b16 %v225
      %v359 = vunpack.c.l.b16 %v226
      %v360 = vunpack.c.l.b16 %v227
      %v361 = vunpack.c.l.b16 %v228
      %v362 = vunpack.c.l.b16 %v229
      %v363 = vunpack.c.l.b16 %v230
      %v364 = vunpack.c.l.b16 %v231
      %v365 = vunpack.c.l.b16 %v232
      %v366 = vunpack.c.l.b16 %v233
      %v367 = vunpack.c.l.b16 %v234
      %v368 = vunpack.c.l.b16 %v235
      %v369 = vunpack.c.l.b16 %v236
      %v370 = vunpack.c.l.b16 %v237
      %v371 = vunpack.c.l.b16 %v238
      %v372 = vunpack.c.l.b16 %v239
      %v373 = vunpack.c.l.b16 %v240
      %v374 = vunpack.c.l.b16 %v241
      %v375 = vunpack.c.l.b16 %v242
      %v376 = vunpack.c.l.b16 %v243
      %v377 = vunpack.c.l.b16 %v244
      %v378 = vunpack.c.l.b16 %v245
      %v379 = vunpack.c.l.b16 %v246
      %v380 = vunpack.c.l.b16 %v247
      %v381 = vunpack.c.l.b16 %v248
      %v382 = vunpack.c.l.b16 %v249
      %v383 = vunpack.c.l.b16 %v250
      %v384 = vunpack.c.l.b16 %v251
      %v385 = vunpack.c.l.b16 %v252
      %v386 = vunpack.c.l.b16 %v253
      %v387 = vunpack.c.l.b16 %v254
      %v388 = vunpack.c.l.b16 %v255
      %v389 = vunpack.c.l.b16 %v256
      %v390 = vunpack.c.l.b16 %v257
      %v391 = vunpack.c.l.b16 %v258
      %v392 = vunpack.c.l.b16 %v259
      %v393 = vunpack.c.l.b16 %v260
      %v394 = vunpack.c.l.b16 %v261
      %v395 = vunpack.c.l.b16 %v262
      %v396 = vunpack.c.l.b16 %v263
      %v397 = vunpack.c.l.b16 %v264
      %v398 = vunpack.c.l.b16 %v265
      %v399 = vunpack.c.l.b16 %v266
      %v400 = vunpack.c.l.b16 %v267
      %v401 = vunpack.c.l.b16 %v268
      %v402 = vunpack.c.l.b16 %v269
      %v403 = vunpack.c.l.b16 %v270
      %v404 = vunpack.c.l.b16 %v271
      %v405 = vunpack.c.l.b16 %v272
      %v406 = vunpack.c.l.b16 %v273
      %v407 = vunpack.c.l.b16 %v274
      %v408 = vunpack.c.l.b16 %v275
      %v409 = vunpack.c.l.b16 %v276
      %v410 = vpack.c.b16 %v347, %v346
      %v411 = vpack.c.b16 %v349, %v348
      %v412 = vpack.c.b16 %v351, %v350
      %v413 = vpack.c.b16 %v353, %v352
      %v414 = vpack.c.b16 %v355, %v354
      %v415 = vpack.c.b16 %v357, %v356
      %v416 = vpack.c.b16 %v359, %v358
      %v417 = vpack.c.b16 %v361, %v360
      %v418 = vpack.c.b16 %v363, %v362
      %v419 = vpack.c.b16 %v365, %v364
      %v420 = vpack.c.b16 %v367, %v366
      %v421 = vpack.c.b16 %v369, %v368
      %v422 = vpack.c.b16 %v371, %v370
      %v423 = vpack.c.b16 %v373, %v372
      %v424 = vpack.c.b16 %v375, %v374
      %v425 = vpack.c.b16 %v377, %v376
      %v426 = vpack.c.b16 %v379, %v378
      %v427 = vpack.c.b16 %v381, %v380
      %v428 = vpack.c.b16 %v383, %v382
      %v429 = vpack.c.b16 %v385, %v384
      %v430 = vpack.c.b16 %v387, %v386
      %v431 = vpack.c.b16 %v389, %v388
      %v432 = vpack.c.b16 %v391, %v390
      %v433 = vpack.c.b16 %v393, %v392
      %v434 = vpack.c.b16 %v395, %v394
      %v435 = vpack.c.b16 %v397, %v396
      %v436 = vpack.c.b16 %v399, %v398
      %v437 = vpack.c.b16 %v401, %v400
      %v438 = vpack.c.b16 %v403, %v402
      %v439 = vpack.c.b16 %v405, %v404
      %v440 = vpack.c.b16 %v407, %v406
      %v441 = vpack.c.b16 %v409, %v408
      %vm442 = vcmask 64512
      %v444 = vsel %vm442, %v410, 0
      %v447 = vsel %vm442, %v411, 0
      %v450 = vsel %vm442, %v412, 0
      %v453 = vsel %vm442, %v413, 0
      %v456 = vsel %vm442, %v414, 0
      %v459 = vsel %vm442, %v415, 0
      %v462 = vsel %vm442, %v416, 0
      %v465 = vsel %vm442, %v417, 0
      %v468 = vsel %vm442, %v418, 0
      %v471 = vsel %vm442, %v419, 0
      %v474 = vsel %vm442, %v420, 0
      %v477 = vsel %vm442, %v421, 0
      %v480 = vsel %vm442, %v422, 0
      %v483 = vsel %vm442, %v423, 0
      %v486 = vsel %vm442, %v424, 0
      %v489 = vsel %vm442, %v425, 0
      %v492 = vsel %vm442, %v426, 0
      %v495 = vsel %vm442, %v427, 0
      %v498 = vsel %vm442, %v428, 0
      %v501 = vsel %vm442, %v429, 0
      %v504 = vsel %vm442, %v430, 0
      %v507 = vsel %vm442, %v431, 0
      %v510 = vsel %vm442, %v432, 0
      %v513 = vsel %vm442, %v433, 0
      %v516 = vsel %vm442, %v434, 0
      %v519 = vsel %vm442, %v435, 0
      %v522 = vsel %vm442, %v436, 0
      %v525 = vsel %vm442, %v437, 0
      %v528 = vsel %vm442, %v438, 0
      %v531 = vsel %vm442, %v439, 0
      %v534 = vsel %vm442, %v440, 0
      %v537 = vsel %vm442, %v441, 0
      %vm539 = vcmask 1043456
      %v541 = vsel %vm539, %v277, 0
      %543 = vmatpush.bf16.msra.mxu0 0
      %544 = vmatpush.bf16.msra.mxu0 0
      %545 = vmatpush.bf16.msra.mxu0 0
      %546 = vmatpush.bf16.msra.mxu0 0
      %547 = vmatpush.bf16.msra.mxu0 0
      %548 = vmatpush.bf16.msra.mxu0 0
      %549 = vmatpush.bf16.msra.mxu0 0
      %550 = vmatpush.bf16.msra.mxu0 %v541
      %551 = vmatmul.bf16.gmra.mxu0 %v444
      %v552 = vpop.f32.mrf.mxu0
      %v553 = vadd.f32 %v280, %v552
      %v554 = vpop.f32.mrf.mxu0
      %v555 = vadd.f32 %v280, %v554
      %556 = vmatmul.bf16.gmra.mxu0 %v447
      %v557 = vpop.f32.mrf.mxu0
      %v558 = vadd.f32 %v280, %v557
      %v559 = vpop.f32.mrf.mxu0
      %v560 = vadd.f32 %v280, %v559
      %561 = vmatmul.bf16.gmra.mxu0 %v450
      %v562 = vpop.f32.mrf.mxu0
      %v563 = vadd.f32 %v280, %v562
      %v564 = vpop.f32.mrf.mxu0
      %v565 = vadd.f32 %v280, %v564
      %566 = vmatmul.bf16.gmra.mxu0 %v453
      %v567 = vpop.f32.mrf.mxu0
      %v568 = vadd.f32 %v280, %v567
      %v569 = vpop.f32.mrf.mxu0
      %v570 = vadd.f32 %v280, %v569
      %571 = vmatmul.bf16.gmra.mxu0 %v456
      %v572 = vpop.f32.mrf.mxu0
      %v573 = vadd.f32 %v280, %v572
      %v574 = vpop.f32.mrf.mxu0
      %v575 = vadd.f32 %v280, %v574
      %576 = vmatmul.bf16.gmra.mxu0 %v459
      %v577 = vpop.f32.mrf.mxu0
      %v578 = vadd.f32 %v280, %v577
      %v579 = vpop.f32.mrf.mxu0
      %v580 = vadd.f32 %v280, %v579
      %581 = vmatmul.bf16.gmra.mxu0 %v462
      %v582 = vpop.f32.mrf.mxu0
      %v583 = vadd.f32 %v280, %v582
      %v584 = vpop.f32.mrf.mxu0
      %v585 = vadd.f32 %v280, %v584
      %586 = vmatmul.bf16.gmra.mxu0 %v465
      %v587 = vpop.f32.mrf.mxu0
      %v588 = vadd.f32 %v280, %v587
      %v589 = vpop.f32.mrf.mxu0
      %v590 = vadd.f32 %v280, %v589
      %591 = vmatmul.bf16.gmra.mxu0 %v468
      %v592 = vpop.f32.mrf.mxu0
      %v593 = vadd.f32 %v280, %v592
      %v594 = vpop.f32.mrf.mxu0
      %v595 = vadd.f32 %v280, %v594
      %596 = vmatmul.bf16.gmra.mxu0 %v471
      %v597 = vpop.f32.mrf.mxu0
      %v598 = vadd.f32 %v280, %v597
      %v599 = vpop.f32.mrf.mxu0
      %v600 = vadd.f32 %v280, %v599
      %601 = vmatmul.bf16.gmra.mxu0 %v474
      %v602 = vpop.f32.mrf.mxu0
      %v603 = vadd.f32 %v280, %v602
      %v604 = vpop.f32.mrf.mxu0
      %v605 = vadd.f32 %v280, %v604
      %606 = vmatmul.bf16.gmra.mxu0 %v477
      %v607 = vpop.f32.mrf.mxu0
      %v608 = vadd.f32 %v280, %v607
      %v609 = vpop.f32.mrf.mxu0
      %v610 = vadd.f32 %v280, %v609
      %611 = vmatmul.bf16.gmra.mxu0 %v480
      %v612 = vpop.f32.mrf.mxu0
      %v613 = vadd.f32 %v280, %v612
      %v614 = vpop.f32.mrf.mxu0
      %v615 = vadd.f32 %v280, %v614
      %616 = vmatmul.bf16.gmra.mxu0 %v483
      %v617 = vpop.f32.mrf.mxu0
      %v618 = vadd.f32 %v280, %v617
      %v619 = vpop.f32.mrf.mxu0
      %v620 = vadd.f32 %v280, %v619
      %621 = vmatmul.bf16.gmra.mxu0 %v486
      %v622 = vpop.f32.mrf.mxu0
      %v623 = vadd.f32 %v280, %v622
      %v624 = vpop.f32.mrf.mxu0
      %v625 = vadd.f32 %v280, %v624
      %626 = vmatmul.bf16.gmra.mxu0 %v489
      %v627 = vpop.f32.mrf.mxu0
      %v628 = vadd.f32 %v280, %v627
      %v629 = vpop.f32.mrf.mxu0
      %v630 = vadd.f32 %v280, %v629
      %631 = vmatmul.bf16.gmra.mxu0 %v492
      %v632 = vpop.f32.mrf.mxu0
      %v633 = vadd.f32 %v280, %v632
      %v634 = vpop.f32.mrf.mxu0
      %v635 = vadd.f32 %v280, %v634
      %636 = vmatmul.bf16.gmra.mxu0 %v495
      %v637 = vpop.f32.mrf.mxu0
      %v638 = vadd.f32 %v280, %v637
      %v639 = vpop.f32.mrf.mxu0
      %v640 = vadd.f32 %v280, %v639
      %641 = vmatmul.bf16.gmra.mxu0 %v498
      %v642 = vpop.f32.mrf.mxu0
      %v643 = vadd.f32 %v280, %v642
      %v644 = vpop.f32.mrf.mxu0
      %v645 = vadd.f32 %v280, %v644
      %646 = vmatmul.bf16.gmra.mxu0 %v501
      %v647 = vpop.f32.mrf.mxu0
      %v648 = vadd.f32 %v280, %v647
      %v649 = vpop.f32.mrf.mxu0
      %v650 = vadd.f32 %v280, %v649
      %651 = vmatmul.bf16.gmra.mxu0 %v504
      %v652 = vpop.f32.mrf.mxu0
      %v653 = vadd.f32 %v280, %v652
      %v654 = vpop.f32.mrf.mxu0
      %v655 = vadd.f32 %v280, %v654
      %656 = vmatmul.bf16.gmra.mxu0 %v507
      %v657 = vpop.f32.mrf.mxu0
      %v658 = vadd.f32 %v280, %v657
      %v659 = vpop.f32.mrf.mxu0
      %v660 = vadd.f32 %v280, %v659
      %661 = vmatmul.bf16.gmra.mxu0 %v510
      %v662 = vpop.f32.mrf.mxu0
      %v663 = vadd.f32 %v280, %v662
      %v664 = vpop.f32.mrf.mxu0
      %v665 = vadd.f32 %v280, %v664
      %666 = vmatmul.bf16.gmra.mxu0 %v513
      %v667 = vpop.f32.mrf.mxu0
      %v668 = vadd.f32 %v280, %v667
      %v669 = vpop.f32.mrf.mxu0
      %v670 = vadd.f32 %v280, %v669
      %671 = vmatmul.bf16.gmra.mxu0 %v516
      %v672 = vpop.f32.mrf.mxu0
      %v673 = vadd.f32 %v280, %v672
      %v674 = vpop.f32.mrf.mxu0
      %v675 = vadd.f32 %v280, %v674
      %676 = vmatmul.bf16.gmra.mxu0 %v519
      %v677 = vpop.f32.mrf.mxu0
      %v678 = vadd.f32 %v280, %v677
      %v679 = vpop.f32.mrf.mxu0
      %v680 = vadd.f32 %v280, %v679
      %681 = vmatmul.bf16.gmra.mxu0 %v522
      %v682 = vpop.f32.mrf.mxu0
      %v683 = vadd.f32 %v280, %v682
      %v684 = vpop.f32.mrf.mxu0
      %v685 = vadd.f32 %v280, %v684
      %686 = vmatmul.bf16.gmra.mxu0 %v525
      %v687 = vpop.f32.mrf.mxu0
      %v688 = vadd.f32 %v280, %v687
      %v689 = vpop.f32.mrf.mxu0
      %v690 = vadd.f32 %v280, %v689
      %691 = vmatmul.bf16.gmra.mxu0 %v528
      %v692 = vpop.f32.mrf.mxu0
      %v693 = vadd.f32 %v280, %v692
      %v694 = vpop.f32.mrf.mxu0
      %v695 = vadd.f32 %v280, %v694
      %696 = vmatmul.bf16.gmra.mxu0 %v531
      %v697 = vpop.f32.mrf.mxu0
      %v698 = vadd.f32 %v280, %v697
      %v699 = vpop.f32.mrf.mxu0
      %v700 = vadd.f32 %v280, %v699
      %701 = vmatmul.bf16.gmra.mxu0 %v534
      %v702 = vpop.f32.mrf.mxu0
      %v703 = vadd.f32 %v280, %v702
      %v704 = vpop.f32.mrf.mxu0
      %v705 = vadd.f32 %v280, %v704
      %706 = vmatmul.bf16.gmra.mxu0 %v537
      %v707 = vpop.f32.mrf.mxu0
      %v708 = vadd.f32 %v280, %v707
      %v709 = vpop.f32.mrf.mxu0
      %v710 = vadd.f32 %v280, %v709
      %711 = vdwg.mxu0
      %v712 = vmax.f32 %v553, 0.0
      %v713 = vmax.f32 %v555, 0.0
      %v714 = vmax.f32 %v558, 0.0
      %v715 = vmax.f32 %v560, 0.0
      %v716 = vmax.f32 %v563, 0.0
      %v717 = vmax.f32 %v565, 0.0
      %v718 = vmax.f32 %v568, 0.0
      %v719 = vmax.f32 %v570, 0.0
      %v720 = vmax.f32 %v573, 0.0
      %v721 = vmax.f32 %v575, 0.0
      %v722 = vmax.f32 %v578, 0.0
      %v723 = vmax.f32 %v580, 0.0
      %v724 = vmax.f32 %v583, 0.0
      %v725 = vmax.f32 %v585, 0.0
      %v726 = vmax.f32 %v588, 0.0
      %v727 = vmax.f32 %v590, 0.0
      %v728 = vmax.f32 %v593, 0.0
      %v729 = vmax.f32 %v595, 0.0
      %v730 = vmax.f32 %v598, 0.0
      %v731 = vmax.f32 %v600, 0.0
      %v732 = vmax.f32 %v603, 0.0
      %v733 = vmax.f32 %v605, 0.0
      %v734 = vmax.f32 %v608, 0.0
      %v735 = vmax.f32 %v610, 0.0
      %v736 = vmax.f32 %v613, 0.0
      %v737 = vmax.f32 %v615, 0.0
      %v738 = vmax.f32 %v618, 0.0
      %v739 = vmax.f32 %v620, 0.0
      %v740 = vmax.f32 %v623, 0.0
      %v741 = vmax.f32 %v625, 0.0
      %v742 = vmax.f32 %v628, 0.0
      %v743 = vmax.f32 %v630, 0.0
      %v744 = vmax.f32 %v633, 0.0
      %v745 = vmax.f32 %v635, 0.0
      %v746 = vmax.f32 %v638, 0.0
      %v747 = vmax.f32 %v640, 0.0
      %v748 = vmax.f32 %v643, 0.0
      %v749 = vmax.f32 %v645, 0.0
      %v750 = vmax.f32 %v648, 0.0
      %v751 = vmax.f32 %v650, 0.0
      %v752 = vmax.f32 %v653, 0.0
      %v753 = vmax.f32 %v655, 0.0
      %v754 = vmax.f32 %v658, 0.0
      %v755 = vmax.f32 %v660, 0.0
      %v756 = vmax.f32 %v663, 0.0
      %v757 = vmax.f32 %v665, 0.0
      %v758 = vmax.f32 %v668, 0.0
      %v759 = vmax.f32 %v670, 0.0
      %v760 = vmax.f32 %v673, 0.0
      %v761 = vmax.f32 %v675, 0.0
      %v762 = vmax.f32 %v678, 0.0
      %v763 = vmax.f32 %v680, 0.0
      %v764 = vmax.f32 %v683, 0.0
      %v765 = vmax.f32 %v685, 0.0
      %v766 = vmax.f32 %v688, 0.0
      %v767 = vmax.f32 %v690, 0.0
      %v768 = vmax.f32 %v693, 0.0
      %v769 = vmax.f32 %v695, 0.0
      %v770 = vmax.f32 %v698, 0.0
      %v771 = vmax.f32 %v700, 0.0
      %v772 = vmax.f32 %v703, 0.0
      %v773 = vmax.f32 %v705, 0.0
      %v774 = vmax.f32 %v708, 0.0
      %v775 = vmax.f32 %v710, 0.0
      %776 = vst.msk [vmem:[%s206] sm:$0xff] %vm442, %v712
      %777 = vst.msk [vmem:[%s206 + $0x8] sm:$0xff] %vm442, %v713
      %778 = vst.msk [vmem:[%s206 + $0x10] sm:$0xff] %vm442, %v714
      %779 = vst.msk [vmem:[%s206 + $0x18] sm:$0xff] %vm442, %v715
      %780 = vst.msk [vmem:[%s206 + $0x20] sm:$0xff] %vm442, %v716
      %781 = vst.msk [vmem:[%s206 + $0x28] sm:$0xff] %vm442, %v717
      %782 = vst.msk [vmem:[%s206 + $0x30] sm:$0xff] %vm442, %v718
      %783 = vst.msk [vmem:[%s206 + $0x38] sm:$0xff] %vm442, %v719
      %784 = vst.msk [vmem:[%s206 + $0x40] sm:$0xff] %vm442, %v720
      %785 = vst.msk [vmem:[%s206 + $0x48] sm:$0xff] %vm442, %v721
      %786 = vst.msk [vmem:[%s206 + $0x50] sm:$0xff] %vm442, %v722
      %787 = vst.msk [vmem:[%s206 + $0x58] sm:$0xff] %vm442, %v723
      %788 = vst.msk [vmem:[%s206 + $0x60] sm:$0xff] %vm442, %v724
      %789 = vst.msk [vmem:[%s206 + $0x68] sm:$0xff] %vm442, %v725
      %790 = vst.msk [vmem:[%s206 + $0x70] sm:$0xff] %vm442, %v726
      %791 = vst.msk [vmem:[%s206 + $0x78] sm:$0xff] %vm442, %v727
      %792 = vst.msk [vmem:[%s206 + $0x80] sm:$0xff] %vm442, %v728
      %793 = vst.msk [vmem:[%s206 + $0x88] sm:$0xff] %vm442, %v729
      %794 = vst.msk [vmem:[%s206 + $0x90] sm:$0xff] %vm442, %v730
      %795 = vst.msk [vmem:[%s206 + $0x98] sm:$0xff] %vm442, %v731
      %796 = vst.msk [vmem:[%s206 + $0xa0] sm:$0xff] %vm442, %v732
      %797 = vst.msk [vmem:[%s206 + $0xa8] sm:$0xff] %vm442, %v733
      %798 = vst.msk [vmem:[%s206 + $0xb0] sm:$0xff] %vm442, %v734
      %799 = vst.msk [vmem:[%s206 + $0xb8] sm:$0xff] %vm442, %v735
      %800 = vst.msk [vmem:[%s206 + $0xc0] sm:$0xff] %vm442, %v736
      %801 = vst.msk [vmem:[%s206 + $0xc8] sm:$0xff] %vm442, %v737
      %802 = vst.msk [vmem:[%s206 + $0xd0] sm:$0xff] %vm442, %v738
      %803 = vst.msk [vmem:[%s206 + $0xd8] sm:$0xff] %vm442, %v739
      %804 = vst.msk [vmem:[%s206 + $0xe0] sm:$0xff] %vm442, %v740
      %805 = vst.msk [vmem:[%s206 + $0xe8] sm:$0xff] %vm442, %v741
      %806 = vst.msk [vmem:[%s206 + $0xf0] sm:$0xff] %vm442, %v742
      %807 = vst.msk [vmem:[%s206 + $0xf8] sm:$0xff] %vm442, %v743
      %808 = vst.msk [vmem:[%s206 + $0x100] sm:$0xff] %vm442, %v744
      %809 = vst.msk [vmem:[%s206 + $0x108] sm:$0xff] %vm442, %v745
      %810 = vst.msk [vmem:[%s206 + $0x110] sm:$0xff] %vm442, %v746
      %811 = vst.msk [vmem:[%s206 + $0x118] sm:$0xff] %vm442, %v747
      %812 = vst.msk [vmem:[%s206 + $0x120] sm:$0xff] %vm442, %v748
      %813 = vst.msk [vmem:[%s206 + $0x128] sm:$0xff] %vm442, %v749
      %814 = vst.msk [vmem:[%s206 + $0x130] sm:$0xff] %vm442, %v750
      %815 = vst.msk [vmem:[%s206 + $0x138] sm:$0xff] %vm442, %v751
      %816 = vst.msk [vmem:[%s206 + $0x140] sm:$0xff] %vm442, %v752
      %817 = vst.msk [vmem:[%s206 + $0x148] sm:$0xff] %vm442, %v753
      %818 = vst.msk [vmem:[%s206 + $0x150] sm:$0xff] %vm442, %v754
      %819 = vst.msk [vmem:[%s206 + $0x158] sm:$0xff] %vm442, %v755
      %820 = vst.msk [vmem:[%s206 + $0x160] sm:$0xff] %vm442, %v756
      %821 = vst.msk [vmem:[%s206 + $0x168] sm:$0xff] %vm442, %v757
      %822 = vst.msk [vmem:[%s206 + $0x170] sm:$0xff] %vm442, %v758
      %823 = vst.msk [vmem:[%s206 + $0x178] sm:$0xff] %vm442, %v759
      %824 = vst.msk [vmem:[%s206 + $0x180] sm:$0xff] %vm442, %v760
      %825 = vst.msk [vmem:[%s206 + $0x188] sm:$0xff] %vm442, %v761
      %826 = vst.msk [vmem:[%s206 + $0x190] sm:$0xff] %vm442, %v762
      %827 = vst.msk [vmem:[%s206 + $0x198] sm:$0xff] %vm442, %v763
      %828 = vst.msk [vmem:[%s206 + $0x1a0] sm:$0xff] %vm442, %v764
      %829 = vst.msk [vmem:[%s206 + $0x1a8] sm:$0xff] %vm442, %v765
      %830 = vst.msk [vmem:[%s206 + $0x1b0] sm:$0xff] %vm442, %v766
      %831 = vst.msk [vmem:[%s206 + $0x1b8] sm:$0xff] %vm442, %v767
      %832 = vst.msk [vmem:[%s206 + $0x1c0] sm:$0xff] %vm442, %v768
      %833 = vst.msk [vmem:[%s206 + $0x1c8] sm:$0xff] %vm442, %v769
      %834 = vst.msk [vmem:[%s206 + $0x1d0] sm:$0xff] %vm442, %v770
      %835 = vst.msk [vmem:[%s206 + $0x1d8] sm:$0xff] %vm442, %v771
      %836 = vst.msk [vmem:[%s206 + $0x1e0] sm:$0xff] %vm442, %v772
      %837 = vst.msk [vmem:[%s206 + $0x1e8] sm:$0xff] %vm442, %v773
      %838 = vst.msk [vmem:[%s206 + $0x1f0] sm:$0xff] %vm442, %v774
      %839 = vst.msk [vmem:[%s206 + $0x1f8] sm:$0xff] %vm442, %v775
      %v840 = vsel %vm442, %v712, 0.0
      %v841 = vsel %vm442, %v713, 0.0
      %v842 = vadd.f32 %v840, %v841
      %v843 = vsel %vm442, %v714, 0.0
      %v844 = vadd.f32 %v842, %v843
      %v845 = vsel %vm442, %v715, 0.0
      %v846 = vadd.f32 %v844, %v845
      %v847 = vsel %vm442, %v716, 0.0
      %v848 = vadd.f32 %v846, %v847
      %v849 = vsel %vm442, %v717, 0.0
      %v850 = vadd.f32 %v848, %v849
      %v851 = vsel %vm442, %v718, 0.0
      %v852 = vadd.f32 %v850, %v851
      %v853 = vsel %vm442, %v719, 0.0
      %v854 = vadd.f32 %v852, %v853
      %v855 = vsel %vm442, %v720, 0.0
      %v856 = vadd.f32 %v854, %v855
      %v857 = vsel %vm442, %v721, 0.0
      %v858 = vadd.f32 %v856, %v857
      %v859 = vsel %vm442, %v722, 0.0
      %v860 = vadd.f32 %v858, %v859
      %v861 = vsel %vm442, %v723, 0.0
      %v862 = vadd.f32 %v860, %v861
      %v863 = vsel %vm442, %v724, 0.0
      %v864 = vadd.f32 %v862, %v863
      %v865 = vsel %vm442, %v725, 0.0
      %v866 = vadd.f32 %v864, %v865
      %v867 = vsel %vm442, %v726, 0.0
      %v868 = vadd.f32 %v866, %v867
      %v869 = vsel %vm442, %v727, 0.0
      %v870 = vadd.f32 %v868, %v869
      %v871 = vsel %vm442, %v728, 0.0
      %v872 = vadd.f32 %v870, %v871
      %v873 = vsel %vm442, %v729, 0.0
      %v874 = vadd.f32 %v872, %v873
      %v875 = vsel %vm442, %v730, 0.0
      %v876 = vadd.f32 %v874, %v875
      %v877 = vsel %vm442, %v731, 0.0
      %v878 = vadd.f32 %v876, %v877
      %v879 = vsel %vm442, %v732, 0.0
      %v880 = vadd.f32 %v878, %v879
      %v881 = vsel %vm442, %v733, 0.0
      %v882 = vadd.f32 %v880, %v881
      %v883 = vsel %vm442, %v734, 0.0
      %v884 = vadd.f32 %v882, %v883
      %v885 = vsel %vm442, %v735, 0.0
      %v886 = vadd.f32 %v884, %v885
      %v887 = vsel %vm442, %v736, 0.0
      %v888 = vadd.f32 %v886, %v887
      %v889 = vsel %vm442, %v737, 0.0
      %v890 = vadd.f32 %v888, %v889
      %v891 = vsel %vm442, %v738, 0.0
      %v892 = vadd.f32 %v890, %v891
      %v893 = vsel %vm442, %v739, 0.0
      %v894 = vadd.f32 %v892, %v893
      %v895 = vsel %vm442, %v740, 0.0
      %v896 = vadd.f32 %v894, %v895
      %v897 = vsel %vm442, %v741, 0.0
      %v898 = vadd.f32 %v896, %v897
      %v899 = vsel %vm442, %v742, 0.0
      %v900 = vadd.f32 %v898, %v899
      %v901 = vsel %vm442, %v743, 0.0
      %v902 = vadd.f32 %v900, %v901
      %v903 = vsel %vm442, %v744, 0.0
      %v904 = vadd.f32 %v902, %v903
      %v905 = vsel %vm442, %v745, 0.0
      %v906 = vadd.f32 %v904, %v905
      %v907 = vsel %vm442, %v746, 0.0
      %v908 = vadd.f32 %v906, %v907
      %v909 = vsel %vm442, %v747, 0.0
      %v910 = vadd.f32 %v908, %v909
      %v911 = vsel %vm442, %v748, 0.0
      %v912 = vadd.f32 %v910, %v911
      %v913 = vsel %vm442, %v749, 0.0
      %v914 = vadd.f32 %v912, %v913
      %v915 = vsel %vm442, %v750, 0.0
      %v916 = vadd.f32 %v914, %v915
      %v917 = vsel %vm442, %v751, 0.0
      %v918 = vadd.f32 %v916, %v917
      %v919 = vsel %vm442, %v752, 0.0
      %v920 = vadd.f32 %v918, %v919
      %v921 = vsel %vm442, %v753, 0.0
      %v922 = vadd.f32 %v920, %v921
      %v923 = vsel %vm442, %v754, 0.0
      %v924 = vadd.f32 %v922, %v923
      %v925 = vsel %vm442, %v755, 0.0
      %v926 = vadd.f32 %v924, %v925
      %v927 = vsel %vm442, %v756, 0.0
      %v928 = vadd.f32 %v926, %v927
      %v929 = vsel %vm442, %v757, 0.0
      %v930 = vadd.f32 %v928, %v929
      %v931 = vsel %vm442, %v758, 0.0
      %v932 = vadd.f32 %v930, %v931
      %v933 = vsel %vm442, %v759, 0.0
      %v934 = vadd.f32 %v932, %v933
      %v935 = vsel %vm442, %v760, 0.0
      %v936 = vadd.f32 %v934, %v935
      %v937 = vsel %vm442, %v761, 0.0
      %v938 = vadd.f32 %v936, %v937
      %v939 = vsel %vm442, %v762, 0.0
      %v940 = vadd.f32 %v938, %v939
      %v941 = vsel %vm442, %v763, 0.0
      %v942 = vadd.f32 %v940, %v941
      %v943 = vsel %vm442, %v764, 0.0
      %v944 = vadd.f32 %v942, %v943
      %v945 = vsel %vm442, %v765, 0.0
      %v946 = vadd.f32 %v944, %v945
      %v947 = vsel %vm442, %v766, 0.0
      %v948 = vadd.f32 %v946, %v947
      %v949 = vsel %vm442, %v767, 0.0
      %v950 = vadd.f32 %v948, %v949
      %v951 = vsel %vm442, %v768, 0.0
      %v952 = vadd.f32 %v950, %v951
      %v953 = vsel %vm442, %v769, 0.0
      %v954 = vadd.f32 %v952, %v953
      %v955 = vsel %vm442, %v770, 0.0
      %v956 = vadd.f32 %v954, %v955
      %v957 = vsel %vm442, %v771, 0.0
      %v958 = vadd.f32 %v956, %v957
      %v959 = vsel %vm442, %v772, 0.0
      %v960 = vadd.f32 %v958, %v959
      %v961 = vsel %vm442, %v773, 0.0
      %v962 = vadd.f32 %v960, %v961
      %v963 = vsel %vm442, %v774, 0.0
      %v964 = vadd.f32 %v962, %v963
      %v965 = vsel %vm442, %v775, 0.0
      %v966 = vadd.f32 %v964, %v965
      %v967 = vrot.slane %v966, 4
      %v968 = vadd.f32 %v966, %v967
      %v969 = vrot.slane %v968, 2
      %v970 = vadd.f32 %v968, %v969
      %v971 = vrot.slane %v970, 1
      %v972 = vadd.f32 %v970, %v971
      %vm973 = vcmask 57344
      %974 = vst.msk [vmem:[%s211] sm:$0x1] %vm973, %v972
      %v975 = vmul.f32 %v712, %v712
      %v976 = vmul.f32 %v713, %v713
      %v977 = vmul.f32 %v714, %v714
      %v978 = vmul.f32 %v715, %v715
      %v979 = vmul.f32 %v716, %v716
      %v980 = vmul.f32 %v717, %v717
      %v981 = vmul.f32 %v718, %v718
      %v982 = vmul.f32 %v719, %v719
      %v983 = vmul.f32 %v720, %v720
      %v984 = vmul.f32 %v721, %v721
      %v985 = vmul.f32 %v722, %v722
      %v986 = vmul.f32 %v723, %v723
      %v987 = vmul.f32 %v724, %v724
      %v988 = vmul.f32 %v725, %v725
      %v989 = vmul.f32 %v726, %v726
      %v990 = vmul.f32 %v727, %v727
      %v991 = vmul.f32 %v728, %v728
      %v992 = vmul.f32 %v729, %v729
      %v993 = vmul.f32 %v730, %v730
      %v994 = vmul.f32 %v731, %v731
      %v995 = vmul.f32 %v732, %v732
      %v996 = vmul.f32 %v733, %v733
      %v997 = vmul.f32 %v734, %v734
      %v998 = vmul.f32 %v735, %v735
      %v999 = vmul.f32 %v736, %v736
      %v1000 = vmul.f32 %v737, %v737
      %v1001 = vmul.f32 %v738, %v738
      %v1002 = vmul.f32 %v739, %v739
      %v1003 = vmul.f32 %v740, %v740
      %v1004 = vmul.f32 %v741, %v741
      %v1005 = vmul.f32 %v742, %v742
      %v1006 = vmul.f32 %v743, %v743
      %v1007 = vmul.f32 %v744, %v744
      %v1008 = vmul.f32 %v745, %v745
      %v1009 = vmul.f32 %v746, %v746
      %v1010 = vmul.f32 %v747, %v747
      %v1011 = vmul.f32 %v748, %v748
      %v1012 = vmul.f32 %v749, %v749
      %v1013 = vmul.f32 %v750, %v750
      %v1014 = vmul.f32 %v751, %v751
      %v1015 = vmul.f32 %v752, %v752
      %v1016 = vmul.f32 %v753, %v753
      %v1017 = vmul.f32 %v754, %v754
      %v1018 = vmul.f32 %v755, %v755
      %v1019 = vmul.f32 %v756, %v756
      %v1020 = vmul.f32 %v757, %v757
      %v1021 = vmul.f32 %v758, %v758
      %v1022 = vmul.f32 %v759, %v759
      %v1023 = vmul.f32 %v760, %v760
      %v1024 = vmul.f32 %v761, %v761
      %v1025 = vmul.f32 %v762, %v762
      %v1026 = vmul.f32 %v763, %v763
      %v1027 = vmul.f32 %v764, %v764
      %v1028 = vmul.f32 %v765, %v765
      %v1029 = vmul.f32 %v766, %v766
      %v1030 = vmul.f32 %v767, %v767
      %v1031 = vmul.f32 %v768, %v768
      %v1032 = vmul.f32 %v769, %v769
      %v1033 = vmul.f32 %v770, %v770
      %v1034 = vmul.f32 %v771, %v771
      %v1035 = vmul.f32 %v772, %v772
      %v1036 = vmul.f32 %v773, %v773
      %v1037 = vmul.f32 %v774, %v774
      %v1038 = vmul.f32 %v775, %v775
      %v1039 = vsel %vm442, %v975, 0.0
      %v1040 = vsel %vm442, %v976, 0.0
      %v1041 = vadd.f32 %v1039, %v1040
      %v1042 = vsel %vm442, %v977, 0.0
      %v1043 = vadd.f32 %v1041, %v1042
      %v1044 = vsel %vm442, %v978, 0.0
      %v1045 = vadd.f32 %v1043, %v1044
      %v1046 = vsel %vm442, %v979, 0.0
      %v1047 = vadd.f32 %v1045, %v1046
      %v1048 = vsel %vm442, %v980, 0.0
      %v1049 = vadd.f32 %v1047, %v1048
      %v1050 = vsel %vm442, %v981, 0.0
      %v1051 = vadd.f32 %v1049, %v1050
      %v1052 = vsel %vm442, %v982, 0.0
      %v1053 = vadd.f32 %v1051, %v1052
      %v1054 = vsel %vm442, %v983, 0.0
      %v1055 = vadd.f32 %v1053, %v1054
      %v1056 = vsel %vm442, %v984, 0.0
      %v1057 = vadd.f32 %v1055, %v1056
      %v1058 = vsel %vm442, %v985, 0.0
      %v1059 = vadd.f32 %v1057, %v1058
      %v1060 = vsel %vm442, %v986, 0.0
      %v1061 = vadd.f32 %v1059, %v1060
      %v1062 = vsel %vm442, %v987, 0.0
      %v1063 = vadd.f32 %v1061, %v1062
      %v1064 = vsel %vm442, %v988, 0.0
      %v1065 = vadd.f32 %v1063, %v1064
      %v1066 = vsel %vm442, %v989, 0.0
      %v1067 = vadd.f32 %v1065, %v1066
      %v1068 = vsel %vm442, %v990, 0.0
      %v1069 = vadd.f32 %v1067, %v1068
      %v1070 = vsel %vm442, %v991, 0.0
      %v1071 = vadd.f32 %v1069, %v1070
      %v1072 = vsel %vm442, %v992, 0.0
      %v1073 = vadd.f32 %v1071, %v1072
      %v1074 = vsel %vm442, %v993, 0.0
      %v1075 = vadd.f32 %v1073, %v1074
      %v1076 = vsel %vm442, %v994, 0.0
      %v1077 = vadd.f32 %v1075, %v1076
      %v1078 = vsel %vm442, %v995, 0.0
      %v1079 = vadd.f32 %v1077, %v1078
      %v1080 = vsel %vm442, %v996, 0.0
      %v1081 = vadd.f32 %v1079, %v1080
      %v1082 = vsel %vm442, %v997, 0.0
      %v1083 = vadd.f32 %v1081, %v1082
      %v1084 = vsel %vm442, %v998, 0.0
      %v1085 = vadd.f32 %v1083, %v1084
      %v1086 = vsel %vm442, %v999, 0.0
      %v1087 = vadd.f32 %v1085, %v1086
      %v1088 = vsel %vm442, %v1000, 0.0
      %v1089 = vadd.f32 %v1087, %v1088
      %v1090 = vsel %vm442, %v1001, 0.0
      %v1091 = vadd.f32 %v1089, %v1090
      %v1092 = vsel %vm442, %v1002, 0.0
      %v1093 = vadd.f32 %v1091, %v1092
      %v1094 = vsel %vm442, %v1003, 0.0
      %v1095 = vadd.f32 %v1093, %v1094
      %v1096 = vsel %vm442, %v1004, 0.0
      %v1097 = vadd.f32 %v1095, %v1096
      %v1098 = vsel %vm442, %v1005, 0.0
      %v1099 = vadd.f32 %v1097, %v1098
      %v1100 = vsel %vm442, %v1006, 0.0
      %v1101 = vadd.f32 %v1099, %v1100
      %v1102 = vsel %vm442, %v1007, 0.0
      %v1103 = vadd.f32 %v1101, %v1102
      %v1104 = vsel %vm442, %v1008, 0.0
      %v1105 = vadd.f32 %v1103, %v1104
      %v1106 = vsel %vm442, %v1009, 0.0
      %v1107 = vadd.f32 %v1105, %v1106
      %v1108 = vsel %vm442, %v1010, 0.0
      %v1109 = vadd.f32 %v1107, %v1108
      %v1110 = vsel %vm442, %v1011, 0.0
      %v1111 = vadd.f32 %v1109, %v1110
      %v1112 = vsel %vm442, %v1012, 0.0
      %v1113 = vadd.f32 %v1111, %v1112
      %v1114 = vsel %vm442, %v1013, 0.0
      %v1115 = vadd.f32 %v1113, %v1114
      %v1116 = vsel %vm442, %v1014, 0.0
      %v1117 = vadd.f32 %v1115, %v1116
      %v1118 = vsel %vm442, %v1015, 0.0
      %v1119 = vadd.f32 %v1117, %v1118
      %v1120 = vsel %vm442, %v1016, 0.0
      %v1121 = vadd.f32 %v1119, %v1120
      %v1122 = vsel %vm442, %v1017, 0.0
      %v1123 = vadd.f32 %v1121, %v1122
      %v1124 = vsel %vm442, %v1018, 0.0
      %v1125 = vadd.f32 %v1123, %v1124
      %v1126 = vsel %vm442, %v1019, 0.0
      %v1127 = vadd.f32 %v1125, %v1126
      %v1128 = vsel %vm442, %v1020, 0.0
      %v1129 = vadd.f32 %v1127, %v1128
      %v1130 = vsel %vm442, %v1021, 0.0
      %v1131 = vadd.f32 %v1129, %v1130
      %v1132 = vsel %vm442, %v1022, 0.0
      %v1133 = vadd.f32 %v1131, %v1132
      %v1134 = vsel %vm442, %v1023, 0.0
      %v1135 = vadd.f32 %v1133, %v1134
      %v1136 = vsel %vm442, %v1024, 0.0
      %v1137 = vadd.f32 %v1135, %v1136
      %v1138 = vsel %vm442, %v1025, 0.0
      %v1139 = vadd.f32 %v1137, %v1138
      %v1140 = vsel %vm442, %v1026, 0.0
      %v1141 = vadd.f32 %v1139, %v1140
      %v1142 = vsel %vm442, %v1027, 0.0
      %v1143 = vadd.f32 %v1141, %v1142
      %v1144 = vsel %vm442, %v1028, 0.0
      %v1145 = vadd.f32 %v1143, %v1144
      %v1146 = vsel %vm442, %v1029, 0.0
      %v1147 = vadd.f32 %v1145, %v1146
      %v1148 = vsel %vm442, %v1030, 0.0
      %v1149 = vadd.f32 %v1147, %v1148
      %v1150 = vsel %vm442, %v1031, 0.0
      %v1151 = vadd.f32 %v1149, %v1150
      %v1152 = vsel %vm442, %v1032, 0.0
      %v1153 = vadd.f32 %v1151, %v1152
      %v1154 = vsel %vm442, %v1033, 0.0
      %v1155 = vadd.f32 %v1153, %v1154
      %v1156 = vsel %vm442, %v1034, 0.0
      %v1157 = vadd.f32 %v1155, %v1156
      %v1158 = vsel %vm442, %v1035, 0.0
      %v1159 = vadd.f32 %v1157, %v1158
      %v1160 = vsel %vm442, %v1036, 0.0
      %v1161 = vadd.f32 %v1159, %v1160
      %v1162 = vsel %vm442, %v1037, 0.0
      %v1163 = vadd.f32 %v1161, %v1162
      %v1164 = vsel %vm442, %v1038, 0.0
      %v1165 = vadd.f32 %v1163, %v1164
      %v1166 = vrot.slane %v1165, 4
      %v1167 = vadd.f32 %v1165, %v1166
      %v1168 = vrot.slane %v1167, 2
      %v1169 = vadd.f32 %v1167, %v1168
      %v1170 = vrot.slane %v1169, 1
      %v1171 = vadd.f32 %v1169, %v1170
      %1172 = vst.msk [vmem:[%s211 + $0x1] sm:$0x1] %vm973, %v1171
      %s1173 = smul.u32 64, %s16
      %p1174 = scmp.lt.s32.totalorder %s1173, 127
      %s1175 = scalar_select %p1174, %s1173, 127
      %s1176 = smul.addr %s1175, 8
      %s1177 = scalar_lea.vmem %s3, %s1176
      %p1178 = scmp.lt.s32.totalorder %s16, 1
      %s1179 = scalar_select %p1178, %s16, 1
      %s1180 = smul.addr %s1179, 2
      %s1181 = scalar_lea.vmem %s4, %s1180
      // Predicated region
      $region33: #{conv_block_up_forward.13} parent=31 // pred_check
        %p1182 = pneg %p102
      $region34: #{conv_block_up_forward.13} parent=31 // pred_check_branch
        %1184 = sbr.rel (%p1182) target = $region36
      $region35: #{conv_block_up_forward.13} parent=31 // pred_region
        %s1185 = smul.u32 64, %s16
      $region36: #{conv_block_up_forward.13} parent=31 // pred_fallthru
        _
      // Predicated region
      $region37: #{conv_block_up_forward.13} parent=31 // pred_check
        %p1186 = pneg %p128
      $region38: #{conv_block_up_forward.13} parent=31 // pred_check_branch
        %1188 = sbr.rel (%p1186) target = $region40
      $region39: #{conv_block_up_forward.13} parent=31 // pred_region
        _
      $region40: #{conv_block_up_forward.13} parent=31 // pred_fallthru
        _
    $region32: #{conv_block_up_forward.13} parent=5 // pred_fallthru
      _
    %p1189 = scmp.le.s32.totalorder 2, %s11
    // Predicated region
    $region41: #{conv_block_up_forward.13} parent=5 // pred_check
      %p1190 = pneg %p1189
    $region42: #{conv_block_up_forward.13} parent=5 // pred_check_branch
      %1192 = sbr.rel (%p1190) target = $region44
    $region43: #{conv_block_up_forward.13} parent=5 // pred_region
      %s1193 = ssub.s32 %s11, 2
      // Predicated region
      $region45: #{conv_block_up_forward.13} parent=43 // pred_check
        %p1194 = pneg %p108
      $region46: #{conv_block_up_forward.13} parent=43 // pred_check_branch
        %1196 = sbr.rel (%p1194) target = $region48
      $region47: #{conv_block_up_forward.13} parent=43 // pred_region
        %s1197 = smul.u32 64, %s17
        %p1198 = scmp.lt.s32.totalorder %s1197, 127
        %s1199 = scalar_select %p1198, %s1197, 127
        %s1200 = smul.addr %s1199, 8
        %s1201 = scalar_lea.vmem %s3, %s1200
      $region48: #{conv_block_up_forward.13} parent=43 // pred_fallthru
        _
      // Predicated region
      $region49: #{conv_block_up_forward.13} parent=43 // pred_check
        %p1202 = pneg %p134
      $region50: #{conv_block_up_forward.13} parent=43 // pred_check_branch
        %1204 = sbr.rel (%p1202) target = $region52
      $region51: #{conv_block_up_forward.13} parent=43 // pred_region
        %p1205 = scmp.lt.s32.totalorder %s17, 1
        %s1206 = scalar_select %p1205, %s17, 1
        %s1207 = smul.addr %s1206, 2
        %s1208 = scalar_lea.vmem %s4, %s1207
      $region52: #{conv_block_up_forward.13} parent=43 // pred_fallthru
        _
    $region44: #{conv_block_up_forward.13} parent=5 // pred_fallthru
      _
  $region6: #{conv_block_up_forward.13} parent=0 // loop_footer
    %s15 = sadd.s32 1, %s11
  $region7: #{conv_block_up_forward.13} parent=0 // loop_footer_branch
    %10 = sbr.rel target = $region3
  $region8: #{conv_block_up_forward.13} parent=0 // loop_exit
    _

// kernel: tile.23
$region0: #{tile.23}
  #allocation0 [shape = 's32[1]{0}', space=sflag, size = 0x4, scoped, tag = 'scoped memory for tile.23']
  %s0 = inlined_call_operand.vmem [shape: f32[8], index: 0, kind: input, shape index: {}]
  %s1 = inlined_call_operand.vmem [shape: f32[16,8], index: 1, kind: output, shape index: {}]
  // Predicated region
  $region2: #{tile.23} parent=0 // pred_check
    _
  $region3: #{tile.23} parent=0 // pred_check_branch
    %3 = sbr.rel (0) target = $region5
  $region4: #{tile.23} parent=0 // pred_region
    _
  $region5: #{tile.23} parent=0 // pred_fallthru
    _
  %v4 = vld [vmem:[%s0] ss:$0 sm:$0xff]
  %5 = vst [vmem:[%s1] sm:$0xff] %v4
  %s6 = scalar_lea.vmem %s1, 8
  %7 = vst [vmem:[%s6] sm:$0xff] %v4

// kernel: tile.24
$region0: #{tile.24}
  %s0 = inlined_call_operand.vmem [shape: f32[16,8], index: 0, kind: input, shape index: {}]
  %s1 = inlined_call_operand.vmem [shape: f32[1,128], index: 1, kind: output, shape index: {}]
  $region1: #{tile.24} parent=0
    #allocation0 [shape = 'u8[4096]{0}', space=vmem, size = 0x1000, scoped, tag = 'scoped mem for output reshape']
    %v2 = vld [vmem:[%s0] sm:$0x1]
    %vm3 = vcmask 64512
    %4 = vst.msk [vmem:[#allocation0] sm:$0x1] %vm3, %v2
    %s5 = scalar_lea.vmem %s0, 15
    %v6 = vld [vmem:[%s5] sm:$0x1]
    %7 = vrot.lane.b32.xlu0 %v6, 120
    %v8 = vpop.permute.xlu0 %7
    %vm9 = vcmask 1048512
    %10 = vst.msk [vmem:[#allocation0] sm:$0x1] %vm9, %v8
    %s11 = scalar_lea.vmem %s0, 14
    %v12 = vld [vmem:[%s11] sm:$0x1]
    %13 = vrot.lane.b32.xlu0 %v12, 112
    %v14 = vpop.permute.xlu0 %13
    %vm15 = vcmask 982912
    %16 = vst.msk [vmem:[#allocation0] sm:$0x1] %vm15, %v14
    %s17 = scalar_lea.vmem %s0, 13
    %v18 = vld [vmem:[%s17] sm:$0x1]
    %19 = vrot.lane.b32.xlu0 %v18, 104
    %v20 = vpop.permute.xlu0 %19
    %vm21 = vcmask 917312
    %22 = vst.msk [vmem:[#allocation0] sm:$0x1] %vm21, %v20
    %s23 = scalar_lea.vmem %s0, 12
    %v24 = vld [vmem:[%s23] sm:$0x1]
    %25 = vrot.lane.b32.xlu0 %v24, 96
    %v26 = vpop.permute.xlu0 %25
    %vm27 = vcmask 851712
    %28 = vst.msk [vmem:[#allocation0] sm:$0x1] %vm27, %v26
    %s29 = scalar_lea.vmem %s0, 11
    %v30 = vld [vmem:[%s29] sm:$0x1]
    %31 = vrot.lane.b32.xlu0 %v30, 88
    %v32 = vpop.permute.xlu0 %31
    %vm33 = vcmask 786112
    %34 = vst.msk [vmem:[#allocation0] sm:$0x1] %vm33, %v32
    %s35 = scalar_lea.vmem %s0, 10
    %v36 = vld [vmem:[%s35] sm:$0x1]
    %37 = vrot.lane.b32.xlu0 %v36, 80
    %v38 = vpop.permute.xlu0 %37
    %vm39 = vcmask 720512
    %40 = vst.msk [vmem:[#allocation0] sm:$0x1] %vm39, %v38
    %s41 = scalar_lea.vmem %s0, 9
    %v42 = vld [vmem:[%s41] sm:$0x1]
    %43 = vrot.lane.b32.xlu0 %v42, 72
    %v44 = vpop.permute.xlu0 %43
    %vm45 = vcmask 654912
    %46 = vst.msk [vmem:[#allocation0] sm:$0x1] %vm45, %v44
    %s47 = scalar_lea.vmem %s0, 8
    %v48 = vld [vmem:[%s47] sm:$0x1]
    %49 = vrot.lane.b32.xlu0 %v48, 64
    %v50 = vpop.permute.xlu0 %49
    %vm51 = vcmask 589312
    %52 = vst.msk [vmem:[#allocation0] sm:$0x1] %vm51, %v50
    %s53 = scalar_lea.vmem %s0, 7
    %v54 = vld [vmem:[%s53] sm:$0x1]
    %55 = vrot.lane.b32.xlu0 %v54, 56
    %v56 = vpop.permute.xlu0 %55
    %vm57 = vcmask 523712
    %58 = vst.msk [vmem:[#allocation0] sm:$0x1] %vm57, %v56
    %s59 = scalar_lea.vmem %s0, 6
    %v60 = vld [vmem:[%s59] sm:$0x1]
    %61 = vrot.lane.b32.xlu0 %v60, 48
    %v62 = vpop.permute.xlu0 %61
    %vm63 = vcmask 458112
    %64 = vst.msk [vmem:[#allocation0] sm:$0x1] %vm63, %v62
    %s65 = scalar_lea.vmem %s0, 5
    %v66 = vld [vmem:[%s65] sm:$0x1]
    %67 = vrot.lane.b32.xlu0 %v66, 40
    %v68 = vpop.permute.xlu0 %67
    %vm69 = vcmask 392512
    %70 = vst.msk [vmem:[#allocation0] sm:$0x1] %vm69, %v68
    %s71 = scalar_lea.vmem %s0, 4
    %v72 = vld [vmem:[%s71] sm:$0x1]
    %73 = vrot.lane.b32.xlu0 %v72, 32
    %v74 = vpop.permute.xlu0 %73
    %vm75 = vcmask 326912
    %76 = vst.msk [vmem:[#allocation0] sm:$0x1] %vm75, %v74
    %s77 = scalar_lea.vmem %s0, 3
    %v78 = vld [vmem:[%s77] sm:$0x1]
    %79 = vrot.lane.b32.xlu0 %v78, 24
    %v80 = vpop.permute.xlu0 %79
    %vm81 = vcmask 261312
    %82 = vst.msk [vmem:[#allocation0] sm:$0x1] %vm81, %v80
    %s83 = scalar_lea.vmem %s0, 2
    %v84 = vld [vmem:[%s83] sm:$0x1]
    %85 = vrot.lane.b32.xlu0 %v84, 16
    %v86 = vpop.permute.xlu0 %85
    %vm87 = vcmask 195712
    %88 = vst.msk [vmem:[#allocation0] sm:$0x1] %vm87, %v86
    %s89 = scalar_lea.vmem %s0, 1
    %v90 = vld [vmem:[%s89] sm:$0x1]
    %91 = vrot.lane.b32.xlu0 %v90, 8
    %v92 = vpop.permute.xlu0 %91
    %vm93 = vcmask 130112
    %94 = vst.msk [vmem:[#allocation0] sm:$0x1] %vm93, %v92
    %s96 = ssub.s32 2, 1
    %v97 = vld [vmem:[#allocation0] sm:%s96]
    %s99 = ssub.s32 2, 1
    %100 = vst [vmem:[%s1] sm:%s99] %v97

// kernel: conv_block_up_forward.11
$region0: #{conv_block_up_forward.11}
  #allocation0 [shape = 'u32[]', space=smem, size = 0x4, offset = 0x4, fixed_abs, tag = 'smem constant byte address 0x4 - core index']
  #allocation1 [shape = 'u32[72,128]{1,0:T(1,128)}', space=vmem, size = 0x9000, scoped, tag = 'internal scratch']
  %s0 = inlined_call_operand.vmem [shape: bf16[1024,4], index: 0, kind: input, shape index: {}]
  %s1 = inlined_call_operand.vmem [shape: bf16[4,8], index: 1, kind: input, shape index: {}]
  %s2 = inlined_call_operand.vmem [shape: f32[1,8], index: 2, kind: input, shape index: {}]
  %s3 = inlined_call_operand.vmem [shape: f32[1024,8], index: 3, kind: output, shape index: {0}]
  %s4 = inlined_call_operand.vmem [shape: f32[2,2,8], index: 4, kind: output, shape index: {1}]
  %5 = xla_tuple %s3, %s4
  %s6 = sld [smem:[#allocation0]]
  $region53: #{conv_block_up_forward.11} parent=0
    _
  %s8 = ssub.s32 1, %s6
  %s9 = scalar_select 0, %s8, %s6
  loop: start=0, step=1, limit=4
  $region2: #{conv_block_up_forward.11} parent=0 // loop_pre_header
    _
  $region3: #{conv_block_up_forward.11} parent=0 // loop_header
    %s11 = sphi 0, %s15
    %p12 = scmp.ge.s32.totalorder %s11, 4
    %s21 = sphi 0, %s23
    %s24 = sphi 0, %s21
    %s25 = sphi 0, %s24
    %s41 = sphi 0, %s25
    %s45 = sphi 0, %s45
    %s47 = sphi 0, %s45
    %s48 = sphi 0, %s47
    %s62 = sphi 0, %s48
    %s66 = sphi 0, %s66
    %s68 = sphi 0, %s66
    %s69 = sphi 0, %s68
    %s83 = sphi 0, %s69
    %s89 = sphi 0, %s91
    %s92 = sphi 0, %s89
    %s93 = sphi 0, %s92
    %s109 = sphi 0, %s93
    %s115 = sphi 0, %s117
    %s118 = sphi 0, %s115
    %s119 = sphi 0, %s118
    %s135 = sphi 0, %s119
  $region4: #{conv_block_up_forward.11} parent=0 // loop_header_branch
    %14 = sbr.rel (%p12) target = $region8
  $region5: #{conv_block_up_forward.11} parent=0 // loop_body
    %s16 = ssub.s32 %s11, 1
    %s17 = ssub.s32 %s11, 2
    %s18 = sadd.s32 %s11, 1
    %s19 = ssub.s32 %s11, %s18
    %p20 = scmp.eq.s32.totalorder %s19, 0
    %s22 = sadd.s32 %s21, 1
    %s23 = scalar_select %p20, %s21, %s22
    %p26 = pneg %p20
    %p27 = scmp.eq.s32.totalorder %s11, 1
    %p28 = por %p26, %p27
    %p29 = scmp.ne.s32.totalorder %s21, %s24
    %p30 = scmp.eq.s32.totalorder %s11, 0
    %p31 = por %p29, %p30
    %p32 = scmp.ne.s32.totalorder %s21, %s24
    %p33 = scmp.eq.s32.totalorder %s16, 1
    %p34 = por %p32, %p33
    %p35 = scmp.ne.s32.totalorder %s24, %s25
    %p36 = scmp.eq.s32.totalorder %s16, 0
    %p37 = por %p35, %p36
    %p38 = scmp.ne.s32.totalorder %s24, %s25
    %p39 = scmp.eq.s32.totalorder %s17, 1
    %p40 = por %p38, %p39
    %p42 = scmp.ne.s32.totalorder %s25, %s41
    %p43 = scmp.eq.s32.totalorder %s17, 0
    %p44 = por %p42, %p43
    %s46 = sadd.s32 %s45, 1
    %p49 = scmp.eq.s32.totalorder %s11, 1
    %p50 = scmp.ne.s32.totalorder %s45, %s47
    %p51 = scmp.eq.s32.totalorder %s11, 0
    %p52 = por %p50, %p51
    %p53 = scmp.ne.s32.totalorder %s45, %s47
    %p54 = scmp.eq.s32.totalorder %s16, 1
    %p55 = por %p53, %p54
    %p56 = scmp.ne.s32.totalorder %s47, %s48
    %p57 = scmp.eq.s32.totalorder %s16, 0
    %p58 = por %p56, %p57
    %p59 = scmp.ne.s32.totalorder %s47, %s48
    %p60 = scmp.eq.s32.totalorder %s17, 1
    %p61 = por %p59, %p60
    %p63 = scmp.ne.s32.totalorder %s48, %s62
    %p64 = scmp.eq.s32.totalorder %s17, 0
    %p65 = por %p63, %p64
    %s67 = sadd.s32 %s66, 1
    %p70 = scmp.eq.s32.totalorder %s11, 1
    %p71 = scmp.ne.s32.totalorder %s66, %s68
    %p72 = scmp.eq.s32.totalorder %s11, 0
    %p73 = por %p71, %p72
    %p74 = scmp.ne.s32.totalorder %s66, %s68
    %p75 = scmp.eq.s32.totalorder %s16, 1
    %p76 = por %p74, %p75
    %p77 = scmp.ne.s32.totalorder %s68, %s69
    %p78 = scmp.eq.s32.totalorder %s16, 0
    %p79 = por %p77, %p78
    %p80 = scmp.ne.s32.totalorder %s68, %s69
    %p81 = scmp.eq.s32.totalorder %s17, 1
    %p82 = por %p80, %p81
    %p84 = scmp.ne.s32.totalorder %s69, %s83
    %p85 = scmp.eq.s32.totalorder %s17, 0
    %p86 = por %p84, %p85
    %s87 = ssub.s32 %s11, %s18
    %p88 = scmp.eq.s32.totalorder %s87, 0
    %s90 = sadd.s32 %s89, 1
    %s91 = scalar_select %p88, %s89, %s90
    %p94 = pneg %p88
    %p95 = scmp.eq.s32.totalorder %s11, 1
    %p96 = por %p94, %p95
    %p97 = scmp.ne.s32.totalorder %s89, %s92
    %p98 = scmp.eq.s32.totalorder %s11, 0
    %p99 = por %p97, %p98
    %p100 = scmp.ne.s32.totalorder %s89, %s92
    %p101 = scmp.eq.s32.totalorder %s16, 1
    %p102 = por %p100, %p101
    %p103 = scmp.ne.s32.totalorder %s92, %s93
    %p104 = scmp.eq.s32.totalorder %s16, 0
    %p105 = por %p103, %p104
    %p106 = scmp.ne.s32.totalorder %s92, %s93
    %p107 = scmp.eq.s32.totalorder %s17, 1
    %p108 = por %p106, %p107
    %p110 = scmp.ne.s32.totalorder %s93, %s109
    %p111 = scmp.eq.s32.totalorder %s17, 0
    %p112 = por %p110, %p111
    %s113 = ssub.s32 %s11, %s18
    %p114 = scmp.eq.s32.totalorder %s113, 0
    %s116 = sadd.s32 %s115, 1
    %s117 = scalar_select %p114, %s115, %s116
    %p120 = pneg %p114
    %p121 = scmp.eq.s32.totalorder %s11, 1
    %p122 = por %p120, %p121
    %p123 = scmp.ne.s32.totalorder %s115, %s118
    %p124 = scmp.eq.s32.totalorder %s11, 0
    %p125 = por %p123, %p124
    %p126 = scmp.ne.s32.totalorder %s115, %s118
    %p127 = scmp.eq.s32.totalorder %s16, 1
    %p128 = por %p126, %p127
    %p129 = scmp.ne.s32.totalorder %s118, %s119
    %p130 = scmp.eq.s32.totalorder %s16, 0
    %p131 = por %p129, %p130
    %p132 = scmp.ne.s32.totalorder %s118, %s119
    %p133 = scmp.eq.s32.totalorder %s17, 1
    %p134 = por %p132, %p133
    %p136 = scmp.ne.s32.totalorder %s119, %s135
    %p137 = scmp.eq.s32.totalorder %s17, 0
    %p138 = por %p136, %p137
    %p139 = scmp.le.s32.totalorder 1, %s11
    %p140 = scmp.lt.s32.totalorder %s11, 3
    %p141 = pnand %p139, %p140
    %p142 = pneg %p141
    // Predicated region
    $region9: #{conv_block_up_forward.11} parent=5 // pred_check
      _
    $region10: #{conv_block_up_forward.11} parent=5 // pred_check_branch
      %144 = sbr.rel (%p141) target = $region12
    $region11: #{conv_block_up_forward.11} parent=5 // pred_region
      %s145 = ssub.s32 %s11, 1
      // Predicated region
      $region13: #{conv_block_up_forward.11} parent=11 // pred_check
        %p146 = pneg %p58
      $region14: #{conv_block_up_forward.11} parent=11 // pred_check_branch
        %148 = sbr.rel (%p146) target = $region16
      $region15: #{conv_block_up_forward.11} parent=11 // pred_region
        _
      $region16: #{conv_block_up_forward.11} parent=11 // pred_fallthru
        _
      // Predicated region
      $region17: #{conv_block_up_forward.11} parent=11 // pred_check
        %p149 = pneg %p79
      $region18: #{conv_block_up_forward.11} parent=11 // pred_check_branch
        %151 = sbr.rel (%p149) target = $region20
      $region19: #{conv_block_up_forward.11} parent=11 // pred_region
        _
      $region20: #{conv_block_up_forward.11} parent=11 // pred_fallthru
        _
    $region12: #{conv_block_up_forward.11} parent=5 // pred_fallthru
      _
    %p152 = scmp.lt.s32.totalorder %s11, 2
    // Predicated region
    $region21: #{conv_block_up_forward.11} parent=5 // pred_check
      %p153 = pneg %p152
    $region22: #{conv_block_up_forward.11} parent=5 // pred_check_branch
      %155 = sbr.rel (%p153) target = $region24
    $region23: #{conv_block_up_forward.11} parent=5 // pred_region
      // Predicated region
      $region25: #{conv_block_up_forward.11} parent=23 // pred_check
        %p156 = pneg %p31
      $region26: #{conv_block_up_forward.11} parent=23 // pred_check_branch
        %158 = sbr.rel (%p156) target = $region28
      $region27: #{conv_block_up_forward.11} parent=23 // pred_region
        %s159 = smul.u32 64, %s11
        %p160 = scmp.lt.s32.totalorder %s159, 127
        %s161 = scalar_select %p160, %s159, 127
        %s162 = smul.addr %s161, 4
        %s163 = scalar_lea.vmem %s0, %s162
        %s164 = smul.u32 64, %s11
      $region28: #{conv_block_up_forward.11} parent=23 // pred_fallthru
        _
    $region24: #{conv_block_up_forward.11} parent=5 // pred_fallthru
      _
    %p165 = scmp.le.s32.totalorder 1, %s11
    %p166 = scmp.lt.s32.totalorder %s11, 3
    %p167 = pnand %p165, %p166
    %p168 = pneg %p167
    // Predicated region
    $region29: #{conv_block_up_forward.11} parent=5 // pred_check
      _
    $region30: #{conv_block_up_forward.11} parent=5 // pred_check_branch
      %170 = sbr.rel (%p167) target = $region32
    $region31: #{conv_block_up_forward.11} parent=5 // pred_region
      %s171 = ssub.s32 %s11, 1
      %s172 = smul.u32 64, %s16
      %p173 = scmp.lt.s32.totalorder %s172, 127
      %s174 = scalar_select %p173, %s172, 127
      %s175 = smul.addr %s174, 4
      %s176 = scalar_lea.vmem %s0, %s175
      %p177 = pneg %p37
      %p178 = pneg %p34
      %p179 = pneg %p58
      %p180 = pneg %p55
      %p181 = pneg %p79
      %p182 = pneg %p76
      %p183 = pneg %p105
      %p184 = pneg %p102
      %s185 = smul.u32 64, %s16
      %p186 = scmp.lt.s32.totalorder %s185, 127
      %s187 = scalar_select %p186, %s185, 127
      %s188 = smul.addr %s187, 8
      %s189 = scalar_lea.vmem %s3, %s188
      %p190 = pneg %p131
      %p191 = pneg %p128
      %p192 = scmp.lt.s32.totalorder %s16, 1
      %s193 = scalar_select %p192, %s16, 1
      %s194 = smul.addr %s193, 2
      %s195 = scalar_lea.vmem %s4, %s194
      %s196 = smul.u32 64, %s16
      %p197 = scmp.lt.s32.totalorder %s196, 127
      %s198 = scalar_select %p197, %s196, 127
      %s199 = smul.addr %s198, 4
      %s200 = scalar_lea.vmem %s0, %s199
      %s201 = smul.u32 64, %s16
      %s202 = smul.u32 64, %s16
      %p203 = scmp.lt.s32.totalorder %s202, 127
      %s204 = scalar_select %p203, %s202, 127
      %s205 = smul.addr %s204, 8
      %s206 = scalar_lea.vmem %s3, %s205
      %s207 = smul.u32 64, %s16
      %p208 = scmp.lt.s32.totalorder %s16, 1
      %s209 = scalar_select %p208, %s16, 1
      %s210 = smul.addr %s209, 2
      %s211 = scalar_lea.vmem %s4, %s210
      %v213 = vld [vmem:[%s200] sm:$0xf]
      %v214 = vld [vmem:[%s200 + $0x4] sm:$0xf]
      %v215 = vld [vmem:[%s200 + $0x8] sm:$0xf]
      %v216 = vld [vmem:[%s200 + $0xc] sm:$0xf]
      %v217 = vld [vmem:[%s200 + $0x10] sm:$0xf]
      %v218 = vld [vmem:[%s200 + $0x14] sm:$0xf]
      %v219 = vld [vmem:[%s200 + $0x18] sm:$0xf]
      %v220 = vld [vmem:[%s200 + $0x1c] sm:$0xf]
      %v221 = vld [vmem:[%s200 + $0x20] sm:$0xf]
      %v222 = vld [vmem:[%s200 + $0x24] sm:$0xf]
      %v223 = vld [vmem:[%s200 + $0x28] sm:$0xf]
      %v224 = vld [vmem:[%s200 + $0x2c] sm:$0xf]
      %v225 = vld [vmem:[%s200 + $0x30] sm:$0xf]
      %v226 = vld [vmem:[%s200 + $0x34] sm:$0xf]
      %v227 = vld [vmem:[%s200 + $0x38] sm:$0xf]
      %v228 = vld [vmem:[%s200 + $0x3c] sm:$0xf]
      %v229 = vld [vmem:[%s200 + $0x40] sm:$0xf]
      %v230 = vld [vmem:[%s200 + $0x44] sm:$0xf]
      %v231 = vld [vmem:[%s200 + $0x48] sm:$0xf]
      %v232 = vld [vmem:[%s200 + $0x4c] sm:$0xf]
      %v233 = vld [vmem:[%s200 + $0x50] sm:$0xf]
      %v234 = vld [vmem:[%s200 + $0x54] sm:$0xf]
      %v235 = vld [vmem:[%s200 + $0x58] sm:$0xf]
      %v236 = vld [vmem:[%s200 + $0x5c] sm:$0xf]
      %v237 = vld [vmem:[%s200 + $0x60] sm:$0xf]
      %v238 = vld [vmem:[%s200 + $0x64] sm:$0xf]
      %v239 = vld [vmem:[%s200 + $0x68] sm:$0xf]
      %v240 = vld [vmem:[%s200 + $0x6c] sm:$0xf]
      %v241 = vld [vmem:[%s200 + $0x70] sm:$0xf]
      %v242 = vld [vmem:[%s200 + $0x74] sm:$0xf]
      %v243 = vld [vmem:[%s200 + $0x78] sm:$0xf]
      %v244 = vld [vmem:[%s200 + $0x7c] sm:$0xf]
      %v245 = vld [vmem:[%s200 + $0x80] sm:$0xf]
      %v246 = vld [vmem:[%s200 + $0x84] sm:$0xf]
      %v247 = vld [vmem:[%s200 + $0x88] sm:$0xf]
      %v248 = vld [vmem:[%s200 + $0x8c] sm:$0xf]
      %v249 = vld [vmem:[%s200 + $0x90] sm:$0xf]
      %v250 = vld [vmem:[%s200 + $0x94] sm:$0xf]
      %v251 = vld [vmem:[%s200 + $0x98] sm:$0xf]
      %v252 = vld [vmem:[%s200 + $0x9c] sm:$0xf]
      %v253 = vld [vmem:[%s200 + $0xa0] sm:$0xf]
      %v254 = vld [vmem:[%s200 + $0xa4] sm:$0xf]
      %v255 = vld [vmem:[%s200 + $0xa8] sm:$0xf]
      %v256 = vld [vmem:[%s200 + $0xac] sm:$0xf]
      %v257 = vld [vmem:[%s200 + $0xb0] sm:$0xf]
      %v258 = vld [vmem:[%s200 + $0xb4] sm:$0xf]
      %v259 = vld [vmem:[%s200 + $0xb8] sm:$0xf]
      %v260 = vld [vmem:[%s200 + $0xbc] sm:$0xf]
      %v261 = vld [vmem:[%s200 + $0xc0] sm:$0xf]
      %v262 = vld [vmem:[%s200 + $0xc4] sm:$0xf]
      %v263 = vld [vmem:[%s200 + $0xc8] sm:$0xf]
      %v264 = vld [vmem:[%s200 + $0xcc] sm:$0xf]
      %v265 = vld [vmem:[%s200 + $0xd0] sm:$0xf]
      %v266 = vld [vmem:[%s200 + $0xd4] sm:$0xf]
      %v267 = vld [vmem:[%s200 + $0xd8] sm:$0xf]
      %v268 = vld [vmem:[%s200 + $0xdc] sm:$0xf]
      %v269 = vld [vmem:[%s200 + $0xe0] sm:$0xf]
      %v270 = vld [vmem:[%s200 + $0xe4] sm:$0xf]
      %v271 = vld [vmem:[%s200 + $0xe8] sm:$0xf]
      %v272 = vld [vmem:[%s200 + $0xec] sm:$0xf]
      %v273 = vld [vmem:[%s200 + $0xf0] sm:$0xf]
      %v274 = vld [vmem:[%s200 + $0xf4] sm:$0xf]
      %v275 = vld [vmem:[%s200 + $0xf8] sm:$0xf]
      %v276 = vld [vmem:[%s200 + $0xfc] sm:$0xf]
      %v277 = vld [vmem:[%s1] sm:$0x3]
      %v278 = vld [vmem:[%s2] sm:$0x1]
      %v280 = vperm.slane %v278, 0
      %v346 = vunpack.c.l.b16 %v213
      %v347 = vunpack.c.l.b16 %v214
      %v348 = vunpack.c.l.b16 %v215
      %v349 = vunpack.c.l.b16 %v216
      %v350 = vunpack.c.l.b16 %v217
      %v351 = vunpack.c.l.b16 %v218
      %v352 = vunpack.c.l.b16 %v219
      %v353 = vunpack.c.l.b16 %v220
      %v354 = vunpack.c.l.b16 %v221
      %v355 = vunpack.c.l.b16 %v222
      %v356 = vunpack.c.l.b16 %v223
      %v357 = vunpack.c.l.b16 %v224
      %v358 = vunpack.c.l.b16 %v225
      %v359 = vunpack.c.l.b16 %v226
      %v360 = vunpack.c.l.b16 %v227
      %v361 = vunpack.c.l.b16 %v228
      %v362 = vunpack.c.l.b16 %v229
      %v363 = vunpack.c.l.b16 %v230
      %v364 = vunpack.c.l.b16 %v231
      %v365 = vunpack.c.l.b16 %v232
      %v366 = vunpack.c.l.b16 %v233
      %v367 = vunpack.c.l.b16 %v234
      %v368 = vunpack.c.l.b16 %v235
      %v369 = vunpack.c.l.b16 %v236
      %v370 = vunpack.c.l.b16 %v237
      %v371 = vunpack.c.l.b16 %v238
      %v372 = vunpack.c.l.b16 %v239
      %v373 = vunpack.c.l.b16 %v240
      %v374 = vunpack.c.l.b16 %v241
      %v375 = vunpack.c.l.b16 %v242
      %v376 = vunpack.c.l.b16 %v243
      %v377 = vunpack.c.l.b16 %v244
      %v378 = vunpack.c.l.b16 %v245
      %v379 = vunpack.c.l.b16 %v246
      %v380 = vunpack.c.l.b16 %v247
      %v381 = vunpack.c.l.b16 %v248
      %v382 = vunpack.c.l.b16 %v249
      %v383 = vunpack.c.l.b16 %v250
      %v384 = vunpack.c.l.b16 %v251
      %v385 = vunpack.c.l.b16 %v252
      %v386 = vunpack.c.l.b16 %v253
      %v387 = vunpack.c.l.b16 %v254
      %v388 = vunpack.c.l.b16 %v255
      %v389 = vunpack.c.l.b16 %v256
      %v390 = vunpack.c.l.b16 %v257
      %v391 = vunpack.c.l.b16 %v258
      %v392 = vunpack.c.l.b16 %v259
      %v393 = vunpack.c.l.b16 %v260
      %v394 = vunpack.c.l.b16 %v261
      %v395 = vunpack.c.l.b16 %v262
      %v396 = vunpack.c.l.b16 %v263
      %v397 = vunpack.c.l.b16 %v264
      %v398 = vunpack.c.l.b16 %v265
      %v399 = vunpack.c.l.b16 %v266
      %v400 = vunpack.c.l.b16 %v267
      %v401 = vunpack.c.l.b16 %v268
      %v402 = vunpack.c.l.b16 %v269
      %v403 = vunpack.c.l.b16 %v270
      %v404 = vunpack.c.l.b16 %v271
      %v405 = vunpack.c.l.b16 %v272
      %v406 = vunpack.c.l.b16 %v273
      %v407 = vunpack.c.l.b16 %v274
      %v408 = vunpack.c.l.b16 %v275
      %v409 = vunpack.c.l.b16 %v276
      %v410 = vpack.c.b16 %v347, %v346
      %v411 = vpack.c.b16 %v349, %v348
      %v412 = vpack.c.b16 %v351, %v350
      %v413 = vpack.c.b16 %v353, %v352
      %v414 = vpack.c.b16 %v355, %v354
      %v415 = vpack.c.b16 %v357, %v356
      %v416 = vpack.c.b16 %v359, %v358
      %v417 = vpack.c.b16 %v361, %v360
      %v418 = vpack.c.b16 %v363, %v362
      %v419 = vpack.c.b16 %v365, %v364
      %v420 = vpack.c.b16 %v367, %v366
      %v421 = vpack.c.b16 %v369, %v368
      %v422 = vpack.c.b16 %v371, %v370
      %v423 = vpack.c.b16 %v373, %v372
      %v424 = vpack.c.b16 %v375, %v374
      %v425 = vpack.c.b16 %v377, %v376
      %v426 = vpack.c.b16 %v379, %v378
      %v427 = vpack.c.b16 %v381, %v380
      %v428 = vpack.c.b16 %v383, %v382
      %v429 = vpack.c.b16 %v385, %v384
      %v430 = vpack.c.b16 %v387, %v386
      %v431 = vpack.c.b16 %v389, %v388
      %v432 = vpack.c.b16 %v391, %v390
      %v433 = vpack.c.b16 %v393, %v392
      %v434 = vpack.c.b16 %v395, %v394
      %v435 = vpack.c.b16 %v397, %v396
      %v436 = vpack.c.b16 %v399, %v398
      %v437 = vpack.c.b16 %v401, %v400
      %v438 = vpack.c.b16 %v403, %v402
      %v439 = vpack.c.b16 %v405, %v404
      %v440 = vpack.c.b16 %v407, %v406
      %v441 = vpack.c.b16 %v409, %v408
      %vm442 = vcmask 31744
      %v444 = vsel %vm442, %v410, 0
      %v447 = vsel %vm442, %v411, 0
      %v450 = vsel %vm442, %v412, 0
      %v453 = vsel %vm442, %v413, 0
      %v456 = vsel %vm442, %v414, 0
      %v459 = vsel %vm442, %v415, 0
      %v462 = vsel %vm442, %v416, 0
      %v465 = vsel %vm442, %v417, 0
      %v468 = vsel %vm442, %v418, 0
      %v471 = vsel %vm442, %v419, 0
      %v474 = vsel %vm442, %v420, 0
      %v477 = vsel %vm442, %v421, 0
      %v480 = vsel %vm442, %v422, 0
      %v483 = vsel %vm442, %v423, 0
      %v486 = vsel %vm442, %v424, 0
      %v489 = vsel %vm442, %v425, 0
      %v492 = vsel %vm442, %v426, 0
      %v495 = vsel %vm442, %v427, 0
      %v498 = vsel %vm442, %v428, 0
      %v501 = vsel %vm442, %v429, 0
      %v504 = vsel %vm442, %v430, 0
      %v507 = vsel %vm442, %v431, 0
      %v510 = vsel %vm442, %v432, 0
      %v513 = vsel %vm442, %v433, 0
      %v516 = vsel %vm442, %v434, 0
      %v519 = vsel %vm442, %v435, 0
      %v522 = vsel %vm442, %v436, 0
      %v525 = vsel %vm442, %v437, 0
      %v528 = vsel %vm442, %v438, 0
      %v531 = vsel %vm442, %v439, 0
      %v534 = vsel %vm442, %v440, 0
      %v537 = vsel %vm442, %v441, 0
      %vm539 = vcmask 1041408
      %v541 = vsel %vm539, %v277, 0
      %543 = vmatpush.bf16.msra.mxu0 0
      %544 = vmatpush.bf16.msra.mxu0 0
      %545 = vmatpush.bf16.msra.mxu0 0
      %546 = vmatpush.bf16.msra.mxu0 0
      %547 = vmatpush.bf16.msra.mxu0 0
      %548 = vmatpush.bf16.msra.mxu0 0
      %549 = vmatpush.bf16.msra.mxu0 0
      %550 = vmatpush.bf16.msra.mxu0 %v541
      %551 = vmatmul.bf16.gmra.mxu0 %v444
      %v552 = vpop.f32.mrf.mxu0
      %v553 = vadd.f32 %v280, %v552
      %v554 = vpop.f32.mrf.mxu0
      %v555 = vadd.f32 %v280, %v554
      %556 = vmatmul.bf16.gmra.mxu0 %v447
      %v557 = vpop.f32.mrf.mxu0
      %v558 = vadd.f32 %v280, %v557
      %v559 = vpop.f32.mrf.mxu0
      %v560 = vadd.f32 %v280, %v559
      %561 = vmatmul.bf16.gmra.mxu0 %v450
      %v562 = vpop.f32.mrf.mxu0
      %v563 = vadd.f32 %v280, %v562
      %v564 = vpop.f32.mrf.mxu0
      %v565 = vadd.f32 %v280, %v564
      %566 = vmatmul.bf16.gmra.mxu0 %v453
      %v567 = vpop.f32.mrf.mxu0
      %v568 = vadd.f32 %v280, %v567
      %v569 = vpop.f32.mrf.mxu0
      %v570 = vadd.f32 %v280, %v569
      %571 = vmatmul.bf16.gmra.mxu0 %v456
      %v572 = vpop.f32.mrf.mxu0
      %v573 = vadd.f32 %v280, %v572
      %v574 = vpop.f32.mrf.mxu0
      %v575 = vadd.f32 %v280, %v574
      %576 = vmatmul.bf16.gmra.mxu0 %v459
      %v577 = vpop.f32.mrf.mxu0
      %v578 = vadd.f32 %v280, %v577
      %v579 = vpop.f32.mrf.mxu0
      %v580 = vadd.f32 %v280, %v579
      %581 = vmatmul.bf16.gmra.mxu0 %v462
      %v582 = vpop.f32.mrf.mxu0
      %v583 = vadd.f32 %v280, %v582
      %v584 = vpop.f32.mrf.mxu0
      %v585 = vadd.f32 %v280, %v584
      %586 = vmatmul.bf16.gmra.mxu0 %v465
      %v587 = vpop.f32.mrf.mxu0
      %v588 = vadd.f32 %v280, %v587
      %v589 = vpop.f32.mrf.mxu0
      %v590 = vadd.f32 %v280, %v589
      %591 = vmatmul.bf16.gmra.mxu0 %v468
      %v592 = vpop.f32.mrf.mxu0
      %v593 = vadd.f32 %v280, %v592
      %v594 = vpop.f32.mrf.mxu0
      %v595 = vadd.f32 %v280, %v594
      %596 = vmatmul.bf16.gmra.mxu0 %v471
      %v597 = vpop.f32.mrf.mxu0
      %v598 = vadd.f32 %v280, %v597
      %v599 = vpop.f32.mrf.mxu0
      %v600 = vadd.f32 %v280, %v599
      %601 = vmatmul.bf16.gmra.mxu0 %v474
      %v602 = vpop.f32.mrf.mxu0
      %v603 = vadd.f32 %v280, %v602
      %v604 = vpop.f32.mrf.mxu0
      %v605 = vadd.f32 %v280, %v604
      %606 = vmatmul.bf16.gmra.mxu0 %v477
      %v607 = vpop.f32.mrf.mxu0
      %v608 = vadd.f32 %v280, %v607
      %v609 = vpop.f32.mrf.mxu0
      %v610 = vadd.f32 %v280, %v609
      %611 = vmatmul.bf16.gmra.mxu0 %v480
      %v612 = vpop.f32.mrf.mxu0
      %v613 = vadd.f32 %v280, %v612
      %v614 = vpop.f32.mrf.mxu0
      %v615 = vadd.f32 %v280, %v614
      %616 = vmatmul.bf16.gmra.mxu0 %v483
      %v617 = vpop.f32.mrf.mxu0
      %v618 = vadd.f32 %v280, %v617
      %v619 = vpop.f32.mrf.mxu0
      %v620 = vadd.f32 %v280, %v619
      %621 = vmatmul.bf16.gmra.mxu0 %v486
      %v622 = vpop.f32.mrf.mxu0
      %v623 = vadd.f32 %v280, %v622
      %v624 = vpop.f32.mrf.mxu0
      %v625 = vadd.f32 %v280, %v624
      %626 = vmatmul.bf16.gmra.mxu0 %v489
      %v627 = vpop.f32.mrf.mxu0
      %v628 = vadd.f32 %v280, %v627
      %v629 = vpop.f32.mrf.mxu0
      %v630 = vadd.f32 %v280, %v629
      %631 = vmatmul.bf16.gmra.mxu0 %v492
      %v632 = vpop.f32.mrf.mxu0
      %v633 = vadd.f32 %v280, %v632
      %v634 = vpop.f32.mrf.mxu0
      %v635 = vadd.f32 %v280, %v634
      %636 = vmatmul.bf16.gmra.mxu0 %v495
      %v637 = vpop.f32.mrf.mxu0
      %v638 = vadd.f32 %v280, %v637
      %v639 = vpop.f32.mrf.mxu0
      %v640 = vadd.f32 %v280, %v639
      %641 = vmatmul.bf16.gmra.mxu0 %v498
      %v642 = vpop.f32.mrf.mxu0
      %v643 = vadd.f32 %v280, %v642
      %v644 = vpop.f32.mrf.mxu0
      %v645 = vadd.f32 %v280, %v644
      %646 = vmatmul.bf16.gmra.mxu0 %v501
      %v647 = vpop.f32.mrf.mxu0
      %v648 = vadd.f32 %v280, %v647
      %v649 = vpop.f32.mrf.mxu0
      %v650 = vadd.f32 %v280, %v649
      %651 = vmatmul.bf16.gmra.mxu0 %v504
      %v652 = vpop.f32.mrf.mxu0
      %v653 = vadd.f32 %v280, %v652
      %v654 = vpop.f32.mrf.mxu0
      %v655 = vadd.f32 %v280, %v654
      %656 = vmatmul.bf16.gmra.mxu0 %v507
      %v657 = vpop.f32.mrf.mxu0
      %v658 = vadd.f32 %v280, %v657
      %v659 = vpop.f32.mrf.mxu0
      %v660 = vadd.f32 %v280, %v659
      %661 = vmatmul.bf16.gmra.mxu0 %v510
      %v662 = vpop.f32.mrf.mxu0
      %v663 = vadd.f32 %v280, %v662
      %v664 = vpop.f32.mrf.mxu0
      %v665 = vadd.f32 %v280, %v664
      %666 = vmatmul.bf16.gmra.mxu0 %v513
      %v667 = vpop.f32.mrf.mxu0
      %v668 = vadd.f32 %v280, %v667
      %v669 = vpop.f32.mrf.mxu0
      %v670 = vadd.f32 %v280, %v669
      %671 = vmatmul.bf16.gmra.mxu0 %v516
      %v672 = vpop.f32.mrf.mxu0
      %v673 = vadd.f32 %v280, %v672
      %v674 = vpop.f32.mrf.mxu0
      %v675 = vadd.f32 %v280, %v674
      %676 = vmatmul.bf16.gmra.mxu0 %v519
      %v677 = vpop.f32.mrf.mxu0
      %v678 = vadd.f32 %v280, %v677
      %v679 = vpop.f32.mrf.mxu0
      %v680 = vadd.f32 %v280, %v679
      %681 = vmatmul.bf16.gmra.mxu0 %v522
      %v682 = vpop.f32.mrf.mxu0
      %v683 = vadd.f32 %v280, %v682
      %v684 = vpop.f32.mrf.mxu0
      %v685 = vadd.f32 %v280, %v684
      %686 = vmatmul.bf16.gmra.mxu0 %v525
      %v687 = vpop.f32.mrf.mxu0
      %v688 = vadd.f32 %v280, %v687
      %v689 = vpop.f32.mrf.mxu0
      %v690 = vadd.f32 %v280, %v689
      %691 = vmatmul.bf16.gmra.mxu0 %v528
      %v692 = vpop.f32.mrf.mxu0
      %v693 = vadd.f32 %v280, %v692
      %v694 = vpop.f32.mrf.mxu0
      %v695 = vadd.f32 %v280, %v694
      %696 = vmatmul.bf16.gmra.mxu0 %v531
      %v697 = vpop.f32.mrf.mxu0
      %v698 = vadd.f32 %v280, %v697
      %v699 = vpop.f32.mrf.mxu0
      %v700 = vadd.f32 %v280, %v699
      %701 = vmatmul.bf16.gmra.mxu0 %v534
      %v702 = vpop.f32.mrf.mxu0
      %v703 = vadd.f32 %v280, %v702
      %v704 = vpop.f32.mrf.mxu0
      %v705 = vadd.f32 %v280, %v704
      %706 = vmatmul.bf16.gmra.mxu0 %v537
      %v707 = vpop.f32.mrf.mxu0
      %v708 = vadd.f32 %v280, %v707
      %v709 = vpop.f32.mrf.mxu0
      %v710 = vadd.f32 %v280, %v709
      %711 = vdwg.mxu0
      %v712 = vmax.f32 %v553, 0.0
      %v713 = vmax.f32 %v555, 0.0
      %v714 = vmax.f32 %v558, 0.0
      %v715 = vmax.f32 %v560, 0.0
      %v716 = vmax.f32 %v563, 0.0
      %v717 = vmax.f32 %v565, 0.0
      %v718 = vmax.f32 %v568, 0.0
      %v719 = vmax.f32 %v570, 0.0
      %v720 = vmax.f32 %v573, 0.0
      %v721 = vmax.f32 %v575, 0.0
      %v722 = vmax.f32 %v578, 0.0
      %v723 = vmax.f32 %v580, 0.0
      %v724 = vmax.f32 %v583, 0.0
      %v725 = vmax.f32 %v585, 0.0
      %v726 = vmax.f32 %v588, 0.0
      %v727 = vmax.f32 %v590, 0.0
      %v728 = vmax.f32 %v593, 0.0
      %v729 = vmax.f32 %v595, 0.0
      %v730 = vmax.f32 %v598, 0.0
      %v731 = vmax.f32 %v600, 0.0
      %v732 = vmax.f32 %v603, 0.0
      %v733 = vmax.f32 %v605, 0.0
      %v734 = vmax.f32 %v608, 0.0
      %v735 = vmax.f32 %v610, 0.0
      %v736 = vmax.f32 %v613, 0.0
      %v737 = vmax.f32 %v615, 0.0
      %v738 = vmax.f32 %v618, 0.0
      %v739 = vmax.f32 %v620, 0.0
      %v740 = vmax.f32 %v623, 0.0
      %v741 = vmax.f32 %v625, 0.0
      %v742 = vmax.f32 %v628, 0.0
      %v743 = vmax.f32 %v630, 0.0
      %v744 = vmax.f32 %v633, 0.0
      %v745 = vmax.f32 %v635, 0.0
      %v746 = vmax.f32 %v638, 0.0
      %v747 = vmax.f32 %v640, 0.0
      %v748 = vmax.f32 %v643, 0.0
      %v749 = vmax.f32 %v645, 0.0
      %v750 = vmax.f32 %v648, 0.0
      %v751 = vmax.f32 %v650, 0.0
      %v752 = vmax.f32 %v653, 0.0
      %v753 = vmax.f32 %v655, 0.0
      %v754 = vmax.f32 %v658, 0.0
      %v755 = vmax.f32 %v660, 0.0
      %v756 = vmax.f32 %v663, 0.0
      %v757 = vmax.f32 %v665, 0.0
      %v758 = vmax.f32 %v668, 0.0
      %v759 = vmax.f32 %v670, 0.0
      %v760 = vmax.f32 %v673, 0.0
      %v761 = vmax.f32 %v675, 0.0
      %v762 = vmax.f32 %v678, 0.0
      %v763 = vmax.f32 %v680, 0.0
      %v764 = vmax.f32 %v683, 0.0
      %v765 = vmax.f32 %v685, 0.0
      %v766 = vmax.f32 %v688, 0.0
      %v767 = vmax.f32 %v690, 0.0
      %v768 = vmax.f32 %v693, 0.0
      %v769 = vmax.f32 %v695, 0.0
      %v770 = vmax.f32 %v698, 0.0
      %v771 = vmax.f32 %v700, 0.0
      %v772 = vmax.f32 %v703, 0.0
      %v773 = vmax.f32 %v705, 0.0
      %v774 = vmax.f32 %v708, 0.0
      %v775 = vmax.f32 %v710, 0.0
      %vm776 = vcmask 64512
      %777 = vst.msk [vmem:[%s206] sm:$0xff] %vm776, %v712
      %778 = vst.msk [vmem:[%s206 + $0x8] sm:$0xff] %vm776, %v713
      %779 = vst.msk [vmem:[%s206 + $0x10] sm:$0xff] %vm776, %v714
      %780 = vst.msk [vmem:[%s206 + $0x18] sm:$0xff] %vm776, %v715
      %781 = vst.msk [vmem:[%s206 + $0x20] sm:$0xff] %vm776, %v716
      %782 = vst.msk [vmem:[%s206 + $0x28] sm:$0xff] %vm776, %v717
      %783 = vst.msk [vmem:[%s206 + $0x30] sm:$0xff] %vm776, %v718
      %784 = vst.msk [vmem:[%s206 + $0x38] sm:$0xff] %vm776, %v719
      %785 = vst.msk [vmem:[%s206 + $0x40] sm:$0xff] %vm776, %v720
      %786 = vst.msk [vmem:[%s206 + $0x48] sm:$0xff] %vm776, %v721
      %787 = vst.msk [vmem:[%s206 + $0x50] sm:$0xff] %vm776, %v722
      %788 = vst.msk [vmem:[%s206 + $0x58] sm:$0xff] %vm776, %v723
      %789 = vst.msk [vmem:[%s206 + $0x60] sm:$0xff] %vm776, %v724
      %790 = vst.msk [vmem:[%s206 + $0x68] sm:$0xff] %vm776, %v725
      %791 = vst.msk [vmem:[%s206 + $0x70] sm:$0xff] %vm776, %v726
      %792 = vst.msk [vmem:[%s206 + $0x78] sm:$0xff] %vm776, %v727
      %793 = vst.msk [vmem:[%s206 + $0x80] sm:$0xff] %vm776, %v728
      %794 = vst.msk [vmem:[%s206 + $0x88] sm:$0xff] %vm776, %v729
      %795 = vst.msk [vmem:[%s206 + $0x90] sm:$0xff] %vm776, %v730
      %796 = vst.msk [vmem:[%s206 + $0x98] sm:$0xff] %vm776, %v731
      %797 = vst.msk [vmem:[%s206 + $0xa0] sm:$0xff] %vm776, %v732
      %798 = vst.msk [vmem:[%s206 + $0xa8] sm:$0xff] %vm776, %v733
      %799 = vst.msk [vmem:[%s206 + $0xb0] sm:$0xff] %vm776, %v734
      %800 = vst.msk [vmem:[%s206 + $0xb8] sm:$0xff] %vm776, %v735
      %801 = vst.msk [vmem:[%s206 + $0xc0] sm:$0xff] %vm776, %v736
      %802 = vst.msk [vmem:[%s206 + $0xc8] sm:$0xff] %vm776, %v737
      %803 = vst.msk [vmem:[%s206 + $0xd0] sm:$0xff] %vm776, %v738
      %804 = vst.msk [vmem:[%s206 + $0xd8] sm:$0xff] %vm776, %v739
      %805 = vst.msk [vmem:[%s206 + $0xe0] sm:$0xff] %vm776, %v740
      %806 = vst.msk [vmem:[%s206 + $0xe8] sm:$0xff] %vm776, %v741
      %807 = vst.msk [vmem:[%s206 + $0xf0] sm:$0xff] %vm776, %v742
      %808 = vst.msk [vmem:[%s206 + $0xf8] sm:$0xff] %vm776, %v743
      %809 = vst.msk [vmem:[%s206 + $0x100] sm:$0xff] %vm776, %v744
      %810 = vst.msk [vmem:[%s206 + $0x108] sm:$0xff] %vm776, %v745
      %811 = vst.msk [vmem:[%s206 + $0x110] sm:$0xff] %vm776, %v746
      %812 = vst.msk [vmem:[%s206 + $0x118] sm:$0xff] %vm776, %v747
      %813 = vst.msk [vmem:[%s206 + $0x120] sm:$0xff] %vm776, %v748
      %814 = vst.msk [vmem:[%s206 + $0x128] sm:$0xff] %vm776, %v749
      %815 = vst.msk [vmem:[%s206 + $0x130] sm:$0xff] %vm776, %v750
      %816 = vst.msk [vmem:[%s206 + $0x138] sm:$0xff] %vm776, %v751
      %817 = vst.msk [vmem:[%s206 + $0x140] sm:$0xff] %vm776, %v752
      %818 = vst.msk [vmem:[%s206 + $0x148] sm:$0xff] %vm776, %v753
      %819 = vst.msk [vmem:[%s206 + $0x150] sm:$0xff] %vm776, %v754
      %820 = vst.msk [vmem:[%s206 + $0x158] sm:$0xff] %vm776, %v755
      %821 = vst.msk [vmem:[%s206 + $0x160] sm:$0xff] %vm776, %v756
      %822 = vst.msk [vmem:[%s206 + $0x168] sm:$0xff] %vm776, %v757
      %823 = vst.msk [vmem:[%s206 + $0x170] sm:$0xff] %vm776, %v758
      %824 = vst.msk [vmem:[%s206 + $0x178] sm:$0xff] %vm776, %v759
      %825 = vst.msk [vmem:[%s206 + $0x180] sm:$0xff] %vm776, %v760
      %826 = vst.msk [vmem:[%s206 + $0x188] sm:$0xff] %vm776, %v761
      %827 = vst.msk [vmem:[%s206 + $0x190] sm:$0xff] %vm776, %v762
      %828 = vst.msk [vmem:[%s206 + $0x198] sm:$0xff] %vm776, %v763
      %829 = vst.msk [vmem:[%s206 + $0x1a0] sm:$0xff] %vm776, %v764
      %830 = vst.msk [vmem:[%s206 + $0x1a8] sm:$0xff] %vm776, %v765
      %831 = vst.msk [vmem:[%s206 + $0x1b0] sm:$0xff] %vm776, %v766
      %832 = vst.msk [vmem:[%s206 + $0x1b8] sm:$0xff] %vm776, %v767
      %833 = vst.msk [vmem:[%s206 + $0x1c0] sm:$0xff] %vm776, %v768
      %834 = vst.msk [vmem:[%s206 + $0x1c8] sm:$0xff] %vm776, %v769
      %835 = vst.msk [vmem:[%s206 + $0x1d0] sm:$0xff] %vm776, %v770
      %836 = vst.msk [vmem:[%s206 + $0x1d8] sm:$0xff] %vm776, %v771
      %837 = vst.msk [vmem:[%s206 + $0x1e0] sm:$0xff] %vm776, %v772
      %838 = vst.msk [vmem:[%s206 + $0x1e8] sm:$0xff] %vm776, %v773
      %839 = vst.msk [vmem:[%s206 + $0x1f0] sm:$0xff] %vm776, %v774
      %840 = vst.msk [vmem:[%s206 + $0x1f8] sm:$0xff] %vm776, %v775
      %v841 = vsel %vm776, %v712, 0.0
      %v842 = vsel %vm776, %v713, 0.0
      %v843 = vadd.f32 %v841, %v842
      %v844 = vsel %vm776, %v714, 0.0
      %v845 = vadd.f32 %v843, %v844
      %v846 = vsel %vm776, %v715, 0.0
      %v847 = vadd.f32 %v845, %v846
      %v848 = vsel %vm776, %v716, 0.0
      %v849 = vadd.f32 %v847, %v848
      %v850 = vsel %vm776, %v717, 0.0
      %v851 = vadd.f32 %v849, %v850
      %v852 = vsel %vm776, %v718, 0.0
      %v853 = vadd.f32 %v851, %v852
      %v854 = vsel %vm776, %v719, 0.0
      %v855 = vadd.f32 %v853, %v854
      %v856 = vsel %vm776, %v720, 0.0
      %v857 = vadd.f32 %v855, %v856
      %v858 = vsel %vm776, %v721, 0.0
      %v859 = vadd.f32 %v857, %v858
      %v860 = vsel %vm776, %v722, 0.0
      %v861 = vadd.f32 %v859, %v860
      %v862 = vsel %vm776, %v723, 0.0
      %v863 = vadd.f32 %v861, %v862
      %v864 = vsel %vm776, %v724, 0.0
      %v865 = vadd.f32 %v863, %v864
      %v866 = vsel %vm776, %v725, 0.0
      %v867 = vadd.f32 %v865, %v866
      %v868 = vsel %vm776, %v726, 0.0
      %v869 = vadd.f32 %v867, %v868
      %v870 = vsel %vm776, %v727, 0.0
      %v871 = vadd.f32 %v869, %v870
      %v872 = vsel %vm776, %v728, 0.0
      %v873 = vadd.f32 %v871, %v872
      %v874 = vsel %vm776, %v729, 0.0
      %v875 = vadd.f32 %v873, %v874
      %v876 = vsel %vm776, %v730, 0.0
      %v877 = vadd.f32 %v875, %v876
      %v878 = vsel %vm776, %v731, 0.0
      %v879 = vadd.f32 %v877, %v878
      %v880 = vsel %vm776, %v732, 0.0
      %v881 = vadd.f32 %v879, %v880
      %v882 = vsel %vm776, %v733, 0.0
      %v883 = vadd.f32 %v881, %v882
      %v884 = vsel %vm776, %v734, 0.0
      %v885 = vadd.f32 %v883, %v884
      %v886 = vsel %vm776, %v735, 0.0
      %v887 = vadd.f32 %v885, %v886
      %v888 = vsel %vm776, %v736, 0.0
      %v889 = vadd.f32 %v887, %v888
      %v890 = vsel %vm776, %v737, 0.0
      %v891 = vadd.f32 %v889, %v890
      %v892 = vsel %vm776, %v738, 0.0
      %v893 = vadd.f32 %v891, %v892
      %v894 = vsel %vm776, %v739, 0.0
      %v895 = vadd.f32 %v893, %v894
      %v896 = vsel %vm776, %v740, 0.0
      %v897 = vadd.f32 %v895, %v896
      %v898 = vsel %vm776, %v741, 0.0
      %v899 = vadd.f32 %v897, %v898
      %v900 = vsel %vm776, %v742, 0.0
      %v901 = vadd.f32 %v899, %v900
      %v902 = vsel %vm776, %v743, 0.0
      %v903 = vadd.f32 %v901, %v902
      %v904 = vsel %vm776, %v744, 0.0
      %v905 = vadd.f32 %v903, %v904
      %v906 = vsel %vm776, %v745, 0.0
      %v907 = vadd.f32 %v905, %v906
      %v908 = vsel %vm776, %v746, 0.0
      %v909 = vadd.f32 %v907, %v908
      %v910 = vsel %vm776, %v747, 0.0
      %v911 = vadd.f32 %v909, %v910
      %v912 = vsel %vm776, %v748, 0.0
      %v913 = vadd.f32 %v911, %v912
      %v914 = vsel %vm776, %v749, 0.0
      %v915 = vadd.f32 %v913, %v914
      %v916 = vsel %vm776, %v750, 0.0
      %v917 = vadd.f32 %v915, %v916
      %v918 = vsel %vm776, %v751, 0.0
      %v919 = vadd.f32 %v917, %v918
      %v920 = vsel %vm776, %v752, 0.0
      %v921 = vadd.f32 %v919, %v920
      %v922 = vsel %vm776, %v753, 0.0
      %v923 = vadd.f32 %v921, %v922
      %v924 = vsel %vm776, %v754, 0.0
      %v925 = vadd.f32 %v923, %v924
      %v926 = vsel %vm776, %v755, 0.0
      %v927 = vadd.f32 %v925, %v926
      %v928 = vsel %vm776, %v756, 0.0
      %v929 = vadd.f32 %v927, %v928
      %v930 = vsel %vm776, %v757, 0.0
      %v931 = vadd.f32 %v929, %v930
      %v932 = vsel %vm776, %v758, 0.0
      %v933 = vadd.f32 %v931, %v932
      %v934 = vsel %vm776, %v759, 0.0
      %v935 = vadd.f32 %v933, %v934
      %v936 = vsel %vm776, %v760, 0.0
      %v937 = vadd.f32 %v935, %v936
      %v938 = vsel %vm776, %v761, 0.0
      %v939 = vadd.f32 %v937, %v938
      %v940 = vsel %vm776, %v762, 0.0
      %v941 = vadd.f32 %v939, %v940
      %v942 = vsel %vm776, %v763, 0.0
      %v943 = vadd.f32 %v941, %v942
      %v944 = vsel %vm776, %v764, 0.0
      %v945 = vadd.f32 %v943, %v944
      %v946 = vsel %vm776, %v765, 0.0
      %v947 = vadd.f32 %v945, %v946
      %v948 = vsel %vm776, %v766, 0.0
      %v949 = vadd.f32 %v947, %v948
      %v950 = vsel %vm776, %v767, 0.0
      %v951 = vadd.f32 %v949, %v950
      %v952 = vsel %vm776, %v768, 0.0
      %v953 = vadd.f32 %v951, %v952
      %v954 = vsel %vm776, %v769, 0.0
      %v955 = vadd.f32 %v953, %v954
      %v956 = vsel %vm776, %v770, 0.0
      %v957 = vadd.f32 %v955, %v956
      %v958 = vsel %vm776, %v771, 0.0
      %v959 = vadd.f32 %v957, %v958
      %v960 = vsel %vm776, %v772, 0.0
      %v961 = vadd.f32 %v959, %v960
      %v962 = vsel %vm776, %v773, 0.0
      %v963 = vadd.f32 %v961, %v962
      %v964 = vsel %vm776, %v774, 0.0
      %v965 = vadd.f32 %v963, %v964
      %v966 = vsel %vm776, %v775, 0.0
      %v967 = vadd.f32 %v965, %v966
      %v968 = vrot.slane %v967, 4
      %v969 = vadd.f32 %v967, %v968
      %v970 = vrot.slane %v969, 2
      %v971 = vadd.f32 %v969, %v970
      %v972 = vrot.slane %v971, 1
      %v973 = vadd.f32 %v971, %v972
      %vm974 = vcmask 57344
      %975 = vst.msk [vmem:[%s211] sm:$0x1] %vm974, %v973
      %v976 = vmul.f32 %v712, %v712
      %v977 = vmul.f32 %v713, %v713
      %v978 = vmul.f32 %v714, %v714
      %v979 = vmul.f32 %v715, %v715
      %v980 = vmul.f32 %v716, %v716
      %v981 = vmul.f32 %v717, %v717
      %v982 = vmul.f32 %v718, %v718
      %v983 = vmul.f32 %v719, %v719
      %v984 = vmul.f32 %v720, %v720
      %v985 = vmul.f32 %v721, %v721
      %v986 = vmul.f32 %v722, %v722
      %v987 = vmul.f32 %v723, %v723
      %v988 = vmul.f32 %v724, %v724
      %v989 = vmul.f32 %v725, %v725
      %v990 = vmul.f32 %v726, %v726
      %v991 = vmul.f32 %v727, %v727
      %v992 = vmul.f32 %v728, %v728
      %v993 = vmul.f32 %v729, %v729
      %v994 = vmul.f32 %v730, %v730
      %v995 = vmul.f32 %v731, %v731
      %v996 = vmul.f32 %v732, %v732
      %v997 = vmul.f32 %v733, %v733
      %v998 = vmul.f32 %v734, %v734
      %v999 = vmul.f32 %v735, %v735
      %v1000 = vmul.f32 %v736, %v736
      %v1001 = vmul.f32 %v737, %v737
      %v1002 = vmul.f32 %v738, %v738
      %v1003 = vmul.f32 %v739, %v739
      %v1004 = vmul.f32 %v740, %v740
      %v1005 = vmul.f32 %v741, %v741
      %v1006 = vmul.f32 %v742, %v742
      %v1007 = vmul.f32 %v743, %v743
      %v1008 = vmul.f32 %v744, %v744
      %v1009 = vmul.f32 %v745, %v745
      %v1010 = vmul.f32 %v746, %v746
      %v1011 = vmul.f32 %v747, %v747
      %v1012 = vmul.f32 %v748, %v748
      %v1013 = vmul.f32 %v749, %v749
      %v1014 = vmul.f32 %v750, %v750
      %v1015 = vmul.f32 %v751, %v751
      %v1016 = vmul.f32 %v752, %v752
      %v1017 = vmul.f32 %v753, %v753
      %v1018 = vmul.f32 %v754, %v754
      %v1019 = vmul.f32 %v755, %v755
      %v1020 = vmul.f32 %v756, %v756
      %v1021 = vmul.f32 %v757, %v757
      %v1022 = vmul.f32 %v758, %v758
      %v1023 = vmul.f32 %v759, %v759
      %v1024 = vmul.f32 %v760, %v760
      %v1025 = vmul.f32 %v761, %v761
      %v1026 = vmul.f32 %v762, %v762
      %v1027 = vmul.f32 %v763, %v763
      %v1028 = vmul.f32 %v764, %v764
      %v1029 = vmul.f32 %v765, %v765
      %v1030 = vmul.f32 %v766, %v766
      %v1031 = vmul.f32 %v767, %v767
      %v1032 = vmul.f32 %v768, %v768
      %v1033 = vmul.f32 %v769, %v769
      %v1034 = vmul.f32 %v770, %v770
      %v1035 = vmul.f32 %v771, %v771
      %v1036 = vmul.f32 %v772, %v772
      %v1037 = vmul.f32 %v773, %v773
      %v1038 = vmul.f32 %v774, %v774
      %v1039 = vmul.f32 %v775, %v775
      %v1040 = vsel %vm776, %v976, 0.0
      %v1041 = vsel %vm776, %v977, 0.0
      %v1042 = vadd.f32 %v1040, %v1041
      %v1043 = vsel %vm776, %v978, 0.0
      %v1044 = vadd.f32 %v1042, %v1043
      %v1045 = vsel %vm776, %v979, 0.0
      %v1046 = vadd.f32 %v1044, %v1045
      %v1047 = vsel %vm776, %v980, 0.0
      %v1048 = vadd.f32 %v1046, %v1047
      %v1049 = vsel %vm776, %v981, 0.0
      %v1050 = vadd.f32 %v1048, %v1049
      %v1051 = vsel %vm776, %v982, 0.0
      %v1052 = vadd.f32 %v1050, %v1051
      %v1053 = vsel %vm776, %v983, 0.0
      %v1054 = vadd.f32 %v1052, %v1053
      %v1055 = vsel %vm776, %v984, 0.0
      %v1056 = vadd.f32 %v1054, %v1055
      %v1057 = vsel %vm776, %v985, 0.0
      %v1058 = vadd.f32 %v1056, %v1057
      %v1059 = vsel %vm776, %v986, 0.0
      %v1060 = vadd.f32 %v1058, %v1059
      %v1061 = vsel %vm776, %v987, 0.0
      %v1062 = vadd.f32 %v1060, %v1061
      %v1063 = vsel %vm776, %v988, 0.0
      %v1064 = vadd.f32 %v1062, %v1063
      %v1065 = vsel %vm776, %v989, 0.0
      %v1066 = vadd.f32 %v1064, %v1065
      %v1067 = vsel %vm776, %v990, 0.0
      %v1068 = vadd.f32 %v1066, %v1067
      %v1069 = vsel %vm776, %v991, 0.0
      %v1070 = vadd.f32 %v1068, %v1069
      %v1071 = vsel %vm776, %v992, 0.0
      %v1072 = vadd.f32 %v1070, %v1071
      %v1073 = vsel %vm776, %v993, 0.0
      %v1074 = vadd.f32 %v1072, %v1073
      %v1075 = vsel %vm776, %v994, 0.0
      %v1076 = vadd.f32 %v1074, %v1075
      %v1077 = vsel %vm776, %v995, 0.0
      %v1078 = vadd.f32 %v1076, %v1077
      %v1079 = vsel %vm776, %v996, 0.0
      %v1080 = vadd.f32 %v1078, %v1079
      %v1081 = vsel %vm776, %v997, 0.0
      %v1082 = vadd.f32 %v1080, %v1081
      %v1083 = vsel %vm776, %v998, 0.0
      %v1084 = vadd.f32 %v1082, %v1083
      %v1085 = vsel %vm776, %v999, 0.0
      %v1086 = vadd.f32 %v1084, %v1085
      %v1087 = vsel %vm776, %v1000, 0.0
      %v1088 = vadd.f32 %v1086, %v1087
      %v1089 = vsel %vm776, %v1001, 0.0
      %v1090 = vadd.f32 %v1088, %v1089
      %v1091 = vsel %vm776, %v1002, 0.0
      %v1092 = vadd.f32 %v1090, %v1091
      %v1093 = vsel %vm776, %v1003, 0.0
      %v1094 = vadd.f32 %v1092, %v1093
      %v1095 = vsel %vm776, %v1004, 0.0
      %v1096 = vadd.f32 %v1094, %v1095
      %v1097 = vsel %vm776, %v1005, 0.0
      %v1098 = vadd.f32 %v1096, %v1097
      %v1099 = vsel %vm776, %v1006, 0.0
      %v1100 = vadd.f32 %v1098, %v1099
      %v1101 = vsel %vm776, %v1007, 0.0
      %v1102 = vadd.f32 %v1100, %v1101
      %v1103 = vsel %vm776, %v1008, 0.0
      %v1104 = vadd.f32 %v1102, %v1103
      %v1105 = vsel %vm776, %v1009, 0.0
      %v1106 = vadd.f32 %v1104, %v1105
      %v1107 = vsel %vm776, %v1010, 0.0
      %v1108 = vadd.f32 %v1106, %v1107
      %v1109 = vsel %vm776, %v1011, 0.0
      %v1110 = vadd.f32 %v1108, %v1109
      %v1111 = vsel %vm776, %v1012, 0.0
      %v1112 = vadd.f32 %v1110, %v1111
      %v1113 = vsel %vm776, %v1013, 0.0
      %v1114 = vadd.f32 %v1112, %v1113
      %v1115 = vsel %vm776, %v1014, 0.0
      %v1116 = vadd.f32 %v1114, %v1115
      %v1117 = vsel %vm776, %v1015, 0.0
      %v1118 = vadd.f32 %v1116, %v1117
      %v1119 = vsel %vm776, %v1016, 0.0
      %v1120 = vadd.f32 %v1118, %v1119
      %v1121 = vsel %vm776, %v1017, 0.0
      %v1122 = vadd.f32 %v1120, %v1121
      %v1123 = vsel %vm776, %v1018, 0.0
      %v1124 = vadd.f32 %v1122, %v1123
      %v1125 = vsel %vm776, %v1019, 0.0
      %v1126 = vadd.f32 %v1124, %v1125
      %v1127 = vsel %vm776, %v1020, 0.0
      %v1128 = vadd.f32 %v1126, %v1127
      %v1129 = vsel %vm776, %v1021, 0.0
      %v1130 = vadd.f32 %v1128, %v1129
      %v1131 = vsel %vm776, %v1022, 0.0
      %v1132 = vadd.f32 %v1130, %v1131
      %v1133 = vsel %vm776, %v1023, 0.0
      %v1134 = vadd.f32 %v1132, %v1133
      %v1135 = vsel %vm776, %v1024, 0.0
      %v1136 = vadd.f32 %v1134, %v1135
      %v1137 = vsel %vm776, %v1025, 0.0
      %v1138 = vadd.f32 %v1136, %v1137
      %v1139 = vsel %vm776, %v1026, 0.0
      %v1140 = vadd.f32 %v1138, %v1139
      %v1141 = vsel %vm776, %v1027, 0.0
      %v1142 = vadd.f32 %v1140, %v1141
      %v1143 = vsel %vm776, %v1028, 0.0
      %v1144 = vadd.f32 %v1142, %v1143
      %v1145 = vsel %vm776, %v1029, 0.0
      %v1146 = vadd.f32 %v1144, %v1145
      %v1147 = vsel %vm776, %v1030, 0.0
      %v1148 = vadd.f32 %v1146, %v1147
      %v1149 = vsel %vm776, %v1031, 0.0
      %v1150 = vadd.f32 %v1148, %v1149
      %v1151 = vsel %vm776, %v1032, 0.0
      %v1152 = vadd.f32 %v1150, %v1151
      %v1153 = vsel %vm776, %v1033, 0.0
      %v1154 = vadd.f32 %v1152, %v1153
      %v1155 = vsel %vm776, %v1034, 0.0
      %v1156 = vadd.f32 %v1154, %v1155
      %v1157 = vsel %vm776, %v1035, 0.0
      %v1158 = vadd.f32 %v1156, %v1157
      %v1159 = vsel %vm776, %v1036, 0.0
      %v1160 = vadd.f32 %v1158, %v1159
      %v1161 = vsel %vm776, %v1037, 0.0
      %v1162 = vadd.f32 %v1160, %v1161
      %v1163 = vsel %vm776, %v1038, 0.0
      %v1164 = vadd.f32 %v1162, %v1163
      %v1165 = vsel %vm776, %v1039, 0.0
      %v1166 = vadd.f32 %v1164, %v1165
      %v1167 = vrot.slane %v1166, 4
      %v1168 = vadd.f32 %v1166, %v1167
      %v1169 = vrot.slane %v1168, 2
      %v1170 = vadd.f32 %v1168, %v1169
      %v1171 = vrot.slane %v1170, 1
      %v1172 = vadd.f32 %v1170, %v1171
      %1173 = vst.msk [vmem:[%s211 + $0x1] sm:$0x1] %vm974, %v1172
      %s1174 = smul.u32 64, %s16
      %p1175 = scmp.lt.s32.totalorder %s1174, 127
      %s1176 = scalar_select %p1175, %s1174, 127
      %s1177 = smul.addr %s1176, 8
      %s1178 = scalar_lea.vmem %s3, %s1177
      %p1179 = scmp.lt.s32.totalorder %s16, 1
      %s1180 = scalar_select %p1179, %s16, 1
      %s1181 = smul.addr %s1180, 2
      %s1182 = scalar_lea.vmem %s4, %s1181
      // Predicated region
      $region33: #{conv_block_up_forward.11} parent=31 // pred_check
        %p1183 = pneg %p102
      $region34: #{conv_block_up_forward.11} parent=31 // pred_check_branch
        %1185 = sbr.rel (%p1183) target = $region36
      $region35: #{conv_block_up_forward.11} parent=31 // pred_region
        %s1186 = smul.u32 64, %s16
      $region36: #{conv_block_up_forward.11} parent=31 // pred_fallthru
        _
      // Predicated region
      $region37: #{conv_block_up_forward.11} parent=31 // pred_check
        %p1187 = pneg %p128
      $region38: #{conv_block_up_forward.11} parent=31 // pred_check_branch
        %1189 = sbr.rel (%p1187) target = $region40
      $region39: #{conv_block_up_forward.11} parent=31 // pred_region
        _
      $region40: #{conv_block_up_forward.11} parent=31 // pred_fallthru
        _
    $region32: #{conv_block_up_forward.11} parent=5 // pred_fallthru
      _
    %p1190 = scmp.le.s32.totalorder 2, %s11
    // Predicated region
    $region41: #{conv_block_up_forward.11} parent=5 // pred_check
      %p1191 = pneg %p1190
    $region42: #{conv_block_up_forward.11} parent=5 // pred_check_branch
      %1193 = sbr.rel (%p1191) target = $region44
    $region43: #{conv_block_up_forward.11} parent=5 // pred_region
      %s1194 = ssub.s32 %s11, 2
      // Predicated region
      $region45: #{conv_block_up_forward.11} parent=43 // pred_check
        %p1195 = pneg %p108
      $region46: #{conv_block_up_forward.11} parent=43 // pred_check_branch
        %1197 = sbr.rel (%p1195) target = $region48
      $region47: #{conv_block_up_forward.11} parent=43 // pred_region
        %s1198 = smul.u32 64, %s17
        %p1199 = scmp.lt.s32.totalorder %s1198, 127
        %s1200 = scalar_select %p1199, %s1198, 127
        %s1201 = smul.addr %s1200, 8
        %s1202 = scalar_lea.vmem %s3, %s1201
      $region48: #{conv_block_up_forward.11} parent=43 // pred_fallthru
        _
      // Predicated region
      $region49: #{conv_block_up_forward.11} parent=43 // pred_check
        %p1203 = pneg %p134
      $region50: #{conv_block_up_forward.11} parent=43 // pred_check_branch
        %1205 = sbr.rel (%p1203) target = $region52
      $region51: #{conv_block_up_forward.11} parent=43 // pred_region
        %p1206 = scmp.lt.s32.totalorder %s17, 1
        %s1207 = scalar_select %p1206, %s17, 1
        %s1208 = smul.addr %s1207, 2
        %s1209 = scalar_lea.vmem %s4, %s1208
      $region52: #{conv_block_up_forward.11} parent=43 // pred_fallthru
        _
    $region44: #{conv_block_up_forward.11} parent=5 // pred_fallthru
      _
  $region6: #{conv_block_up_forward.11} parent=0 // loop_footer
    %s15 = sadd.s32 1, %s11
  $region7: #{conv_block_up_forward.11} parent=0 // loop_footer_branch
    %10 = sbr.rel target = $region3
  $region8: #{conv_block_up_forward.11} parent=0 // loop_exit
    _

// kernel: conv_block_up_forward.19
$region0: #{conv_block_up_forward.19}
  #allocation0 [shape = 'u32[]', space=smem, size = 0x4, offset = 0x4, fixed_abs, tag = 'smem constant byte address 0x4 - core index']
  #allocation1 [shape = 'u32[72,128]{1,0:T(1,128)}', space=vmem, size = 0x9000, scoped, tag = 'internal scratch']
  %s0 = inlined_call_operand.vmem [shape: f32[512,128], index: 0, kind: input, shape index: {}]
  %s1 = inlined_call_operand.vmem [shape: f32[1,128], index: 1, kind: input, shape index: {}]
  %s2 = inlined_call_operand.vmem [shape: f32[1,128], index: 2, kind: input, shape index: {}]
  %s3 = inlined_call_operand.vmem [shape: bf16[512,128], index: 3, kind: output, shape index: {}]
  %s4 = sld [smem:[#allocation0]]
  $region22: #{conv_block_up_forward.19} parent=0
    _
  %s6 = ssub.s32 1, %s4
  %s7 = scalar_select 0, %s6, %s4
  // Predicated region
  $region2: #{conv_block_up_forward.19} parent=0 // pred_check
    _
  $region3: #{conv_block_up_forward.19} parent=0 // pred_check_branch
    %9 = sbr.rel (0) target = $region5
  $region4: #{conv_block_up_forward.19} parent=0 // pred_region
    _
  $region5: #{conv_block_up_forward.19} parent=0 // pred_fallthru
    _
  // Predicated region
  $region6: #{conv_block_up_forward.19} parent=0 // pred_check
    _
  $region7: #{conv_block_up_forward.19} parent=0 // pred_check_branch
    %11 = sbr.rel (0) target = $region9
  $region8: #{conv_block_up_forward.19} parent=0 // pred_region
    _
  $region9: #{conv_block_up_forward.19} parent=0 // pred_fallthru
    _
  // Predicated region
  $region10: #{conv_block_up_forward.19} parent=0 // pred_check
    _
  $region11: #{conv_block_up_forward.19} parent=0 // pred_check_branch
    %13 = sbr.rel (0) target = $region13
  $region12: #{conv_block_up_forward.19} parent=0 // pred_region
    _
  $region13: #{conv_block_up_forward.19} parent=0 // pred_fallthru
    _
  %v14 = vld [vmem:[%s0] sm:$0xff]
  %v15 = vld [vmem:[%s0 + $0x8] sm:$0xff]
  %v16 = vld [vmem:[%s0 + $0x10] sm:$0xff]
  %v17 = vld [vmem:[%s0 + $0x18] sm:$0xff]
  %v18 = vld [vmem:[%s0 + $0x20] sm:$0xff]
  %v19 = vld [vmem:[%s0 + $0x28] sm:$0xff]
  %v20 = vld [vmem:[%s0 + $0x30] sm:$0xff]
  %v21 = vld [vmem:[%s0 + $0x38] sm:$0xff]
  %v22 = vld [vmem:[%s0 + $0x40] sm:$0xff]
  %v23 = vld [vmem:[%s0 + $0x48] sm:$0xff]
  %v24 = vld [vmem:[%s0 + $0x50] sm:$0xff]
  %v25 = vld [vmem:[%s0 + $0x58] sm:$0xff]
  %v26 = vld [vmem:[%s0 + $0x60] sm:$0xff]
  %v27 = vld [vmem:[%s0 + $0x68] sm:$0xff]
  %v28 = vld [vmem:[%s0 + $0x70] sm:$0xff]
  %v29 = vld [vmem:[%s0 + $0x78] sm:$0xff]
  %v30 = vld [vmem:[%s0 + $0x80] sm:$0xff]
  %v31 = vld [vmem:[%s0 + $0x88] sm:$0xff]
  %v32 = vld [vmem:[%s0 + $0x90] sm:$0xff]
  %v33 = vld [vmem:[%s0 + $0x98] sm:$0xff]
  %v34 = vld [vmem:[%s0 + $0xa0] sm:$0xff]
  %v35 = vld [vmem:[%s0 + $0xa8] sm:$0xff]
  %v36 = vld [vmem:[%s0 + $0xb0] sm:$0xff]
  %v37 = vld [vmem:[%s0 + $0xb8] sm:$0xff]
  %v38 = vld [vmem:[%s0 + $0xc0] sm:$0xff]
  %v39 = vld [vmem:[%s0 + $0xc8] sm:$0xff]
  %v40 = vld [vmem:[%s0 + $0xd0] sm:$0xff]
  %v41 = vld [vmem:[%s0 + $0xd8] sm:$0xff]
  %v42 = vld [vmem:[%s0 + $0xe0] sm:$0xff]
  %v43 = vld [vmem:[%s0 + $0xe8] sm:$0xff]
  %v44 = vld [vmem:[%s0 + $0xf0] sm:$0xff]
  %v45 = vld [vmem:[%s0 + $0xf8] sm:$0xff]
  %v46 = vld [vmem:[%s0 + $0x100] sm:$0xff]
  %v47 = vld [vmem:[%s0 + $0x108] sm:$0xff]
  %v48 = vld [vmem:[%s0 + $0x110] sm:$0xff]
  %v49 = vld [vmem:[%s0 + $0x118] sm:$0xff]
  %v50 = vld [vmem:[%s0 + $0x120] sm:$0xff]
  %v51 = vld [vmem:[%s0 + $0x128] sm:$0xff]
  %v52 = vld [vmem:[%s0 + $0x130] sm:$0xff]
  %v53 = vld [vmem:[%s0 + $0x138] sm:$0xff]
  %v54 = vld [vmem:[%s0 + $0x140] sm:$0xff]
  %v55 = vld [vmem:[%s0 + $0x148] sm:$0xff]
  %v56 = vld [vmem:[%s0 + $0x150] sm:$0xff]
  %v57 = vld [vmem:[%s0 + $0x158] sm:$0xff]
  %v58 = vld [vmem:[%s0 + $0x160] sm:$0xff]
  %v59 = vld [vmem:[%s0 + $0x168] sm:$0xff]
  %v60 = vld [vmem:[%s0 + $0x170] sm:$0xff]
  %v61 = vld [vmem:[%s0 + $0x178] sm:$0xff]
  %v62 = vld [vmem:[%s0 + $0x180] sm:$0xff]
  %v63 = vld [vmem:[%s0 + $0x188] sm:$0xff]
  %v64 = vld [vmem:[%s0 + $0x190] sm:$0xff]
  %v65 = vld [vmem:[%s0 + $0x198] sm:$0xff]
  %v66 = vld [vmem:[%s0 + $0x1a0] sm:$0xff]
  %v67 = vld [vmem:[%s0 + $0x1a8] sm:$0xff]
  %v68 = vld [vmem:[%s0 + $0x1b0] sm:$0xff]
  %v69 = vld [vmem:[%s0 + $0x1b8] sm:$0xff]
  %v70 = vld [vmem:[%s0 + $0x1c0] sm:$0xff]
  %v71 = vld [vmem:[%s0 + $0x1c8] sm:$0xff]
  %v72 = vld [vmem:[%s0 + $0x1d0] sm:$0xff]
  %v73 = vld [vmem:[%s0 + $0x1d8] sm:$0xff]
  %v74 = vld [vmem:[%s0 + $0x1e0] sm:$0xff]
  %v75 = vld [vmem:[%s0 + $0x1e8] sm:$0xff]
  %v76 = vld [vmem:[%s0 + $0x1f0] sm:$0xff]
  %v77 = vld [vmem:[%s0 + $0x1f8] sm:$0xff]
  %v78 = vld [vmem:[%s1] sm:$0x1]
  %v80 = vperm.slane %v78, 0
  %v82 = vmul.f32 %v14, %v80
  %v83 = vmul.f32 %v15, %v80
  %v84 = vmul.f32 %v16, %v80
  %v85 = vmul.f32 %v17, %v80
  %v86 = vmul.f32 %v18, %v80
  %v87 = vmul.f32 %v19, %v80
  %v88 = vmul.f32 %v20, %v80
  %v89 = vmul.f32 %v21, %v80
  %v90 = vmul.f32 %v22, %v80
  %v91 = vmul.f32 %v23, %v80
  %v92 = vmul.f32 %v24, %v80
  %v93 = vmul.f32 %v25, %v80
  %v94 = vmul.f32 %v26, %v80
  %v95 = vmul.f32 %v27, %v80
  %v96 = vmul.f32 %v28, %v80
  %v97 = vmul.f32 %v29, %v80
  %v98 = vmul.f32 %v30, %v80
  %v99 = vmul.f32 %v31, %v80
  %v100 = vmul.f32 %v32, %v80
  %v101 = vmul.f32 %v33, %v80
  %v102 = vmul.f32 %v34, %v80
  %v103 = vmul.f32 %v35, %v80
  %v104 = vmul.f32 %v36, %v80
  %v105 = vmul.f32 %v37, %v80
  %v106 = vmul.f32 %v38, %v80
  %v107 = vmul.f32 %v39, %v80
  %v108 = vmul.f32 %v40, %v80
  %v109 = vmul.f32 %v41, %v80
  %v110 = vmul.f32 %v42, %v80
  %v111 = vmul.f32 %v43, %v80
  %v112 = vmul.f32 %v44, %v80
  %v113 = vmul.f32 %v45, %v80
  %v114 = vmul.f32 %v46, %v80
  %v115 = vmul.f32 %v47, %v80
  %v116 = vmul.f32 %v48, %v80
  %v117 = vmul.f32 %v49, %v80
  %v118 = vmul.f32 %v50, %v80
  %v119 = vmul.f32 %v51, %v80
  %v120 = vmul.f32 %v52, %v80
  %v121 = vmul.f32 %v53, %v80
  %v122 = vmul.f32 %v54, %v80
  %v123 = vmul.f32 %v55, %v80
  %v124 = vmul.f32 %v56, %v80
  %v125 = vmul.f32 %v57, %v80
  %v126 = vmul.f32 %v58, %v80
  %v127 = vmul.f32 %v59, %v80
  %v128 = vmul.f32 %v60, %v80
  %v129 = vmul.f32 %v61, %v80
  %v130 = vmul.f32 %v62, %v80
  %v131 = vmul.f32 %v63, %v80
  %v132 = vmul.f32 %v64, %v80
  %v133 = vmul.f32 %v65, %v80
  %v134 = vmul.f32 %v66, %v80
  %v135 = vmul.f32 %v67, %v80
  %v136 = vmul.f32 %v68, %v80
  %v137 = vmul.f32 %v69, %v80
  %v138 = vmul.f32 %v70, %v80
  %v139 = vmul.f32 %v71, %v80
  %v140 = vmul.f32 %v72, %v80
  %v141 = vmul.f32 %v73, %v80
  %v142 = vmul.f32 %v74, %v80
  %v143 = vmul.f32 %v75, %v80
  %v144 = vmul.f32 %v76, %v80
  %v145 = vmul.f32 %v77, %v80
  %v146 = vld [vmem:[%s2] sm:$0x1]
  %v148 = vperm.slane %v146, 0
  %v150 = vadd.f32 %v82, %v148
  %v151 = vadd.f32 %v83, %v148
  %v152 = vadd.f32 %v84, %v148
  %v153 = vadd.f32 %v85, %v148
  %v154 = vadd.f32 %v86, %v148
  %v155 = vadd.f32 %v87, %v148
  %v156 = vadd.f32 %v88, %v148
  %v157 = vadd.f32 %v89, %v148
  %v158 = vadd.f32 %v90, %v148
  %v159 = vadd.f32 %v91, %v148
  %v160 = vadd.f32 %v92, %v148
  %v161 = vadd.f32 %v93, %v148
  %v162 = vadd.f32 %v94, %v148
  %v163 = vadd.f32 %v95, %v148
  %v164 = vadd.f32 %v96, %v148
  %v165 = vadd.f32 %v97, %v148
  %v166 = vadd.f32 %v98, %v148
  %v167 = vadd.f32 %v99, %v148
  %v168 = vadd.f32 %v100, %v148
  %v169 = vadd.f32 %v101, %v148
  %v170 = vadd.f32 %v102, %v148
  %v171 = vadd.f32 %v103, %v148
  %v172 = vadd.f32 %v104, %v148
  %v173 = vadd.f32 %v105, %v148
  %v174 = vadd.f32 %v106, %v148
  %v175 = vadd.f32 %v107, %v148
  %v176 = vadd.f32 %v108, %v148
  %v177 = vadd.f32 %v109, %v148
  %v178 = vadd.f32 %v110, %v148
  %v179 = vadd.f32 %v111, %v148
  %v180 = vadd.f32 %v112, %v148
  %v181 = vadd.f32 %v113, %v148
  %v182 = vadd.f32 %v114, %v148
  %v183 = vadd.f32 %v115, %v148
  %v184 = vadd.f32 %v116, %v148
  %v185 = vadd.f32 %v117, %v148
  %v186 = vadd.f32 %v118, %v148
  %v187 = vadd.f32 %v119, %v148
  %v188 = vadd.f32 %v120, %v148
  %v189 = vadd.f32 %v121, %v148
  %v190 = vadd.f32 %v122, %v148
  %v191 = vadd.f32 %v123, %v148
  %v192 = vadd.f32 %v124, %v148
  %v193 = vadd.f32 %v125, %v148
  %v194 = vadd.f32 %v126, %v148
  %v195 = vadd.f32 %v127, %v148
  %v196 = vadd.f32 %v128, %v148
  %v197 = vadd.f32 %v129, %v148
  %v198 = vadd.f32 %v130, %v148
  %v199 = vadd.f32 %v131, %v148
  %v200 = vadd.f32 %v132, %v148
  %v201 = vadd.f32 %v133, %v148
  %v202 = vadd.f32 %v134, %v148
  %v203 = vadd.f32 %v135, %v148
  %v204 = vadd.f32 %v136, %v148
  %v205 = vadd.f32 %v137, %v148
  %v206 = vadd.f32 %v138, %v148
  %v207 = vadd.f32 %v139, %v148
  %v208 = vadd.f32 %v140, %v148
  %v209 = vadd.f32 %v141, %v148
  %v210 = vadd.f32 %v142, %v148
  %v211 = vadd.f32 %v143, %v148
  %v212 = vadd.f32 %v144, %v148
  %v213 = vadd.f32 %v145, %v148
  %v214 = vpack.c.bf16 %v150, %v150
  %v215 = vpack.c.bf16 %v151, %v151
  %v216 = vpack.c.bf16 %v152, %v152
  %v217 = vpack.c.bf16 %v153, %v153
  %v218 = vpack.c.bf16 %v154, %v154
  %v219 = vpack.c.bf16 %v155, %v155
  %v220 = vpack.c.bf16 %v156, %v156
  %v221 = vpack.c.bf16 %v157, %v157
  %v222 = vpack.c.bf16 %v158, %v158
  %v223 = vpack.c.bf16 %v159, %v159
  %v224 = vpack.c.bf16 %v160, %v160
  %v225 = vpack.c.bf16 %v161, %v161
  %v226 = vpack.c.bf16 %v162, %v162
  %v227 = vpack.c.bf16 %v163, %v163
  %v228 = vpack.c.bf16 %v164, %v164
  %v229 = vpack.c.bf16 %v165, %v165
  %v230 = vpack.c.bf16 %v166, %v166
  %v231 = vpack.c.bf16 %v167, %v167
  %v232 = vpack.c.bf16 %v168, %v168
  %v233 = vpack.c.bf16 %v169, %v169
  %v234 = vpack.c.bf16 %v170, %v170
  %v235 = vpack.c.bf16 %v171, %v171
  %v236 = vpack.c.bf16 %v172, %v172
  %v237 = vpack.c.bf16 %v173, %v173
  %v238 = vpack.c.bf16 %v174, %v174
  %v239 = vpack.c.bf16 %v175, %v175
  %v240 = vpack.c.bf16 %v176, %v176
  %v241 = vpack.c.bf16 %v177, %v177
  %v242 = vpack.c.bf16 %v178, %v178
  %v243 = vpack.c.bf16 %v179, %v179
  %v244 = vpack.c.bf16 %v180, %v180
  %v245 = vpack.c.bf16 %v181, %v181
  %v246 = vpack.c.bf16 %v182, %v182
  %v247 = vpack.c.bf16 %v183, %v183
  %v248 = vpack.c.bf16 %v184, %v184
  %v249 = vpack.c.bf16 %v185, %v185
  %v250 = vpack.c.bf16 %v186, %v186
  %v251 = vpack.c.bf16 %v187, %v187
  %v252 = vpack.c.bf16 %v188, %v188
  %v253 = vpack.c.bf16 %v189, %v189
  %v254 = vpack.c.bf16 %v190, %v190
  %v255 = vpack.c.bf16 %v191, %v191
  %v256 = vpack.c.bf16 %v192, %v192
  %v257 = vpack.c.bf16 %v193, %v193
  %v258 = vpack.c.bf16 %v194, %v194
  %v259 = vpack.c.bf16 %v195, %v195
  %v260 = vpack.c.bf16 %v196, %v196
  %v261 = vpack.c.bf16 %v197, %v197
  %v262 = vpack.c.bf16 %v198, %v198
  %v263 = vpack.c.bf16 %v199, %v199
  %v264 = vpack.c.bf16 %v200, %v200
  %v265 = vpack.c.bf16 %v201, %v201
  %v266 = vpack.c.bf16 %v202, %v202
  %v267 = vpack.c.bf16 %v203, %v203
  %v268 = vpack.c.bf16 %v204, %v204
  %v269 = vpack.c.bf16 %v205, %v205
  %v270 = vpack.c.bf16 %v206, %v206
  %v271 = vpack.c.bf16 %v207, %v207
  %v272 = vpack.c.bf16 %v208, %v208
  %v273 = vpack.c.bf16 %v209, %v209
  %v274 = vpack.c.bf16 %v210, %v210
  %v275 = vpack.c.bf16 %v211, %v211
  %v276 = vpack.c.bf16 %v212, %v212
  %v277 = vpack.c.bf16 %v213, %v213
  %278 = vst [vmem:[%s3] sm:$0xf] %v214
  %279 = vst [vmem:[%s3 + $0x4] sm:$0xf] %v215
  %280 = vst [vmem:[%s3 + $0x8] sm:$0xf] %v216
  %281 = vst [vmem:[%s3 + $0xc] sm:$0xf] %v217
  %282 = vst [vmem:[%s3 + $0x10] sm:$0xf] %v218
  %283 = vst [vmem:[%s3 + $0x14] sm:$0xf] %v219
  %284 = vst [vmem:[%s3 + $0x18] sm:$0xf] %v220
  %285 = vst [vmem:[%s3 + $0x1c] sm:$0xf] %v221
  %286 = vst [vmem:[%s3 + $0x20] sm:$0xf] %v222
  %287 = vst [vmem:[%s3 + $0x24] sm:$0xf] %v223
  %288 = vst [vmem:[%s3 + $0x28] sm:$0xf] %v224
  %289 = vst [vmem:[%s3 + $0x2c] sm:$0xf] %v225
  %290 = vst [vmem:[%s3 + $0x30] sm:$0xf] %v226
  %291 = vst [vmem:[%s3 + $0x34] sm:$0xf] %v227
  %292 = vst [vmem:[%s3 + $0x38] sm:$0xf] %v228
  %293 = vst [vmem:[%s3 + $0x3c] sm:$0xf] %v229
  %294 = vst [vmem:[%s3 + $0x40] sm:$0xf] %v230
  %295 = vst [vmem:[%s3 + $0x44] sm:$0xf] %v231
  %296 = vst [vmem:[%s3 + $0x48] sm:$0xf] %v232
  %297 = vst [vmem:[%s3 + $0x4c] sm:$0xf] %v233
  %298 = vst [vmem:[%s3 + $0x50] sm:$0xf] %v234
  %299 = vst [vmem:[%s3 + $0x54] sm:$0xf] %v235
  %300 = vst [vmem:[%s3 + $0x58] sm:$0xf] %v236
  %301 = vst [vmem:[%s3 + $0x5c] sm:$0xf] %v237
  %302 = vst [vmem:[%s3 + $0x60] sm:$0xf] %v238
  %303 = vst [vmem:[%s3 + $0x64] sm:$0xf] %v239
  %304 = vst [vmem:[%s3 + $0x68] sm:$0xf] %v240
  %305 = vst [vmem:[%s3 + $0x6c] sm:$0xf] %v241
  %306 = vst [vmem:[%s3 + $0x70] sm:$0xf] %v242
  %307 = vst [vmem:[%s3 + $0x74] sm:$0xf] %v243
  %308 = vst [vmem:[%s3 + $0x78] sm:$0xf] %v244
  %309 = vst [vmem:[%s3 + $0x7c] sm:$0xf] %v245
  %310 = vst [vmem:[%s3 + $0x80] sm:$0xf] %v246
  %311 = vst [vmem:[%s3 + $0x84] sm:$0xf] %v247
  %312 = vst [vmem:[%s3 + $0x88] sm:$0xf] %v248
  %313 = vst [vmem:[%s3 + $0x8c] sm:$0xf] %v249
  %314 = vst [vmem:[%s3 + $0x90] sm:$0xf] %v250
  %315 = vst [vmem:[%s3 + $0x94] sm:$0xf] %v251
  %316 = vst [vmem:[%s3 + $0x98] sm:$0xf] %v252
  %317 = vst [vmem:[%s3 + $0x9c] sm:$0xf] %v253
  %318 = vst [vmem:[%s3 + $0xa0] sm:$0xf] %v254
  %319 = vst [vmem:[%s3 + $0xa4] sm:$0xf] %v255
  %320 = vst [vmem:[%s3 + $0xa8] sm:$0xf] %v256
  %321 = vst [vmem:[%s3 + $0xac] sm:$0xf] %v257
  %322 = vst [vmem:[%s3 + $0xb0] sm:$0xf] %v258
  %323 = vst [vmem:[%s3 + $0xb4] sm:$0xf] %v259
  %324 = vst [vmem:[%s3 + $0xb8] sm:$0xf] %v260
  %325 = vst [vmem:[%s3 + $0xbc] sm:$0xf] %v261
  %326 = vst [vmem:[%s3 + $0xc0] sm:$0xf] %v262
  %327 = vst [vmem:[%s3 + $0xc4] sm:$0xf] %v263
  %328 = vst [vmem:[%s3 + $0xc8] sm:$0xf] %v264
  %329 = vst [vmem:[%s3 + $0xcc] sm:$0xf] %v265
  %330 = vst [vmem:[%s3 + $0xd0] sm:$0xf] %v266
  %331 = vst [vmem:[%s3 + $0xd4] sm:$0xf] %v267
  %332 = vst [vmem:[%s3 + $0xd8] sm:$0xf] %v268
  %333 = vst [vmem:[%s3 + $0xdc] sm:$0xf] %v269
  %334 = vst [vmem:[%s3 + $0xe0] sm:$0xf] %v270
  %335 = vst [vmem:[%s3 + $0xe4] sm:$0xf] %v271
  %336 = vst [vmem:[%s3 + $0xe8] sm:$0xf] %v272
  %337 = vst [vmem:[%s3 + $0xec] sm:$0xf] %v273
  %338 = vst [vmem:[%s3 + $0xf0] sm:$0xf] %v274
  %339 = vst [vmem:[%s3 + $0xf4] sm:$0xf] %v275
  %340 = vst [vmem:[%s3 + $0xf8] sm:$0xf] %v276
  %341 = vst [vmem:[%s3 + $0xfc] sm:$0xf] %v277
  // Predicated region
  $region14: #{conv_block_up_forward.19} parent=0 // pred_check
    _
  $region15: #{conv_block_up_forward.19} parent=0 // pred_check_branch
    %343 = sbr.rel (0) target = $region17
  $region16: #{conv_block_up_forward.19} parent=0 // pred_region
    _
  $region17: #{conv_block_up_forward.19} parent=0 // pred_fallthru
    _
  // Predicated region
  $region18: #{conv_block_up_forward.19} parent=0 // pred_check
    _
  $region19: #{conv_block_up_forward.19} parent=0 // pred_check_branch
    %345 = sbr.rel (0) target = $region21
  $region20: #{conv_block_up_forward.19} parent=0 // pred_region
    _
  $region21: #{conv_block_up_forward.19} parent=0 // pred_fallthru
    _

// kernel: conv_block_up_forward.20
$region0: #{conv_block_up_forward.20}
  #allocation0 [shape = 'u32[]', space=smem, size = 0x4, offset = 0x4, fixed_abs, tag = 'smem constant byte address 0x4 - core index']
  #allocation1 [shape = 'u32[72,128]{1,0:T(1,128)}', space=vmem, size = 0x9000, scoped, tag = 'internal scratch']
  %s0 = inlined_call_operand.vmem [shape: bf16[8192,216], index: 0, kind: input, shape index: {}]
  %s1 = inlined_call_operand.vmem [shape: bf16[216,8], index: 1, kind: input, shape index: {}]
  %s2 = inlined_call_operand.vmem [shape: f32[1,8], index: 2, kind: input, shape index: {}]
  %s3 = inlined_call_operand.vmem [shape: f32[8192,8], index: 3, kind: output, shape index: {0}]
  %s4 = inlined_call_operand.vmem [shape: f32[16,2,8], index: 4, kind: output, shape index: {1}]
  %5 = xla_tuple %s3, %s4
  %s6 = sld [smem:[#allocation0]]
  $region53: #{conv_block_up_forward.20} parent=0
    _
  %s8 = ssub.s32 1, %s6
  %s9 = scalar_select 0, %s8, %s6
  loop: start=0, step=1, limit=18
  $region2: #{conv_block_up_forward.20} parent=0 // loop_pre_header
    _
  $region3: #{conv_block_up_forward.20} parent=0 // loop_header
    %s11 = sphi 0, %s15
    %p12 = scmp.ge.s32.totalorder %s11, 18
    %s21 = sphi 0, %s23
    %s24 = sphi 0, %s21
    %s25 = sphi 0, %s24
    %s41 = sphi 0, %s25
    %s45 = sphi 0, %s45
    %s47 = sphi 0, %s45
    %s48 = sphi 0, %s47
    %s62 = sphi 0, %s48
    %s66 = sphi 0, %s66
    %s68 = sphi 0, %s66
    %s69 = sphi 0, %s68
    %s83 = sphi 0, %s69
    %s89 = sphi 0, %s91
    %s92 = sphi 0, %s89
    %s93 = sphi 0, %s92
    %s109 = sphi 0, %s93
    %s115 = sphi 0, %s117
    %s118 = sphi 0, %s115
    %s119 = sphi 0, %s118
    %s135 = sphi 0, %s119
  $region4: #{conv_block_up_forward.20} parent=0 // loop_header_branch
    %14 = sbr.rel (%p12) target = $region8
  $region5: #{conv_block_up_forward.20} parent=0 // loop_body
    %s16 = ssub.s32 %s11, 1
    %s17 = ssub.s32 %s11, 2
    %s18 = sadd.s32 %s11, 1
    %s19 = ssub.s32 %s11, %s18
    %p20 = scmp.eq.s32.totalorder %s19, 0
    %s22 = sadd.s32 %s21, 1
    %s23 = scalar_select %p20, %s21, %s22
    %p26 = pneg %p20
    %p27 = scmp.eq.s32.totalorder %s11, 15
    %p28 = por %p26, %p27
    %p29 = scmp.ne.s32.totalorder %s21, %s24
    %p30 = scmp.eq.s32.totalorder %s11, 0
    %p31 = por %p29, %p30
    %p32 = scmp.ne.s32.totalorder %s21, %s24
    %p33 = scmp.eq.s32.totalorder %s16, 15
    %p34 = por %p32, %p33
    %p35 = scmp.ne.s32.totalorder %s24, %s25
    %p36 = scmp.eq.s32.totalorder %s16, 0
    %p37 = por %p35, %p36
    %p38 = scmp.ne.s32.totalorder %s24, %s25
    %p39 = scmp.eq.s32.totalorder %s17, 15
    %p40 = por %p38, %p39
    %p42 = scmp.ne.s32.totalorder %s25, %s41
    %p43 = scmp.eq.s32.totalorder %s17, 0
    %p44 = por %p42, %p43
    %s46 = sadd.s32 %s45, 1
    %p49 = scmp.eq.s32.totalorder %s11, 15
    %p50 = scmp.ne.s32.totalorder %s45, %s47
    %p51 = scmp.eq.s32.totalorder %s11, 0
    %p52 = por %p50, %p51
    %p53 = scmp.ne.s32.totalorder %s45, %s47
    %p54 = scmp.eq.s32.totalorder %s16, 15
    %p55 = por %p53, %p54
    %p56 = scmp.ne.s32.totalorder %s47, %s48
    %p57 = scmp.eq.s32.totalorder %s16, 0
    %p58 = por %p56, %p57
    %p59 = scmp.ne.s32.totalorder %s47, %s48
    %p60 = scmp.eq.s32.totalorder %s17, 15
    %p61 = por %p59, %p60
    %p63 = scmp.ne.s32.totalorder %s48, %s62
    %p64 = scmp.eq.s32.totalorder %s17, 0
    %p65 = por %p63, %p64
    %s67 = sadd.s32 %s66, 1
    %p70 = scmp.eq.s32.totalorder %s11, 15
    %p71 = scmp.ne.s32.totalorder %s66, %s68
    %p72 = scmp.eq.s32.totalorder %s11, 0
    %p73 = por %p71, %p72
    %p74 = scmp.ne.s32.totalorder %s66, %s68
    %p75 = scmp.eq.s32.totalorder %s16, 15
    %p76 = por %p74, %p75
    %p77 = scmp.ne.s32.totalorder %s68, %s69
    %p78 = scmp.eq.s32.totalorder %s16, 0
    %p79 = por %p77, %p78
    %p80 = scmp.ne.s32.totalorder %s68, %s69
    %p81 = scmp.eq.s32.totalorder %s17, 15
    %p82 = por %p80, %p81
    %p84 = scmp.ne.s32.totalorder %s69, %s83
    %p85 = scmp.eq.s32.totalorder %s17, 0
    %p86 = por %p84, %p85
    %s87 = ssub.s32 %s11, %s18
    %p88 = scmp.eq.s32.totalorder %s87, 0
    %s90 = sadd.s32 %s89, 1
    %s91 = scalar_select %p88, %s89, %s90
    %p94 = pneg %p88
    %p95 = scmp.eq.s32.totalorder %s11, 15
    %p96 = por %p94, %p95
    %p97 = scmp.ne.s32.totalorder %s89, %s92
    %p98 = scmp.eq.s32.totalorder %s11, 0
    %p99 = por %p97, %p98
    %p100 = scmp.ne.s32.totalorder %s89, %s92
    %p101 = scmp.eq.s32.totalorder %s16, 15
    %p102 = por %p100, %p101
    %p103 = scmp.ne.s32.totalorder %s92, %s93
    %p104 = scmp.eq.s32.totalorder %s16, 0
    %p105 = por %p103, %p104
    %p106 = scmp.ne.s32.totalorder %s92, %s93
    %p107 = scmp.eq.s32.totalorder %s17, 15
    %p108 = por %p106, %p107
    %p110 = scmp.ne.s32.totalorder %s93, %s109
    %p111 = scmp.eq.s32.totalorder %s17, 0
    %p112 = por %p110, %p111
    %s113 = ssub.s32 %s11, %s18
    %p114 = scmp.eq.s32.totalorder %s113, 0
    %s116 = sadd.s32 %s115, 1
    %s117 = scalar_select %p114, %s115, %s116
    %p120 = pneg %p114
    %p121 = scmp.eq.s32.totalorder %s11, 15
    %p122 = por %p120, %p121
    %p123 = scmp.ne.s32.totalorder %s115, %s118
    %p124 = scmp.eq.s32.totalorder %s11, 0
    %p125 = por %p123, %p124
    %p126 = scmp.ne.s32.totalorder %s115, %s118
    %p127 = scmp.eq.s32.totalorder %s16, 15
    %p128 = por %p126, %p127
    %p129 = scmp.ne.s32.totalorder %s118, %s119
    %p130 = scmp.eq.s32.totalorder %s16, 0
    %p131 = por %p129, %p130
    %p132 = scmp.ne.s32.totalorder %s118, %s119
    %p133 = scmp.eq.s32.totalorder %s17, 15
    %p134 = por %p132, %p133
    %p136 = scmp.ne.s32.totalorder %s119, %s135
    %p137 = scmp.eq.s32.totalorder %s17, 0
    %p138 = por %p136, %p137
    %p139 = scmp.le.s32.totalorder 1, %s11
    %p140 = scmp.lt.s32.totalorder %s11, 17
    %p141 = pnand %p139, %p140
    %p142 = pneg %p141
    // Predicated region
    $region9: #{conv_block_up_forward.20} parent=5 // pred_check
      _
    $region10: #{conv_block_up_forward.20} parent=5 // pred_check_branch
      %144 = sbr.rel (%p141) target = $region12
    $region11: #{conv_block_up_forward.20} parent=5 // pred_region
      %s145 = ssub.s32 %s11, 1
      // Predicated region
      $region13: #{conv_block_up_forward.20} parent=11 // pred_check
        %p146 = pneg %p58
      $region14: #{conv_block_up_forward.20} parent=11 // pred_check_branch
        %148 = sbr.rel (%p146) target = $region16
      $region15: #{conv_block_up_forward.20} parent=11 // pred_region
        _
      $region16: #{conv_block_up_forward.20} parent=11 // pred_fallthru
        _
      // Predicated region
      $region17: #{conv_block_up_forward.20} parent=11 // pred_check
        %p149 = pneg %p79
      $region18: #{conv_block_up_forward.20} parent=11 // pred_check_branch
        %151 = sbr.rel (%p149) target = $region20
      $region19: #{conv_block_up_forward.20} parent=11 // pred_region
        _
      $region20: #{conv_block_up_forward.20} parent=11 // pred_fallthru
        _
    $region12: #{conv_block_up_forward.20} parent=5 // pred_fallthru
      _
    %p152 = scmp.lt.s32.totalorder %s11, 16
    // Predicated region
    $region21: #{conv_block_up_forward.20} parent=5 // pred_check
      %p153 = pneg %p152
    $region22: #{conv_block_up_forward.20} parent=5 // pred_check_branch
      %155 = sbr.rel (%p153) target = $region24
    $region23: #{conv_block_up_forward.20} parent=5 // pred_region
      // Predicated region
      $region25: #{conv_block_up_forward.20} parent=23 // pred_check
        %p156 = pneg %p31
      $region26: #{conv_block_up_forward.20} parent=23 // pred_check_branch
        %158 = sbr.rel (%p156) target = $region28
      $region27: #{conv_block_up_forward.20} parent=23 // pred_region
        %s159 = smul.u32 64, %s11
        %p160 = scmp.lt.s32.totalorder %s159, 1023
        %s161 = scalar_select %p160, %s159, 1023
        %s162 = smul.addr %s161, 2
        %s163 = smul.addr %s162, 4
        %s164 = scalar_lea.vmem %s0, %s163
        %s165 = smul.u32 64, %s11
      $region28: #{conv_block_up_forward.20} parent=23 // pred_fallthru
        _
    $region24: #{conv_block_up_forward.20} parent=5 // pred_fallthru
      _
    %p166 = scmp.le.s32.totalorder 1, %s11
    %p167 = scmp.lt.s32.totalorder %s11, 17
    %p168 = pnand %p166, %p167
    %p169 = pneg %p168
    // Predicated region
    $region29: #{conv_block_up_forward.20} parent=5 // pred_check
      _
    $region30: #{conv_block_up_forward.20} parent=5 // pred_check_branch
      %171 = sbr.rel (%p168) target = $region32
    $region31: #{conv_block_up_forward.20} parent=5 // pred_region
      %s172 = ssub.s32 %s11, 1
      %s173 = smul.u32 64, %s16
      %p174 = scmp.lt.s32.totalorder %s173, 1023
      %s175 = scalar_select %p174, %s173, 1023
      %s176 = smul.addr %s175, 2
      %s177 = smul.addr %s176, 4
      %s178 = scalar_lea.vmem %s0, %s177
      %p179 = pneg %p37
      %p180 = pneg %p34
      %p181 = pneg %p58
      %p182 = pneg %p55
      %p183 = pneg %p79
      %p184 = pneg %p76
      %p185 = pneg %p105
      %p186 = pneg %p102
      %s187 = smul.u32 64, %s16
      %p188 = scmp.lt.s32.totalorder %s187, 1023
      %s189 = scalar_select %p188, %s187, 1023
      %s190 = smul.addr %s189, 8
      %s191 = scalar_lea.vmem %s3, %s190
      %p192 = pneg %p131
      %p193 = pneg %p128
      %p194 = scmp.lt.s32.totalorder %s16, 15
      %s195 = scalar_select %p194, %s16, 15
      %s196 = smul.addr %s195, 2
      %s197 = scalar_lea.vmem %s4, %s196
      %s198 = smul.u32 64, %s16
      %p199 = scmp.lt.s32.totalorder %s198, 1023
      %s200 = scalar_select %p199, %s198, 1023
      %s201 = smul.addr %s200, 2
      %s202 = smul.addr %s201, 4
      %s203 = scalar_lea.vmem %s0, %s202
      %s204 = smul.u32 64, %s16
      %s205 = smul.u32 64, %s16
      %p206 = scmp.lt.s32.totalorder %s205, 1023
      %s207 = scalar_select %p206, %s205, 1023
      %s208 = smul.addr %s207, 8
      %s209 = scalar_lea.vmem %s3, %s208
      %s210 = smul.u32 64, %s16
      %p211 = scmp.lt.s32.totalorder %s16, 15
      %s212 = scalar_select %p211, %s16, 15
      %s213 = smul.addr %s212, 2
      %s214 = scalar_lea.vmem %s4, %s213
      %v216 = vld [vmem:[%s203] sm:$0xff]
      %v217 = vld [vmem:[%s203 + $0x8] sm:$0xff]
      %v218 = vld [vmem:[%s203 + $0x10] sm:$0xff]
      %v219 = vld [vmem:[%s203 + $0x18] sm:$0xff]
      %v220 = vld [vmem:[%s203 + $0x20] sm:$0xff]
      %v221 = vld [vmem:[%s203 + $0x28] sm:$0xff]
      %v222 = vld [vmem:[%s203 + $0x30] sm:$0xff]
      %v223 = vld [vmem:[%s203 + $0x38] sm:$0xff]
      %v224 = vld [vmem:[%s203 + $0x40] sm:$0xff]
      %v225 = vld [vmem:[%s203 + $0x48] sm:$0xff]
      %v226 = vld [vmem:[%s203 + $0x50] sm:$0xff]
      %v227 = vld [vmem:[%s203 + $0x58] sm:$0xff]
      %v228 = vld [vmem:[%s203 + $0x60] sm:$0xff]
      %v229 = vld [vmem:[%s203 + $0x68] sm:$0xff]
      %v230 = vld [vmem:[%s203 + $0x70] sm:$0xff]
      %v231 = vld [vmem:[%s203 + $0x78] sm:$0xff]
      %v232 = vld [vmem:[%s203 + $0x80] sm:$0xff]
      %v233 = vld [vmem:[%s203 + $0x88] sm:$0xff]
      %v234 = vld [vmem:[%s203 + $0x90] sm:$0xff]
      %v235 = vld [vmem:[%s203 + $0x98] sm:$0xff]
      %v236 = vld [vmem:[%s203 + $0xa0] sm:$0xff]
      %v237 = vld [vmem:[%s203 + $0xa8] sm:$0xff]
      %v238 = vld [vmem:[%s203 + $0xb0] sm:$0xff]
      %v239 = vld [vmem:[%s203 + $0xb8] sm:$0xff]
      %v240 = vld [vmem:[%s203 + $0xc0] sm:$0xff]
      %v241 = vld [vmem:[%s203 + $0xc8] sm:$0xff]
      %v242 = vld [vmem:[%s203 + $0xd0] sm:$0xff]
      %v243 = vld [vmem:[%s203 + $0xd8] sm:$0xff]
      %v244 = vld [vmem:[%s203 + $0xe0] sm:$0xff]
      %v245 = vld [vmem:[%s203 + $0xe8] sm:$0xff]
      %v246 = vld [vmem:[%s203 + $0xf0] sm:$0xff]
      %v247 = vld [vmem:[%s203 + $0xf8] sm:$0xff]
      %v248 = vld [vmem:[%s203 + $0x100] sm:$0xff]
      %v249 = vld [vmem:[%s203 + $0x108] sm:$0xff]
      %v250 = vld [vmem:[%s203 + $0x110] sm:$0xff]
      %v251 = vld [vmem:[%s203 + $0x118] sm:$0xff]
      %v252 = vld [vmem:[%s203 + $0x120] sm:$0xff]
      %v253 = vld [vmem:[%s203 + $0x128] sm:$0xff]
      %v254 = vld [vmem:[%s203 + $0x130] sm:$0xff]
      %v255 = vld [vmem:[%s203 + $0x138] sm:$0xff]
      %v256 = vld [vmem:[%s203 + $0x140] sm:$0xff]
      %v257 = vld [vmem:[%s203 + $0x148] sm:$0xff]
      %v258 = vld [vmem:[%s203 + $0x150] sm:$0xff]
      %v259 = vld [vmem:[%s203 + $0x158] sm:$0xff]
      %v260 = vld [vmem:[%s203 + $0x160] sm:$0xff]
      %v261 = vld [vmem:[%s203 + $0x168] sm:$0xff]
      %v262 = vld [vmem:[%s203 + $0x170] sm:$0xff]
      %v263 = vld [vmem:[%s203 + $0x178] sm:$0xff]
      %v264 = vld [vmem:[%s203 + $0x180] sm:$0xff]
      %v265 = vld [vmem:[%s203 + $0x188] sm:$0xff]
      %v266 = vld [vmem:[%s203 + $0x190] sm:$0xff]
      %v267 = vld [vmem:[%s203 + $0x198] sm:$0xff]
      %v268 = vld [vmem:[%s203 + $0x1a0] sm:$0xff]
      %v269 = vld [vmem:[%s203 + $0x1a8] sm:$0xff]
      %v270 = vld [vmem:[%s203 + $0x1b0] sm:$0xff]
      %v271 = vld [vmem:[%s203 + $0x1b8] sm:$0xff]
      %v272 = vld [vmem:[%s203 + $0x1c0] sm:$0xff]
      %v273 = vld [vmem:[%s203 + $0x1c8] sm:$0xff]
      %v274 = vld [vmem:[%s203 + $0x1d0] sm:$0xff]
      %v275 = vld [vmem:[%s203 + $0x1d8] sm:$0xff]
      %v276 = vld [vmem:[%s203 + $0x1e0] sm:$0xff]
      %v277 = vld [vmem:[%s203 + $0x1e8] sm:$0xff]
      %v278 = vld [vmem:[%s203 + $0x1f0] sm:$0xff]
      %v279 = vld [vmem:[%s203 + $0x1f8] sm:$0xff]
      %v280 = vld [vmem:[%s1] sm:$0xf]
      %v281 = vld [vmem:[%s1 + $0x4] sm:$0xf]
      %v282 = vld [vmem:[%s1 + $0x8] sm:$0xf]
      %v283 = vld [vmem:[%s1 + $0xc] sm:$0xf]
      %v284 = vld [vmem:[%s1 + $0x10] sm:$0xf]
      %v285 = vld [vmem:[%s1 + $0x14] sm:$0xf]
      %v286 = vld [vmem:[%s1 + $0x18] sm:$0xf]
      %v287 = vld [vmem:[%s1 + $0x1c] sm:$0xf]
      %v288 = vld [vmem:[%s1 + $0x20] sm:$0xf]
      %v289 = vld [vmem:[%s1 + $0x24] sm:$0xf]
      %v290 = vld [vmem:[%s1 + $0x28] sm:$0xf]
      %v291 = vld [vmem:[%s1 + $0x2c] sm:$0xf]
      %v292 = vld [vmem:[%s1 + $0x30] sm:$0xf]
      %v293 = vld [vmem:[%s1 + $0x34] sm:$0xf]
      %v294 = vld [vmem:[%s1 + $0x38] sm:$0xf]
      %v295 = vld [vmem:[%s1 + $0x3c] sm:$0xf]
      %v296 = vld [vmem:[%s1 + $0x40] sm:$0xf]
      %v297 = vld [vmem:[%s1 + $0x44] sm:$0xf]
      %v298 = vld [vmem:[%s1 + $0x48] sm:$0xf]
      %v299 = vld [vmem:[%s1 + $0x4c] sm:$0xf]
      %v300 = vld [vmem:[%s1 + $0x50] sm:$0xf]
      %v301 = vld [vmem:[%s1 + $0x54] sm:$0xf]
      %v302 = vld [vmem:[%s1 + $0x58] sm:$0xf]
      %v303 = vld [vmem:[%s1 + $0x5c] sm:$0xf]
      %v304 = vld [vmem:[%s1 + $0x60] sm:$0xf]
      %v305 = vld [vmem:[%s1 + $0x64] sm:$0xf]
      %v306 = vld [vmem:[%s1 + $0x68] sm:$0xf]
      %v307 = vld [vmem:[%s2] sm:$0x1]
      %v309 = vperm.slane %v307, 0
      %v375 = vunpack.c.l.b16 %v216
      %v376 = vunpack.c.h.b16 %v216
      %v377 = vunpack.c.l.b16 %v217
      %v378 = vunpack.c.h.b16 %v217
      %v379 = vunpack.c.l.b16 %v218
      %v380 = vunpack.c.h.b16 %v218
      %v381 = vunpack.c.l.b16 %v219
      %v382 = vunpack.c.h.b16 %v219
      %v383 = vunpack.c.l.b16 %v220
      %v384 = vunpack.c.h.b16 %v220
      %v385 = vunpack.c.l.b16 %v221
      %v386 = vunpack.c.h.b16 %v221
      %v387 = vunpack.c.l.b16 %v222
      %v388 = vunpack.c.h.b16 %v222
      %v389 = vunpack.c.l.b16 %v223
      %v390 = vunpack.c.h.b16 %v223
      %v391 = vunpack.c.l.b16 %v224
      %v392 = vunpack.c.h.b16 %v224
      %v393 = vunpack.c.l.b16 %v225
      %v394 = vunpack.c.h.b16 %v225
      %v395 = vunpack.c.l.b16 %v226
      %v396 = vunpack.c.h.b16 %v226
      %v397 = vunpack.c.l.b16 %v227
      %v398 = vunpack.c.h.b16 %v227
      %v399 = vunpack.c.l.b16 %v228
      %v400 = vunpack.c.h.b16 %v228
      %v401 = vunpack.c.l.b16 %v229
      %v402 = vunpack.c.h.b16 %v229
      %v403 = vunpack.c.l.b16 %v230
      %v404 = vunpack.c.h.b16 %v230
      %v405 = vunpack.c.l.b16 %v231
      %v406 = vunpack.c.h.b16 %v231
      %v407 = vunpack.c.l.b16 %v232
      %v408 = vunpack.c.h.b16 %v232
      %v409 = vunpack.c.l.b16 %v233
      %v410 = vunpack.c.h.b16 %v233
      %v411 = vunpack.c.l.b16 %v234
      %v412 = vunpack.c.h.b16 %v234
      %v413 = vunpack.c.l.b16 %v235
      %v414 = vunpack.c.h.b16 %v235
      %v415 = vunpack.c.l.b16 %v236
      %v416 = vunpack.c.h.b16 %v236
      %v417 = vunpack.c.l.b16 %v237
      %v418 = vunpack.c.h.b16 %v237
      %v419 = vunpack.c.l.b16 %v238
      %v420 = vunpack.c.h.b16 %v238
      %v421 = vunpack.c.l.b16 %v239
      %v422 = vunpack.c.h.b16 %v239
      %v423 = vunpack.c.l.b16 %v240
      %v424 = vunpack.c.h.b16 %v240
      %v425 = vunpack.c.l.b16 %v241
      %v426 = vunpack.c.h.b16 %v241
      %v427 = vunpack.c.l.b16 %v242
      %v428 = vunpack.c.h.b16 %v242
      %v429 = vunpack.c.l.b16 %v243
      %v430 = vunpack.c.h.b16 %v243
      %v431 = vunpack.c.l.b16 %v244
      %v432 = vunpack.c.h.b16 %v244
      %v433 = vunpack.c.l.b16 %v245
      %v434 = vunpack.c.h.b16 %v245
      %v435 = vunpack.c.l.b16 %v246
      %v436 = vunpack.c.h.b16 %v246
      %v437 = vunpack.c.l.b16 %v247
      %v438 = vunpack.c.h.b16 %v247
      %v439 = vunpack.c.l.b16 %v248
      %v440 = vunpack.c.h.b16 %v248
      %v441 = vunpack.c.l.b16 %v249
      %v442 = vunpack.c.h.b16 %v249
      %v443 = vunpack.c.l.b16 %v250
      %v444 = vunpack.c.h.b16 %v250
      %v445 = vunpack.c.l.b16 %v251
      %v446 = vunpack.c.h.b16 %v251
      %v447 = vunpack.c.l.b16 %v252
      %v448 = vunpack.c.h.b16 %v252
      %v449 = vunpack.c.l.b16 %v253
      %v450 = vunpack.c.h.b16 %v253
      %v451 = vunpack.c.l.b16 %v254
      %v452 = vunpack.c.h.b16 %v254
      %v453 = vunpack.c.l.b16 %v255
      %v454 = vunpack.c.h.b16 %v255
      %v455 = vunpack.c.l.b16 %v256
      %v456 = vunpack.c.h.b16 %v256
      %v457 = vunpack.c.l.b16 %v257
      %v458 = vunpack.c.h.b16 %v257
      %v459 = vunpack.c.l.b16 %v258
      %v460 = vunpack.c.h.b16 %v258
      %v461 = vunpack.c.l.b16 %v259
      %v462 = vunpack.c.h.b16 %v259
      %v463 = vunpack.c.l.b16 %v260
      %v464 = vunpack.c.h.b16 %v260
      %v465 = vunpack.c.l.b16 %v261
      %v466 = vunpack.c.h.b16 %v261
      %v467 = vunpack.c.l.b16 %v262
      %v468 = vunpack.c.h.b16 %v262
      %v469 = vunpack.c.l.b16 %v263
      %v470 = vunpack.c.h.b16 %v263
      %v471 = vunpack.c.l.b16 %v264
      %v472 = vunpack.c.h.b16 %v264
      %v473 = vunpack.c.l.b16 %v265
      %v474 = vunpack.c.h.b16 %v265
      %v475 = vunpack.c.l.b16 %v266
      %v476 = vunpack.c.h.b16 %v266
      %v477 = vunpack.c.l.b16 %v267
      %v478 = vunpack.c.h.b16 %v267
      %v479 = vunpack.c.l.b16 %v268
      %v480 = vunpack.c.h.b16 %v268
      %v481 = vunpack.c.l.b16 %v269
      %v482 = vunpack.c.h.b16 %v269
      %v483 = vunpack.c.l.b16 %v270
      %v484 = vunpack.c.h.b16 %v270
      %v485 = vunpack.c.l.b16 %v271
      %v486 = vunpack.c.h.b16 %v271
      %v487 = vunpack.c.l.b16 %v272
      %v488 = vunpack.c.h.b16 %v272
      %v489 = vunpack.c.l.b16 %v273
      %v490 = vunpack.c.h.b16 %v273
      %v491 = vunpack.c.l.b16 %v274
      %v492 = vunpack.c.h.b16 %v274
      %v493 = vunpack.c.l.b16 %v275
      %v494 = vunpack.c.h.b16 %v275
      %v495 = vunpack.c.l.b16 %v276
      %v496 = vunpack.c.h.b16 %v276
      %v497 = vunpack.c.l.b16 %v277
      %v498 = vunpack.c.h.b16 %v277
      %v499 = vunpack.c.l.b16 %v278
      %v500 = vunpack.c.h.b16 %v278
      %v501 = vunpack.c.l.b16 %v279
      %v502 = vunpack.c.h.b16 %v279
      %v503 = vpack.c.b16 %v377, %v375
      %v504 = vpack.c.b16 %v378, %v376
      %v505 = vpack.c.b16 %v381, %v379
      %v506 = vpack.c.b16 %v382, %v380
      %v507 = vpack.c.b16 %v385, %v383
      %v508 = vpack.c.b16 %v386, %v384
      %v509 = vpack.c.b16 %v389, %v387
      %v510 = vpack.c.b16 %v390, %v388
      %v511 = vpack.c.b16 %v393, %v391
      %v512 = vpack.c.b16 %v394, %v392
      %v513 = vpack.c.b16 %v397, %v395
      %v514 = vpack.c.b16 %v398, %v396
      %v515 = vpack.c.b16 %v401, %v399
      %v516 = vpack.c.b16 %v402, %v400
      %v517 = vpack.c.b16 %v405, %v403
      %v518 = vpack.c.b16 %v406, %v404
      %v519 = vpack.c.b16 %v409, %v407
      %v520 = vpack.c.b16 %v410, %v408
      %v521 = vpack.c.b16 %v413, %v411
      %v522 = vpack.c.b16 %v414, %v412
      %v523 = vpack.c.b16 %v417, %v415
      %v524 = vpack.c.b16 %v418, %v416
      %v525 = vpack.c.b16 %v421, %v419
      %v526 = vpack.c.b16 %v422, %v420
      %v527 = vpack.c.b16 %v425, %v423
      %v528 = vpack.c.b16 %v426, %v424
      %v529 = vpack.c.b16 %v429, %v427
      %v530 = vpack.c.b16 %v430, %v428
      %v531 = vpack.c.b16 %v433, %v431
      %v532 = vpack.c.b16 %v434, %v432
      %v533 = vpack.c.b16 %v437, %v435
      %v534 = vpack.c.b16 %v438, %v436
      %v535 = vpack.c.b16 %v441, %v439
      %v536 = vpack.c.b16 %v442, %v440
      %v537 = vpack.c.b16 %v445, %v443
      %v538 = vpack.c.b16 %v446, %v444
      %v539 = vpack.c.b16 %v449, %v447
      %v540 = vpack.c.b16 %v450, %v448
      %v541 = vpack.c.b16 %v453, %v451
      %v542 = vpack.c.b16 %v454, %v452
      %v543 = vpack.c.b16 %v457, %v455
      %v544 = vpack.c.b16 %v458, %v456
      %v545 = vpack.c.b16 %v461, %v459
      %v546 = vpack.c.b16 %v462, %v460
      %v547 = vpack.c.b16 %v465, %v463
      %v548 = vpack.c.b16 %v466, %v464
      %v549 = vpack.c.b16 %v469, %v467
      %v550 = vpack.c.b16 %v470, %v468
      %v551 = vpack.c.b16 %v473, %v471
      %v552 = vpack.c.b16 %v474, %v472
      %v553 = vpack.c.b16 %v477, %v475
      %v554 = vpack.c.b16 %v478, %v476
      %v555 = vpack.c.b16 %v481, %v479
      %v556 = vpack.c.b16 %v482, %v480
      %v557 = vpack.c.b16 %v485, %v483
      %v558 = vpack.c.b16 %v486, %v484
      %v559 = vpack.c.b16 %v489, %v487
      %v560 = vpack.c.b16 %v490, %v488
      %v561 = vpack.c.b16 %v493, %v491
      %v562 = vpack.c.b16 %v494, %v492
      %v563 = vpack.c.b16 %v497, %v495
      %v564 = vpack.c.b16 %v498, %v496
      %v565 = vpack.c.b16 %v501, %v499
      %v566 = vpack.c.b16 %v502, %v500
      %v626 = vunpack.c.l.b16 %v280
      %v627 = vunpack.c.l.b16 %v281
      %v628 = vunpack.c.l.b16 %v282
      %v629 = vunpack.c.l.b16 %v283
      %v630 = vunpack.c.l.b16 %v284
      %v631 = vunpack.c.l.b16 %v285
      %v632 = vunpack.c.l.b16 %v286
      %v633 = vunpack.c.l.b16 %v287
      %v634 = vunpack.c.l.b16 %v288
      %v635 = vunpack.c.l.b16 %v289
      %v636 = vunpack.c.l.b16 %v290
      %v637 = vunpack.c.l.b16 %v291
      %v638 = vunpack.c.l.b16 %v292
      %v639 = vunpack.c.l.b16 %v293
      %v640 = vunpack.c.l.b16 %v294
      %v641 = vunpack.c.l.b16 %v295
      %v642 = vunpack.c.l.b16 %v296
      %v643 = vunpack.c.l.b16 %v297
      %v644 = vunpack.c.l.b16 %v298
      %v645 = vunpack.c.l.b16 %v299
      %v646 = vunpack.c.l.b16 %v300
      %v647 = vunpack.c.l.b16 %v301
      %v648 = vunpack.c.l.b16 %v302
      %v649 = vunpack.c.l.b16 %v303
      %v650 = vunpack.c.l.b16 %v304
      %v651 = vunpack.c.l.b16 %v305
      %v652 = vunpack.c.l.b16 %v306
      %v653 = vpack.c.b16 %v627, %v626
      %v654 = vpack.c.b16 %v629, %v628
      %v655 = vpack.c.b16 %v631, %v630
      %v656 = vpack.c.b16 %v633, %v632
      %v657 = vpack.c.b16 %v635, %v634
      %v658 = vpack.c.b16 %v637, %v636
      %v659 = vpack.c.b16 %v639, %v638
      %v660 = vpack.c.b16 %v641, %v640
      %v661 = vpack.c.b16 %v643, %v642
      %v662 = vpack.c.b16 %v645, %v644
      %v663 = vpack.c.b16 %v647, %v646
      %v664 = vpack.c.b16 %v649, %v648
      %v665 = vpack.c.b16 %v651, %v650
      %v666 = vpack.c.b16 %v652, %v652
      %vm680 = vcmask 719872
      %v682 = vsel %vm680, %v504, 0
      %v685 = vsel %vm680, %v506, 0
      %v688 = vsel %vm680, %v508, 0
      %v691 = vsel %vm680, %v510, 0
      %v694 = vsel %vm680, %v512, 0
      %v697 = vsel %vm680, %v514, 0
      %v700 = vsel %vm680, %v516, 0
      %v703 = vsel %vm680, %v518, 0
      %v706 = vsel %vm680, %v520, 0
      %v709 = vsel %vm680, %v522, 0
      %v712 = vsel %vm680, %v524, 0
      %v715 = vsel %vm680, %v526, 0
      %v718 = vsel %vm680, %v528, 0
      %v721 = vsel %vm680, %v530, 0
      %v724 = vsel %vm680, %v532, 0
      %v727 = vsel %vm680, %v534, 0
      %v730 = vsel %vm680, %v536, 0
      %v733 = vsel %vm680, %v538, 0
      %v736 = vsel %vm680, %v540, 0
      %v739 = vsel %vm680, %v542, 0
      %v742 = vsel %vm680, %v544, 0
      %v745 = vsel %vm680, %v546, 0
      %v748 = vsel %vm680, %v548, 0
      %v751 = vsel %vm680, %v550, 0
      %v754 = vsel %vm680, %v552, 0
      %v757 = vsel %vm680, %v554, 0
      %v760 = vsel %vm680, %v556, 0
      %v763 = vsel %vm680, %v558, 0
      %v766 = vsel %vm680, %v560, 0
      %v769 = vsel %vm680, %v562, 0
      %v772 = vsel %vm680, %v564, 0
      %v775 = vsel %vm680, %v566, 0
      %vm777 = vcmask 1043456
      %v779 = vsel %vm777, %v666, 0
      %781 = vmatpush.bf16.msra.mxu0 %v660
      %782 = vmatpush.bf16.msra.mxu0 %v659
      %783 = vmatpush.bf16.msra.mxu0 %v658
      %784 = vmatpush.bf16.msra.mxu0 %v657
      %785 = vmatpush.bf16.msra.mxu0 %v656
      %786 = vmatpush.bf16.msra.mxu0 %v655
      %787 = vmatpush.bf16.msra.mxu0 %v654
      %788 = vmatpush.bf16.msra.mxu0 %v653
      %789 = vmatmul.bf16.gmra.mxu0 %v503
      %v790 = vpop.f32.mrf.mxu0
      %v791 = vadd.f32 %v309, %v790
      %v792 = vpop.f32.mrf.mxu0
      %v793 = vadd.f32 %v309, %v792
      %794 = vmatmul.bf16.gmra.mxu0 %v505
      %v795 = vpop.f32.mrf.mxu0
      %v796 = vadd.f32 %v309, %v795
      %v797 = vpop.f32.mrf.mxu0
      %v798 = vadd.f32 %v309, %v797
      %799 = vmatmul.bf16.gmra.mxu0 %v507
      %v800 = vpop.f32.mrf.mxu0
      %v801 = vadd.f32 %v309, %v800
      %v802 = vpop.f32.mrf.mxu0
      %v803 = vadd.f32 %v309, %v802
      %804 = vmatmul.bf16.gmra.mxu0 %v509
      %v805 = vpop.f32.mrf.mxu0
      %v806 = vadd.f32 %v309, %v805
      %v807 = vpop.f32.mrf.mxu0
      %v808 = vadd.f32 %v309, %v807
      %809 = vmatmul.bf16.gmra.mxu0 %v511
      %v810 = vpop.f32.mrf.mxu0
      %v811 = vadd.f32 %v309, %v810
      %v812 = vpop.f32.mrf.mxu0
      %v813 = vadd.f32 %v309, %v812
      %814 = vmatmul.bf16.gmra.mxu0 %v513
      %v815 = vpop.f32.mrf.mxu0
      %v816 = vadd.f32 %v309, %v815
      %v817 = vpop.f32.mrf.mxu0
      %v818 = vadd.f32 %v309, %v817
      %819 = vmatmul.bf16.gmra.mxu0 %v515
      %v820 = vpop.f32.mrf.mxu0
      %v821 = vadd.f32 %v309, %v820
      %v822 = vpop.f32.mrf.mxu0
      %v823 = vadd.f32 %v309, %v822
      %824 = vmatmul.bf16.gmra.mxu0 %v517
      %v825 = vpop.f32.mrf.mxu0
      %v826 = vadd.f32 %v309, %v825
      %v827 = vpop.f32.mrf.mxu0
      %v828 = vadd.f32 %v309, %v827
      %829 = vmatmul.bf16.gmra.mxu0 %v519
      %v830 = vpop.f32.mrf.mxu0
      %v831 = vadd.f32 %v309, %v830
      %v832 = vpop.f32.mrf.mxu0
      %v833 = vadd.f32 %v309, %v832
      %834 = vmatmul.bf16.gmra.mxu0 %v521
      %v835 = vpop.f32.mrf.mxu0
      %v836 = vadd.f32 %v309, %v835
      %v837 = vpop.f32.mrf.mxu0
      %v838 = vadd.f32 %v309, %v837
      %839 = vmatmul.bf16.gmra.mxu0 %v523
      %v840 = vpop.f32.mrf.mxu0
      %v841 = vadd.f32 %v309, %v840
      %v842 = vpop.f32.mrf.mxu0
      %v843 = vadd.f32 %v309, %v842
      %844 = vmatmul.bf16.gmra.mxu0 %v525
      %v845 = vpop.f32.mrf.mxu0
      %v846 = vadd.f32 %v309, %v845
      %v847 = vpop.f32.mrf.mxu0
      %v848 = vadd.f32 %v309, %v847
      %849 = vmatmul.bf16.gmra.mxu0 %v527
      %v850 = vpop.f32.mrf.mxu0
      %v851 = vadd.f32 %v309, %v850
      %v852 = vpop.f32.mrf.mxu0
      %v853 = vadd.f32 %v309, %v852
      %854 = vmatmul.bf16.gmra.mxu0 %v529
      %v855 = vpop.f32.mrf.mxu0
      %v856 = vadd.f32 %v309, %v855
      %v857 = vpop.f32.mrf.mxu0
      %v858 = vadd.f32 %v309, %v857
      %859 = vmatmul.bf16.gmra.mxu0 %v531
      %v860 = vpop.f32.mrf.mxu0
      %v861 = vadd.f32 %v309, %v860
      %v862 = vpop.f32.mrf.mxu0
      %v863 = vadd.f32 %v309, %v862
      %864 = vmatmul.bf16.gmra.mxu0 %v533
      %v865 = vpop.f32.mrf.mxu0
      %v866 = vadd.f32 %v309, %v865
      %v867 = vpop.f32.mrf.mxu0
      %v868 = vadd.f32 %v309, %v867
      %869 = vmatmul.bf16.gmra.mxu0 %v535
      %v870 = vpop.f32.mrf.mxu0
      %v871 = vadd.f32 %v309, %v870
      %v872 = vpop.f32.mrf.mxu0
      %v873 = vadd.f32 %v309, %v872
      %874 = vmatmul.bf16.gmra.mxu0 %v537
      %v875 = vpop.f32.mrf.mxu0
      %v876 = vadd.f32 %v309, %v875
      %v877 = vpop.f32.mrf.mxu0
      %v878 = vadd.f32 %v309, %v877
      %879 = vmatmul.bf16.gmra.mxu0 %v539
      %v880 = vpop.f32.mrf.mxu0
      %v881 = vadd.f32 %v309, %v880
      %v882 = vpop.f32.mrf.mxu0
      %v883 = vadd.f32 %v309, %v882
      %884 = vmatmul.bf16.gmra.mxu0 %v541
      %v885 = vpop.f32.mrf.mxu0
      %v886 = vadd.f32 %v309, %v885
      %v887 = vpop.f32.mrf.mxu0
      %v888 = vadd.f32 %v309, %v887
      %889 = vmatmul.bf16.gmra.mxu0 %v543
      %v890 = vpop.f32.mrf.mxu0
      %v891 = vadd.f32 %v309, %v890
      %v892 = vpop.f32.mrf.mxu0
      %v893 = vadd.f32 %v309, %v892
      %894 = vmatmul.bf16.gmra.mxu0 %v545
      %v895 = vpop.f32.mrf.mxu0
      %v896 = vadd.f32 %v309, %v895
      %v897 = vpop.f32.mrf.mxu0
      %v898 = vadd.f32 %v309, %v897
      %899 = vmatmul.bf16.gmra.mxu0 %v547
      %v900 = vpop.f32.mrf.mxu0
      %v901 = vadd.f32 %v309, %v900
      %v902 = vpop.f32.mrf.mxu0
      %v903 = vadd.f32 %v309, %v902
      %904 = vmatmul.bf16.gmra.mxu0 %v549
      %v905 = vpop.f32.mrf.mxu0
      %v906 = vadd.f32 %v309, %v905
      %v907 = vpop.f32.mrf.mxu0
      %v908 = vadd.f32 %v309, %v907
      %909 = vmatmul.bf16.gmra.mxu0 %v551
      %v910 = vpop.f32.mrf.mxu0
      %v911 = vadd.f32 %v309, %v910
      %v912 = vpop.f32.mrf.mxu0
      %v913 = vadd.f32 %v309, %v912
      %914 = vmatmul.bf16.gmra.mxu0 %v553
      %v915 = vpop.f32.mrf.mxu0
      %v916 = vadd.f32 %v309, %v915
      %v917 = vpop.f32.mrf.mxu0
      %v918 = vadd.f32 %v309, %v917
      %919 = vmatmul.bf16.gmra.mxu0 %v555
      %v920 = vpop.f32.mrf.mxu0
      %v921 = vadd.f32 %v309, %v920
      %v922 = vpop.f32.mrf.mxu0
      %v923 = vadd.f32 %v309, %v922
      %924 = vmatmul.bf16.gmra.mxu0 %v557
      %v925 = vpop.f32.mrf.mxu0
      %v926 = vadd.f32 %v309, %v925
      %v927 = vpop.f32.mrf.mxu0
      %v928 = vadd.f32 %v309, %v927
      %929 = vmatmul.bf16.gmra.mxu0 %v559
      %v930 = vpop.f32.mrf.mxu0
      %v931 = vadd.f32 %v309, %v930
      %v932 = vpop.f32.mrf.mxu0
      %v933 = vadd.f32 %v309, %v932
      %934 = vmatmul.bf16.gmra.mxu0 %v561
      %v935 = vpop.f32.mrf.mxu0
      %v936 = vadd.f32 %v309, %v935
      %v937 = vpop.f32.mrf.mxu0
      %v938 = vadd.f32 %v309, %v937
      %939 = vmatmul.bf16.gmra.mxu0 %v563
      %v940 = vpop.f32.mrf.mxu0
      %v941 = vadd.f32 %v309, %v940
      %v942 = vpop.f32.mrf.mxu0
      %v943 = vadd.f32 %v309, %v942
      %944 = vmatmul.bf16.gmra.mxu0 %v565
      %v945 = vpop.f32.mrf.mxu0
      %v946 = vadd.f32 %v309, %v945
      %v947 = vpop.f32.mrf.mxu0
      %v948 = vadd.f32 %v309, %v947
      %949 = vdwg.mxu0
      %950 = vmatpush.bf16.msra.mxu0 0
      %951 = vmatpush.bf16.msra.mxu0 0
      %952 = vmatpush.bf16.msra.mxu0 %v779
      %953 = vmatpush.bf16.msra.mxu0 %v665
      %954 = vmatpush.bf16.msra.mxu0 %v664
      %955 = vmatpush.bf16.msra.mxu0 %v663
      %956 = vmatpush.bf16.msra.mxu0 %v662
      %957 = vmatpush.bf16.msra.mxu0 %v661
      %958 = vmatmul.bf16.gmra.mxu0 %v682
      %v959 = vpop.f32.mrf.mxu0
      %v960 = vadd.f32 %v791, %v959
      %v961 = vpop.f32.mrf.mxu0
      %v962 = vadd.f32 %v793, %v961
      %963 = vmatmul.bf16.gmra.mxu0 %v685
      %v964 = vpop.f32.mrf.mxu0
      %v965 = vadd.f32 %v796, %v964
      %v966 = vpop.f32.mrf.mxu0
      %v967 = vadd.f32 %v798, %v966
      %968 = vmatmul.bf16.gmra.mxu0 %v688
      %v969 = vpop.f32.mrf.mxu0
      %v970 = vadd.f32 %v801, %v969
      %v971 = vpop.f32.mrf.mxu0
      %v972 = vadd.f32 %v803, %v971
      %973 = vmatmul.bf16.gmra.mxu0 %v691
      %v974 = vpop.f32.mrf.mxu0
      %v975 = vadd.f32 %v806, %v974
      %v976 = vpop.f32.mrf.mxu0
      %v977 = vadd.f32 %v808, %v976
      %978 = vmatmul.bf16.gmra.mxu0 %v694
      %v979 = vpop.f32.mrf.mxu0
      %v980 = vadd.f32 %v811, %v979
      %v981 = vpop.f32.mrf.mxu0
      %v982 = vadd.f32 %v813, %v981
      %983 = vmatmul.bf16.gmra.mxu0 %v697
      %v984 = vpop.f32.mrf.mxu0
      %v985 = vadd.f32 %v816, %v984
      %v986 = vpop.f32.mrf.mxu0
      %v987 = vadd.f32 %v818, %v986
      %988 = vmatmul.bf16.gmra.mxu0 %v700
      %v989 = vpop.f32.mrf.mxu0
      %v990 = vadd.f32 %v821, %v989
      %v991 = vpop.f32.mrf.mxu0
      %v992 = vadd.f32 %v823, %v991
      %993 = vmatmul.bf16.gmra.mxu0 %v703
      %v994 = vpop.f32.mrf.mxu0
      %v995 = vadd.f32 %v826, %v994
      %v996 = vpop.f32.mrf.mxu0
      %v997 = vadd.f32 %v828, %v996
      %998 = vmatmul.bf16.gmra.mxu0 %v706
      %v999 = vpop.f32.mrf.mxu0
      %v1000 = vadd.f32 %v831, %v999
      %v1001 = vpop.f32.mrf.mxu0
      %v1002 = vadd.f32 %v833, %v1001
      %1003 = vmatmul.bf16.gmra.mxu0 %v709
      %v1004 = vpop.f32.mrf.mxu0
      %v1005 = vadd.f32 %v836, %v1004
      %v1006 = vpop.f32.mrf.mxu0
      %v1007 = vadd.f32 %v838, %v1006
      %1008 = vmatmul.bf16.gmra.mxu0 %v712
      %v1009 = vpop.f32.mrf.mxu0
      %v1010 = vadd.f32 %v841, %v1009
      %v1011 = vpop.f32.mrf.mxu0
      %v1012 = vadd.f32 %v843, %v1011
      %1013 = vmatmul.bf16.gmra.mxu0 %v715
      %v1014 = vpop.f32.mrf.mxu0
      %v1015 = vadd.f32 %v846, %v1014
      %v1016 = vpop.f32.mrf.mxu0
      %v1017 = vadd.f32 %v848, %v1016
      %1018 = vmatmul.bf16.gmra.mxu0 %v718
      %v1019 = vpop.f32.mrf.mxu0
      %v1020 = vadd.f32 %v851, %v1019
      %v1021 = vpop.f32.mrf.mxu0
      %v1022 = vadd.f32 %v853, %v1021
      %1023 = vmatmul.bf16.gmra.mxu0 %v721
      %v1024 = vpop.f32.mrf.mxu0
      %v1025 = vadd.f32 %v856, %v1024
      %v1026 = vpop.f32.mrf.mxu0
      %v1027 = vadd.f32 %v858, %v1026
      %1028 = vmatmul.bf16.gmra.mxu0 %v724
      %v1029 = vpop.f32.mrf.mxu0
      %v1030 = vadd.f32 %v861, %v1029
      %v1031 = vpop.f32.mrf.mxu0
      %v1032 = vadd.f32 %v863, %v1031
      %1033 = vmatmul.bf16.gmra.mxu0 %v727
      %v1034 = vpop.f32.mrf.mxu0
      %v1035 = vadd.f32 %v866, %v1034
      %v1036 = vpop.f32.mrf.mxu0
      %v1037 = vadd.f32 %v868, %v1036
      %1038 = vmatmul.bf16.gmra.mxu0 %v730
      %v1039 = vpop.f32.mrf.mxu0
      %v1040 = vadd.f32 %v871, %v1039
      %v1041 = vpop.f32.mrf.mxu0
      %v1042 = vadd.f32 %v873, %v1041
      %1043 = vmatmul.bf16.gmra.mxu0 %v733
      %v1044 = vpop.f32.mrf.mxu0
      %v1045 = vadd.f32 %v876, %v1044
      %v1046 = vpop.f32.mrf.mxu0
      %v1047 = vadd.f32 %v878, %v1046
      %1048 = vmatmul.bf16.gmra.mxu0 %v736
      %v1049 = vpop.f32.mrf.mxu0
      %v1050 = vadd.f32 %v881, %v1049
      %v1051 = vpop.f32.mrf.mxu0
      %v1052 = vadd.f32 %v883, %v1051
      %1053 = vmatmul.bf16.gmra.mxu0 %v739
      %v1054 = vpop.f32.mrf.mxu0
      %v1055 = vadd.f32 %v886, %v1054
      %v1056 = vpop.f32.mrf.mxu0
      %v1057 = vadd.f32 %v888, %v1056
      %1058 = vmatmul.bf16.gmra.mxu0 %v742
      %v1059 = vpop.f32.mrf.mxu0
      %v1060 = vadd.f32 %v891, %v1059
      %v1061 = vpop.f32.mrf.mxu0
      %v1062 = vadd.f32 %v893, %v1061
      %1063 = vmatmul.bf16.gmra.mxu0 %v745
      %v1064 = vpop.f32.mrf.mxu0
      %v1065 = vadd.f32 %v896, %v1064
      %v1066 = vpop.f32.mrf.mxu0
      %v1067 = vadd.f32 %v898, %v1066
      %1068 = vmatmul.bf16.gmra.mxu0 %v748
      %v1069 = vpop.f32.mrf.mxu0
      %v1070 = vadd.f32 %v901, %v1069
      %v1071 = vpop.f32.mrf.mxu0
      %v1072 = vadd.f32 %v903, %v1071
      %1073 = vmatmul.bf16.gmra.mxu0 %v751
      %v1074 = vpop.f32.mrf.mxu0
      %v1075 = vadd.f32 %v906, %v1074
      %v1076 = vpop.f32.mrf.mxu0
      %v1077 = vadd.f32 %v908, %v1076
      %1078 = vmatmul.bf16.gmra.mxu0 %v754
      %v1079 = vpop.f32.mrf.mxu0
      %v1080 = vadd.f32 %v911, %v1079
      %v1081 = vpop.f32.mrf.mxu0
      %v1082 = vadd.f32 %v913, %v1081
      %1083 = vmatmul.bf16.gmra.mxu0 %v757
      %v1084 = vpop.f32.mrf.mxu0
      %v1085 = vadd.f32 %v916, %v1084
      %v1086 = vpop.f32.mrf.mxu0
      %v1087 = vadd.f32 %v918, %v1086
      %1088 = vmatmul.bf16.gmra.mxu0 %v760
      %v1089 = vpop.f32.mrf.mxu0
      %v1090 = vadd.f32 %v921, %v1089
      %v1091 = vpop.f32.mrf.mxu0
      %v1092 = vadd.f32 %v923, %v1091
      %1093 = vmatmul.bf16.gmra.mxu0 %v763
      %v1094 = vpop.f32.mrf.mxu0
      %v1095 = vadd.f32 %v926, %v1094
      %v1096 = vpop.f32.mrf.mxu0
      %v1097 = vadd.f32 %v928, %v1096
      %1098 = vmatmul.bf16.gmra.mxu0 %v766
      %v1099 = vpop.f32.mrf.mxu0
      %v1100 = vadd.f32 %v931, %v1099
      %v1101 = vpop.f32.mrf.mxu0
      %v1102 = vadd.f32 %v933, %v1101
      %1103 = vmatmul.bf16.gmra.mxu0 %v769
      %v1104 = vpop.f32.mrf.mxu0
      %v1105 = vadd.f32 %v936, %v1104
      %v1106 = vpop.f32.mrf.mxu0
      %v1107 = vadd.f32 %v938, %v1106
      %1108 = vmatmul.bf16.gmra.mxu0 %v772
      %v1109 = vpop.f32.mrf.mxu0
      %v1110 = vadd.f32 %v941, %v1109
      %v1111 = vpop.f32.mrf.mxu0
      %v1112 = vadd.f32 %v943, %v1111
      %1113 = vmatmul.bf16.gmra.mxu0 %v775
      %v1114 = vpop.f32.mrf.mxu0
      %v1115 = vadd.f32 %v946, %v1114
      %v1116 = vpop.f32.mrf.mxu0
      %v1117 = vadd.f32 %v948, %v1116
      %1118 = vdwg.mxu0
      %v1119 = vmax.f32 %v960, 0.0
      %v1120 = vmax.f32 %v962, 0.0
      %v1121 = vmax.f32 %v965, 0.0
      %v1122 = vmax.f32 %v967, 0.0
      %v1123 = vmax.f32 %v970, 0.0
      %v1124 = vmax.f32 %v972, 0.0
      %v1125 = vmax.f32 %v975, 0.0
      %v1126 = vmax.f32 %v977, 0.0
      %v1127 = vmax.f32 %v980, 0.0
      %v1128 = vmax.f32 %v982, 0.0
      %v1129 = vmax.f32 %v985, 0.0
      %v1130 = vmax.f32 %v987, 0.0
      %v1131 = vmax.f32 %v990, 0.0
      %v1132 = vmax.f32 %v992, 0.0
      %v1133 = vmax.f32 %v995, 0.0
      %v1134 = vmax.f32 %v997, 0.0
      %v1135 = vmax.f32 %v1000, 0.0
      %v1136 = vmax.f32 %v1002, 0.0
      %v1137 = vmax.f32 %v1005, 0.0
      %v1138 = vmax.f32 %v1007, 0.0
      %v1139 = vmax.f32 %v1010, 0.0
      %v1140 = vmax.f32 %v1012, 0.0
      %v1141 = vmax.f32 %v1015, 0.0
      %v1142 = vmax.f32 %v1017, 0.0
      %v1143 = vmax.f32 %v1020, 0.0
      %v1144 = vmax.f32 %v1022, 0.0
      %v1145 = vmax.f32 %v1025, 0.0
      %v1146 = vmax.f32 %v1027, 0.0
      %v1147 = vmax.f32 %v1030, 0.0
      %v1148 = vmax.f32 %v1032, 0.0
      %v1149 = vmax.f32 %v1035, 0.0
      %v1150 = vmax.f32 %v1037, 0.0
      %v1151 = vmax.f32 %v1040, 0.0
      %v1152 = vmax.f32 %v1042, 0.0
      %v1153 = vmax.f32 %v1045, 0.0
      %v1154 = vmax.f32 %v1047, 0.0
      %v1155 = vmax.f32 %v1050, 0.0
      %v1156 = vmax.f32 %v1052, 0.0
      %v1157 = vmax.f32 %v1055, 0.0
      %v1158 = vmax.f32 %v1057, 0.0
      %v1159 = vmax.f32 %v1060, 0.0
      %v1160 = vmax.f32 %v1062, 0.0
      %v1161 = vmax.f32 %v1065, 0.0
      %v1162 = vmax.f32 %v1067, 0.0
      %v1163 = vmax.f32 %v1070, 0.0
      %v1164 = vmax.f32 %v1072, 0.0
      %v1165 = vmax.f32 %v1075, 0.0
      %v1166 = vmax.f32 %v1077, 0.0
      %v1167 = vmax.f32 %v1080, 0.0
      %v1168 = vmax.f32 %v1082, 0.0
      %v1169 = vmax.f32 %v1085, 0.0
      %v1170 = vmax.f32 %v1087, 0.0
      %v1171 = vmax.f32 %v1090, 0.0
      %v1172 = vmax.f32 %v1092, 0.0
      %v1173 = vmax.f32 %v1095, 0.0
      %v1174 = vmax.f32 %v1097, 0.0
      %v1175 = vmax.f32 %v1100, 0.0
      %v1176 = vmax.f32 %v1102, 0.0
      %v1177 = vmax.f32 %v1105, 0.0
      %v1178 = vmax.f32 %v1107, 0.0
      %v1179 = vmax.f32 %v1110, 0.0
      %v1180 = vmax.f32 %v1112, 0.0
      %v1181 = vmax.f32 %v1115, 0.0
      %v1182 = vmax.f32 %v1117, 0.0
      %vm1183 = vcmask 64512
      %1184 = vst.msk [vmem:[%s209] sm:$0xff] %vm1183, %v1119
      %1185 = vst.msk [vmem:[%s209 + $0x8] sm:$0xff] %vm1183, %v1120
      %1186 = vst.msk [vmem:[%s209 + $0x10] sm:$0xff] %vm1183, %v1121
      %1187 = vst.msk [vmem:[%s209 + $0x18] sm:$0xff] %vm1183, %v1122
      %1188 = vst.msk [vmem:[%s209 + $0x20] sm:$0xff] %vm1183, %v1123
      %1189 = vst.msk [vmem:[%s209 + $0x28] sm:$0xff] %vm1183, %v1124
      %1190 = vst.msk [vmem:[%s209 + $0x30] sm:$0xff] %vm1183, %v1125
      %1191 = vst.msk [vmem:[%s209 + $0x38] sm:$0xff] %vm1183, %v1126
      %1192 = vst.msk [vmem:[%s209 + $0x40] sm:$0xff] %vm1183, %v1127
      %1193 = vst.msk [vmem:[%s209 + $0x48] sm:$0xff] %vm1183, %v1128
      %1194 = vst.msk [vmem:[%s209 + $0x50] sm:$0xff] %vm1183, %v1129
      %1195 = vst.msk [vmem:[%s209 + $0x58] sm:$0xff] %vm1183, %v1130
      %1196 = vst.msk [vmem:[%s209 + $0x60] sm:$0xff] %vm1183, %v1131
      %1197 = vst.msk [vmem:[%s209 + $0x68] sm:$0xff] %vm1183, %v1132
      %1198 = vst.msk [vmem:[%s209 + $0x70] sm:$0xff] %vm1183, %v1133
      %1199 = vst.msk [vmem:[%s209 + $0x78] sm:$0xff] %vm1183, %v1134
      %1200 = vst.msk [vmem:[%s209 + $0x80] sm:$0xff] %vm1183, %v1135
      %1201 = vst.msk [vmem:[%s209 + $0x88] sm:$0xff] %vm1183, %v1136
      %1202 = vst.msk [vmem:[%s209 + $0x90] sm:$0xff] %vm1183, %v1137
      %1203 = vst.msk [vmem:[%s209 + $0x98] sm:$0xff] %vm1183, %v1138
      %1204 = vst.msk [vmem:[%s209 + $0xa0] sm:$0xff] %vm1183, %v1139
      %1205 = vst.msk [vmem:[%s209 + $0xa8] sm:$0xff] %vm1183, %v1140
      %1206 = vst.msk [vmem:[%s209 + $0xb0] sm:$0xff] %vm1183, %v1141
      %1207 = vst.msk [vmem:[%s209 + $0xb8] sm:$0xff] %vm1183, %v1142
      %1208 = vst.msk [vmem:[%s209 + $0xc0] sm:$0xff] %vm1183, %v1143
      %1209 = vst.msk [vmem:[%s209 + $0xc8] sm:$0xff] %vm1183, %v1144
      %1210 = vst.msk [vmem:[%s209 + $0xd0] sm:$0xff] %vm1183, %v1145
      %1211 = vst.msk [vmem:[%s209 + $0xd8] sm:$0xff] %vm1183, %v1146
      %1212 = vst.msk [vmem:[%s209 + $0xe0] sm:$0xff] %vm1183, %v1147
      %1213 = vst.msk [vmem:[%s209 + $0xe8] sm:$0xff] %vm1183, %v1148
      %1214 = vst.msk [vmem:[%s209 + $0xf0] sm:$0xff] %vm1183, %v1149
      %1215 = vst.msk [vmem:[%s209 + $0xf8] sm:$0xff] %vm1183, %v1150
      %1216 = vst.msk [vmem:[%s209 + $0x100] sm:$0xff] %vm1183, %v1151
      %1217 = vst.msk [vmem:[%s209 + $0x108] sm:$0xff] %vm1183, %v1152
      %1218 = vst.msk [vmem:[%s209 + $0x110] sm:$0xff] %vm1183, %v1153
      %1219 = vst.msk [vmem:[%s209 + $0x118] sm:$0xff] %vm1183, %v1154
      %1220 = vst.msk [vmem:[%s209 + $0x120] sm:$0xff] %vm1183, %v1155
      %1221 = vst.msk [vmem:[%s209 + $0x128] sm:$0xff] %vm1183, %v1156
      %1222 = vst.msk [vmem:[%s209 + $0x130] sm:$0xff] %vm1183, %v1157
      %1223 = vst.msk [vmem:[%s209 + $0x138] sm:$0xff] %vm1183, %v1158
      %1224 = vst.msk [vmem:[%s209 + $0x140] sm:$0xff] %vm1183, %v1159
      %1225 = vst.msk [vmem:[%s209 + $0x148] sm:$0xff] %vm1183, %v1160
      %1226 = vst.msk [vmem:[%s209 + $0x150] sm:$0xff] %vm1183, %v1161
      %1227 = vst.msk [vmem:[%s209 + $0x158] sm:$0xff] %vm1183, %v1162
      %1228 = vst.msk [vmem:[%s209 + $0x160] sm:$0xff] %vm1183, %v1163
      %1229 = vst.msk [vmem:[%s209 + $0x168] sm:$0xff] %vm1183, %v1164
      %1230 = vst.msk [vmem:[%s209 + $0x170] sm:$0xff] %vm1183, %v1165
      %1231 = vst.msk [vmem:[%s209 + $0x178] sm:$0xff] %vm1183, %v1166
      %1232 = vst.msk [vmem:[%s209 + $0x180] sm:$0xff] %vm1183, %v1167
      %1233 = vst.msk [vmem:[%s209 + $0x188] sm:$0xff] %vm1183, %v1168
      %1234 = vst.msk [vmem:[%s209 + $0x190] sm:$0xff] %vm1183, %v1169
      %1235 = vst.msk [vmem:[%s209 + $0x198] sm:$0xff] %vm1183, %v1170
      %1236 = vst.msk [vmem:[%s209 + $0x1a0] sm:$0xff] %vm1183, %v1171
      %1237 = vst.msk [vmem:[%s209 + $0x1a8] sm:$0xff] %vm1183, %v1172
      %1238 = vst.msk [vmem:[%s209 + $0x1b0] sm:$0xff] %vm1183, %v1173
      %1239 = vst.msk [vmem:[%s209 + $0x1b8] sm:$0xff] %vm1183, %v1174
      %1240 = vst.msk [vmem:[%s209 + $0x1c0] sm:$0xff] %vm1183, %v1175
      %1241 = vst.msk [vmem:[%s209 + $0x1c8] sm:$0xff] %vm1183, %v1176
      %1242 = vst.msk [vmem:[%s209 + $0x1d0] sm:$0xff] %vm1183, %v1177
      %1243 = vst.msk [vmem:[%s209 + $0x1d8] sm:$0xff] %vm1183, %v1178
      %1244 = vst.msk [vmem:[%s209 + $0x1e0] sm:$0xff] %vm1183, %v1179
      %1245 = vst.msk [vmem:[%s209 + $0x1e8] sm:$0xff] %vm1183, %v1180
      %1246 = vst.msk [vmem:[%s209 + $0x1f0] sm:$0xff] %vm1183, %v1181
      %1247 = vst.msk [vmem:[%s209 + $0x1f8] sm:$0xff] %vm1183, %v1182
      %v1248 = vsel %vm1183, %v1119, 0.0
      %v1249 = vsel %vm1183, %v1120, 0.0
      %v1250 = vadd.f32 %v1248, %v1249
      %v1251 = vsel %vm1183, %v1121, 0.0
      %v1252 = vadd.f32 %v1250, %v1251
      %v1253 = vsel %vm1183, %v1122, 0.0
      %v1254 = vadd.f32 %v1252, %v1253
      %v1255 = vsel %vm1183, %v1123, 0.0
      %v1256 = vadd.f32 %v1254, %v1255
      %v1257 = vsel %vm1183, %v1124, 0.0
      %v1258 = vadd.f32 %v1256, %v1257
      %v1259 = vsel %vm1183, %v1125, 0.0
      %v1260 = vadd.f32 %v1258, %v1259
      %v1261 = vsel %vm1183, %v1126, 0.0
      %v1262 = vadd.f32 %v1260, %v1261
      %v1263 = vsel %vm1183, %v1127, 0.0
      %v1264 = vadd.f32 %v1262, %v1263
      %v1265 = vsel %vm1183, %v1128, 0.0
      %v1266 = vadd.f32 %v1264, %v1265
      %v1267 = vsel %vm1183, %v1129, 0.0
      %v1268 = vadd.f32 %v1266, %v1267
      %v1269 = vsel %vm1183, %v1130, 0.0
      %v1270 = vadd.f32 %v1268, %v1269
      %v1271 = vsel %vm1183, %v1131, 0.0
      %v1272 = vadd.f32 %v1270, %v1271
      %v1273 = vsel %vm1183, %v1132, 0.0
      %v1274 = vadd.f32 %v1272, %v1273
      %v1275 = vsel %vm1183, %v1133, 0.0
      %v1276 = vadd.f32 %v1274, %v1275
      %v1277 = vsel %vm1183, %v1134, 0.0
      %v1278 = vadd.f32 %v1276, %v1277
      %v1279 = vsel %vm1183, %v1135, 0.0
      %v1280 = vadd.f32 %v1278, %v1279
      %v1281 = vsel %vm1183, %v1136, 0.0
      %v1282 = vadd.f32 %v1280, %v1281
      %v1283 = vsel %vm1183, %v1137, 0.0
      %v1284 = vadd.f32 %v1282, %v1283
      %v1285 = vsel %vm1183, %v1138, 0.0
      %v1286 = vadd.f32 %v1284, %v1285
      %v1287 = vsel %vm1183, %v1139, 0.0
      %v1288 = vadd.f32 %v1286, %v1287
      %v1289 = vsel %vm1183, %v1140, 0.0
      %v1290 = vadd.f32 %v1288, %v1289
      %v1291 = vsel %vm1183, %v1141, 0.0
      %v1292 = vadd.f32 %v1290, %v1291
      %v1293 = vsel %vm1183, %v1142, 0.0
      %v1294 = vadd.f32 %v1292, %v1293
      %v1295 = vsel %vm1183, %v1143, 0.0
      %v1296 = vadd.f32 %v1294, %v1295
      %v1297 = vsel %vm1183, %v1144, 0.0
      %v1298 = vadd.f32 %v1296, %v1297
      %v1299 = vsel %vm1183, %v1145, 0.0
      %v1300 = vadd.f32 %v1298, %v1299
      %v1301 = vsel %vm1183, %v1146, 0.0
      %v1302 = vadd.f32 %v1300, %v1301
      %v1303 = vsel %vm1183, %v1147, 0.0
      %v1304 = vadd.f32 %v1302, %v1303
      %v1305 = vsel %vm1183, %v1148, 0.0
      %v1306 = vadd.f32 %v1304, %v1305
      %v1307 = vsel %vm1183, %v1149, 0.0
      %v1308 = vadd.f32 %v1306, %v1307
      %v1309 = vsel %vm1183, %v1150, 0.0
      %v1310 = vadd.f32 %v1308, %v1309
      %v1311 = vsel %vm1183, %v1151, 0.0
      %v1312 = vadd.f32 %v1310, %v1311
      %v1313 = vsel %vm1183, %v1152, 0.0
      %v1314 = vadd.f32 %v1312, %v1313
      %v1315 = vsel %vm1183, %v1153, 0.0
      %v1316 = vadd.f32 %v1314, %v1315
      %v1317 = vsel %vm1183, %v1154, 0.0
      %v1318 = vadd.f32 %v1316, %v1317
      %v1319 = vsel %vm1183, %v1155, 0.0
      %v1320 = vadd.f32 %v1318, %v1319
      %v1321 = vsel %vm1183, %v1156, 0.0
      %v1322 = vadd.f32 %v1320, %v1321
      %v1323 = vsel %vm1183, %v1157, 0.0
      %v1324 = vadd.f32 %v1322, %v1323
      %v1325 = vsel %vm1183, %v1158, 0.0
      %v1326 = vadd.f32 %v1324, %v1325
      %v1327 = vsel %vm1183, %v1159, 0.0
      %v1328 = vadd.f32 %v1326, %v1327
      %v1329 = vsel %vm1183, %v1160, 0.0
      %v1330 = vadd.f32 %v1328, %v1329
      %v1331 = vsel %vm1183, %v1161, 0.0
      %v1332 = vadd.f32 %v1330, %v1331
      %v1333 = vsel %vm1183, %v1162, 0.0
      %v1334 = vadd.f32 %v1332, %v1333
      %v1335 = vsel %vm1183, %v1163, 0.0
      %v1336 = vadd.f32 %v1334, %v1335
      %v1337 = vsel %vm1183, %v1164, 0.0
      %v1338 = vadd.f32 %v1336, %v1337
      %v1339 = vsel %vm1183, %v1165, 0.0
      %v1340 = vadd.f32 %v1338, %v1339
      %v1341 = vsel %vm1183, %v1166, 0.0
      %v1342 = vadd.f32 %v1340, %v1341
      %v1343 = vsel %vm1183, %v1167, 0.0
      %v1344 = vadd.f32 %v1342, %v1343
      %v1345 = vsel %vm1183, %v1168, 0.0
      %v1346 = vadd.f32 %v1344, %v1345
      %v1347 = vsel %vm1183, %v1169, 0.0
      %v1348 = vadd.f32 %v1346, %v1347
      %v1349 = vsel %vm1183, %v1170, 0.0
      %v1350 = vadd.f32 %v1348, %v1349
      %v1351 = vsel %vm1183, %v1171, 0.0
      %v1352 = vadd.f32 %v1350, %v1351
      %v1353 = vsel %vm1183, %v1172, 0.0
      %v1354 = vadd.f32 %v1352, %v1353
      %v1355 = vsel %vm1183, %v1173, 0.0
      %v1356 = vadd.f32 %v1354, %v1355
      %v1357 = vsel %vm1183, %v1174, 0.0
      %v1358 = vadd.f32 %v1356, %v1357
      %v1359 = vsel %vm1183, %v1175, 0.0
      %v1360 = vadd.f32 %v1358, %v1359
      %v1361 = vsel %vm1183, %v1176, 0.0
      %v1362 = vadd.f32 %v1360, %v1361
      %v1363 = vsel %vm1183, %v1177, 0.0
      %v1364 = vadd.f32 %v1362, %v1363
      %v1365 = vsel %vm1183, %v1178, 0.0
      %v1366 = vadd.f32 %v1364, %v1365
      %v1367 = vsel %vm1183, %v1179, 0.0
      %v1368 = vadd.f32 %v1366, %v1367
      %v1369 = vsel %vm1183, %v1180, 0.0
      %v1370 = vadd.f32 %v1368, %v1369
      %v1371 = vsel %vm1183, %v1181, 0.0
      %v1372 = vadd.f32 %v1370, %v1371
      %v1373 = vsel %vm1183, %v1182, 0.0
      %v1374 = vadd.f32 %v1372, %v1373
      %v1375 = vrot.slane %v1374, 4
      %v1376 = vadd.f32 %v1374, %v1375
      %v1377 = vrot.slane %v1376, 2
      %v1378 = vadd.f32 %v1376, %v1377
      %v1379 = vrot.slane %v1378, 1
      %v1380 = vadd.f32 %v1378, %v1379
      %vm1381 = vcmask 57344
      %1382 = vst.msk [vmem:[%s214] sm:$0x1] %vm1381, %v1380
      %v1383 = vmul.f32 %v1119, %v1119
      %v1384 = vmul.f32 %v1120, %v1120
      %v1385 = vmul.f32 %v1121, %v1121
      %v1386 = vmul.f32 %v1122, %v1122
      %v1387 = vmul.f32 %v1123, %v1123
      %v1388 = vmul.f32 %v1124, %v1124
      %v1389 = vmul.f32 %v1125, %v1125
      %v1390 = vmul.f32 %v1126, %v1126
      %v1391 = vmul.f32 %v1127, %v1127
      %v1392 = vmul.f32 %v1128, %v1128
      %v1393 = vmul.f32 %v1129, %v1129
      %v1394 = vmul.f32 %v1130, %v1130
      %v1395 = vmul.f32 %v1131, %v1131
      %v1396 = vmul.f32 %v1132, %v1132
      %v1397 = vmul.f32 %v1133, %v1133
      %v1398 = vmul.f32 %v1134, %v1134
      %v1399 = vmul.f32 %v1135, %v1135
      %v1400 = vmul.f32 %v1136, %v1136
      %v1401 = vmul.f32 %v1137, %v1137
      %v1402 = vmul.f32 %v1138, %v1138
      %v1403 = vmul.f32 %v1139, %v1139
      %v1404 = vmul.f32 %v1140, %v1140
      %v1405 = vmul.f32 %v1141, %v1141
      %v1406 = vmul.f32 %v1142, %v1142
      %v1407 = vmul.f32 %v1143, %v1143
      %v1408 = vmul.f32 %v1144, %v1144
      %v1409 = vmul.f32 %v1145, %v1145
      %v1410 = vmul.f32 %v1146, %v1146
      %v1411 = vmul.f32 %v1147, %v1147
      %v1412 = vmul.f32 %v1148, %v1148
      %v1413 = vmul.f32 %v1149, %v1149
      %v1414 = vmul.f32 %v1150, %v1150
      %v1415 = vmul.f32 %v1151, %v1151
      %v1416 = vmul.f32 %v1152, %v1152
      %v1417 = vmul.f32 %v1153, %v1153
      %v1418 = vmul.f32 %v1154, %v1154
      %v1419 = vmul.f32 %v1155, %v1155
      %v1420 = vmul.f32 %v1156, %v1156
      %v1421 = vmul.f32 %v1157, %v1157
      %v1422 = vmul.f32 %v1158, %v1158
      %v1423 = vmul.f32 %v1159, %v1159
      %v1424 = vmul.f32 %v1160, %v1160
      %v1425 = vmul.f32 %v1161, %v1161
      %v1426 = vmul.f32 %v1162, %v1162
      %v1427 = vmul.f32 %v1163, %v1163
      %v1428 = vmul.f32 %v1164, %v1164
      %v1429 = vmul.f32 %v1165, %v1165
      %v1430 = vmul.f32 %v1166, %v1166
      %v1431 = vmul.f32 %v1167, %v1167
      %v1432 = vmul.f32 %v1168, %v1168
      %v1433 = vmul.f32 %v1169, %v1169
      %v1434 = vmul.f32 %v1170, %v1170
      %v1435 = vmul.f32 %v1171, %v1171
      %v1436 = vmul.f32 %v1172, %v1172
      %v1437 = vmul.f32 %v1173, %v1173
      %v1438 = vmul.f32 %v1174, %v1174
      %v1439 = vmul.f32 %v1175, %v1175
      %v1440 = vmul.f32 %v1176, %v1176
      %v1441 = vmul.f32 %v1177, %v1177
      %v1442 = vmul.f32 %v1178, %v1178
      %v1443 = vmul.f32 %v1179, %v1179
      %v1444 = vmul.f32 %v1180, %v1180
      %v1445 = vmul.f32 %v1181, %v1181
      %v1446 = vmul.f32 %v1182, %v1182
      %v1447 = vsel %vm1183, %v1383, 0.0
      %v1448 = vsel %vm1183, %v1384, 0.0
      %v1449 = vadd.f32 %v1447, %v1448
      %v1450 = vsel %vm1183, %v1385, 0.0
      %v1451 = vadd.f32 %v1449, %v1450
      %v1452 = vsel %vm1183, %v1386, 0.0
      %v1453 = vadd.f32 %v1451, %v1452
      %v1454 = vsel %vm1183, %v1387, 0.0
      %v1455 = vadd.f32 %v1453, %v1454
      %v1456 = vsel %vm1183, %v1388, 0.0
      %v1457 = vadd.f32 %v1455, %v1456
      %v1458 = vsel %vm1183, %v1389, 0.0
      %v1459 = vadd.f32 %v1457, %v1458
      %v1460 = vsel %vm1183, %v1390, 0.0
      %v1461 = vadd.f32 %v1459, %v1460
      %v1462 = vsel %vm1183, %v1391, 0.0
      %v1463 = vadd.f32 %v1461, %v1462
      %v1464 = vsel %vm1183, %v1392, 0.0
      %v1465 = vadd.f32 %v1463, %v1464
      %v1466 = vsel %vm1183, %v1393, 0.0
      %v1467 = vadd.f32 %v1465, %v1466
      %v1468 = vsel %vm1183, %v1394, 0.0
      %v1469 = vadd.f32 %v1467, %v1468
      %v1470 = vsel %vm1183, %v1395, 0.0
      %v1471 = vadd.f32 %v1469, %v1470
      %v1472 = vsel %vm1183, %v1396, 0.0
      %v1473 = vadd.f32 %v1471, %v1472
      %v1474 = vsel %vm1183, %v1397, 0.0
      %v1475 = vadd.f32 %v1473, %v1474
      %v1476 = vsel %vm1183, %v1398, 0.0
      %v1477 = vadd.f32 %v1475, %v1476
      %v1478 = vsel %vm1183, %v1399, 0.0
      %v1479 = vadd.f32 %v1477, %v1478
      %v1480 = vsel %vm1183, %v1400, 0.0
      %v1481 = vadd.f32 %v1479, %v1480
      %v1482 = vsel %vm1183, %v1401, 0.0
      %v1483 = vadd.f32 %v1481, %v1482
      %v1484 = vsel %vm1183, %v1402, 0.0
      %v1485 = vadd.f32 %v1483, %v1484
      %v1486 = vsel %vm1183, %v1403, 0.0
      %v1487 = vadd.f32 %v1485, %v1486
      %v1488 = vsel %vm1183, %v1404, 0.0
      %v1489 = vadd.f32 %v1487, %v1488
      %v1490 = vsel %vm1183, %v1405, 0.0
      %v1491 = vadd.f32 %v1489, %v1490
      %v1492 = vsel %vm1183, %v1406, 0.0
      %v1493 = vadd.f32 %v1491, %v1492
      %v1494 = vsel %vm1183, %v1407, 0.0
      %v1495 = vadd.f32 %v1493, %v1494
      %v1496 = vsel %vm1183, %v1408, 0.0
      %v1497 = vadd.f32 %v1495, %v1496
      %v1498 = vsel %vm1183, %v1409, 0.0
      %v1499 = vadd.f32 %v1497, %v1498
      %v1500 = vsel %vm1183, %v1410, 0.0
      %v1501 = vadd.f32 %v1499, %v1500
      %v1502 = vsel %vm1183, %v1411, 0.0
      %v1503 = vadd.f32 %v1501, %v1502
      %v1504 = vsel %vm1183, %v1412, 0.0
      %v1505 = vadd.f32 %v1503, %v1504
      %v1506 = vsel %vm1183, %v1413, 0.0
      %v1507 = vadd.f32 %v1505, %v1506
      %v1508 = vsel %vm1183, %v1414, 0.0
      %v1509 = vadd.f32 %v1507, %v1508
      %v1510 = vsel %vm1183, %v1415, 0.0
      %v1511 = vadd.f32 %v1509, %v1510
      %v1512 = vsel %vm1183, %v1416, 0.0
      %v1513 = vadd.f32 %v1511, %v1512
      %v1514 = vsel %vm1183, %v1417, 0.0
      %v1515 = vadd.f32 %v1513, %v1514
      %v1516 = vsel %vm1183, %v1418, 0.0
      %v1517 = vadd.f32 %v1515, %v1516
      %v1518 = vsel %vm1183, %v1419, 0.0
      %v1519 = vadd.f32 %v1517, %v1518
      %v1520 = vsel %vm1183, %v1420, 0.0
      %v1521 = vadd.f32 %v1519, %v1520
      %v1522 = vsel %vm1183, %v1421, 0.0
      %v1523 = vadd.f32 %v1521, %v1522
      %v1524 = vsel %vm1183, %v1422, 0.0
      %v1525 = vadd.f32 %v1523, %v1524
      %v1526 = vsel %vm1183, %v1423, 0.0
      %v1527 = vadd.f32 %v1525, %v1526
      %v1528 = vsel %vm1183, %v1424, 0.0
      %v1529 = vadd.f32 %v1527, %v1528
      %v1530 = vsel %vm1183, %v1425, 0.0
      %v1531 = vadd.f32 %v1529, %v1530
      %v1532 = vsel %vm1183, %v1426, 0.0
      %v1533 = vadd.f32 %v1531, %v1532
      %v1534 = vsel %vm1183, %v1427, 0.0
      %v1535 = vadd.f32 %v1533, %v1534
      %v1536 = vsel %vm1183, %v1428, 0.0
      %v1537 = vadd.f32 %v1535, %v1536
      %v1538 = vsel %vm1183, %v1429, 0.0
      %v1539 = vadd.f32 %v1537, %v1538
      %v1540 = vsel %vm1183, %v1430, 0.0
      %v1541 = vadd.f32 %v1539, %v1540
      %v1542 = vsel %vm1183, %v1431, 0.0
      %v1543 = vadd.f32 %v1541, %v1542
      %v1544 = vsel %vm1183, %v1432, 0.0
      %v1545 = vadd.f32 %v1543, %v1544
      %v1546 = vsel %vm1183, %v1433, 0.0
      %v1547 = vadd.f32 %v1545, %v1546
      %v1548 = vsel %vm1183, %v1434, 0.0
      %v1549 = vadd.f32 %v1547, %v1548
      %v1550 = vsel %vm1183, %v1435, 0.0
      %v1551 = vadd.f32 %v1549, %v1550
      %v1552 = vsel %vm1183, %v1436, 0.0
      %v1553 = vadd.f32 %v1551, %v1552
      %v1554 = vsel %vm1183, %v1437, 0.0
      %v1555 = vadd.f32 %v1553, %v1554
      %v1556 = vsel %vm1183, %v1438, 0.0
      %v1557 = vadd.f32 %v1555, %v1556
      %v1558 = vsel %vm1183, %v1439, 0.0
      %v1559 = vadd.f32 %v1557, %v1558
      %v1560 = vsel %vm1183, %v1440, 0.0
      %v1561 = vadd.f32 %v1559, %v1560
      %v1562 = vsel %vm1183, %v1441, 0.0
      %v1563 = vadd.f32 %v1561, %v1562
      %v1564 = vsel %vm1183, %v1442, 0.0
      %v1565 = vadd.f32 %v1563, %v1564
      %v1566 = vsel %vm1183, %v1443, 0.0
      %v1567 = vadd.f32 %v1565, %v1566
      %v1568 = vsel %vm1183, %v1444, 0.0
      %v1569 = vadd.f32 %v1567, %v1568
      %v1570 = vsel %vm1183, %v1445, 0.0
      %v1571 = vadd.f32 %v1569, %v1570
      %v1572 = vsel %vm1183, %v1446, 0.0
      %v1573 = vadd.f32 %v1571, %v1572
      %v1574 = vrot.slane %v1573, 4
      %v1575 = vadd.f32 %v1573, %v1574
      %v1576 = vrot.slane %v1575, 2
      %v1577 = vadd.f32 %v1575, %v1576
      %v1578 = vrot.slane %v1577, 1
      %v1579 = vadd.f32 %v1577, %v1578
      %1580 = vst.msk [vmem:[%s214 + $0x1] sm:$0x1] %vm1381, %v1579
      %s1581 = smul.u32 64, %s16
      %p1582 = scmp.lt.s32.totalorder %s1581, 1023
      %s1583 = scalar_select %p1582, %s1581, 1023
      %s1584 = smul.addr %s1583, 8
      %s1585 = scalar_lea.vmem %s3, %s1584
      %p1586 = scmp.lt.s32.totalorder %s16, 15
      %s1587 = scalar_select %p1586, %s16, 15
      %s1588 = smul.addr %s1587, 2
      %s1589 = scalar_lea.vmem %s4, %s1588
      // Predicated region
      $region33: #{conv_block_up_forward.20} parent=31 // pred_check
        %p1590 = pneg %p102
      $region34: #{conv_block_up_forward.20} parent=31 // pred_check_branch
        %1592 = sbr.rel (%p1590) target = $region36
      $region35: #{conv_block_up_forward.20} parent=31 // pred_region
        %s1593 = smul.u32 64, %s16
      $region36: #{conv_block_up_forward.20} parent=31 // pred_fallthru
        _
      // Predicated region
      $region37: #{conv_block_up_forward.20} parent=31 // pred_check
        %p1594 = pneg %p128
      $region38: #{conv_block_up_forward.20} parent=31 // pred_check_branch
        %1596 = sbr.rel (%p1594) target = $region40
      $region39: #{conv_block_up_forward.20} parent=31 // pred_region
        _
      $region40: #{conv_block_up_forward.20} parent=31 // pred_fallthru
        _
    $region32: #{conv_block_up_forward.20} parent=5 // pred_fallthru
      _
    %p1597 = scmp.le.s32.totalorder 2, %s11
    // Predicated region
    $region41: #{conv_block_up_forward.20} parent=5 // pred_check
      %p1598 = pneg %p1597
    $region42: #{conv_block_up_forward.20} parent=5 // pred_check_branch
      %1600 = sbr.rel (%p1598) target = $region44
    $region43: #{conv_block_up_forward.20} parent=5 // pred_region
      %s1601 = ssub.s32 %s11, 2
      // Predicated region
      $region45: #{conv_block_up_forward.20} parent=43 // pred_check
        %p1602 = pneg %p108
      $region46: #{conv_block_up_forward.20} parent=43 // pred_check_branch
        %1604 = sbr.rel (%p1602) target = $region48
      $region47: #{conv_block_up_forward.20} parent=43 // pred_region
        %s1605 = smul.u32 64, %s17
        %p1606 = scmp.lt.s32.totalorder %s1605, 1023
        %s1607 = scalar_select %p1606, %s1605, 1023
        %s1608 = smul.addr %s1607, 8
        %s1609 = scalar_lea.vmem %s3, %s1608
      $region48: #{conv_block_up_forward.20} parent=43 // pred_fallthru
        _
      // Predicated region
      $region49: #{conv_block_up_forward.20} parent=43 // pred_check
        %p1610 = pneg %p134
      $region50: #{conv_block_up_forward.20} parent=43 // pred_check_branch
        %1612 = sbr.rel (%p1610) target = $region52
      $region51: #{conv_block_up_forward.20} parent=43 // pred_region
        %p1613 = scmp.lt.s32.totalorder %s17, 15
        %s1614 = scalar_select %p1613, %s17, 15
        %s1615 = smul.addr %s1614, 2
        %s1616 = scalar_lea.vmem %s4, %s1615
      $region52: #{conv_block_up_forward.20} parent=43 // pred_fallthru
        _
    $region44: #{conv_block_up_forward.20} parent=5 // pred_fallthru
      _
  $region6: #{conv_block_up_forward.20} parent=0 // loop_footer
    %s15 = sadd.s32 1, %s11
  $region7: #{conv_block_up_forward.20} parent=0 // loop_footer_branch
    %10 = sbr.rel target = $region3
  $region8: #{conv_block_up_forward.20} parent=0 // loop_exit
    _

// kernel: conv_block_up_forward.21
$region0: #{conv_block_up_forward.21}
  #allocation0 [shape = 'u32[]', space=smem, size = 0x4, offset = 0x4, fixed_abs, tag = 'smem constant byte address 0x4 - core index']
  #allocation1 [shape = 'u32[72,128]{1,0:T(1,128)}', space=vmem, size = 0x9000, scoped, tag = 'internal scratch']
  %s0 = inlined_call_operand.vmem [shape: f32[512,128], index: 0, kind: input, shape index: {}]
  %s1 = inlined_call_operand.vmem [shape: f32[1,128], index: 1, kind: input, shape index: {}]
  %s2 = inlined_call_operand.vmem [shape: f32[1,128], index: 2, kind: input, shape index: {}]
  %s3 = inlined_call_operand.vmem [shape: f32[512,128], index: 3, kind: output, shape index: {}]
  %s4 = sld [smem:[#allocation0]]
  $region22: #{conv_block_up_forward.21} parent=0
    _
  %s6 = ssub.s32 1, %s4
  %s7 = scalar_select 0, %s6, %s4
  // Predicated region
  $region2: #{conv_block_up_forward.21} parent=0 // pred_check
    _
  $region3: #{conv_block_up_forward.21} parent=0 // pred_check_branch
    %9 = sbr.rel (0) target = $region5
  $region4: #{conv_block_up_forward.21} parent=0 // pred_region
    _
  $region5: #{conv_block_up_forward.21} parent=0 // pred_fallthru
    _
  // Predicated region
  $region6: #{conv_block_up_forward.21} parent=0 // pred_check
    _
  $region7: #{conv_block_up_forward.21} parent=0 // pred_check_branch
    %11 = sbr.rel (0) target = $region9
  $region8: #{conv_block_up_forward.21} parent=0 // pred_region
    _
  $region9: #{conv_block_up_forward.21} parent=0 // pred_fallthru
    _
  // Predicated region
  $region10: #{conv_block_up_forward.21} parent=0 // pred_check
    _
  $region11: #{conv_block_up_forward.21} parent=0 // pred_check_branch
    %13 = sbr.rel (0) target = $region13
  $region12: #{conv_block_up_forward.21} parent=0 // pred_region
    _
  $region13: #{conv_block_up_forward.21} parent=0 // pred_fallthru
    _
  %v14 = vld [vmem:[%s0] sm:$0xff]
  %v15 = vld [vmem:[%s0 + $0x8] sm:$0xff]
  %v16 = vld [vmem:[%s0 + $0x10] sm:$0xff]
  %v17 = vld [vmem:[%s0 + $0x18] sm:$0xff]
  %v18 = vld [vmem:[%s0 + $0x20] sm:$0xff]
  %v19 = vld [vmem:[%s0 + $0x28] sm:$0xff]
  %v20 = vld [vmem:[%s0 + $0x30] sm:$0xff]
  %v21 = vld [vmem:[%s0 + $0x38] sm:$0xff]
  %v22 = vld [vmem:[%s0 + $0x40] sm:$0xff]
  %v23 = vld [vmem:[%s0 + $0x48] sm:$0xff]
  %v24 = vld [vmem:[%s0 + $0x50] sm:$0xff]
  %v25 = vld [vmem:[%s0 + $0x58] sm:$0xff]
  %v26 = vld [vmem:[%s0 + $0x60] sm:$0xff]
  %v27 = vld [vmem:[%s0 + $0x68] sm:$0xff]
  %v28 = vld [vmem:[%s0 + $0x70] sm:$0xff]
  %v29 = vld [vmem:[%s0 + $0x78] sm:$0xff]
  %v30 = vld [vmem:[%s0 + $0x80] sm:$0xff]
  %v31 = vld [vmem:[%s0 + $0x88] sm:$0xff]
  %v32 = vld [vmem:[%s0 + $0x90] sm:$0xff]
  %v33 = vld [vmem:[%s0 + $0x98] sm:$0xff]
  %v34 = vld [vmem:[%s0 + $0xa0] sm:$0xff]
  %v35 = vld [vmem:[%s0 + $0xa8] sm:$0xff]
  %v36 = vld [vmem:[%s0 + $0xb0] sm:$0xff]
  %v37 = vld [vmem:[%s0 + $0xb8] sm:$0xff]
  %v38 = vld [vmem:[%s0 + $0xc0] sm:$0xff]
  %v39 = vld [vmem:[%s0 + $0xc8] sm:$0xff]
  %v40 = vld [vmem:[%s0 + $0xd0] sm:$0xff]
  %v41 = vld [vmem:[%s0 + $0xd8] sm:$0xff]
  %v42 = vld [vmem:[%s0 + $0xe0] sm:$0xff]
  %v43 = vld [vmem:[%s0 + $0xe8] sm:$0xff]
  %v44 = vld [vmem:[%s0 + $0xf0] sm:$0xff]
  %v45 = vld [vmem:[%s0 + $0xf8] sm:$0xff]
  %v46 = vld [vmem:[%s0 + $0x100] sm:$0xff]
  %v47 = vld [vmem:[%s0 + $0x108] sm:$0xff]
  %v48 = vld [vmem:[%s0 + $0x110] sm:$0xff]
  %v49 = vld [vmem:[%s0 + $0x118] sm:$0xff]
  %v50 = vld [vmem:[%s0 + $0x120] sm:$0xff]
  %v51 = vld [vmem:[%s0 + $0x128] sm:$0xff]
  %v52 = vld [vmem:[%s0 + $0x130] sm:$0xff]
  %v53 = vld [vmem:[%s0 + $0x138] sm:$0xff]
  %v54 = vld [vmem:[%s0 + $0x140] sm:$0xff]
  %v55 = vld [vmem:[%s0 + $0x148] sm:$0xff]
  %v56 = vld [vmem:[%s0 + $0x150] sm:$0xff]
  %v57 = vld [vmem:[%s0 + $0x158] sm:$0xff]
  %v58 = vld [vmem:[%s0 + $0x160] sm:$0xff]
  %v59 = vld [vmem:[%s0 + $0x168] sm:$0xff]
  %v60 = vld [vmem:[%s0 + $0x170] sm:$0xff]
  %v61 = vld [vmem:[%s0 + $0x178] sm:$0xff]
  %v62 = vld [vmem:[%s0 + $0x180] sm:$0xff]
  %v63 = vld [vmem:[%s0 + $0x188] sm:$0xff]
  %v64 = vld [vmem:[%s0 + $0x190] sm:$0xff]
  %v65 = vld [vmem:[%s0 + $0x198] sm:$0xff]
  %v66 = vld [vmem:[%s0 + $0x1a0] sm:$0xff]
  %v67 = vld [vmem:[%s0 + $0x1a8] sm:$0xff]
  %v68 = vld [vmem:[%s0 + $0x1b0] sm:$0xff]
  %v69 = vld [vmem:[%s0 + $0x1b8] sm:$0xff]
  %v70 = vld [vmem:[%s0 + $0x1c0] sm:$0xff]
  %v71 = vld [vmem:[%s0 + $0x1c8] sm:$0xff]
  %v72 = vld [vmem:[%s0 + $0x1d0] sm:$0xff]
  %v73 = vld [vmem:[%s0 + $0x1d8] sm:$0xff]
  %v74 = vld [vmem:[%s0 + $0x1e0] sm:$0xff]
  %v75 = vld [vmem:[%s0 + $0x1e8] sm:$0xff]
  %v76 = vld [vmem:[%s0 + $0x1f0] sm:$0xff]
  %v77 = vld [vmem:[%s0 + $0x1f8] sm:$0xff]
  %v78 = vld [vmem:[%s1] sm:$0x1]
  %v80 = vperm.slane %v78, 0
  %v82 = vmul.f32 %v14, %v80
  %v83 = vmul.f32 %v15, %v80
  %v84 = vmul.f32 %v16, %v80
  %v85 = vmul.f32 %v17, %v80
  %v86 = vmul.f32 %v18, %v80
  %v87 = vmul.f32 %v19, %v80
  %v88 = vmul.f32 %v20, %v80
  %v89 = vmul.f32 %v21, %v80
  %v90 = vmul.f32 %v22, %v80
  %v91 = vmul.f32 %v23, %v80
  %v92 = vmul.f32 %v24, %v80
  %v93 = vmul.f32 %v25, %v80
  %v94 = vmul.f32 %v26, %v80
  %v95 = vmul.f32 %v27, %v80
  %v96 = vmul.f32 %v28, %v80
  %v97 = vmul.f32 %v29, %v80
  %v98 = vmul.f32 %v30, %v80
  %v99 = vmul.f32 %v31, %v80
  %v100 = vmul.f32 %v32, %v80
  %v101 = vmul.f32 %v33, %v80
  %v102 = vmul.f32 %v34, %v80
  %v103 = vmul.f32 %v35, %v80
  %v104 = vmul.f32 %v36, %v80
  %v105 = vmul.f32 %v37, %v80
  %v106 = vmul.f32 %v38, %v80
  %v107 = vmul.f32 %v39, %v80
  %v108 = vmul.f32 %v40, %v80
  %v109 = vmul.f32 %v41, %v80
  %v110 = vmul.f32 %v42, %v80
  %v111 = vmul.f32 %v43, %v80
  %v112 = vmul.f32 %v44, %v80
  %v113 = vmul.f32 %v45, %v80
  %v114 = vmul.f32 %v46, %v80
  %v115 = vmul.f32 %v47, %v80
  %v116 = vmul.f32 %v48, %v80
  %v117 = vmul.f32 %v49, %v80
  %v118 = vmul.f32 %v50, %v80
  %v119 = vmul.f32 %v51, %v80
  %v120 = vmul.f32 %v52, %v80
  %v121 = vmul.f32 %v53, %v80
  %v122 = vmul.f32 %v54, %v80
  %v123 = vmul.f32 %v55, %v80
  %v124 = vmul.f32 %v56, %v80
  %v125 = vmul.f32 %v57, %v80
  %v126 = vmul.f32 %v58, %v80
  %v127 = vmul.f32 %v59, %v80
  %v128 = vmul.f32 %v60, %v80
  %v129 = vmul.f32 %v61, %v80
  %v130 = vmul.f32 %v62, %v80
  %v131 = vmul.f32 %v63, %v80
  %v132 = vmul.f32 %v64, %v80
  %v133 = vmul.f32 %v65, %v80
  %v134 = vmul.f32 %v66, %v80
  %v135 = vmul.f32 %v67, %v80
  %v136 = vmul.f32 %v68, %v80
  %v137 = vmul.f32 %v69, %v80
  %v138 = vmul.f32 %v70, %v80
  %v139 = vmul.f32 %v71, %v80
  %v140 = vmul.f32 %v72, %v80
  %v141 = vmul.f32 %v73, %v80
  %v142 = vmul.f32 %v74, %v80
  %v143 = vmul.f32 %v75, %v80
  %v144 = vmul.f32 %v76, %v80
  %v145 = vmul.f32 %v77, %v80
  %v146 = vld [vmem:[%s2] sm:$0x1]
  %v148 = vperm.slane %v146, 0
  %v150 = vadd.f32 %v82, %v148
  %v151 = vadd.f32 %v83, %v148
  %v152 = vadd.f32 %v84, %v148
  %v153 = vadd.f32 %v85, %v148
  %v154 = vadd.f32 %v86, %v148
  %v155 = vadd.f32 %v87, %v148
  %v156 = vadd.f32 %v88, %v148
  %v157 = vadd.f32 %v89, %v148
  %v158 = vadd.f32 %v90, %v148
  %v159 = vadd.f32 %v91, %v148
  %v160 = vadd.f32 %v92, %v148
  %v161 = vadd.f32 %v93, %v148
  %v162 = vadd.f32 %v94, %v148
  %v163 = vadd.f32 %v95, %v148
  %v164 = vadd.f32 %v96, %v148
  %v165 = vadd.f32 %v97, %v148
  %v166 = vadd.f32 %v98, %v148
  %v167 = vadd.f32 %v99, %v148
  %v168 = vadd.f32 %v100, %v148
  %v169 = vadd.f32 %v101, %v148
  %v170 = vadd.f32 %v102, %v148
  %v171 = vadd.f32 %v103, %v148
  %v172 = vadd.f32 %v104, %v148
  %v173 = vadd.f32 %v105, %v148
  %v174 = vadd.f32 %v106, %v148
  %v175 = vadd.f32 %v107, %v148
  %v176 = vadd.f32 %v108, %v148
  %v177 = vadd.f32 %v109, %v148
  %v178 = vadd.f32 %v110, %v148
  %v179 = vadd.f32 %v111, %v148
  %v180 = vadd.f32 %v112, %v148
  %v181 = vadd.f32 %v113, %v148
  %v182 = vadd.f32 %v114, %v148
  %v183 = vadd.f32 %v115, %v148
  %v184 = vadd.f32 %v116, %v148
  %v185 = vadd.f32 %v117, %v148
  %v186 = vadd.f32 %v118, %v148
  %v187 = vadd.f32 %v119, %v148
  %v188 = vadd.f32 %v120, %v148
  %v189 = vadd.f32 %v121, %v148
  %v190 = vadd.f32 %v122, %v148
  %v191 = vadd.f32 %v123, %v148
  %v192 = vadd.f32 %v124, %v148
  %v193 = vadd.f32 %v125, %v148
  %v194 = vadd.f32 %v126, %v148
  %v195 = vadd.f32 %v127, %v148
  %v196 = vadd.f32 %v128, %v148
  %v197 = vadd.f32 %v129, %v148
  %v198 = vadd.f32 %v130, %v148
  %v199 = vadd.f32 %v131, %v148
  %v200 = vadd.f32 %v132, %v148
  %v201 = vadd.f32 %v133, %v148
  %v202 = vadd.f32 %v134, %v148
  %v203 = vadd.f32 %v135, %v148
  %v204 = vadd.f32 %v136, %v148
  %v205 = vadd.f32 %v137, %v148
  %v206 = vadd.f32 %v138, %v148
  %v207 = vadd.f32 %v139, %v148
  %v208 = vadd.f32 %v140, %v148
  %v209 = vadd.f32 %v141, %v148
  %v210 = vadd.f32 %v142, %v148
  %v211 = vadd.f32 %v143, %v148
  %v212 = vadd.f32 %v144, %v148
  %v213 = vadd.f32 %v145, %v148
  %214 = vst [vmem:[%s3] sm:$0xff] %v150
  %215 = vst [vmem:[%s3 + $0x8] sm:$0xff] %v151
  %216 = vst [vmem:[%s3 + $0x10] sm:$0xff] %v152
  %217 = vst [vmem:[%s3 + $0x18] sm:$0xff] %v153
  %218 = vst [vmem:[%s3 + $0x20] sm:$0xff] %v154
  %219 = vst [vmem:[%s3 + $0x28] sm:$0xff] %v155
  %220 = vst [vmem:[%s3 + $0x30] sm:$0xff] %v156
  %221 = vst [vmem:[%s3 + $0x38] sm:$0xff] %v157
  %222 = vst [vmem:[%s3 + $0x40] sm:$0xff] %v158
  %223 = vst [vmem:[%s3 + $0x48] sm:$0xff] %v159
  %224 = vst [vmem:[%s3 + $0x50] sm:$0xff] %v160
  %225 = vst [vmem:[%s3 + $0x58] sm:$0xff] %v161
  %226 = vst [vmem:[%s3 + $0x60] sm:$0xff] %v162
  %227 = vst [vmem:[%s3 + $0x68] sm:$0xff] %v163
  %228 = vst [vmem:[%s3 + $0x70] sm:$0xff] %v164
  %229 = vst [vmem:[%s3 + $0x78] sm:$0xff] %v165
  %230 = vst [vmem:[%s3 + $0x80] sm:$0xff] %v166
  %231 = vst [vmem:[%s3 + $0x88] sm:$0xff] %v167
  %232 = vst [vmem:[%s3 + $0x90] sm:$0xff] %v168
  %233 = vst [vmem:[%s3 + $0x98] sm:$0xff] %v169
  %234 = vst [vmem:[%s3 + $0xa0] sm:$0xff] %v170
  %235 = vst [vmem:[%s3 + $0xa8] sm:$0xff] %v171
  %236 = vst [vmem:[%s3 + $0xb0] sm:$0xff] %v172
  %237 = vst [vmem:[%s3 + $0xb8] sm:$0xff] %v173
  %238 = vst [vmem:[%s3 + $0xc0] sm:$0xff] %v174
  %239 = vst [vmem:[%s3 + $0xc8] sm:$0xff] %v175
  %240 = vst [vmem:[%s3 + $0xd0] sm:$0xff] %v176
  %241 = vst [vmem:[%s3 + $0xd8] sm:$0xff] %v177
  %242 = vst [vmem:[%s3 + $0xe0] sm:$0xff] %v178
  %243 = vst [vmem:[%s3 + $0xe8] sm:$0xff] %v179
  %244 = vst [vmem:[%s3 + $0xf0] sm:$0xff] %v180
  %245 = vst [vmem:[%s3 + $0xf8] sm:$0xff] %v181
  %246 = vst [vmem:[%s3 + $0x100] sm:$0xff] %v182
  %247 = vst [vmem:[%s3 + $0x108] sm:$0xff] %v183
  %248 = vst [vmem:[%s3 + $0x110] sm:$0xff] %v184
  %249 = vst [vmem:[%s3 + $0x118] sm:$0xff] %v185
  %250 = vst [vmem:[%s3 + $0x120] sm:$0xff] %v186
  %251 = vst [vmem:[%s3 + $0x128] sm:$0xff] %v187
  %252 = vst [vmem:[%s3 + $0x130] sm:$0xff] %v188
  %253 = vst [vmem:[%s3 + $0x138] sm:$0xff] %v189
  %254 = vst [vmem:[%s3 + $0x140] sm:$0xff] %v190
  %255 = vst [vmem:[%s3 + $0x148] sm:$0xff] %v191
  %256 = vst [vmem:[%s3 + $0x150] sm:$0xff] %v192
  %257 = vst [vmem:[%s3 + $0x158] sm:$0xff] %v193
  %258 = vst [vmem:[%s3 + $0x160] sm:$0xff] %v194
  %259 = vst [vmem:[%s3 + $0x168] sm:$0xff] %v195
  %260 = vst [vmem:[%s3 + $0x170] sm:$0xff] %v196
  %261 = vst [vmem:[%s3 + $0x178] sm:$0xff] %v197
  %262 = vst [vmem:[%s3 + $0x180] sm:$0xff] %v198
  %263 = vst [vmem:[%s3 + $0x188] sm:$0xff] %v199
  %264 = vst [vmem:[%s3 + $0x190] sm:$0xff] %v200
  %265 = vst [vmem:[%s3 + $0x198] sm:$0xff] %v201
  %266 = vst [vmem:[%s3 + $0x1a0] sm:$0xff] %v202
  %267 = vst [vmem:[%s3 + $0x1a8] sm:$0xff] %v203
  %268 = vst [vmem:[%s3 + $0x1b0] sm:$0xff] %v204
  %269 = vst [vmem:[%s3 + $0x1b8] sm:$0xff] %v205
  %270 = vst [vmem:[%s3 + $0x1c0] sm:$0xff] %v206
  %271 = vst [vmem:[%s3 + $0x1c8] sm:$0xff] %v207
  %272 = vst [vmem:[%s3 + $0x1d0] sm:$0xff] %v208
  %273 = vst [vmem:[%s3 + $0x1d8] sm:$0xff] %v209
  %274 = vst [vmem:[%s3 + $0x1e0] sm:$0xff] %v210
  %275 = vst [vmem:[%s3 + $0x1e8] sm:$0xff] %v211
  %276 = vst [vmem:[%s3 + $0x1f0] sm:$0xff] %v212
  %277 = vst [vmem:[%s3 + $0x1f8] sm:$0xff] %v213
  // Predicated region
  $region14: #{conv_block_up_forward.21} parent=0 // pred_check
    _
  $region15: #{conv_block_up_forward.21} parent=0 // pred_check_branch
    %279 = sbr.rel (0) target = $region17
  $region16: #{conv_block_up_forward.21} parent=0 // pred_region
    _
  $region17: #{conv_block_up_forward.21} parent=0 // pred_fallthru
    _
  // Predicated region
  $region18: #{conv_block_up_forward.21} parent=0 // pred_check
    _
  $region19: #{conv_block_up_forward.21} parent=0 // pred_check_branch
    %281 = sbr.rel (0) target = $region21
  $region20: #{conv_block_up_forward.21} parent=0 // pred_region
    _
  $region21: #{conv_block_up_forward.21} parent=0 // pred_fallthru
    _

</llo_original>
